<compile_context>
chip_gen: v7x
topology: tpu7x:2x2x1
jax: 0.10.0
libtpu: 0.0.40
codegen_flags: <defaults>
</compile_context>

<pallas_src>
import jax
import jax.numpy as jnp
from jax.experimental import pallas as pl
from jax.experimental.pallas import tpu as pltpu


def _fused_mlp_kernel(x_ref,
                      w1_ref, b1_ref,
                      w2_ref, b2_ref,
                      w3_ref, b3_ref,
                      w4_ref, b4_ref,
                      o_ref):
    """Fused 4-layer MLP: sigmoid(((x@W1+b1)@W2+b2)@W3+b3)@W4+b4.

    Everything (x, all weights, all biases, intermediates) lives in VMEM;
    each layer is a single MXU matmul with f32 accumulation.
    """
    h = jnp.dot(x_ref[...], w1_ref[...],
                preferred_element_type=jnp.float32) + b1_ref[...]
    h = jnp.dot(h, w2_ref[...],
                preferred_element_type=jnp.float32) + b2_ref[...]
    h = jnp.dot(h, w3_ref[...],
                preferred_element_type=jnp.float32) + b3_ref[...]
    # ReLU is intentionally NOT applied: the reference module assigns
    # `our = self.relu(out)` (a typo) and never uses it.
    h = jnp.dot(h, w4_ref[...],
                preferred_element_type=jnp.float32) + b4_ref[...]
    o_ref[...] = jax.nn.sigmoid(h).astype(o_ref.dtype)


def base_line_forward(x, params):
    """Run the fused MLP as ONE pallas_call (no grid, no pipelining needed)."""
    M = x.shape[0]
    out_dim = params[-1][0].shape[1]

    # Flatten (w, b) pairs; biases reshaped to (1, N) for clean broadcast.
    flat_args = []
    for w, b in params:
        flat_args.append(w)
        flat_args.append(b.reshape(1, -1))

    vmem_spec = pl.BlockSpec(memory_space=pltpu.MemorySpace.VMEM)

    return pl.pallas_call(
        _fused_mlp_kernel,
        out_shape=jax.ShapeDtypeStruct((M, out_dim), x.dtype),
        in_specs=[vmem_spec] * (1 + len(flat_args)),
        out_specs=vmem_spec,
    )(x, *flat_args)


def init_params(key, fin, out):
    """Deterministic init mimicking nn.Linear's U(-1/sqrt(fan_in), 1/sqrt(fan_in)).

    Weights are stored transposed vs. PyTorch, i.e. (in_features, out_features),
    so the kernel computes y = x @ W + b directly on the MXU.
    """
    dims = [(fin, 2048), (2048, 1024), (1024, 512), (512, out)]
    params = []
    for din, dout in dims:
        key, kw, kb = jax.random.split(key, 3)
        bound = 1.0 / float(jnp.sqrt(jnp.float32(din)))
        w = jax.random.uniform(kw, (din, dout), jnp.float32, -bound, bound)
        b = jax.random.uniform(kb, (dout,), jnp.float32, -bound, bound)
        params.append((w, b))
    return params


if __name__ == "__main__":
    fin, out_dim, batch = 32, 16, 8

    key = jax.random.PRNGKey(0)
    key, kx = jax.random.split(key)
    x = jax.random.normal(kx, (batch, fin), jnp.float32)
    params = init_params(key, fin, out_dim)

    y = base_line_forward(x, params)
    y = jax.block_until_ready(y)

    # Cross-check against a pure-JAX reference of the same forward pass.
    ref = x
    for w, b in params:
        ref = ref @ w + b
    ref = jax.nn.sigmoid(ref)
    assert y.shape == (batch, out_dim)
    assert jnp.allclose(y, ref, atol=1e-5, rtol=1e-5)

    print("KERNEL_OK")
</pallas_src>

<mosaic_0001>
module attributes {stable_mosaic.version = 11 : i64} {
  func.func @_fused_mlp_kernel(%arg0: memref<8x32xf32, #tpu.memory_space<vmem>>, %arg1: memref<32x2048xf32, #tpu.memory_space<vmem>>, %arg2: memref<1x2048xf32, #tpu.memory_space<vmem>>, %arg3: memref<2048x1024xf32, #tpu.memory_space<vmem>>, %arg4: memref<1x1024xf32, #tpu.memory_space<vmem>>, %arg5: memref<1024x512xf32, #tpu.memory_space<vmem>>, %arg6: memref<1x512xf32, #tpu.memory_space<vmem>>, %arg7: memref<512x16xf32, #tpu.memory_space<vmem>>, %arg8: memref<1x16xf32, #tpu.memory_space<vmem>>, %arg9: memref<8x16xf32, #tpu.memory_space<vmem>>) attributes {dimension_semantics = [], scalar_prefetch = 0 : i64, scratch_operands = 0 : i64, tpu.core_type = #tpu.core_type<tc>} {
    %c0 = arith.constant 0 : index
    %c0_0 = arith.constant 0 : index
    %0 = vector.load %arg0[%c0, %c0_0] : memref<8x32xf32, #tpu.memory_space<vmem>>, vector<8x32xf32>
    %c0_1 = arith.constant 0 : index
    %c0_2 = arith.constant 0 : index
    %1 = vector.load %arg1[%c0_1, %c0_2] : memref<32x2048xf32, #tpu.memory_space<vmem>>, vector<32x2048xf32>
    %cst = arith.constant dense<0.000000e+00> : vector<8x2048xf32>
    %2 = tpu.matmul %0, %1, %cst {dimension_numbers = #tpu.dot_dimension_numbers<[1], [0], [0], [1], [0, 0, 1, 1], [], []>} : vector<8x32xf32>, vector<32x2048xf32>, vector<8x2048xf32> -> vector<8x2048xf32>
    %c0_3 = arith.constant 0 : index
    %c0_4 = arith.constant 0 : index
    %3 = vector.load %arg2[%c0_3, %c0_4] : memref<1x2048xf32, #tpu.memory_space<vmem>>, vector<1x2048xf32>
    %4 = vector.broadcast %3 : vector<1x2048xf32> to vector<8x2048xf32>
    %5 = arith.addf %2, %4 : vector<8x2048xf32>
    %c0_5 = arith.constant 0 : index
    %c0_6 = arith.constant 0 : index
    %6 = vector.load %arg3[%c0_5, %c0_6] : memref<2048x1024xf32, #tpu.memory_space<vmem>>, vector<2048x1024xf32>
    %cst_7 = arith.constant dense<0.000000e+00> : vector<8x1024xf32>
    %7 = tpu.matmul %5, %6, %cst_7 {dimension_numbers = #tpu.dot_dimension_numbers<[1], [0], [0], [1], [0, 0, 1, 1], [], []>} : vector<8x2048xf32>, vector<2048x1024xf32>, vector<8x1024xf32> -> vector<8x1024xf32>
    %c0_8 = arith.constant 0 : index
    %c0_9 = arith.constant 0 : index
    %8 = vector.load %arg4[%c0_8, %c0_9] : memref<1x1024xf32, #tpu.memory_space<vmem>>, vector<1x1024xf32>
    %9 = vector.broadcast %8 : vector<1x1024xf32> to vector<8x1024xf32>
    %10 = arith.addf %7, %9 : vector<8x1024xf32>
    %c0_10 = arith.constant 0 : index
    %c0_11 = arith.constant 0 : index
    %11 = vector.load %arg5[%c0_10, %c0_11] : memref<1024x512xf32, #tpu.memory_space<vmem>>, vector<1024x512xf32>
    %cst_12 = arith.constant dense<0.000000e+00> : vector<8x512xf32>
    %12 = tpu.matmul %10, %11, %cst_12 {dimension_numbers = #tpu.dot_dimension_numbers<[1], [0], [0], [1], [0, 0, 1, 1], [], []>} : vector<8x1024xf32>, vector<1024x512xf32>, vector<8x512xf32> -> vector<8x512xf32>
    %c0_13 = arith.constant 0 : index
    %c0_14 = arith.constant 0 : index
    %13 = vector.load %arg6[%c0_13, %c0_14] : memref<1x512xf32, #tpu.memory_space<vmem>>, vector<1x512xf32>
    %14 = vector.broadcast %13 : vector<1x512xf32> to vector<8x512xf32>
    %15 = arith.addf %12, %14 : vector<8x512xf32>
    %c0_15 = arith.constant 0 : index
    %c0_16 = arith.constant 0 : index
    %16 = vector.load %arg7[%c0_15, %c0_16] : memref<512x16xf32, #tpu.memory_space<vmem>>, vector<512x16xf32>
    %cst_17 = arith.constant dense<0.000000e+00> : vector<8x16xf32>
    %17 = tpu.matmul %15, %16, %cst_17 {dimension_numbers = #tpu.dot_dimension_numbers<[1], [0], [0], [1], [0, 0, 1, 1], [], []>} : vector<8x512xf32>, vector<512x16xf32>, vector<8x16xf32> -> vector<8x16xf32>
    %c0_18 = arith.constant 0 : index
    %c0_19 = arith.constant 0 : index
    %18 = vector.load %arg8[%c0_18, %c0_19] : memref<1x16xf32, #tpu.memory_space<vmem>>, vector<1x16xf32>
    %19 = vector.broadcast %18 : vector<1x16xf32> to vector<8x16xf32>
    %20 = arith.addf %17, %19 : vector<8x16xf32>
    %21 = arith.negf %20 : vector<8x16xf32>
    %22 = math.exp %21 : vector<8x16xf32>
    %cst_20 = arith.constant 1.000000e+00 : f32
    %23 = vector.broadcast %cst_20 : f32 to vector<8x16xf32>
    %24 = arith.addf %23, %22 : vector<8x16xf32>
    %25 = arith.divf %23, %24 : vector<8x16xf32>
    %c0_21 = arith.constant 0 : index
    %c0_22 = arith.constant 0 : index
    %26 = vector.load %arg9[%c0_21, %c0_22] : memref<8x16xf32, #tpu.memory_space<vmem>>, vector<8x16xf32>
    tpu.vector_store %arg9[%c0_21, %c0_22], %25 {strides = array<i32>} : memref<8x16xf32, #tpu.memory_space<vmem>>, vector<8x16xf32>,
    return
  }
}

</mosaic_0001>

<llo_original>
// kernel: tpu_custom_call.1
$region0: #{tpu_custom_call.1}
  #allocation0 [shape = 'u32[]', space=smem, size = 0x4, offset = 0x4, fixed_abs, tag = 'smem constant byte address 0x4 - core index']
  #allocation1 [shape = 'u32[144,128]{1,0:T(1,128)}', space=vmem, size = 0x12000, scoped, tag = 'internal scratch']
  %s0 = inlined_call_operand.hbm [shape: f32[8,32], index: 0, kind: input, shape index: {}]
  %s1 = inlined_call_operand.hbm [shape: f32[32,2048], index: 1, kind: input, shape index: {}]
  %s2 = inlined_call_operand.hbm [shape: f32[1,2048], index: 2, kind: input, shape index: {}]
  %s3 = inlined_call_operand.hbm [shape: f32[2048,1024], index: 3, kind: input, shape index: {}]
  %s4 = inlined_call_operand.hbm [shape: f32[1,1024], index: 4, kind: input, shape index: {}]
  %s5 = inlined_call_operand.hbm [shape: f32[1024,512], index: 5, kind: input, shape index: {}]
  %s6 = inlined_call_operand.hbm [shape: f32[1,512], index: 6, kind: input, shape index: {}]
  %s7 = inlined_call_operand.vmem [shape: f32[512,16], index: 7, kind: input, shape index: {}]
  %s8 = inlined_call_operand.hbm [shape: f32[1,16], index: 8, kind: input, shape index: {}]
  %s9 = inlined_call_operand.hbm [shape: f32[8,16], index: 9, kind: output, shape index: {}]
  %s10 = sld [smem:[#allocation0]]
  $region78: #{tpu_custom_call.1} parent=0
    _
  %s12 = ssub.s32 1, %s10
  %s13 = scalar_select 0, %s12, %s10
  $region1: #{tpu_custom_call.1} parent=0
    #allocation2 [shape = 'u8[4096]{0}', space=vmem, size = 0x1000, scoped, tag = 'input window, operand 0, single buffered']
    #allocation3 [shape = 's32[1]{0}', space=sflag, size = 0x4, scoped, tag = 'scoped memory for tpu_custom_call.1']
    #allocation4 [shape = 's32[1]{0}', space=sflag, size = 0x4, scoped, tag = 'scoped memory for tpu_custom_call.1']
    #allocation5 [shape = 'u8[262144]{0}', space=vmem, size = 0x40000, scoped, tag = 'input window, operand 1, single buffered']
    #allocation6 [shape = 's32[1]{0}', space=sflag, size = 0x4, scoped, tag = 'scoped memory for tpu_custom_call.1']
    #allocation7 [shape = 'u8[8192]{0}', space=vmem, size = 0x2000, scoped, tag = 'input window, operand 2, single buffered']
    #allocation8 [shape = 'u8[8388608]{0}', space=vmem, size = 0x800000, scoped, tag = 'input window, operand 3, single buffered']
    #allocation9 [shape = 's32[1]{0}', space=sflag, size = 0x4, scoped, tag = 'scoped memory for tpu_custom_call.1']
    #allocation10 [shape = 'u8[4096]{0}', space=vmem, size = 0x1000, scoped, tag = 'input window, operand 4, single buffered']
    #allocation11 [shape = 'u8[2097152]{0}', space=vmem, size = 0x200000, scoped, tag = 'input window, operand 5, single buffered']
    #allocation12 [shape = 's32[1]{0}', space=sflag, size = 0x4, scoped, tag = 'scoped memory for tpu_custom_call.1']
    #allocation13 [shape = 'u8[2048]{0}', space=vmem, size = 0x800, scoped, tag = 'input window, operand 6, single buffered']
    #allocation14 [shape = 'u8[512]{0}', space=vmem, size = 0x400, scoped, tag = 'input window, operand 8, single buffered']
    #allocation15 [shape = 's32[1]{0}', space=sflag, size = 0x4, scoped, tag = 'scoped memory for tpu_custom_call.1']
    #allocation16 [shape = 'u8[4096]{0}', space=vmem, size = 0x1000, scoped, tag = 'output window, operand 0, single buffered']
    %14 = vsyncpa [#allocation3], 0
    %15 = vsyncpa [#allocation6], 0
    %16 = vsyncpa [#allocation9], 0
    %17 = vsyncpa [#allocation12], 0
    %18 = vsyncpa [#allocation15], 0
    %19 = vsyncpa [#allocation4], 0
    // Predicated region
    $region2: #{tpu_custom_call.1} parent=1 // pred_check
      _
    $region3: #{tpu_custom_call.1} parent=1 // pred_check_branch
      %21 = sbr.rel (0) target = $region5
    $region4: #{tpu_custom_call.1} parent=1 // pred_region
      %s23 = ssub.s32 128, 128
      %24 = vsyncadd [#allocation3], %s23
      %s26 = sshll.u32 [#allocation2], 4
      %s27 = int_to_ptr.vmem [resolvable:$true] %s26
      %29 = dma.hbm_to_vmem [thread:$0]  %s0, 128, %s27, [#allocation3]
    $region5: #{tpu_custom_call.1} parent=1 // pred_fallthru
      _
    // Predicated region
    $region6: #{tpu_custom_call.1} parent=1 // pred_check
      _
    $region7: #{tpu_custom_call.1} parent=1 // pred_check_branch
      %31 = sbr.rel (0) target = $region9
    $region8: #{tpu_custom_call.1} parent=1 // pred_region
      %s33 = ssub.s32 8192, 8192
      %34 = vsyncadd [#allocation6], %s33
      %s35 = sshll.u32 [#allocation5], 4
      %s36 = int_to_ptr.vmem [resolvable:$true] %s35
      %41 = dma.hbm_to_vmem [thread:$0]  %s1, 8192, %s36, [#allocation6], 2048, 2048, 128
    $region9: #{tpu_custom_call.1} parent=1 // pred_fallthru
      _
    // Predicated region
    $region10: #{tpu_custom_call.1} parent=1 // pred_check
      _
    $region11: #{tpu_custom_call.1} parent=1 // pred_check_branch
      %43 = sbr.rel (0) target = $region13
    $region12: #{tpu_custom_call.1} parent=1 // pred_region
      %s45 = ssub.s32 256, 256
      %46 = vsyncadd [#allocation6], %s45
      %s48 = sshll.u32 [#allocation7], 4
      %s49 = int_to_ptr.vmem [resolvable:$true] %s48
      %51 = dma.hbm_to_vmem [thread:$0]  %s2, 256, %s49, [#allocation6]
    $region13: #{tpu_custom_call.1} parent=1 // pred_fallthru
      _
    // Predicated region
    $region14: #{tpu_custom_call.1} parent=1 // pred_check
      _
    $region15: #{tpu_custom_call.1} parent=1 // pred_check_branch
      %53 = sbr.rel (0) target = $region17
    $region16: #{tpu_custom_call.1} parent=1 // pred_region
      %s55 = ssub.s32 262144, 262144
      %56 = vsyncadd [#allocation9], %s55
      %s57 = sshll.u32 [#allocation8], 4
      %s58 = int_to_ptr.vmem [resolvable:$true] %s57
      %63 = dma.hbm_to_vmem [thread:$0]  %s3, 262144, %s58, [#allocation9], 1024, 1024, 64
    $region17: #{tpu_custom_call.1} parent=1 // pred_fallthru
      _
    // Predicated region
    $region18: #{tpu_custom_call.1} parent=1 // pred_check
      _
    $region19: #{tpu_custom_call.1} parent=1 // pred_check_branch
      %65 = sbr.rel (0) target = $region21
    $region20: #{tpu_custom_call.1} parent=1 // pred_region
      %s67 = ssub.s32 128, 128
      %68 = vsyncadd [#allocation9], %s67
      %s70 = sshll.u32 [#allocation10], 4
      %s71 = int_to_ptr.vmem [resolvable:$true] %s70
      %73 = dma.hbm_to_vmem [thread:$0]  %s4, 128, %s71, [#allocation9]
    $region21: #{tpu_custom_call.1} parent=1 // pred_fallthru
      _
    // Predicated region
    $region22: #{tpu_custom_call.1} parent=1 // pred_check
      _
    $region23: #{tpu_custom_call.1} parent=1 // pred_check_branch
      %75 = sbr.rel (0) target = $region25
    $region24: #{tpu_custom_call.1} parent=1 // pred_region
      %s77 = ssub.s32 65536, 65536
      %78 = vsyncadd [#allocation12], %s77
      %s79 = sshll.u32 [#allocation11], 4
      %s80 = int_to_ptr.vmem [resolvable:$true] %s79
      %85 = dma.hbm_to_vmem [thread:$0]  %s5, 65536, %s80, [#allocation12], 512, 512, 32
    $region25: #{tpu_custom_call.1} parent=1 // pred_fallthru
      _
    // Predicated region
    $region26: #{tpu_custom_call.1} parent=1 // pred_check
      _
    $region27: #{tpu_custom_call.1} parent=1 // pred_check_branch
      %87 = sbr.rel (0) target = $region29
    $region28: #{tpu_custom_call.1} parent=1 // pred_region
      %s89 = ssub.s32 64, 64
      %90 = vsyncadd [#allocation12], %s89
      %s92 = sshll.u32 [#allocation13], 4
      %s93 = int_to_ptr.vmem [resolvable:$true] %s92
      %95 = dma.hbm_to_vmem [thread:$0]  %s6, 64, %s93, [#allocation12]
    $region29: #{tpu_custom_call.1} parent=1 // pred_fallthru
      _
    // Predicated region
    $region30: #{tpu_custom_call.1} parent=1 // pred_check
      _
    $region31: #{tpu_custom_call.1} parent=1 // pred_check_branch
      %97 = sbr.rel (0) target = $region33
    $region32: #{tpu_custom_call.1} parent=1 // pred_region
      _
    $region33: #{tpu_custom_call.1} parent=1 // pred_fallthru
      _
    // Predicated region
    $region34: #{tpu_custom_call.1} parent=1 // pred_check
      _
    $region35: #{tpu_custom_call.1} parent=1 // pred_check_branch
      %99 = sbr.rel (0) target = $region37
    $region36: #{tpu_custom_call.1} parent=1 // pred_region
      %s101 = ssub.s32 16, 16
      %102 = vsyncadd [#allocation15], %s101
      %s104 = sshll.u32 [#allocation14], 4
      %s105 = int_to_ptr.vmem [resolvable:$true] %s104
      %107 = dma.hbm_to_vmem [thread:$0]  %s8, 16, %s105, [#allocation15]
    $region37: #{tpu_custom_call.1} parent=1 // pred_fallthru
      _
    // Predicated region
    $region38: #{tpu_custom_call.1} parent=1 // pred_check
      _
    $region39: #{tpu_custom_call.1} parent=1 // pred_check_branch
      %109 = sbr.rel (0) target = $region41
    $region40: #{tpu_custom_call.1} parent=1 // pred_region
      %110 = dma.done [#allocation3], 128
    $region41: #{tpu_custom_call.1} parent=1 // pred_fallthru
      _
    // Predicated region
    $region42: #{tpu_custom_call.1} parent=1 // pred_check
      _
    $region43: #{tpu_custom_call.1} parent=1 // pred_check_branch
      %112 = sbr.rel (0) target = $region45
    $region44: #{tpu_custom_call.1} parent=1 // pred_region
      %113 = dma.done [#allocation6], 8192
    $region45: #{tpu_custom_call.1} parent=1 // pred_fallthru
      _
    // Predicated region
    $region46: #{tpu_custom_call.1} parent=1 // pred_check
      _
    $region47: #{tpu_custom_call.1} parent=1 // pred_check_branch
      %115 = sbr.rel (0) target = $region49
    $region48: #{tpu_custom_call.1} parent=1 // pred_region
      %116 = dma.done [#allocation6], 256
    $region49: #{tpu_custom_call.1} parent=1 // pred_fallthru
      _
    // Predicated region
    $region50: #{tpu_custom_call.1} parent=1 // pred_check
      _
    $region51: #{tpu_custom_call.1} parent=1 // pred_check_branch
      %118 = sbr.rel (0) target = $region53
    $region52: #{tpu_custom_call.1} parent=1 // pred_region
      %119 = dma.done [#allocation9], 262144
    $region53: #{tpu_custom_call.1} parent=1 // pred_fallthru
      _
    // Predicated region
    $region54: #{tpu_custom_call.1} parent=1 // pred_check
      _
    $region55: #{tpu_custom_call.1} parent=1 // pred_check_branch
      %121 = sbr.rel (0) target = $region57
    $region56: #{tpu_custom_call.1} parent=1 // pred_region
      %122 = dma.done [#allocation9], 128
    $region57: #{tpu_custom_call.1} parent=1 // pred_fallthru
      _
    // Predicated region
    $region58: #{tpu_custom_call.1} parent=1 // pred_check
      _
    $region59: #{tpu_custom_call.1} parent=1 // pred_check_branch
      %124 = sbr.rel (0) target = $region61
    $region60: #{tpu_custom_call.1} parent=1 // pred_region
      %125 = dma.done [#allocation12], 65536
    $region61: #{tpu_custom_call.1} parent=1 // pred_fallthru
      _
    // Predicated region
    $region62: #{tpu_custom_call.1} parent=1 // pred_check
      _
    $region63: #{tpu_custom_call.1} parent=1 // pred_check_branch
      %127 = sbr.rel (0) target = $region65
    $region64: #{tpu_custom_call.1} parent=1 // pred_region
      %128 = dma.done [#allocation12], 64
    $region65: #{tpu_custom_call.1} parent=1 // pred_fallthru
      _
    // Predicated region
    $region66: #{tpu_custom_call.1} parent=1 // pred_check
      _
    $region67: #{tpu_custom_call.1} parent=1 // pred_check_branch
      %130 = sbr.rel (0) target = $region69
    $region68: #{tpu_custom_call.1} parent=1 // pred_region
      %131 = dma.done [#allocation15], 16
    $region69: #{tpu_custom_call.1} parent=1 // pred_fallthru
      _
    %v132 = vld [vmem:[#allocation2] sm:$0xff]
    %v133 = vld [vmem:[#allocation5] sm:$0xff]
    %v134 = vld [vmem:[#allocation5 + $0x8] sm:$0xff]
    %v135 = vld [vmem:[#allocation5 + $0x10] sm:$0xff]
    %v136 = vld [vmem:[#allocation5 + $0x18] sm:$0xff]
    %v137 = vld [vmem:[#allocation5 + $0x20] sm:$0xff]
    %v138 = vld [vmem:[#allocation5 + $0x28] sm:$0xff]
    %v139 = vld [vmem:[#allocation5 + $0x30] sm:$0xff]
    %v140 = vld [vmem:[#allocation5 + $0x38] sm:$0xff]
    %v141 = vld [vmem:[#allocation5 + $0x40] sm:$0xff]
    %v142 = vld [vmem:[#allocation5 + $0x48] sm:$0xff]
    %v143 = vld [vmem:[#allocation5 + $0x50] sm:$0xff]
    %v144 = vld [vmem:[#allocation5 + $0x58] sm:$0xff]
    %v145 = vld [vmem:[#allocation5 + $0x60] sm:$0xff]
    %v146 = vld [vmem:[#allocation5 + $0x68] sm:$0xff]
    %v147 = vld [vmem:[#allocation5 + $0x70] sm:$0xff]
    %v148 = vld [vmem:[#allocation5 + $0x78] sm:$0xff]
    %v149 = vld [vmem:[#allocation5 + $0x80] sm:$0xff]
    %v150 = vld [vmem:[#allocation5 + $0x88] sm:$0xff]
    %v151 = vld [vmem:[#allocation5 + $0x90] sm:$0xff]
    %v152 = vld [vmem:[#allocation5 + $0x98] sm:$0xff]
    %v153 = vld [vmem:[#allocation5 + $0xa0] sm:$0xff]
    %v154 = vld [vmem:[#allocation5 + $0xa8] sm:$0xff]
    %v155 = vld [vmem:[#allocation5 + $0xb0] sm:$0xff]
    %v156 = vld [vmem:[#allocation5 + $0xb8] sm:$0xff]
    %v157 = vld [vmem:[#allocation5 + $0xc0] sm:$0xff]
    %v158 = vld [vmem:[#allocation5 + $0xc8] sm:$0xff]
    %v159 = vld [vmem:[#allocation5 + $0xd0] sm:$0xff]
    %v160 = vld [vmem:[#allocation5 + $0xd8] sm:$0xff]
    %v161 = vld [vmem:[#allocation5 + $0xe0] sm:$0xff]
    %v162 = vld [vmem:[#allocation5 + $0xe8] sm:$0xff]
    %v163 = vld [vmem:[#allocation5 + $0xf0] sm:$0xff]
    %v164 = vld [vmem:[#allocation5 + $0xf8] sm:$0xff]
    %v165 = vld [vmem:[#allocation5 + $0x100] sm:$0xff]
    %v166 = vld [vmem:[#allocation5 + $0x108] sm:$0xff]
    %v167 = vld [vmem:[#allocation5 + $0x110] sm:$0xff]
    %v168 = vld [vmem:[#allocation5 + $0x118] sm:$0xff]
    %v169 = vld [vmem:[#allocation5 + $0x120] sm:$0xff]
    %v170 = vld [vmem:[#allocation5 + $0x128] sm:$0xff]
    %v171 = vld [vmem:[#allocation5 + $0x130] sm:$0xff]
    %v172 = vld [vmem:[#allocation5 + $0x138] sm:$0xff]
    %v173 = vld [vmem:[#allocation5 + $0x140] sm:$0xff]
    %v174 = vld [vmem:[#allocation5 + $0x148] sm:$0xff]
    %v175 = vld [vmem:[#allocation5 + $0x150] sm:$0xff]
    %v176 = vld [vmem:[#allocation5 + $0x158] sm:$0xff]
    %v177 = vld [vmem:[#allocation5 + $0x160] sm:$0xff]
    %v178 = vld [vmem:[#allocation5 + $0x168] sm:$0xff]
    %v179 = vld [vmem:[#allocation5 + $0x170] sm:$0xff]
    %v180 = vld [vmem:[#allocation5 + $0x178] sm:$0xff]
    %v181 = vld [vmem:[#allocation5 + $0x180] sm:$0xff]
    %v182 = vld [vmem:[#allocation5 + $0x188] sm:$0xff]
    %v183 = vld [vmem:[#allocation5 + $0x190] sm:$0xff]
    %v184 = vld [vmem:[#allocation5 + $0x198] sm:$0xff]
    %v185 = vld [vmem:[#allocation5 + $0x1a0] sm:$0xff]
    %v186 = vld [vmem:[#allocation5 + $0x1a8] sm:$0xff]
    %v187 = vld [vmem:[#allocation5 + $0x1b0] sm:$0xff]
    %v188 = vld [vmem:[#allocation5 + $0x1b8] sm:$0xff]
    %v189 = vld [vmem:[#allocation5 + $0x1c0] sm:$0xff]
    %v190 = vld [vmem:[#allocation5 + $0x1c8] sm:$0xff]
    %v191 = vld [vmem:[#allocation5 + $0x1d0] sm:$0xff]
    %v192 = vld [vmem:[#allocation5 + $0x1d8] sm:$0xff]
    %v193 = vld [vmem:[#allocation5 + $0x1e0] sm:$0xff]
    %v194 = vld [vmem:[#allocation5 + $0x1e8] sm:$0xff]
    %v195 = vld [vmem:[#allocation5 + $0x1f0] sm:$0xff]
    %v196 = vld [vmem:[#allocation5 + $0x1f8] sm:$0xff]
    %v197 = vld [vmem:[#allocation7] sm:$0xff]
    %v198 = vld [vmem:[#allocation7 + $0x8] sm:$0xff]
    %v201 = vlaneseq
    %v202 = vshrl.u32 %v201, 7
    %v203 = vsub.s32 0, %v202
    %v204 = vrot.slane %v197, %v203
    %v205 = vlaneseq
    %v206 = vshrl.u32 %v205, 7
    %v207 = vsub.s32 1, %v206
    %v208 = vrot.slane %v197, %v207
    %v209 = vlaneseq
    %v210 = vshrl.u32 %v209, 7
    %v211 = vsub.s32 2, %v210
    %v212 = vrot.slane %v197, %v211
    %v213 = vlaneseq
    %v214 = vshrl.u32 %v213, 7
    %v215 = vsub.s32 3, %v214
    %v216 = vrot.slane %v197, %v215
    %v217 = vlaneseq
    %v218 = vshrl.u32 %v217, 7
    %v219 = vsub.s32 4, %v218
    %v220 = vrot.slane %v197, %v219
    %v221 = vlaneseq
    %v222 = vshrl.u32 %v221, 7
    %v223 = vsub.s32 5, %v222
    %v224 = vrot.slane %v197, %v223
    %v225 = vlaneseq
    %v226 = vshrl.u32 %v225, 7
    %v227 = vsub.s32 6, %v226
    %v228 = vrot.slane %v197, %v227
    %v229 = vlaneseq
    %v230 = vshrl.u32 %v229, 7
    %v231 = vsub.s32 7, %v230
    %v232 = vrot.slane %v197, %v231
    %v233 = vlaneseq
    %v234 = vshrl.u32 %v233, 7
    %v235 = vsub.s32 0, %v234
    %v236 = vrot.slane %v198, %v235
    %v237 = vlaneseq
    %v238 = vshrl.u32 %v237, 7
    %v239 = vsub.s32 1, %v238
    %v240 = vrot.slane %v198, %v239
    %v241 = vlaneseq
    %v242 = vshrl.u32 %v241, 7
    %v243 = vsub.s32 2, %v242
    %v244 = vrot.slane %v198, %v243
    %v245 = vlaneseq
    %v246 = vshrl.u32 %v245, 7
    %v247 = vsub.s32 3, %v246
    %v248 = vrot.slane %v198, %v247
    %v249 = vlaneseq
    %v250 = vshrl.u32 %v249, 7
    %v251 = vsub.s32 4, %v250
    %v252 = vrot.slane %v198, %v251
    %v253 = vlaneseq
    %v254 = vshrl.u32 %v253, 7
    %v255 = vsub.s32 5, %v254
    %v256 = vrot.slane %v198, %v255
    %v257 = vlaneseq
    %v258 = vshrl.u32 %v257, 7
    %v259 = vsub.s32 6, %v258
    %v260 = vrot.slane %v198, %v259
    %v261 = vlaneseq
    %v262 = vshrl.u32 %v261, 7
    %v263 = vsub.s32 7, %v262
    %v264 = vrot.slane %v198, %v263
    %vm281 = vcmask 261120
    %v283 = vsel %vm281, %v132, 0
    %285 = vmatprep.subr.mxu0 %v134
    %286 = vmatpush1.msra.mxu0 %v133
    %287 = vmatprep.subr.mxu0 %v150
    %288 = vmatpush1.msra.mxu0 %v149
    %289 = vmatprep.subr.mxu0 %v166
    %290 = vmatpush1.msra.mxu0 %v165
    %291 = vmatprep.subr.mxu0 %v182
    %292 = vmatpush1.msra.mxu0 %v181
    %293 = vmatprep.subr.mxu0 0.0
    %294 = vmatpush1.msra.mxu0 0.0
    %295 = vmatprep.subr.mxu0 0.0
    %296 = vmatpush1.msra.mxu0 0.0
    %297 = vmatprep.subr.mxu0 0.0
    %298 = vmatpush1.msra.mxu0 0.0
    %299 = vmatprep.subr.mxu0 0.0
    %300 = vmatpush1.msra.mxu0 0.0
    %301 = vmatprep.subr.mxu0 0.0
    %302 = vmatpush1.msra.mxu0 0.0
    %303 = vmatprep.subr.mxu0 0.0
    %304 = vmatpush1.msra.mxu0 0.0
    %305 = vmatprep.subr.mxu0 0.0
    %306 = vmatpush1.msra.mxu0 0.0
    %307 = vmatprep.subr.mxu0 0.0
    %308 = vmatpush1.msra.mxu0 0.0
    %309 = vmatprep.subr.mxu0 0.0
    %310 = vmatpush1.msra.mxu0 0.0
    %311 = vmatprep.subr.mxu0 0.0
    %312 = vmatpush1.msra.mxu0 0.0
    %313 = vmatprep.subr.mxu0 0.0
    %314 = vmatpush1.msra.mxu0 0.0
    %315 = vmatprep.subr.mxu0 0.0
    %316 = vmatpush1.msra.mxu0 0.0
    %317 = vmatprep.subr.mxu0 0.0
    %318 = vmatpush1.msra.mxu0 0.0
    %319 = vmatprep.subr.mxu0 0.0
    %320 = vmatpush1.msra.mxu0 0.0
    %321 = vmatprep.subr.mxu0 0.0
    %322 = vmatpush1.msra.mxu0 0.0
    %323 = vmatprep.subr.mxu0 0.0
    %324 = vmatpush1.msra.mxu0 0.0
    %325 = vmatprep.subr.mxu0 0.0
    %326 = vmatpush1.msra.mxu0 0.0
    %327 = vmatprep.subr.mxu0 0.0
    %328 = vmatpush1.msra.mxu0 0.0
    %329 = vmatprep.subr.mxu0 0.0
    %330 = vmatpush1.msra.mxu0 0.0
    %331 = vmatprep.subr.mxu0 0.0
    %332 = vmatpush1.msra.mxu0 0.0
    %333 = vmatprep.subr.mxu0 0.0
    %334 = vmatpush1.msra.mxu0 0.0
    %335 = vmatprep.subr.mxu0 0.0
    %336 = vmatpush1.msra.mxu0 0.0
    %337 = vmatprep.subr.mxu0 0.0
    %338 = vmatpush1.msra.mxu0 0.0
    %339 = vmatprep.subr.mxu0 0.0
    %340 = vmatpush1.msra.mxu0 0.0
    %341 = vmatprep.subr.mxu0 0.0
    %342 = vmatpush1.msra.mxu0 0.0
    %343 = vmatprep.subr.mxu0 0.0
    %344 = vmatpush1.msra.mxu0 0.0
    %345 = vmatprep.subr.mxu0 0.0
    %346 = vmatpush1.msra.mxu0 0.0
    %347 = vmatprep.subr.mxu0 0.0
    %348 = vmatpush1.msra.mxu0 0.0
    %349 = vmatprep.mubr.f32.mxu0 0.0
    %350 = vmatmul.mubr.f32.gmra.mrb[0].mxu0 %v283
    %v351 = vpop.f32.mrb[0].mxu0
    %v352 = vadd.f32 %v204, %v351
    %v353 = vpop.f32.mrb[0].mxu0
    %v354 = vadd.f32 %v208, %v353
    %355 = vdwg.mxu0
    %356 = vmatprep.subr.mxu0 %v136
    %357 = vmatpush1.msra.mxu0 %v135
    %358 = vmatprep.subr.mxu0 %v152
    %359 = vmatpush1.msra.mxu0 %v151
    %360 = vmatprep.subr.mxu0 %v168
    %361 = vmatpush1.msra.mxu0 %v167
    %362 = vmatprep.subr.mxu0 %v184
    %363 = vmatpush1.msra.mxu0 %v183
    %364 = vmatprep.subr.mxu0 0.0
    %365 = vmatpush1.msra.mxu0 0.0
    %366 = vmatprep.subr.mxu0 0.0
    %367 = vmatpush1.msra.mxu0 0.0
    %368 = vmatprep.subr.mxu0 0.0
    %369 = vmatpush1.msra.mxu0 0.0
    %370 = vmatprep.subr.mxu0 0.0
    %371 = vmatpush1.msra.mxu0 0.0
    %372 = vmatprep.subr.mxu0 0.0
    %373 = vmatpush1.msra.mxu0 0.0
    %374 = vmatprep.subr.mxu0 0.0
    %375 = vmatpush1.msra.mxu0 0.0
    %376 = vmatprep.subr.mxu0 0.0
    %377 = vmatpush1.msra.mxu0 0.0
    %378 = vmatprep.subr.mxu0 0.0
    %379 = vmatpush1.msra.mxu0 0.0
    %380 = vmatprep.subr.mxu0 0.0
    %381 = vmatpush1.msra.mxu0 0.0
    %382 = vmatprep.subr.mxu0 0.0
    %383 = vmatpush1.msra.mxu0 0.0
    %384 = vmatprep.subr.mxu0 0.0
    %385 = vmatpush1.msra.mxu0 0.0
    %386 = vmatprep.subr.mxu0 0.0
    %387 = vmatpush1.msra.mxu0 0.0
    %388 = vmatprep.subr.mxu0 0.0
    %389 = vmatpush1.msra.mxu0 0.0
    %390 = vmatprep.subr.mxu0 0.0
    %391 = vmatpush1.msra.mxu0 0.0
    %392 = vmatprep.subr.mxu0 0.0
    %393 = vmatpush1.msra.mxu0 0.0
    %394 = vmatprep.subr.mxu0 0.0
    %395 = vmatpush1.msra.mxu0 0.0
    %396 = vmatprep.subr.mxu0 0.0
    %397 = vmatpush1.msra.mxu0 0.0
    %398 = vmatprep.subr.mxu0 0.0
    %399 = vmatpush1.msra.mxu0 0.0
    %400 = vmatprep.subr.mxu0 0.0
    %401 = vmatpush1.msra.mxu0 0.0
    %402 = vmatprep.subr.mxu0 0.0
    %403 = vmatpush1.msra.mxu0 0.0
    %404 = vmatprep.subr.mxu0 0.0
    %405 = vmatpush1.msra.mxu0 0.0
    %406 = vmatprep.subr.mxu0 0.0
    %407 = vmatpush1.msra.mxu0 0.0
    %408 = vmatprep.subr.mxu0 0.0
    %409 = vmatpush1.msra.mxu0 0.0
    %410 = vmatprep.subr.mxu0 0.0
    %411 = vmatpush1.msra.mxu0 0.0
    %412 = vmatprep.subr.mxu0 0.0
    %413 = vmatpush1.msra.mxu0 0.0
    %414 = vmatprep.subr.mxu0 0.0
    %415 = vmatpush1.msra.mxu0 0.0
    %416 = vmatprep.subr.mxu0 0.0
    %417 = vmatpush1.msra.mxu0 0.0
    %418 = vmatprep.subr.mxu0 0.0
    %419 = vmatpush1.msra.mxu0 0.0
    %420 = vmatprep.mubr.f32.mxu0 0.0
    %421 = vmatmul.mubr.f32.gmra.mrb[0].mxu0 %v283
    %v422 = vpop.f32.mrb[0].mxu0
    %v423 = vadd.f32 %v212, %v422
    %v424 = vpop.f32.mrb[0].mxu0
    %v425 = vadd.f32 %v216, %v424
    %426 = vdwg.mxu0
    %427 = vmatprep.subr.mxu0 %v138
    %428 = vmatpush1.msra.mxu0 %v137
    %429 = vmatprep.subr.mxu0 %v154
    %430 = vmatpush1.msra.mxu0 %v153
    %431 = vmatprep.subr.mxu0 %v170
    %432 = vmatpush1.msra.mxu0 %v169
    %433 = vmatprep.subr.mxu0 %v186
    %434 = vmatpush1.msra.mxu0 %v185
    %435 = vmatprep.subr.mxu0 0.0
    %436 = vmatpush1.msra.mxu0 0.0
    %437 = vmatprep.subr.mxu0 0.0
    %438 = vmatpush1.msra.mxu0 0.0
    %439 = vmatprep.subr.mxu0 0.0
    %440 = vmatpush1.msra.mxu0 0.0
    %441 = vmatprep.subr.mxu0 0.0
    %442 = vmatpush1.msra.mxu0 0.0
    %443 = vmatprep.subr.mxu0 0.0
    %444 = vmatpush1.msra.mxu0 0.0
    %445 = vmatprep.subr.mxu0 0.0
    %446 = vmatpush1.msra.mxu0 0.0
    %447 = vmatprep.subr.mxu0 0.0
    %448 = vmatpush1.msra.mxu0 0.0
    %449 = vmatprep.subr.mxu0 0.0
    %450 = vmatpush1.msra.mxu0 0.0
    %451 = vmatprep.subr.mxu0 0.0
    %452 = vmatpush1.msra.mxu0 0.0
    %453 = vmatprep.subr.mxu0 0.0
    %454 = vmatpush1.msra.mxu0 0.0
    %455 = vmatprep.subr.mxu0 0.0
    %456 = vmatpush1.msra.mxu0 0.0
    %457 = vmatprep.subr.mxu0 0.0
    %458 = vmatpush1.msra.mxu0 0.0
    %459 = vmatprep.subr.mxu0 0.0
    %460 = vmatpush1.msra.mxu0 0.0
    %461 = vmatprep.subr.mxu0 0.0
    %462 = vmatpush1.msra.mxu0 0.0
    %463 = vmatprep.subr.mxu0 0.0
    %464 = vmatpush1.msra.mxu0 0.0
    %465 = vmatprep.subr.mxu0 0.0
    %466 = vmatpush1.msra.mxu0 0.0
    %467 = vmatprep.subr.mxu0 0.0
    %468 = vmatpush1.msra.mxu0 0.0
    %469 = vmatprep.subr.mxu0 0.0
    %470 = vmatpush1.msra.mxu0 0.0
    %471 = vmatprep.subr.mxu0 0.0
    %472 = vmatpush1.msra.mxu0 0.0
    %473 = vmatprep.subr.mxu0 0.0
    %474 = vmatpush1.msra.mxu0 0.0
    %475 = vmatprep.subr.mxu0 0.0
    %476 = vmatpush1.msra.mxu0 0.0
    %477 = vmatprep.subr.mxu0 0.0
    %478 = vmatpush1.msra.mxu0 0.0
    %479 = vmatprep.subr.mxu0 0.0
    %480 = vmatpush1.msra.mxu0 0.0
    %481 = vmatprep.subr.mxu0 0.0
    %482 = vmatpush1.msra.mxu0 0.0
    %483 = vmatprep.subr.mxu0 0.0
    %484 = vmatpush1.msra.mxu0 0.0
    %485 = vmatprep.subr.mxu0 0.0
    %486 = vmatpush1.msra.mxu0 0.0
    %487 = vmatprep.subr.mxu0 0.0
    %488 = vmatpush1.msra.mxu0 0.0
    %489 = vmatprep.subr.mxu0 0.0
    %490 = vmatpush1.msra.mxu0 0.0
    %491 = vmatprep.mubr.f32.mxu0 0.0
    %492 = vmatmul.mubr.f32.gmra.mrb[0].mxu0 %v283
    %v493 = vpop.f32.mrb[0].mxu0
    %v494 = vadd.f32 %v220, %v493
    %v495 = vpop.f32.mrb[0].mxu0
    %v496 = vadd.f32 %v224, %v495
    %497 = vdwg.mxu0
    %498 = vmatprep.subr.mxu0 %v140
    %499 = vmatpush1.msra.mxu0 %v139
    %500 = vmatprep.subr.mxu0 %v156
    %501 = vmatpush1.msra.mxu0 %v155
    %502 = vmatprep.subr.mxu0 %v172
    %503 = vmatpush1.msra.mxu0 %v171
    %504 = vmatprep.subr.mxu0 %v188
    %505 = vmatpush1.msra.mxu0 %v187
    %506 = vmatprep.subr.mxu0 0.0
    %507 = vmatpush1.msra.mxu0 0.0
    %508 = vmatprep.subr.mxu0 0.0
    %509 = vmatpush1.msra.mxu0 0.0
    %510 = vmatprep.subr.mxu0 0.0
    %511 = vmatpush1.msra.mxu0 0.0
    %512 = vmatprep.subr.mxu0 0.0
    %513 = vmatpush1.msra.mxu0 0.0
    %514 = vmatprep.subr.mxu0 0.0
    %515 = vmatpush1.msra.mxu0 0.0
    %516 = vmatprep.subr.mxu0 0.0
    %517 = vmatpush1.msra.mxu0 0.0
    %518 = vmatprep.subr.mxu0 0.0
    %519 = vmatpush1.msra.mxu0 0.0
    %520 = vmatprep.subr.mxu0 0.0
    %521 = vmatpush1.msra.mxu0 0.0
    %522 = vmatprep.subr.mxu0 0.0
    %523 = vmatpush1.msra.mxu0 0.0
    %524 = vmatprep.subr.mxu0 0.0
    %525 = vmatpush1.msra.mxu0 0.0
    %526 = vmatprep.subr.mxu0 0.0
    %527 = vmatpush1.msra.mxu0 0.0
    %528 = vmatprep.subr.mxu0 0.0
    %529 = vmatpush1.msra.mxu0 0.0
    %530 = vmatprep.subr.mxu0 0.0
    %531 = vmatpush1.msra.mxu0 0.0
    %532 = vmatprep.subr.mxu0 0.0
    %533 = vmatpush1.msra.mxu0 0.0
    %534 = vmatprep.subr.mxu0 0.0
    %535 = vmatpush1.msra.mxu0 0.0
    %536 = vmatprep.subr.mxu0 0.0
    %537 = vmatpush1.msra.mxu0 0.0
    %538 = vmatprep.subr.mxu0 0.0
    %539 = vmatpush1.msra.mxu0 0.0
    %540 = vmatprep.subr.mxu0 0.0
    %541 = vmatpush1.msra.mxu0 0.0
    %542 = vmatprep.subr.mxu0 0.0
    %543 = vmatpush1.msra.mxu0 0.0
    %544 = vmatprep.subr.mxu0 0.0
    %545 = vmatpush1.msra.mxu0 0.0
    %546 = vmatprep.subr.mxu0 0.0
    %547 = vmatpush1.msra.mxu0 0.0
    %548 = vmatprep.subr.mxu0 0.0
    %549 = vmatpush1.msra.mxu0 0.0
    %550 = vmatprep.subr.mxu0 0.0
    %551 = vmatpush1.msra.mxu0 0.0
    %552 = vmatprep.subr.mxu0 0.0
    %553 = vmatpush1.msra.mxu0 0.0
    %554 = vmatprep.subr.mxu0 0.0
    %555 = vmatpush1.msra.mxu0 0.0
    %556 = vmatprep.subr.mxu0 0.0
    %557 = vmatpush1.msra.mxu0 0.0
    %558 = vmatprep.subr.mxu0 0.0
    %559 = vmatpush1.msra.mxu0 0.0
    %560 = vmatprep.subr.mxu0 0.0
    %561 = vmatpush1.msra.mxu0 0.0
    %562 = vmatprep.mubr.f32.mxu0 0.0
    %563 = vmatmul.mubr.f32.gmra.mrb[0].mxu0 %v283
    %v564 = vpop.f32.mrb[0].mxu0
    %v565 = vadd.f32 %v228, %v564
    %v566 = vpop.f32.mrb[0].mxu0
    %v567 = vadd.f32 %v232, %v566
    %568 = vdwg.mxu0
    %569 = vmatprep.subr.mxu0 %v142
    %570 = vmatpush1.msra.mxu0 %v141
    %571 = vmatprep.subr.mxu0 %v158
    %572 = vmatpush1.msra.mxu0 %v157
    %573 = vmatprep.subr.mxu0 %v174
    %574 = vmatpush1.msra.mxu0 %v173
    %575 = vmatprep.subr.mxu0 %v190
    %576 = vmatpush1.msra.mxu0 %v189
    %577 = vmatprep.subr.mxu0 0.0
    %578 = vmatpush1.msra.mxu0 0.0
    %579 = vmatprep.subr.mxu0 0.0
    %580 = vmatpush1.msra.mxu0 0.0
    %581 = vmatprep.subr.mxu0 0.0
    %582 = vmatpush1.msra.mxu0 0.0
    %583 = vmatprep.subr.mxu0 0.0
    %584 = vmatpush1.msra.mxu0 0.0
    %585 = vmatprep.subr.mxu0 0.0
    %586 = vmatpush1.msra.mxu0 0.0
    %587 = vmatprep.subr.mxu0 0.0
    %588 = vmatpush1.msra.mxu0 0.0
    %589 = vmatprep.subr.mxu0 0.0
    %590 = vmatpush1.msra.mxu0 0.0
    %591 = vmatprep.subr.mxu0 0.0
    %592 = vmatpush1.msra.mxu0 0.0
    %593 = vmatprep.subr.mxu0 0.0
    %594 = vmatpush1.msra.mxu0 0.0
    %595 = vmatprep.subr.mxu0 0.0
    %596 = vmatpush1.msra.mxu0 0.0
    %597 = vmatprep.subr.mxu0 0.0
    %598 = vmatpush1.msra.mxu0 0.0
    %599 = vmatprep.subr.mxu0 0.0
    %600 = vmatpush1.msra.mxu0 0.0
    %601 = vmatprep.subr.mxu0 0.0
    %602 = vmatpush1.msra.mxu0 0.0
    %603 = vmatprep.subr.mxu0 0.0
    %604 = vmatpush1.msra.mxu0 0.0
    %605 = vmatprep.subr.mxu0 0.0
    %606 = vmatpush1.msra.mxu0 0.0
    %607 = vmatprep.subr.mxu0 0.0
    %608 = vmatpush1.msra.mxu0 0.0
    %609 = vmatprep.subr.mxu0 0.0
    %610 = vmatpush1.msra.mxu0 0.0
    %611 = vmatprep.subr.mxu0 0.0
    %612 = vmatpush1.msra.mxu0 0.0
    %613 = vmatprep.subr.mxu0 0.0
    %614 = vmatpush1.msra.mxu0 0.0
    %615 = vmatprep.subr.mxu0 0.0
    %616 = vmatpush1.msra.mxu0 0.0
    %617 = vmatprep.subr.mxu0 0.0
    %618 = vmatpush1.msra.mxu0 0.0
    %619 = vmatprep.subr.mxu0 0.0
    %620 = vmatpush1.msra.mxu0 0.0
    %621 = vmatprep.subr.mxu0 0.0
    %622 = vmatpush1.msra.mxu0 0.0
    %623 = vmatprep.subr.mxu0 0.0
    %624 = vmatpush1.msra.mxu0 0.0
    %625 = vmatprep.subr.mxu0 0.0
    %626 = vmatpush1.msra.mxu0 0.0
    %627 = vmatprep.subr.mxu0 0.0
    %628 = vmatpush1.msra.mxu0 0.0
    %629 = vmatprep.subr.mxu0 0.0
    %630 = vmatpush1.msra.mxu0 0.0
    %631 = vmatprep.subr.mxu0 0.0
    %632 = vmatpush1.msra.mxu0 0.0
    %633 = vmatprep.mubr.f32.mxu0 0.0
    %634 = vmatmul.mubr.f32.gmra.mrb[0].mxu0 %v283
    %v635 = vpop.f32.mrb[0].mxu0
    %v636 = vadd.f32 %v236, %v635
    %v637 = vpop.f32.mrb[0].mxu0
    %v638 = vadd.f32 %v240, %v637
    %639 = vdwg.mxu0
    %640 = vmatprep.subr.mxu0 %v144
    %641 = vmatpush1.msra.mxu0 %v143
    %642 = vmatprep.subr.mxu0 %v160
    %643 = vmatpush1.msra.mxu0 %v159
    %644 = vmatprep.subr.mxu0 %v176
    %645 = vmatpush1.msra.mxu0 %v175
    %646 = vmatprep.subr.mxu0 %v192
    %647 = vmatpush1.msra.mxu0 %v191
    %648 = vmatprep.subr.mxu0 0.0
    %649 = vmatpush1.msra.mxu0 0.0
    %650 = vmatprep.subr.mxu0 0.0
    %651 = vmatpush1.msra.mxu0 0.0
    %652 = vmatprep.subr.mxu0 0.0
    %653 = vmatpush1.msra.mxu0 0.0
    %654 = vmatprep.subr.mxu0 0.0
    %655 = vmatpush1.msra.mxu0 0.0
    %656 = vmatprep.subr.mxu0 0.0
    %657 = vmatpush1.msra.mxu0 0.0
    %658 = vmatprep.subr.mxu0 0.0
    %659 = vmatpush1.msra.mxu0 0.0
    %660 = vmatprep.subr.mxu0 0.0
    %661 = vmatpush1.msra.mxu0 0.0
    %662 = vmatprep.subr.mxu0 0.0
    %663 = vmatpush1.msra.mxu0 0.0
    %664 = vmatprep.subr.mxu0 0.0
    %665 = vmatpush1.msra.mxu0 0.0
    %666 = vmatprep.subr.mxu0 0.0
    %667 = vmatpush1.msra.mxu0 0.0
    %668 = vmatprep.subr.mxu0 0.0
    %669 = vmatpush1.msra.mxu0 0.0
    %670 = vmatprep.subr.mxu0 0.0
    %671 = vmatpush1.msra.mxu0 0.0
    %672 = vmatprep.subr.mxu0 0.0
    %673 = vmatpush1.msra.mxu0 0.0
    %674 = vmatprep.subr.mxu0 0.0
    %675 = vmatpush1.msra.mxu0 0.0
    %676 = vmatprep.subr.mxu0 0.0
    %677 = vmatpush1.msra.mxu0 0.0
    %678 = vmatprep.subr.mxu0 0.0
    %679 = vmatpush1.msra.mxu0 0.0
    %680 = vmatprep.subr.mxu0 0.0
    %681 = vmatpush1.msra.mxu0 0.0
    %682 = vmatprep.subr.mxu0 0.0
    %683 = vmatpush1.msra.mxu0 0.0
    %684 = vmatprep.subr.mxu0 0.0
    %685 = vmatpush1.msra.mxu0 0.0
    %686 = vmatprep.subr.mxu0 0.0
    %687 = vmatpush1.msra.mxu0 0.0
    %688 = vmatprep.subr.mxu0 0.0
    %689 = vmatpush1.msra.mxu0 0.0
    %690 = vmatprep.subr.mxu0 0.0
    %691 = vmatpush1.msra.mxu0 0.0
    %692 = vmatprep.subr.mxu0 0.0
    %693 = vmatpush1.msra.mxu0 0.0
    %694 = vmatprep.subr.mxu0 0.0
    %695 = vmatpush1.msra.mxu0 0.0
    %696 = vmatprep.subr.mxu0 0.0
    %697 = vmatpush1.msra.mxu0 0.0
    %698 = vmatprep.subr.mxu0 0.0
    %699 = vmatpush1.msra.mxu0 0.0
    %700 = vmatprep.subr.mxu0 0.0
    %701 = vmatpush1.msra.mxu0 0.0
    %702 = vmatprep.subr.mxu0 0.0
    %703 = vmatpush1.msra.mxu0 0.0
    %704 = vmatprep.mubr.f32.mxu0 0.0
    %705 = vmatmul.mubr.f32.gmra.mrb[0].mxu0 %v283
    %v706 = vpop.f32.mrb[0].mxu0
    %v707 = vadd.f32 %v244, %v706
    %v708 = vpop.f32.mrb[0].mxu0
    %v709 = vadd.f32 %v248, %v708
    %710 = vdwg.mxu0
    %711 = vmatprep.subr.mxu0 %v146
    %712 = vmatpush1.msra.mxu0 %v145
    %713 = vmatprep.subr.mxu0 %v162
    %714 = vmatpush1.msra.mxu0 %v161
    %715 = vmatprep.subr.mxu0 %v178
    %716 = vmatpush1.msra.mxu0 %v177
    %717 = vmatprep.subr.mxu0 %v194
    %718 = vmatpush1.msra.mxu0 %v193
    %719 = vmatprep.subr.mxu0 0.0
    %720 = vmatpush1.msra.mxu0 0.0
    %721 = vmatprep.subr.mxu0 0.0
    %722 = vmatpush1.msra.mxu0 0.0
    %723 = vmatprep.subr.mxu0 0.0
    %724 = vmatpush1.msra.mxu0 0.0
    %725 = vmatprep.subr.mxu0 0.0
    %726 = vmatpush1.msra.mxu0 0.0
    %727 = vmatprep.subr.mxu0 0.0
    %728 = vmatpush1.msra.mxu0 0.0
    %729 = vmatprep.subr.mxu0 0.0
    %730 = vmatpush1.msra.mxu0 0.0
    %731 = vmatprep.subr.mxu0 0.0
    %732 = vmatpush1.msra.mxu0 0.0
    %733 = vmatprep.subr.mxu0 0.0
    %734 = vmatpush1.msra.mxu0 0.0
    %735 = vmatprep.subr.mxu0 0.0
    %736 = vmatpush1.msra.mxu0 0.0
    %737 = vmatprep.subr.mxu0 0.0
    %738 = vmatpush1.msra.mxu0 0.0
    %739 = vmatprep.subr.mxu0 0.0
    %740 = vmatpush1.msra.mxu0 0.0
    %741 = vmatprep.subr.mxu0 0.0
    %742 = vmatpush1.msra.mxu0 0.0
    %743 = vmatprep.subr.mxu0 0.0
    %744 = vmatpush1.msra.mxu0 0.0
    %745 = vmatprep.subr.mxu0 0.0
    %746 = vmatpush1.msra.mxu0 0.0
    %747 = vmatprep.subr.mxu0 0.0
    %748 = vmatpush1.msra.mxu0 0.0
    %749 = vmatprep.subr.mxu0 0.0
    %750 = vmatpush1.msra.mxu0 0.0
    %751 = vmatprep.subr.mxu0 0.0
    %752 = vmatpush1.msra.mxu0 0.0
    %753 = vmatprep.subr.mxu0 0.0
    %754 = vmatpush1.msra.mxu0 0.0
    %755 = vmatprep.subr.mxu0 0.0
    %756 = vmatpush1.msra.mxu0 0.0
    %757 = vmatprep.subr.mxu0 0.0
    %758 = vmatpush1.msra.mxu0 0.0
    %759 = vmatprep.subr.mxu0 0.0
    %760 = vmatpush1.msra.mxu0 0.0
    %761 = vmatprep.subr.mxu0 0.0
    %762 = vmatpush1.msra.mxu0 0.0
    %763 = vmatprep.subr.mxu0 0.0
    %764 = vmatpush1.msra.mxu0 0.0
    %765 = vmatprep.subr.mxu0 0.0
    %766 = vmatpush1.msra.mxu0 0.0
    %767 = vmatprep.subr.mxu0 0.0
    %768 = vmatpush1.msra.mxu0 0.0
    %769 = vmatprep.subr.mxu0 0.0
    %770 = vmatpush1.msra.mxu0 0.0
    %771 = vmatprep.subr.mxu0 0.0
    %772 = vmatpush1.msra.mxu0 0.0
    %773 = vmatprep.subr.mxu0 0.0
    %774 = vmatpush1.msra.mxu0 0.0
    %775 = vmatprep.mubr.f32.mxu0 0.0
    %776 = vmatmul.mubr.f32.gmra.mrb[0].mxu0 %v283
    %v777 = vpop.f32.mrb[0].mxu0
    %v778 = vadd.f32 %v252, %v777
    %v779 = vpop.f32.mrb[0].mxu0
    %v780 = vadd.f32 %v256, %v779
    %781 = vdwg.mxu0
    %782 = vmatprep.subr.mxu0 %v148
    %783 = vmatpush1.msra.mxu0 %v147
    %784 = vmatprep.subr.mxu0 %v164
    %785 = vmatpush1.msra.mxu0 %v163
    %786 = vmatprep.subr.mxu0 %v180
    %787 = vmatpush1.msra.mxu0 %v179
    %788 = vmatprep.subr.mxu0 %v196
    %789 = vmatpush1.msra.mxu0 %v195
    %790 = vmatprep.subr.mxu0 0.0
    %791 = vmatpush1.msra.mxu0 0.0
    %792 = vmatprep.subr.mxu0 0.0
    %793 = vmatpush1.msra.mxu0 0.0
    %794 = vmatprep.subr.mxu0 0.0
    %795 = vmatpush1.msra.mxu0 0.0
    %796 = vmatprep.subr.mxu0 0.0
    %797 = vmatpush1.msra.mxu0 0.0
    %798 = vmatprep.subr.mxu0 0.0
    %799 = vmatpush1.msra.mxu0 0.0
    %800 = vmatprep.subr.mxu0 0.0
    %801 = vmatpush1.msra.mxu0 0.0
    %802 = vmatprep.subr.mxu0 0.0
    %803 = vmatpush1.msra.mxu0 0.0
    %804 = vmatprep.subr.mxu0 0.0
    %805 = vmatpush1.msra.mxu0 0.0
    %806 = vmatprep.subr.mxu0 0.0
    %807 = vmatpush1.msra.mxu0 0.0
    %808 = vmatprep.subr.mxu0 0.0
    %809 = vmatpush1.msra.mxu0 0.0
    %810 = vmatprep.subr.mxu0 0.0
    %811 = vmatpush1.msra.mxu0 0.0
    %812 = vmatprep.subr.mxu0 0.0
    %813 = vmatpush1.msra.mxu0 0.0
    %814 = vmatprep.subr.mxu0 0.0
    %815 = vmatpush1.msra.mxu0 0.0
    %816 = vmatprep.subr.mxu0 0.0
    %817 = vmatpush1.msra.mxu0 0.0
    %818 = vmatprep.subr.mxu0 0.0
    %819 = vmatpush1.msra.mxu0 0.0
    %820 = vmatprep.subr.mxu0 0.0
    %821 = vmatpush1.msra.mxu0 0.0
    %822 = vmatprep.subr.mxu0 0.0
    %823 = vmatpush1.msra.mxu0 0.0
    %824 = vmatprep.subr.mxu0 0.0
    %825 = vmatpush1.msra.mxu0 0.0
    %826 = vmatprep.subr.mxu0 0.0
    %827 = vmatpush1.msra.mxu0 0.0
    %828 = vmatprep.subr.mxu0 0.0
    %829 = vmatpush1.msra.mxu0 0.0
    %830 = vmatprep.subr.mxu0 0.0
    %831 = vmatpush1.msra.mxu0 0.0
    %832 = vmatprep.subr.mxu0 0.0
    %833 = vmatpush1.msra.mxu0 0.0
    %834 = vmatprep.subr.mxu0 0.0
    %835 = vmatpush1.msra.mxu0 0.0
    %836 = vmatprep.subr.mxu0 0.0
    %837 = vmatpush1.msra.mxu0 0.0
    %838 = vmatprep.subr.mxu0 0.0
    %839 = vmatpush1.msra.mxu0 0.0
    %840 = vmatprep.subr.mxu0 0.0
    %841 = vmatpush1.msra.mxu0 0.0
    %842 = vmatprep.subr.mxu0 0.0
    %843 = vmatpush1.msra.mxu0 0.0
    %844 = vmatprep.subr.mxu0 0.0
    %845 = vmatpush1.msra.mxu0 0.0
    %846 = vmatprep.mubr.f32.mxu0 0.0
    %847 = vmatmul.mubr.f32.gmra.mrb[0].mxu0 %v283
    %v848 = vpop.f32.mrb[0].mxu0
    %v849 = vadd.f32 %v260, %v848
    %v850 = vpop.f32.mrb[0].mxu0
    %v851 = vadd.f32 %v264, %v850
    %852 = vdwg.mxu0
    %v853 = vld [vmem:[#allocation8] sm:$0xff]
    %v854 = vld [vmem:[#allocation8 + $0x8] sm:$0xff]
    %v855 = vld [vmem:[#allocation8 + $0x10] sm:$0xff]
    %v856 = vld [vmem:[#allocation8 + $0x18] sm:$0xff]
    %v857 = vld [vmem:[#allocation8 + $0x20] sm:$0xff]
    %v858 = vld [vmem:[#allocation8 + $0x28] sm:$0xff]
    %v859 = vld [vmem:[#allocation8 + $0x30] sm:$0xff]
    %v860 = vld [vmem:[#allocation8 + $0x38] sm:$0xff]
    %v861 = vld [vmem:[#allocation8 + $0x40] sm:$0xff]
    %v862 = vld [vmem:[#allocation8 + $0x48] sm:$0xff]
    %v863 = vld [vmem:[#allocation8 + $0x50] sm:$0xff]
    %v864 = vld [vmem:[#allocation8 + $0x58] sm:$0xff]
    %v865 = vld [vmem:[#allocation8 + $0x60] sm:$0xff]
    %v866 = vld [vmem:[#allocation8 + $0x68] sm:$0xff]
    %v867 = vld [vmem:[#allocation8 + $0x70] sm:$0xff]
    %v868 = vld [vmem:[#allocation8 + $0x78] sm:$0xff]
    %v869 = vld [vmem:[#allocation8 + $0x80] sm:$0xff]
    %v870 = vld [vmem:[#allocation8 + $0x88] sm:$0xff]
    %v871 = vld [vmem:[#allocation8 + $0x90] sm:$0xff]
    %v872 = vld [vmem:[#allocation8 + $0x98] sm:$0xff]
    %v873 = vld [vmem:[#allocation8 + $0xa0] sm:$0xff]
    %v874 = vld [vmem:[#allocation8 + $0xa8] sm:$0xff]
    %v875 = vld [vmem:[#allocation8 + $0xb0] sm:$0xff]
    %v876 = vld [vmem:[#allocation8 + $0xb8] sm:$0xff]
    %v877 = vld [vmem:[#allocation8 + $0xc0] sm:$0xff]
    %v878 = vld [vmem:[#allocation8 + $0xc8] sm:$0xff]
    %v879 = vld [vmem:[#allocation8 + $0xd0] sm:$0xff]
    %v880 = vld [vmem:[#allocation8 + $0xd8] sm:$0xff]
    %v881 = vld [vmem:[#allocation8 + $0xe0] sm:$0xff]
    %v882 = vld [vmem:[#allocation8 + $0xe8] sm:$0xff]
    %v883 = vld [vmem:[#allocation8 + $0xf0] sm:$0xff]
    %v884 = vld [vmem:[#allocation8 + $0xf8] sm:$0xff]
    %v885 = vld [vmem:[#allocation8 + $0x100] sm:$0xff]
    %v886 = vld [vmem:[#allocation8 + $0x108] sm:$0xff]
    %v887 = vld [vmem:[#allocation8 + $0x110] sm:$0xff]
    %v888 = vld [vmem:[#allocation8 + $0x118] sm:$0xff]
    %v889 = vld [vmem:[#allocation8 + $0x120] sm:$0xff]
    %v890 = vld [vmem:[#allocation8 + $0x128] sm:$0xff]
    %v891 = vld [vmem:[#allocation8 + $0x130] sm:$0xff]
    %v892 = vld [vmem:[#allocation8 + $0x138] sm:$0xff]
    %v893 = vld [vmem:[#allocation8 + $0x140] sm:$0xff]
    %v894 = vld [vmem:[#allocation8 + $0x148] sm:$0xff]
    %v895 = vld [vmem:[#allocation8 + $0x150] sm:$0xff]
    %v896 = vld [vmem:[#allocation8 + $0x158] sm:$0xff]
    %v897 = vld [vmem:[#allocation8 + $0x160] sm:$0xff]
    %v898 = vld [vmem:[#allocation8 + $0x168] sm:$0xff]
    %v899 = vld [vmem:[#allocation8 + $0x170] sm:$0xff]
    %v900 = vld [vmem:[#allocation8 + $0x178] sm:$0xff]
    %v901 = vld [vmem:[#allocation8 + $0x180] sm:$0xff]
    %v902 = vld [vmem:[#allocation8 + $0x188] sm:$0xff]
    %v903 = vld [vmem:[#allocation8 + $0x190] sm:$0xff]
    %v904 = vld [vmem:[#allocation8 + $0x198] sm:$0xff]
    %v905 = vld [vmem:[#allocation8 + $0x1a0] sm:$0xff]
    %v906 = vld [vmem:[#allocation8 + $0x1a8] sm:$0xff]
    %v907 = vld [vmem:[#allocation8 + $0x1b0] sm:$0xff]
    %v908 = vld [vmem:[#allocation8 + $0x1b8] sm:$0xff]
    %v909 = vld [vmem:[#allocation8 + $0x1c0] sm:$0xff]
    %v910 = vld [vmem:[#allocation8 + $0x1c8] sm:$0xff]
    %v911 = vld [vmem:[#allocation8 + $0x1d0] sm:$0xff]
    %v912 = vld [vmem:[#allocation8 + $0x1d8] sm:$0xff]
    %v913 = vld [vmem:[#allocation8 + $0x1e0] sm:$0xff]
    %v914 = vld [vmem:[#allocation8 + $0x1e8] sm:$0xff]
    %v915 = vld [vmem:[#allocation8 + $0x1f0] sm:$0xff]
    %v916 = vld [vmem:[#allocation8 + $0x1f8] sm:$0xff]
    %v917 = vld [vmem:[#allocation8 + $0x200] sm:$0xff]
    %v918 = vld [vmem:[#allocation8 + $0x208] sm:$0xff]
    %v919 = vld [vmem:[#allocation8 + $0x210] sm:$0xff]
    %v920 = vld [vmem:[#allocation8 + $0x218] sm:$0xff]
    %v921 = vld [vmem:[#allocation8 + $0x220] sm:$0xff]
    %v922 = vld [vmem:[#allocation8 + $0x228] sm:$0xff]
    %v923 = vld [vmem:[#allocation8 + $0x230] sm:$0xff]
    %v924 = vld [vmem:[#allocation8 + $0x238] sm:$0xff]
    %v925 = vld [vmem:[#allocation8 + $0x240] sm:$0xff]
    %v926 = vld [vmem:[#allocation8 + $0x248] sm:$0xff]
    %v927 = vld [vmem:[#allocation8 + $0x250] sm:$0xff]
    %v928 = vld [vmem:[#allocation8 + $0x258] sm:$0xff]
    %v929 = vld [vmem:[#allocation8 + $0x260] sm:$0xff]
    %v930 = vld [vmem:[#allocation8 + $0x268] sm:$0xff]
    %v931 = vld [vmem:[#allocation8 + $0x270] sm:$0xff]
    %v932 = vld [vmem:[#allocation8 + $0x278] sm:$0xff]
    %v933 = vld [vmem:[#allocation8 + $0x280] sm:$0xff]
    %v934 = vld [vmem:[#allocation8 + $0x288] sm:$0xff]
    %v935 = vld [vmem:[#allocation8 + $0x290] sm:$0xff]
    %v936 = vld [vmem:[#allocation8 + $0x298] sm:$0xff]
    %v937 = vld [vmem:[#allocation8 + $0x2a0] sm:$0xff]
    %v938 = vld [vmem:[#allocation8 + $0x2a8] sm:$0xff]
    %v939 = vld [vmem:[#allocation8 + $0x2b0] sm:$0xff]
    %v940 = vld [vmem:[#allocation8 + $0x2b8] sm:$0xff]
    %v941 = vld [vmem:[#allocation8 + $0x2c0] sm:$0xff]
    %v942 = vld [vmem:[#allocation8 + $0x2c8] sm:$0xff]
    %v943 = vld [vmem:[#allocation8 + $0x2d0] sm:$0xff]
    %v944 = vld [vmem:[#allocation8 + $0x2d8] sm:$0xff]
    %v945 = vld [vmem:[#allocation8 + $0x2e0] sm:$0xff]
    %v946 = vld [vmem:[#allocation8 + $0x2e8] sm:$0xff]
    %v947 = vld [vmem:[#allocation8 + $0x2f0] sm:$0xff]
    %v948 = vld [vmem:[#allocation8 + $0x2f8] sm:$0xff]
    %v949 = vld [vmem:[#allocation8 + $0x300] sm:$0xff]
    %v950 = vld [vmem:[#allocation8 + $0x308] sm:$0xff]
    %v951 = vld [vmem:[#allocation8 + $0x310] sm:$0xff]
    %v952 = vld [vmem:[#allocation8 + $0x318] sm:$0xff]
    %v953 = vld [vmem:[#allocation8 + $0x320] sm:$0xff]
    %v954 = vld [vmem:[#allocation8 + $0x328] sm:$0xff]
    %v955 = vld [vmem:[#allocation8 + $0x330] sm:$0xff]
    %v956 = vld [vmem:[#allocation8 + $0x338] sm:$0xff]
    %v957 = vld [vmem:[#allocation8 + $0x340] sm:$0xff]
    %v958 = vld [vmem:[#allocation8 + $0x348] sm:$0xff]
    %v959 = vld [vmem:[#allocation8 + $0x350] sm:$0xff]
    %v960 = vld [vmem:[#allocation8 + $0x358] sm:$0xff]
    %v961 = vld [vmem:[#allocation8 + $0x360] sm:$0xff]
    %v962 = vld [vmem:[#allocation8 + $0x368] sm:$0xff]
    %v963 = vld [vmem:[#allocation8 + $0x370] sm:$0xff]
    %v964 = vld [vmem:[#allocation8 + $0x378] sm:$0xff]
    %v965 = vld [vmem:[#allocation8 + $0x380] sm:$0xff]
    %v966 = vld [vmem:[#allocation8 + $0x388] sm:$0xff]
    %v967 = vld [vmem:[#allocation8 + $0x390] sm:$0xff]
    %v968 = vld [vmem:[#allocation8 + $0x398] sm:$0xff]
    %v969 = vld [vmem:[#allocation8 + $0x3a0] sm:$0xff]
    %v970 = vld [vmem:[#allocation8 + $0x3a8] sm:$0xff]
    %v971 = vld [vmem:[#allocation8 + $0x3b0] sm:$0xff]
    %v972 = vld [vmem:[#allocation8 + $0x3b8] sm:$0xff]
    %v973 = vld [vmem:[#allocation8 + $0x3c0] sm:$0xff]
    %v974 = vld [vmem:[#allocation8 + $0x3c8] sm:$0xff]
    %v975 = vld [vmem:[#allocation8 + $0x3d0] sm:$0xff]
    %v976 = vld [vmem:[#allocation8 + $0x3d8] sm:$0xff]
    %v977 = vld [vmem:[#allocation8 + $0x3e0] sm:$0xff]
    %v978 = vld [vmem:[#allocation8 + $0x3e8] sm:$0xff]
    %v979 = vld [vmem:[#allocation8 + $0x3f0] sm:$0xff]
    %v980 = vld [vmem:[#allocation8 + $0x3f8] sm:$0xff]
    %v981 = vld [vmem:[#allocation8 + $0x400] sm:$0xff]
    %v982 = vld [vmem:[#allocation8 + $0x408] sm:$0xff]
    %v983 = vld [vmem:[#allocation8 + $0x410] sm:$0xff]
    %v984 = vld [vmem:[#allocation8 + $0x418] sm:$0xff]
    %v985 = vld [vmem:[#allocation8 + $0x420] sm:$0xff]
    %v986 = vld [vmem:[#allocation8 + $0x428] sm:$0xff]
    %v987 = vld [vmem:[#allocation8 + $0x430] sm:$0xff]
    %v988 = vld [vmem:[#allocation8 + $0x438] sm:$0xff]
    %v989 = vld [vmem:[#allocation8 + $0x440] sm:$0xff]
    %v990 = vld [vmem:[#allocation8 + $0x448] sm:$0xff]
    %v991 = vld [vmem:[#allocation8 + $0x450] sm:$0xff]
    %v992 = vld [vmem:[#allocation8 + $0x458] sm:$0xff]
    %v993 = vld [vmem:[#allocation8 + $0x460] sm:$0xff]
    %v994 = vld [vmem:[#allocation8 + $0x468] sm:$0xff]
    %v995 = vld [vmem:[#allocation8 + $0x470] sm:$0xff]
    %v996 = vld [vmem:[#allocation8 + $0x478] sm:$0xff]
    %v997 = vld [vmem:[#allocation8 + $0x480] sm:$0xff]
    %v998 = vld [vmem:[#allocation8 + $0x488] sm:$0xff]
    %v999 = vld [vmem:[#allocation8 + $0x490] sm:$0xff]
    %v1000 = vld [vmem:[#allocation8 + $0x498] sm:$0xff]
    %v1001 = vld [vmem:[#allocation8 + $0x4a0] sm:$0xff]
    %v1002 = vld [vmem:[#allocation8 + $0x4a8] sm:$0xff]
    %v1003 = vld [vmem:[#allocation8 + $0x4b0] sm:$0xff]
    %v1004 = vld [vmem:[#allocation8 + $0x4b8] sm:$0xff]
    %v1005 = vld [vmem:[#allocation8 + $0x4c0] sm:$0xff]
    %v1006 = vld [vmem:[#allocation8 + $0x4c8] sm:$0xff]
    %v1007 = vld [vmem:[#allocation8 + $0x4d0] sm:$0xff]
    %v1008 = vld [vmem:[#allocation8 + $0x4d8] sm:$0xff]
    %v1009 = vld [vmem:[#allocation8 + $0x4e0] sm:$0xff]
    %v1010 = vld [vmem:[#allocation8 + $0x4e8] sm:$0xff]
    %v1011 = vld [vmem:[#allocation8 + $0x4f0] sm:$0xff]
    %v1012 = vld [vmem:[#allocation8 + $0x4f8] sm:$0xff]
    %v1013 = vld [vmem:[#allocation8 + $0x500] sm:$0xff]
    %v1014 = vld [vmem:[#allocation8 + $0x508] sm:$0xff]
    %v1015 = vld [vmem:[#allocation8 + $0x510] sm:$0xff]
    %v1016 = vld [vmem:[#allocation8 + $0x518] sm:$0xff]
    %v1017 = vld [vmem:[#allocation8 + $0x520] sm:$0xff]
    %v1018 = vld [vmem:[#allocation8 + $0x528] sm:$0xff]
    %v1019 = vld [vmem:[#allocation8 + $0x530] sm:$0xff]
    %v1020 = vld [vmem:[#allocation8 + $0x538] sm:$0xff]
    %v1021 = vld [vmem:[#allocation8 + $0x540] sm:$0xff]
    %v1022 = vld [vmem:[#allocation8 + $0x548] sm:$0xff]
    %v1023 = vld [vmem:[#allocation8 + $0x550] sm:$0xff]
    %v1024 = vld [vmem:[#allocation8 + $0x558] sm:$0xff]
    %v1025 = vld [vmem:[#allocation8 + $0x560] sm:$0xff]
    %v1026 = vld [vmem:[#allocation8 + $0x568] sm:$0xff]
    %v1027 = vld [vmem:[#allocation8 + $0x570] sm:$0xff]
    %v1028 = vld [vmem:[#allocation8 + $0x578] sm:$0xff]
    %v1029 = vld [vmem:[#allocation8 + $0x580] sm:$0xff]
    %v1030 = vld [vmem:[#allocation8 + $0x588] sm:$0xff]
    %v1031 = vld [vmem:[#allocation8 + $0x590] sm:$0xff]
    %v1032 = vld [vmem:[#allocation8 + $0x598] sm:$0xff]
    %v1033 = vld [vmem:[#allocation8 + $0x5a0] sm:$0xff]
    %v1034 = vld [vmem:[#allocation8 + $0x5a8] sm:$0xff]
    %v1035 = vld [vmem:[#allocation8 + $0x5b0] sm:$0xff]
    %v1036 = vld [vmem:[#allocation8 + $0x5b8] sm:$0xff]
    %v1037 = vld [vmem:[#allocation8 + $0x5c0] sm:$0xff]
    %v1038 = vld [vmem:[#allocation8 + $0x5c8] sm:$0xff]
    %v1039 = vld [vmem:[#allocation8 + $0x5d0] sm:$0xff]
    %v1040 = vld [vmem:[#allocation8 + $0x5d8] sm:$0xff]
    %v1041 = vld [vmem:[#allocation8 + $0x5e0] sm:$0xff]
    %v1042 = vld [vmem:[#allocation8 + $0x5e8] sm:$0xff]
    %v1043 = vld [vmem:[#allocation8 + $0x5f0] sm:$0xff]
    %v1044 = vld [vmem:[#allocation8 + $0x5f8] sm:$0xff]
    %v1045 = vld [vmem:[#allocation8 + $0x600] sm:$0xff]
    %v1046 = vld [vmem:[#allocation8 + $0x608] sm:$0xff]
    %v1047 = vld [vmem:[#allocation8 + $0x610] sm:$0xff]
    %v1048 = vld [vmem:[#allocation8 + $0x618] sm:$0xff]
    %v1049 = vld [vmem:[#allocation8 + $0x620] sm:$0xff]
    %v1050 = vld [vmem:[#allocation8 + $0x628] sm:$0xff]
    %v1051 = vld [vmem:[#allocation8 + $0x630] sm:$0xff]
    %v1052 = vld [vmem:[#allocation8 + $0x638] sm:$0xff]
    %v1053 = vld [vmem:[#allocation8 + $0x640] sm:$0xff]
    %v1054 = vld [vmem:[#allocation8 + $0x648] sm:$0xff]
    %v1055 = vld [vmem:[#allocation8 + $0x650] sm:$0xff]
    %v1056 = vld [vmem:[#allocation8 + $0x658] sm:$0xff]
    %v1057 = vld [vmem:[#allocation8 + $0x660] sm:$0xff]
    %v1058 = vld [vmem:[#allocation8 + $0x668] sm:$0xff]
    %v1059 = vld [vmem:[#allocation8 + $0x670] sm:$0xff]
    %v1060 = vld [vmem:[#allocation8 + $0x678] sm:$0xff]
    %v1061 = vld [vmem:[#allocation8 + $0x680] sm:$0xff]
    %v1062 = vld [vmem:[#allocation8 + $0x688] sm:$0xff]
    %v1063 = vld [vmem:[#allocation8 + $0x690] sm:$0xff]
    %v1064 = vld [vmem:[#allocation8 + $0x698] sm:$0xff]
    %v1065 = vld [vmem:[#allocation8 + $0x6a0] sm:$0xff]
    %v1066 = vld [vmem:[#allocation8 + $0x6a8] sm:$0xff]
    %v1067 = vld [vmem:[#allocation8 + $0x6b0] sm:$0xff]
    %v1068 = vld [vmem:[#allocation8 + $0x6b8] sm:$0xff]
    %v1069 = vld [vmem:[#allocation8 + $0x6c0] sm:$0xff]
    %v1070 = vld [vmem:[#allocation8 + $0x6c8] sm:$0xff]
    %v1071 = vld [vmem:[#allocation8 + $0x6d0] sm:$0xff]
    %v1072 = vld [vmem:[#allocation8 + $0x6d8] sm:$0xff]
    %v1073 = vld [vmem:[#allocation8 + $0x6e0] sm:$0xff]
    %v1074 = vld [vmem:[#allocation8 + $0x6e8] sm:$0xff]
    %v1075 = vld [vmem:[#allocation8 + $0x6f0] sm:$0xff]
    %v1076 = vld [vmem:[#allocation8 + $0x6f8] sm:$0xff]
    %v1077 = vld [vmem:[#allocation8 + $0x700] sm:$0xff]
    %v1078 = vld [vmem:[#allocation8 + $0x708] sm:$0xff]
    %v1079 = vld [vmem:[#allocation8 + $0x710] sm:$0xff]
    %v1080 = vld [vmem:[#allocation8 + $0x718] sm:$0xff]
    %v1081 = vld [vmem:[#allocation8 + $0x720] sm:$0xff]
    %v1082 = vld [vmem:[#allocation8 + $0x728] sm:$0xff]
    %v1083 = vld [vmem:[#allocation8 + $0x730] sm:$0xff]
    %v1084 = vld [vmem:[#allocation8 + $0x738] sm:$0xff]
    %v1085 = vld [vmem:[#allocation8 + $0x740] sm:$0xff]
    %v1086 = vld [vmem:[#allocation8 + $0x748] sm:$0xff]
    %v1087 = vld [vmem:[#allocation8 + $0x750] sm:$0xff]
    %v1088 = vld [vmem:[#allocation8 + $0x758] sm:$0xff]
    %v1089 = vld [vmem:[#allocation8 + $0x760] sm:$0xff]
    %v1090 = vld [vmem:[#allocation8 + $0x768] sm:$0xff]
    %v1091 = vld [vmem:[#allocation8 + $0x770] sm:$0xff]
    %v1092 = vld [vmem:[#allocation8 + $0x778] sm:$0xff]
    %v1093 = vld [vmem:[#allocation8 + $0x780] sm:$0xff]
    %v1094 = vld [vmem:[#allocation8 + $0x788] sm:$0xff]
    %v1095 = vld [vmem:[#allocation8 + $0x790] sm:$0xff]
    %v1096 = vld [vmem:[#allocation8 + $0x798] sm:$0xff]
    %v1097 = vld [vmem:[#allocation8 + $0x7a0] sm:$0xff]
    %v1098 = vld [vmem:[#allocation8 + $0x7a8] sm:$0xff]
    %v1099 = vld [vmem:[#allocation8 + $0x7b0] sm:$0xff]
    %v1100 = vld [vmem:[#allocation8 + $0x7b8] sm:$0xff]
    %v1101 = vld [vmem:[#allocation8 + $0x7c0] sm:$0xff]
    %v1102 = vld [vmem:[#allocation8 + $0x7c8] sm:$0xff]
    %v1103 = vld [vmem:[#allocation8 + $0x7d0] sm:$0xff]
    %v1104 = vld [vmem:[#allocation8 + $0x7d8] sm:$0xff]
    %v1105 = vld [vmem:[#allocation8 + $0x7e0] sm:$0xff]
    %v1106 = vld [vmem:[#allocation8 + $0x7e8] sm:$0xff]
    %v1107 = vld [vmem:[#allocation8 + $0x7f0] sm:$0xff]
    %v1108 = vld [vmem:[#allocation8 + $0x7f8] sm:$0xff]
    %v1109 = vld [vmem:[#allocation8 + $0x800] sm:$0xff]
    %v1110 = vld [vmem:[#allocation8 + $0x808] sm:$0xff]
    %v1111 = vld [vmem:[#allocation8 + $0x810] sm:$0xff]
    %v1112 = vld [vmem:[#allocation8 + $0x818] sm:$0xff]
    %v1113 = vld [vmem:[#allocation8 + $0x820] sm:$0xff]
    %v1114 = vld [vmem:[#allocation8 + $0x828] sm:$0xff]
    %v1115 = vld [vmem:[#allocation8 + $0x830] sm:$0xff]
    %v1116 = vld [vmem:[#allocation8 + $0x838] sm:$0xff]
    %v1117 = vld [vmem:[#allocation8 + $0x840] sm:$0xff]
    %v1118 = vld [vmem:[#allocation8 + $0x848] sm:$0xff]
    %v1119 = vld [vmem:[#allocation8 + $0x850] sm:$0xff]
    %v1120 = vld [vmem:[#allocation8 + $0x858] sm:$0xff]
    %v1121 = vld [vmem:[#allocation8 + $0x860] sm:$0xff]
    %v1122 = vld [vmem:[#allocation8 + $0x868] sm:$0xff]
    %v1123 = vld [vmem:[#allocation8 + $0x870] sm:$0xff]
    %v1124 = vld [vmem:[#allocation8 + $0x878] sm:$0xff]
    %v1125 = vld [vmem:[#allocation8 + $0x880] sm:$0xff]
    %v1126 = vld [vmem:[#allocation8 + $0x888] sm:$0xff]
    %v1127 = vld [vmem:[#allocation8 + $0x890] sm:$0xff]
    %v1128 = vld [vmem:[#allocation8 + $0x898] sm:$0xff]
    %v1129 = vld [vmem:[#allocation8 + $0x8a0] sm:$0xff]
    %v1130 = vld [vmem:[#allocation8 + $0x8a8] sm:$0xff]
    %v1131 = vld [vmem:[#allocation8 + $0x8b0] sm:$0xff]
    %v1132 = vld [vmem:[#allocation8 + $0x8b8] sm:$0xff]
    %v1133 = vld [vmem:[#allocation8 + $0x8c0] sm:$0xff]
    %v1134 = vld [vmem:[#allocation8 + $0x8c8] sm:$0xff]
    %v1135 = vld [vmem:[#allocation8 + $0x8d0] sm:$0xff]
    %v1136 = vld [vmem:[#allocation8 + $0x8d8] sm:$0xff]
    %v1137 = vld [vmem:[#allocation8 + $0x8e0] sm:$0xff]
    %v1138 = vld [vmem:[#allocation8 + $0x8e8] sm:$0xff]
    %v1139 = vld [vmem:[#allocation8 + $0x8f0] sm:$0xff]
    %v1140 = vld [vmem:[#allocation8 + $0x8f8] sm:$0xff]
    %v1141 = vld [vmem:[#allocation8 + $0x900] sm:$0xff]
    %v1142 = vld [vmem:[#allocation8 + $0x908] sm:$0xff]
    %v1143 = vld [vmem:[#allocation8 + $0x910] sm:$0xff]
    %v1144 = vld [vmem:[#allocation8 + $0x918] sm:$0xff]
    %v1145 = vld [vmem:[#allocation8 + $0x920] sm:$0xff]
    %v1146 = vld [vmem:[#allocation8 + $0x928] sm:$0xff]
    %v1147 = vld [vmem:[#allocation8 + $0x930] sm:$0xff]
    %v1148 = vld [vmem:[#allocation8 + $0x938] sm:$0xff]
    %v1149 = vld [vmem:[#allocation8 + $0x940] sm:$0xff]
    %v1150 = vld [vmem:[#allocation8 + $0x948] sm:$0xff]
    %v1151 = vld [vmem:[#allocation8 + $0x950] sm:$0xff]
    %v1152 = vld [vmem:[#allocation8 + $0x958] sm:$0xff]
    %v1153 = vld [vmem:[#allocation8 + $0x960] sm:$0xff]
    %v1154 = vld [vmem:[#allocation8 + $0x968] sm:$0xff]
    %v1155 = vld [vmem:[#allocation8 + $0x970] sm:$0xff]
    %v1156 = vld [vmem:[#allocation8 + $0x978] sm:$0xff]
    %v1157 = vld [vmem:[#allocation8 + $0x980] sm:$0xff]
    %v1158 = vld [vmem:[#allocation8 + $0x988] sm:$0xff]
    %v1159 = vld [vmem:[#allocation8 + $0x990] sm:$0xff]
    %v1160 = vld [vmem:[#allocation8 + $0x998] sm:$0xff]
    %v1161 = vld [vmem:[#allocation8 + $0x9a0] sm:$0xff]
    %v1162 = vld [vmem:[#allocation8 + $0x9a8] sm:$0xff]
    %v1163 = vld [vmem:[#allocation8 + $0x9b0] sm:$0xff]
    %v1164 = vld [vmem:[#allocation8 + $0x9b8] sm:$0xff]
    %v1165 = vld [vmem:[#allocation8 + $0x9c0] sm:$0xff]
    %v1166 = vld [vmem:[#allocation8 + $0x9c8] sm:$0xff]
    %v1167 = vld [vmem:[#allocation8 + $0x9d0] sm:$0xff]
    %v1168 = vld [vmem:[#allocation8 + $0x9d8] sm:$0xff]
    %v1169 = vld [vmem:[#allocation8 + $0x9e0] sm:$0xff]
    %v1170 = vld [vmem:[#allocation8 + $0x9e8] sm:$0xff]
    %v1171 = vld [vmem:[#allocation8 + $0x9f0] sm:$0xff]
    %v1172 = vld [vmem:[#allocation8 + $0x9f8] sm:$0xff]
    %v1173 = vld [vmem:[#allocation8 + $0xa00] sm:$0xff]
    %v1174 = vld [vmem:[#allocation8 + $0xa08] sm:$0xff]
    %v1175 = vld [vmem:[#allocation8 + $0xa10] sm:$0xff]
    %v1176 = vld [vmem:[#allocation8 + $0xa18] sm:$0xff]
    %v1177 = vld [vmem:[#allocation8 + $0xa20] sm:$0xff]
    %v1178 = vld [vmem:[#allocation8 + $0xa28] sm:$0xff]
    %v1179 = vld [vmem:[#allocation8 + $0xa30] sm:$0xff]
    %v1180 = vld [vmem:[#allocation8 + $0xa38] sm:$0xff]
    %v1181 = vld [vmem:[#allocation8 + $0xa40] sm:$0xff]
    %v1182 = vld [vmem:[#allocation8 + $0xa48] sm:$0xff]
    %v1183 = vld [vmem:[#allocation8 + $0xa50] sm:$0xff]
    %v1184 = vld [vmem:[#allocation8 + $0xa58] sm:$0xff]
    %v1185 = vld [vmem:[#allocation8 + $0xa60] sm:$0xff]
    %v1186 = vld [vmem:[#allocation8 + $0xa68] sm:$0xff]
    %v1187 = vld [vmem:[#allocation8 + $0xa70] sm:$0xff]
    %v1188 = vld [vmem:[#allocation8 + $0xa78] sm:$0xff]
    %v1189 = vld [vmem:[#allocation8 + $0xa80] sm:$0xff]
    %v1190 = vld [vmem:[#allocation8 + $0xa88] sm:$0xff]
    %v1191 = vld [vmem:[#allocation8 + $0xa90] sm:$0xff]
    %v1192 = vld [vmem:[#allocation8 + $0xa98] sm:$0xff]
    %v1193 = vld [vmem:[#allocation8 + $0xaa0] sm:$0xff]
    %v1194 = vld [vmem:[#allocation8 + $0xaa8] sm:$0xff]
    %v1195 = vld [vmem:[#allocation8 + $0xab0] sm:$0xff]
    %v1196 = vld [vmem:[#allocation8 + $0xab8] sm:$0xff]
    %v1197 = vld [vmem:[#allocation8 + $0xac0] sm:$0xff]
    %v1198 = vld [vmem:[#allocation8 + $0xac8] sm:$0xff]
    %v1199 = vld [vmem:[#allocation8 + $0xad0] sm:$0xff]
    %v1200 = vld [vmem:[#allocation8 + $0xad8] sm:$0xff]
    %v1201 = vld [vmem:[#allocation8 + $0xae0] sm:$0xff]
    %v1202 = vld [vmem:[#allocation8 + $0xae8] sm:$0xff]
    %v1203 = vld [vmem:[#allocation8 + $0xaf0] sm:$0xff]
    %v1204 = vld [vmem:[#allocation8 + $0xaf8] sm:$0xff]
    %v1205 = vld [vmem:[#allocation8 + $0xb00] sm:$0xff]
    %v1206 = vld [vmem:[#allocation8 + $0xb08] sm:$0xff]
    %v1207 = vld [vmem:[#allocation8 + $0xb10] sm:$0xff]
    %v1208 = vld [vmem:[#allocation8 + $0xb18] sm:$0xff]
    %v1209 = vld [vmem:[#allocation8 + $0xb20] sm:$0xff]
    %v1210 = vld [vmem:[#allocation8 + $0xb28] sm:$0xff]
    %v1211 = vld [vmem:[#allocation8 + $0xb30] sm:$0xff]
    %v1212 = vld [vmem:[#allocation8 + $0xb38] sm:$0xff]
    %v1213 = vld [vmem:[#allocation8 + $0xb40] sm:$0xff]
    %v1214 = vld [vmem:[#allocation8 + $0xb48] sm:$0xff]
    %v1215 = vld [vmem:[#allocation8 + $0xb50] sm:$0xff]
    %v1216 = vld [vmem:[#allocation8 + $0xb58] sm:$0xff]
    %v1217 = vld [vmem:[#allocation8 + $0xb60] sm:$0xff]
    %v1218 = vld [vmem:[#allocation8 + $0xb68] sm:$0xff]
    %v1219 = vld [vmem:[#allocation8 + $0xb70] sm:$0xff]
    %v1220 = vld [vmem:[#allocation8 + $0xb78] sm:$0xff]
    %v1221 = vld [vmem:[#allocation8 + $0xb80] sm:$0xff]
    %v1222 = vld [vmem:[#allocation8 + $0xb88] sm:$0xff]
    %v1223 = vld [vmem:[#allocation8 + $0xb90] sm:$0xff]
    %v1224 = vld [vmem:[#allocation8 + $0xb98] sm:$0xff]
    %v1225 = vld [vmem:[#allocation8 + $0xba0] sm:$0xff]
    %v1226 = vld [vmem:[#allocation8 + $0xba8] sm:$0xff]
    %v1227 = vld [vmem:[#allocation8 + $0xbb0] sm:$0xff]
    %v1228 = vld [vmem:[#allocation8 + $0xbb8] sm:$0xff]
    %v1229 = vld [vmem:[#allocation8 + $0xbc0] sm:$0xff]
    %v1230 = vld [vmem:[#allocation8 + $0xbc8] sm:$0xff]
    %v1231 = vld [vmem:[#allocation8 + $0xbd0] sm:$0xff]
    %v1232 = vld [vmem:[#allocation8 + $0xbd8] sm:$0xff]
    %v1233 = vld [vmem:[#allocation8 + $0xbe0] sm:$0xff]
    %v1234 = vld [vmem:[#allocation8 + $0xbe8] sm:$0xff]
    %v1235 = vld [vmem:[#allocation8 + $0xbf0] sm:$0xff]
    %v1236 = vld [vmem:[#allocation8 + $0xbf8] sm:$0xff]
    %v1237 = vld [vmem:[#allocation8 + $0xc00] sm:$0xff]
    %v1238 = vld [vmem:[#allocation8 + $0xc08] sm:$0xff]
    %v1239 = vld [vmem:[#allocation8 + $0xc10] sm:$0xff]
    %v1240 = vld [vmem:[#allocation8 + $0xc18] sm:$0xff]
    %v1241 = vld [vmem:[#allocation8 + $0xc20] sm:$0xff]
    %v1242 = vld [vmem:[#allocation8 + $0xc28] sm:$0xff]
    %v1243 = vld [vmem:[#allocation8 + $0xc30] sm:$0xff]
    %v1244 = vld [vmem:[#allocation8 + $0xc38] sm:$0xff]
    %v1245 = vld [vmem:[#allocation8 + $0xc40] sm:$0xff]
    %v1246 = vld [vmem:[#allocation8 + $0xc48] sm:$0xff]
    %v1247 = vld [vmem:[#allocation8 + $0xc50] sm:$0xff]
    %v1248 = vld [vmem:[#allocation8 + $0xc58] sm:$0xff]
    %v1249 = vld [vmem:[#allocation8 + $0xc60] sm:$0xff]
    %v1250 = vld [vmem:[#allocation8 + $0xc68] sm:$0xff]
    %v1251 = vld [vmem:[#allocation8 + $0xc70] sm:$0xff]
    %v1252 = vld [vmem:[#allocation8 + $0xc78] sm:$0xff]
    %v1253 = vld [vmem:[#allocation8 + $0xc80] sm:$0xff]
    %v1254 = vld [vmem:[#allocation8 + $0xc88] sm:$0xff]
    %v1255 = vld [vmem:[#allocation8 + $0xc90] sm:$0xff]
    %v1256 = vld [vmem:[#allocation8 + $0xc98] sm:$0xff]
    %v1257 = vld [vmem:[#allocation8 + $0xca0] sm:$0xff]
    %v1258 = vld [vmem:[#allocation8 + $0xca8] sm:$0xff]
    %v1259 = vld [vmem:[#allocation8 + $0xcb0] sm:$0xff]
    %v1260 = vld [vmem:[#allocation8 + $0xcb8] sm:$0xff]
    %v1261 = vld [vmem:[#allocation8 + $0xcc0] sm:$0xff]
    %v1262 = vld [vmem:[#allocation8 + $0xcc8] sm:$0xff]
    %v1263 = vld [vmem:[#allocation8 + $0xcd0] sm:$0xff]
    %v1264 = vld [vmem:[#allocation8 + $0xcd8] sm:$0xff]
    %v1265 = vld [vmem:[#allocation8 + $0xce0] sm:$0xff]
    %v1266 = vld [vmem:[#allocation8 + $0xce8] sm:$0xff]
    %v1267 = vld [vmem:[#allocation8 + $0xcf0] sm:$0xff]
    %v1268 = vld [vmem:[#allocation8 + $0xcf8] sm:$0xff]
    %v1269 = vld [vmem:[#allocation8 + $0xd00] sm:$0xff]
    %v1270 = vld [vmem:[#allocation8 + $0xd08] sm:$0xff]
    %v1271 = vld [vmem:[#allocation8 + $0xd10] sm:$0xff]
    %v1272 = vld [vmem:[#allocation8 + $0xd18] sm:$0xff]
    %v1273 = vld [vmem:[#allocation8 + $0xd20] sm:$0xff]
    %v1274 = vld [vmem:[#allocation8 + $0xd28] sm:$0xff]
    %v1275 = vld [vmem:[#allocation8 + $0xd30] sm:$0xff]
    %v1276 = vld [vmem:[#allocation8 + $0xd38] sm:$0xff]
    %v1277 = vld [vmem:[#allocation8 + $0xd40] sm:$0xff]
    %v1278 = vld [vmem:[#allocation8 + $0xd48] sm:$0xff]
    %v1279 = vld [vmem:[#allocation8 + $0xd50] sm:$0xff]
    %v1280 = vld [vmem:[#allocation8 + $0xd58] sm:$0xff]
    %v1281 = vld [vmem:[#allocation8 + $0xd60] sm:$0xff]
    %v1282 = vld [vmem:[#allocation8 + $0xd68] sm:$0xff]
    %v1283 = vld [vmem:[#allocation8 + $0xd70] sm:$0xff]
    %v1284 = vld [vmem:[#allocation8 + $0xd78] sm:$0xff]
    %v1285 = vld [vmem:[#allocation8 + $0xd80] sm:$0xff]
    %v1286 = vld [vmem:[#allocation8 + $0xd88] sm:$0xff]
    %v1287 = vld [vmem:[#allocation8 + $0xd90] sm:$0xff]
    %v1288 = vld [vmem:[#allocation8 + $0xd98] sm:$0xff]
    %v1289 = vld [vmem:[#allocation8 + $0xda0] sm:$0xff]
    %v1290 = vld [vmem:[#allocation8 + $0xda8] sm:$0xff]
    %v1291 = vld [vmem:[#allocation8 + $0xdb0] sm:$0xff]
    %v1292 = vld [vmem:[#allocation8 + $0xdb8] sm:$0xff]
    %v1293 = vld [vmem:[#allocation8 + $0xdc0] sm:$0xff]
    %v1294 = vld [vmem:[#allocation8 + $0xdc8] sm:$0xff]
    %v1295 = vld [vmem:[#allocation8 + $0xdd0] sm:$0xff]
    %v1296 = vld [vmem:[#allocation8 + $0xdd8] sm:$0xff]
    %v1297 = vld [vmem:[#allocation8 + $0xde0] sm:$0xff]
    %v1298 = vld [vmem:[#allocation8 + $0xde8] sm:$0xff]
    %v1299 = vld [vmem:[#allocation8 + $0xdf0] sm:$0xff]
    %v1300 = vld [vmem:[#allocation8 + $0xdf8] sm:$0xff]
    %v1301 = vld [vmem:[#allocation8 + $0xe00] sm:$0xff]
    %v1302 = vld [vmem:[#allocation8 + $0xe08] sm:$0xff]
    %v1303 = vld [vmem:[#allocation8 + $0xe10] sm:$0xff]
    %v1304 = vld [vmem:[#allocation8 + $0xe18] sm:$0xff]
    %v1305 = vld [vmem:[#allocation8 + $0xe20] sm:$0xff]
    %v1306 = vld [vmem:[#allocation8 + $0xe28] sm:$0xff]
    %v1307 = vld [vmem:[#allocation8 + $0xe30] sm:$0xff]
    %v1308 = vld [vmem:[#allocation8 + $0xe38] sm:$0xff]
    %v1309 = vld [vmem:[#allocation8 + $0xe40] sm:$0xff]
    %v1310 = vld [vmem:[#allocation8 + $0xe48] sm:$0xff]
    %v1311 = vld [vmem:[#allocation8 + $0xe50] sm:$0xff]
    %v1312 = vld [vmem:[#allocation8 + $0xe58] sm:$0xff]
    %v1313 = vld [vmem:[#allocation8 + $0xe60] sm:$0xff]
    %v1314 = vld [vmem:[#allocation8 + $0xe68] sm:$0xff]
    %v1315 = vld [vmem:[#allocation8 + $0xe70] sm:$0xff]
    %v1316 = vld [vmem:[#allocation8 + $0xe78] sm:$0xff]
    %v1317 = vld [vmem:[#allocation8 + $0xe80] sm:$0xff]
    %v1318 = vld [vmem:[#allocation8 + $0xe88] sm:$0xff]
    %v1319 = vld [vmem:[#allocation8 + $0xe90] sm:$0xff]
    %v1320 = vld [vmem:[#allocation8 + $0xe98] sm:$0xff]
    %v1321 = vld [vmem:[#allocation8 + $0xea0] sm:$0xff]
    %v1322 = vld [vmem:[#allocation8 + $0xea8] sm:$0xff]
    %v1323 = vld [vmem:[#allocation8 + $0xeb0] sm:$0xff]
    %v1324 = vld [vmem:[#allocation8 + $0xeb8] sm:$0xff]
    %v1325 = vld [vmem:[#allocation8 + $0xec0] sm:$0xff]
    %v1326 = vld [vmem:[#allocation8 + $0xec8] sm:$0xff]
    %v1327 = vld [vmem:[#allocation8 + $0xed0] sm:$0xff]
    %v1328 = vld [vmem:[#allocation8 + $0xed8] sm:$0xff]
    %v1329 = vld [vmem:[#allocation8 + $0xee0] sm:$0xff]
    %v1330 = vld [vmem:[#allocation8 + $0xee8] sm:$0xff]
    %v1331 = vld [vmem:[#allocation8 + $0xef0] sm:$0xff]
    %v1332 = vld [vmem:[#allocation8 + $0xef8] sm:$0xff]
    %v1333 = vld [vmem:[#allocation8 + $0xf00] sm:$0xff]
    %v1334 = vld [vmem:[#allocation8 + $0xf08] sm:$0xff]
    %v1335 = vld [vmem:[#allocation8 + $0xf10] sm:$0xff]
    %v1336 = vld [vmem:[#allocation8 + $0xf18] sm:$0xff]
    %v1337 = vld [vmem:[#allocation8 + $0xf20] sm:$0xff]
    %v1338 = vld [vmem:[#allocation8 + $0xf28] sm:$0xff]
    %v1339 = vld [vmem:[#allocation8 + $0xf30] sm:$0xff]
    %v1340 = vld [vmem:[#allocation8 + $0xf38] sm:$0xff]
    %v1341 = vld [vmem:[#allocation8 + $0xf40] sm:$0xff]
    %v1342 = vld [vmem:[#allocation8 + $0xf48] sm:$0xff]
    %v1343 = vld [vmem:[#allocation8 + $0xf50] sm:$0xff]
    %v1344 = vld [vmem:[#allocation8 + $0xf58] sm:$0xff]
    %v1345 = vld [vmem:[#allocation8 + $0xf60] sm:$0xff]
    %v1346 = vld [vmem:[#allocation8 + $0xf68] sm:$0xff]
    %v1347 = vld [vmem:[#allocation8 + $0xf70] sm:$0xff]
    %v1348 = vld [vmem:[#allocation8 + $0xf78] sm:$0xff]
    %v1349 = vld [vmem:[#allocation8 + $0xf80] sm:$0xff]
    %v1350 = vld [vmem:[#allocation8 + $0xf88] sm:$0xff]
    %v1351 = vld [vmem:[#allocation8 + $0xf90] sm:$0xff]
    %v1352 = vld [vmem:[#allocation8 + $0xf98] sm:$0xff]
    %v1353 = vld [vmem:[#allocation8 + $0xfa0] sm:$0xff]
    %v1354 = vld [vmem:[#allocation8 + $0xfa8] sm:$0xff]
    %v1355 = vld [vmem:[#allocation8 + $0xfb0] sm:$0xff]
    %v1356 = vld [vmem:[#allocation8 + $0xfb8] sm:$0xff]
    %v1357 = vld [vmem:[#allocation8 + $0xfc0] sm:$0xff]
    %v1358 = vld [vmem:[#allocation8 + $0xfc8] sm:$0xff]
    %v1359 = vld [vmem:[#allocation8 + $0xfd0] sm:$0xff]
    %v1360 = vld [vmem:[#allocation8 + $0xfd8] sm:$0xff]
    %v1361 = vld [vmem:[#allocation8 + $0xfe0] sm:$0xff]
    %v1362 = vld [vmem:[#allocation8 + $0xfe8] sm:$0xff]
    %v1363 = vld [vmem:[#allocation8 + $0xff0] sm:$0xff]
    %v1364 = vld [vmem:[#allocation8 + $0xff8] sm:$0xff]
    %v1365 = vld [vmem:[#allocation8 + $0x1000] sm:$0xff]
    %v1366 = vld [vmem:[#allocation8 + $0x1008] sm:$0xff]
    %v1367 = vld [vmem:[#allocation8 + $0x1010] sm:$0xff]
    %v1368 = vld [vmem:[#allocation8 + $0x1018] sm:$0xff]
    %v1369 = vld [vmem:[#allocation8 + $0x1020] sm:$0xff]
    %v1370 = vld [vmem:[#allocation8 + $0x1028] sm:$0xff]
    %v1371 = vld [vmem:[#allocation8 + $0x1030] sm:$0xff]
    %v1372 = vld [vmem:[#allocation8 + $0x1038] sm:$0xff]
    %v1373 = vld [vmem:[#allocation8 + $0x1040] sm:$0xff]
    %v1374 = vld [vmem:[#allocation8 + $0x1048] sm:$0xff]
    %v1375 = vld [vmem:[#allocation8 + $0x1050] sm:$0xff]
    %v1376 = vld [vmem:[#allocation8 + $0x1058] sm:$0xff]
    %v1377 = vld [vmem:[#allocation8 + $0x1060] sm:$0xff]
    %v1378 = vld [vmem:[#allocation8 + $0x1068] sm:$0xff]
    %v1379 = vld [vmem:[#allocation8 + $0x1070] sm:$0xff]
    %v1380 = vld [vmem:[#allocation8 + $0x1078] sm:$0xff]
    %v1381 = vld [vmem:[#allocation8 + $0x1080] sm:$0xff]
    %v1382 = vld [vmem:[#allocation8 + $0x1088] sm:$0xff]
    %v1383 = vld [vmem:[#allocation8 + $0x1090] sm:$0xff]
    %v1384 = vld [vmem:[#allocation8 + $0x1098] sm:$0xff]
    %v1385 = vld [vmem:[#allocation8 + $0x10a0] sm:$0xff]
    %v1386 = vld [vmem:[#allocation8 + $0x10a8] sm:$0xff]
    %v1387 = vld [vmem:[#allocation8 + $0x10b0] sm:$0xff]
    %v1388 = vld [vmem:[#allocation8 + $0x10b8] sm:$0xff]
    %v1389 = vld [vmem:[#allocation8 + $0x10c0] sm:$0xff]
    %v1390 = vld [vmem:[#allocation8 + $0x10c8] sm:$0xff]
    %v1391 = vld [vmem:[#allocation8 + $0x10d0] sm:$0xff]
    %v1392 = vld [vmem:[#allocation8 + $0x10d8] sm:$0xff]
    %v1393 = vld [vmem:[#allocation8 + $0x10e0] sm:$0xff]
    %v1394 = vld [vmem:[#allocation8 + $0x10e8] sm:$0xff]
    %v1395 = vld [vmem:[#allocation8 + $0x10f0] sm:$0xff]
    %v1396 = vld [vmem:[#allocation8 + $0x10f8] sm:$0xff]
    %v1397 = vld [vmem:[#allocation8 + $0x1100] sm:$0xff]
    %v1398 = vld [vmem:[#allocation8 + $0x1108] sm:$0xff]
    %v1399 = vld [vmem:[#allocation8 + $0x1110] sm:$0xff]
    %v1400 = vld [vmem:[#allocation8 + $0x1118] sm:$0xff]
    %v1401 = vld [vmem:[#allocation8 + $0x1120] sm:$0xff]
    %v1402 = vld [vmem:[#allocation8 + $0x1128] sm:$0xff]
    %v1403 = vld [vmem:[#allocation8 + $0x1130] sm:$0xff]
    %v1404 = vld [vmem:[#allocation8 + $0x1138] sm:$0xff]
    %v1405 = vld [vmem:[#allocation8 + $0x1140] sm:$0xff]
    %v1406 = vld [vmem:[#allocation8 + $0x1148] sm:$0xff]
    %v1407 = vld [vmem:[#allocation8 + $0x1150] sm:$0xff]
    %v1408 = vld [vmem:[#allocation8 + $0x1158] sm:$0xff]
    %v1409 = vld [vmem:[#allocation8 + $0x1160] sm:$0xff]
    %v1410 = vld [vmem:[#allocation8 + $0x1168] sm:$0xff]
    %v1411 = vld [vmem:[#allocation8 + $0x1170] sm:$0xff]
    %v1412 = vld [vmem:[#allocation8 + $0x1178] sm:$0xff]
    %v1413 = vld [vmem:[#allocation8 + $0x1180] sm:$0xff]
    %v1414 = vld [vmem:[#allocation8 + $0x1188] sm:$0xff]
    %v1415 = vld [vmem:[#allocation8 + $0x1190] sm:$0xff]
    %v1416 = vld [vmem:[#allocation8 + $0x1198] sm:$0xff]
    %v1417 = vld [vmem:[#allocation8 + $0x11a0] sm:$0xff]
    %v1418 = vld [vmem:[#allocation8 + $0x11a8] sm:$0xff]
    %v1419 = vld [vmem:[#allocation8 + $0x11b0] sm:$0xff]
    %v1420 = vld [vmem:[#allocation8 + $0x11b8] sm:$0xff]
    %v1421 = vld [vmem:[#allocation8 + $0x11c0] sm:$0xff]
    %v1422 = vld [vmem:[#allocation8 + $0x11c8] sm:$0xff]
    %v1423 = vld [vmem:[#allocation8 + $0x11d0] sm:$0xff]
    %v1424 = vld [vmem:[#allocation8 + $0x11d8] sm:$0xff]
    %v1425 = vld [vmem:[#allocation8 + $0x11e0] sm:$0xff]
    %v1426 = vld [vmem:[#allocation8 + $0x11e8] sm:$0xff]
    %v1427 = vld [vmem:[#allocation8 + $0x11f0] sm:$0xff]
    %v1428 = vld [vmem:[#allocation8 + $0x11f8] sm:$0xff]
    %v1429 = vld [vmem:[#allocation8 + $0x1200] sm:$0xff]
    %v1430 = vld [vmem:[#allocation8 + $0x1208] sm:$0xff]
    %v1431 = vld [vmem:[#allocation8 + $0x1210] sm:$0xff]
    %v1432 = vld [vmem:[#allocation8 + $0x1218] sm:$0xff]
    %v1433 = vld [vmem:[#allocation8 + $0x1220] sm:$0xff]
    %v1434 = vld [vmem:[#allocation8 + $0x1228] sm:$0xff]
    %v1435 = vld [vmem:[#allocation8 + $0x1230] sm:$0xff]
    %v1436 = vld [vmem:[#allocation8 + $0x1238] sm:$0xff]
    %v1437 = vld [vmem:[#allocation8 + $0x1240] sm:$0xff]
    %v1438 = vld [vmem:[#allocation8 + $0x1248] sm:$0xff]
    %v1439 = vld [vmem:[#allocation8 + $0x1250] sm:$0xff]
    %v1440 = vld [vmem:[#allocation8 + $0x1258] sm:$0xff]
    %v1441 = vld [vmem:[#allocation8 + $0x1260] sm:$0xff]
    %v1442 = vld [vmem:[#allocation8 + $0x1268] sm:$0xff]
    %v1443 = vld [vmem:[#allocation8 + $0x1270] sm:$0xff]
    %v1444 = vld [vmem:[#allocation8 + $0x1278] sm:$0xff]
    %v1445 = vld [vmem:[#allocation8 + $0x1280] sm:$0xff]
    %v1446 = vld [vmem:[#allocation8 + $0x1288] sm:$0xff]
    %v1447 = vld [vmem:[#allocation8 + $0x1290] sm:$0xff]
    %v1448 = vld [vmem:[#allocation8 + $0x1298] sm:$0xff]
    %v1449 = vld [vmem:[#allocation8 + $0x12a0] sm:$0xff]
    %v1450 = vld [vmem:[#allocation8 + $0x12a8] sm:$0xff]
    %v1451 = vld [vmem:[#allocation8 + $0x12b0] sm:$0xff]
    %v1452 = vld [vmem:[#allocation8 + $0x12b8] sm:$0xff]
    %v1453 = vld [vmem:[#allocation8 + $0x12c0] sm:$0xff]
    %v1454 = vld [vmem:[#allocation8 + $0x12c8] sm:$0xff]
    %v1455 = vld [vmem:[#allocation8 + $0x12d0] sm:$0xff]
    %v1456 = vld [vmem:[#allocation8 + $0x12d8] sm:$0xff]
    %v1457 = vld [vmem:[#allocation8 + $0x12e0] sm:$0xff]
    %v1458 = vld [vmem:[#allocation8 + $0x12e8] sm:$0xff]
    %v1459 = vld [vmem:[#allocation8 + $0x12f0] sm:$0xff]
    %v1460 = vld [vmem:[#allocation8 + $0x12f8] sm:$0xff]
    %v1461 = vld [vmem:[#allocation8 + $0x1300] sm:$0xff]
    %v1462 = vld [vmem:[#allocation8 + $0x1308] sm:$0xff]
    %v1463 = vld [vmem:[#allocation8 + $0x1310] sm:$0xff]
    %v1464 = vld [vmem:[#allocation8 + $0x1318] sm:$0xff]
    %v1465 = vld [vmem:[#allocation8 + $0x1320] sm:$0xff]
    %v1466 = vld [vmem:[#allocation8 + $0x1328] sm:$0xff]
    %v1467 = vld [vmem:[#allocation8 + $0x1330] sm:$0xff]
    %v1468 = vld [vmem:[#allocation8 + $0x1338] sm:$0xff]
    %v1469 = vld [vmem:[#allocation8 + $0x1340] sm:$0xff]
    %v1470 = vld [vmem:[#allocation8 + $0x1348] sm:$0xff]
    %v1471 = vld [vmem:[#allocation8 + $0x1350] sm:$0xff]
    %v1472 = vld [vmem:[#allocation8 + $0x1358] sm:$0xff]
    %v1473 = vld [vmem:[#allocation8 + $0x1360] sm:$0xff]
    %v1474 = vld [vmem:[#allocation8 + $0x1368] sm:$0xff]
    %v1475 = vld [vmem:[#allocation8 + $0x1370] sm:$0xff]
    %v1476 = vld [vmem:[#allocation8 + $0x1378] sm:$0xff]
    %v1477 = vld [vmem:[#allocation8 + $0x1380] sm:$0xff]
    %v1478 = vld [vmem:[#allocation8 + $0x1388] sm:$0xff]
    %v1479 = vld [vmem:[#allocation8 + $0x1390] sm:$0xff]
    %v1480 = vld [vmem:[#allocation8 + $0x1398] sm:$0xff]
    %v1481 = vld [vmem:[#allocation8 + $0x13a0] sm:$0xff]
    %v1482 = vld [vmem:[#allocation8 + $0x13a8] sm:$0xff]
    %v1483 = vld [vmem:[#allocation8 + $0x13b0] sm:$0xff]
    %v1484 = vld [vmem:[#allocation8 + $0x13b8] sm:$0xff]
    %v1485 = vld [vmem:[#allocation8 + $0x13c0] sm:$0xff]
    %v1486 = vld [vmem:[#allocation8 + $0x13c8] sm:$0xff]
    %v1487 = vld [vmem:[#allocation8 + $0x13d0] sm:$0xff]
    %v1488 = vld [vmem:[#allocation8 + $0x13d8] sm:$0xff]
    %v1489 = vld [vmem:[#allocation8 + $0x13e0] sm:$0xff]
    %v1490 = vld [vmem:[#allocation8 + $0x13e8] sm:$0xff]
    %v1491 = vld [vmem:[#allocation8 + $0x13f0] sm:$0xff]
    %v1492 = vld [vmem:[#allocation8 + $0x13f8] sm:$0xff]
    %v1493 = vld [vmem:[#allocation8 + $0x1400] sm:$0xff]
    %v1494 = vld [vmem:[#allocation8 + $0x1408] sm:$0xff]
    %v1495 = vld [vmem:[#allocation8 + $0x1410] sm:$0xff]
    %v1496 = vld [vmem:[#allocation8 + $0x1418] sm:$0xff]
    %v1497 = vld [vmem:[#allocation8 + $0x1420] sm:$0xff]
    %v1498 = vld [vmem:[#allocation8 + $0x1428] sm:$0xff]
    %v1499 = vld [vmem:[#allocation8 + $0x1430] sm:$0xff]
    %v1500 = vld [vmem:[#allocation8 + $0x1438] sm:$0xff]
    %v1501 = vld [vmem:[#allocation8 + $0x1440] sm:$0xff]
    %v1502 = vld [vmem:[#allocation8 + $0x1448] sm:$0xff]
    %v1503 = vld [vmem:[#allocation8 + $0x1450] sm:$0xff]
    %v1504 = vld [vmem:[#allocation8 + $0x1458] sm:$0xff]
    %v1505 = vld [vmem:[#allocation8 + $0x1460] sm:$0xff]
    %v1506 = vld [vmem:[#allocation8 + $0x1468] sm:$0xff]
    %v1507 = vld [vmem:[#allocation8 + $0x1470] sm:$0xff]
    %v1508 = vld [vmem:[#allocation8 + $0x1478] sm:$0xff]
    %v1509 = vld [vmem:[#allocation8 + $0x1480] sm:$0xff]
    %v1510 = vld [vmem:[#allocation8 + $0x1488] sm:$0xff]
    %v1511 = vld [vmem:[#allocation8 + $0x1490] sm:$0xff]
    %v1512 = vld [vmem:[#allocation8 + $0x1498] sm:$0xff]
    %v1513 = vld [vmem:[#allocation8 + $0x14a0] sm:$0xff]
    %v1514 = vld [vmem:[#allocation8 + $0x14a8] sm:$0xff]
    %v1515 = vld [vmem:[#allocation8 + $0x14b0] sm:$0xff]
    %v1516 = vld [vmem:[#allocation8 + $0x14b8] sm:$0xff]
    %v1517 = vld [vmem:[#allocation8 + $0x14c0] sm:$0xff]
    %v1518 = vld [vmem:[#allocation8 + $0x14c8] sm:$0xff]
    %v1519 = vld [vmem:[#allocation8 + $0x14d0] sm:$0xff]
    %v1520 = vld [vmem:[#allocation8 + $0x14d8] sm:$0xff]
    %v1521 = vld [vmem:[#allocation8 + $0x14e0] sm:$0xff]
    %v1522 = vld [vmem:[#allocation8 + $0x14e8] sm:$0xff]
    %v1523 = vld [vmem:[#allocation8 + $0x14f0] sm:$0xff]
    %v1524 = vld [vmem:[#allocation8 + $0x14f8] sm:$0xff]
    %v1525 = vld [vmem:[#allocation8 + $0x1500] sm:$0xff]
    %v1526 = vld [vmem:[#allocation8 + $0x1508] sm:$0xff]
    %v1527 = vld [vmem:[#allocation8 + $0x1510] sm:$0xff]
    %v1528 = vld [vmem:[#allocation8 + $0x1518] sm:$0xff]
    %v1529 = vld [vmem:[#allocation8 + $0x1520] sm:$0xff]
    %v1530 = vld [vmem:[#allocation8 + $0x1528] sm:$0xff]
    %v1531 = vld [vmem:[#allocation8 + $0x1530] sm:$0xff]
    %v1532 = vld [vmem:[#allocation8 + $0x1538] sm:$0xff]
    %v1533 = vld [vmem:[#allocation8 + $0x1540] sm:$0xff]
    %v1534 = vld [vmem:[#allocation8 + $0x1548] sm:$0xff]
    %v1535 = vld [vmem:[#allocation8 + $0x1550] sm:$0xff]
    %v1536 = vld [vmem:[#allocation8 + $0x1558] sm:$0xff]
    %v1537 = vld [vmem:[#allocation8 + $0x1560] sm:$0xff]
    %v1538 = vld [vmem:[#allocation8 + $0x1568] sm:$0xff]
    %v1539 = vld [vmem:[#allocation8 + $0x1570] sm:$0xff]
    %v1540 = vld [vmem:[#allocation8 + $0x1578] sm:$0xff]
    %v1541 = vld [vmem:[#allocation8 + $0x1580] sm:$0xff]
    %v1542 = vld [vmem:[#allocation8 + $0x1588] sm:$0xff]
    %v1543 = vld [vmem:[#allocation8 + $0x1590] sm:$0xff]
    %v1544 = vld [vmem:[#allocation8 + $0x1598] sm:$0xff]
    %v1545 = vld [vmem:[#allocation8 + $0x15a0] sm:$0xff]
    %v1546 = vld [vmem:[#allocation8 + $0x15a8] sm:$0xff]
    %v1547 = vld [vmem:[#allocation8 + $0x15b0] sm:$0xff]
    %v1548 = vld [vmem:[#allocation8 + $0x15b8] sm:$0xff]
    %v1549 = vld [vmem:[#allocation8 + $0x15c0] sm:$0xff]
    %v1550 = vld [vmem:[#allocation8 + $0x15c8] sm:$0xff]
    %v1551 = vld [vmem:[#allocation8 + $0x15d0] sm:$0xff]
    %v1552 = vld [vmem:[#allocation8 + $0x15d8] sm:$0xff]
    %v1553 = vld [vmem:[#allocation8 + $0x15e0] sm:$0xff]
    %v1554 = vld [vmem:[#allocation8 + $0x15e8] sm:$0xff]
    %v1555 = vld [vmem:[#allocation8 + $0x15f0] sm:$0xff]
    %v1556 = vld [vmem:[#allocation8 + $0x15f8] sm:$0xff]
    %v1557 = vld [vmem:[#allocation8 + $0x1600] sm:$0xff]
    %v1558 = vld [vmem:[#allocation8 + $0x1608] sm:$0xff]
    %v1559 = vld [vmem:[#allocation8 + $0x1610] sm:$0xff]
    %v1560 = vld [vmem:[#allocation8 + $0x1618] sm:$0xff]
    %v1561 = vld [vmem:[#allocation8 + $0x1620] sm:$0xff]
    %v1562 = vld [vmem:[#allocation8 + $0x1628] sm:$0xff]
    %v1563 = vld [vmem:[#allocation8 + $0x1630] sm:$0xff]
    %v1564 = vld [vmem:[#allocation8 + $0x1638] sm:$0xff]
    %v1565 = vld [vmem:[#allocation8 + $0x1640] sm:$0xff]
    %v1566 = vld [vmem:[#allocation8 + $0x1648] sm:$0xff]
    %v1567 = vld [vmem:[#allocation8 + $0x1650] sm:$0xff]
    %v1568 = vld [vmem:[#allocation8 + $0x1658] sm:$0xff]
    %v1569 = vld [vmem:[#allocation8 + $0x1660] sm:$0xff]
    %v1570 = vld [vmem:[#allocation8 + $0x1668] sm:$0xff]
    %v1571 = vld [vmem:[#allocation8 + $0x1670] sm:$0xff]
    %v1572 = vld [vmem:[#allocation8 + $0x1678] sm:$0xff]
    %v1573 = vld [vmem:[#allocation8 + $0x1680] sm:$0xff]
    %v1574 = vld [vmem:[#allocation8 + $0x1688] sm:$0xff]
    %v1575 = vld [vmem:[#allocation8 + $0x1690] sm:$0xff]
    %v1576 = vld [vmem:[#allocation8 + $0x1698] sm:$0xff]
    %v1577 = vld [vmem:[#allocation8 + $0x16a0] sm:$0xff]
    %v1578 = vld [vmem:[#allocation8 + $0x16a8] sm:$0xff]
    %v1579 = vld [vmem:[#allocation8 + $0x16b0] sm:$0xff]
    %v1580 = vld [vmem:[#allocation8 + $0x16b8] sm:$0xff]
    %v1581 = vld [vmem:[#allocation8 + $0x16c0] sm:$0xff]
    %v1582 = vld [vmem:[#allocation8 + $0x16c8] sm:$0xff]
    %v1583 = vld [vmem:[#allocation8 + $0x16d0] sm:$0xff]
    %v1584 = vld [vmem:[#allocation8 + $0x16d8] sm:$0xff]
    %v1585 = vld [vmem:[#allocation8 + $0x16e0] sm:$0xff]
    %v1586 = vld [vmem:[#allocation8 + $0x16e8] sm:$0xff]
    %v1587 = vld [vmem:[#allocation8 + $0x16f0] sm:$0xff]
    %v1588 = vld [vmem:[#allocation8 + $0x16f8] sm:$0xff]
    %v1589 = vld [vmem:[#allocation8 + $0x1700] sm:$0xff]
    %v1590 = vld [vmem:[#allocation8 + $0x1708] sm:$0xff]
    %v1591 = vld [vmem:[#allocation8 + $0x1710] sm:$0xff]
    %v1592 = vld [vmem:[#allocation8 + $0x1718] sm:$0xff]
    %v1593 = vld [vmem:[#allocation8 + $0x1720] sm:$0xff]
    %v1594 = vld [vmem:[#allocation8 + $0x1728] sm:$0xff]
    %v1595 = vld [vmem:[#allocation8 + $0x1730] sm:$0xff]
    %v1596 = vld [vmem:[#allocation8 + $0x1738] sm:$0xff]
    %v1597 = vld [vmem:[#allocation8 + $0x1740] sm:$0xff]
    %v1598 = vld [vmem:[#allocation8 + $0x1748] sm:$0xff]
    %v1599 = vld [vmem:[#allocation8 + $0x1750] sm:$0xff]
    %v1600 = vld [vmem:[#allocation8 + $0x1758] sm:$0xff]
    %v1601 = vld [vmem:[#allocation8 + $0x1760] sm:$0xff]
    %v1602 = vld [vmem:[#allocation8 + $0x1768] sm:$0xff]
    %v1603 = vld [vmem:[#allocation8 + $0x1770] sm:$0xff]
    %v1604 = vld [vmem:[#allocation8 + $0x1778] sm:$0xff]
    %v1605 = vld [vmem:[#allocation8 + $0x1780] sm:$0xff]
    %v1606 = vld [vmem:[#allocation8 + $0x1788] sm:$0xff]
    %v1607 = vld [vmem:[#allocation8 + $0x1790] sm:$0xff]
    %v1608 = vld [vmem:[#allocation8 + $0x1798] sm:$0xff]
    %v1609 = vld [vmem:[#allocation8 + $0x17a0] sm:$0xff]
    %v1610 = vld [vmem:[#allocation8 + $0x17a8] sm:$0xff]
    %v1611 = vld [vmem:[#allocation8 + $0x17b0] sm:$0xff]
    %v1612 = vld [vmem:[#allocation8 + $0x17b8] sm:$0xff]
    %v1613 = vld [vmem:[#allocation8 + $0x17c0] sm:$0xff]
    %v1614 = vld [vmem:[#allocation8 + $0x17c8] sm:$0xff]
    %v1615 = vld [vmem:[#allocation8 + $0x17d0] sm:$0xff]
    %v1616 = vld [vmem:[#allocation8 + $0x17d8] sm:$0xff]
    %v1617 = vld [vmem:[#allocation8 + $0x17e0] sm:$0xff]
    %v1618 = vld [vmem:[#allocation8 + $0x17e8] sm:$0xff]
    %v1619 = vld [vmem:[#allocation8 + $0x17f0] sm:$0xff]
    %v1620 = vld [vmem:[#allocation8 + $0x17f8] sm:$0xff]
    %v1621 = vld [vmem:[#allocation8 + $0x1800] sm:$0xff]
    %v1622 = vld [vmem:[#allocation8 + $0x1808] sm:$0xff]
    %v1623 = vld [vmem:[#allocation8 + $0x1810] sm:$0xff]
    %v1624 = vld [vmem:[#allocation8 + $0x1818] sm:$0xff]
    %v1625 = vld [vmem:[#allocation8 + $0x1820] sm:$0xff]
    %v1626 = vld [vmem:[#allocation8 + $0x1828] sm:$0xff]
    %v1627 = vld [vmem:[#allocation8 + $0x1830] sm:$0xff]
    %v1628 = vld [vmem:[#allocation8 + $0x1838] sm:$0xff]
    %v1629 = vld [vmem:[#allocation8 + $0x1840] sm:$0xff]
    %v1630 = vld [vmem:[#allocation8 + $0x1848] sm:$0xff]
    %v1631 = vld [vmem:[#allocation8 + $0x1850] sm:$0xff]
    %v1632 = vld [vmem:[#allocation8 + $0x1858] sm:$0xff]
    %v1633 = vld [vmem:[#allocation8 + $0x1860] sm:$0xff]
    %v1634 = vld [vmem:[#allocation8 + $0x1868] sm:$0xff]
    %v1635 = vld [vmem:[#allocation8 + $0x1870] sm:$0xff]
    %v1636 = vld [vmem:[#allocation8 + $0x1878] sm:$0xff]
    %v1637 = vld [vmem:[#allocation8 + $0x1880] sm:$0xff]
    %v1638 = vld [vmem:[#allocation8 + $0x1888] sm:$0xff]
    %v1639 = vld [vmem:[#allocation8 + $0x1890] sm:$0xff]
    %v1640 = vld [vmem:[#allocation8 + $0x1898] sm:$0xff]
    %v1641 = vld [vmem:[#allocation8 + $0x18a0] sm:$0xff]
    %v1642 = vld [vmem:[#allocation8 + $0x18a8] sm:$0xff]
    %v1643 = vld [vmem:[#allocation8 + $0x18b0] sm:$0xff]
    %v1644 = vld [vmem:[#allocation8 + $0x18b8] sm:$0xff]
    %v1645 = vld [vmem:[#allocation8 + $0x18c0] sm:$0xff]
    %v1646 = vld [vmem:[#allocation8 + $0x18c8] sm:$0xff]
    %v1647 = vld [vmem:[#allocation8 + $0x18d0] sm:$0xff]
    %v1648 = vld [vmem:[#allocation8 + $0x18d8] sm:$0xff]
    %v1649 = vld [vmem:[#allocation8 + $0x18e0] sm:$0xff]
    %v1650 = vld [vmem:[#allocation8 + $0x18e8] sm:$0xff]
    %v1651 = vld [vmem:[#allocation8 + $0x18f0] sm:$0xff]
    %v1652 = vld [vmem:[#allocation8 + $0x18f8] sm:$0xff]
    %v1653 = vld [vmem:[#allocation8 + $0x1900] sm:$0xff]
    %v1654 = vld [vmem:[#allocation8 + $0x1908] sm:$0xff]
    %v1655 = vld [vmem:[#allocation8 + $0x1910] sm:$0xff]
    %v1656 = vld [vmem:[#allocation8 + $0x1918] sm:$0xff]
    %v1657 = vld [vmem:[#allocation8 + $0x1920] sm:$0xff]
    %v1658 = vld [vmem:[#allocation8 + $0x1928] sm:$0xff]
    %v1659 = vld [vmem:[#allocation8 + $0x1930] sm:$0xff]
    %v1660 = vld [vmem:[#allocation8 + $0x1938] sm:$0xff]
    %v1661 = vld [vmem:[#allocation8 + $0x1940] sm:$0xff]
    %v1662 = vld [vmem:[#allocation8 + $0x1948] sm:$0xff]
    %v1663 = vld [vmem:[#allocation8 + $0x1950] sm:$0xff]
    %v1664 = vld [vmem:[#allocation8 + $0x1958] sm:$0xff]
    %v1665 = vld [vmem:[#allocation8 + $0x1960] sm:$0xff]
    %v1666 = vld [vmem:[#allocation8 + $0x1968] sm:$0xff]
    %v1667 = vld [vmem:[#allocation8 + $0x1970] sm:$0xff]
    %v1668 = vld [vmem:[#allocation8 + $0x1978] sm:$0xff]
    %v1669 = vld [vmem:[#allocation8 + $0x1980] sm:$0xff]
    %v1670 = vld [vmem:[#allocation8 + $0x1988] sm:$0xff]
    %v1671 = vld [vmem:[#allocation8 + $0x1990] sm:$0xff]
    %v1672 = vld [vmem:[#allocation8 + $0x1998] sm:$0xff]
    %v1673 = vld [vmem:[#allocation8 + $0x19a0] sm:$0xff]
    %v1674 = vld [vmem:[#allocation8 + $0x19a8] sm:$0xff]
    %v1675 = vld [vmem:[#allocation8 + $0x19b0] sm:$0xff]
    %v1676 = vld [vmem:[#allocation8 + $0x19b8] sm:$0xff]
    %v1677 = vld [vmem:[#allocation8 + $0x19c0] sm:$0xff]
    %v1678 = vld [vmem:[#allocation8 + $0x19c8] sm:$0xff]
    %v1679 = vld [vmem:[#allocation8 + $0x19d0] sm:$0xff]
    %v1680 = vld [vmem:[#allocation8 + $0x19d8] sm:$0xff]
    %v1681 = vld [vmem:[#allocation8 + $0x19e0] sm:$0xff]
    %v1682 = vld [vmem:[#allocation8 + $0x19e8] sm:$0xff]
    %v1683 = vld [vmem:[#allocation8 + $0x19f0] sm:$0xff]
    %v1684 = vld [vmem:[#allocation8 + $0x19f8] sm:$0xff]
    %v1685 = vld [vmem:[#allocation8 + $0x1a00] sm:$0xff]
    %v1686 = vld [vmem:[#allocation8 + $0x1a08] sm:$0xff]
    %v1687 = vld [vmem:[#allocation8 + $0x1a10] sm:$0xff]
    %v1688 = vld [vmem:[#allocation8 + $0x1a18] sm:$0xff]
    %v1689 = vld [vmem:[#allocation8 + $0x1a20] sm:$0xff]
    %v1690 = vld [vmem:[#allocation8 + $0x1a28] sm:$0xff]
    %v1691 = vld [vmem:[#allocation8 + $0x1a30] sm:$0xff]
    %v1692 = vld [vmem:[#allocation8 + $0x1a38] sm:$0xff]
    %v1693 = vld [vmem:[#allocation8 + $0x1a40] sm:$0xff]
    %v1694 = vld [vmem:[#allocation8 + $0x1a48] sm:$0xff]
    %v1695 = vld [vmem:[#allocation8 + $0x1a50] sm:$0xff]
    %v1696 = vld [vmem:[#allocation8 + $0x1a58] sm:$0xff]
    %v1697 = vld [vmem:[#allocation8 + $0x1a60] sm:$0xff]
    %v1698 = vld [vmem:[#allocation8 + $0x1a68] sm:$0xff]
    %v1699 = vld [vmem:[#allocation8 + $0x1a70] sm:$0xff]
    %v1700 = vld [vmem:[#allocation8 + $0x1a78] sm:$0xff]
    %v1701 = vld [vmem:[#allocation8 + $0x1a80] sm:$0xff]
    %v1702 = vld [vmem:[#allocation8 + $0x1a88] sm:$0xff]
    %v1703 = vld [vmem:[#allocation8 + $0x1a90] sm:$0xff]
    %v1704 = vld [vmem:[#allocation8 + $0x1a98] sm:$0xff]
    %v1705 = vld [vmem:[#allocation8 + $0x1aa0] sm:$0xff]
    %v1706 = vld [vmem:[#allocation8 + $0x1aa8] sm:$0xff]
    %v1707 = vld [vmem:[#allocation8 + $0x1ab0] sm:$0xff]
    %v1708 = vld [vmem:[#allocation8 + $0x1ab8] sm:$0xff]
    %v1709 = vld [vmem:[#allocation8 + $0x1ac0] sm:$0xff]
    %v1710 = vld [vmem:[#allocation8 + $0x1ac8] sm:$0xff]
    %v1711 = vld [vmem:[#allocation8 + $0x1ad0] sm:$0xff]
    %v1712 = vld [vmem:[#allocation8 + $0x1ad8] sm:$0xff]
    %v1713 = vld [vmem:[#allocation8 + $0x1ae0] sm:$0xff]
    %v1714 = vld [vmem:[#allocation8 + $0x1ae8] sm:$0xff]
    %v1715 = vld [vmem:[#allocation8 + $0x1af0] sm:$0xff]
    %v1716 = vld [vmem:[#allocation8 + $0x1af8] sm:$0xff]
    %v1717 = vld [vmem:[#allocation8 + $0x1b00] sm:$0xff]
    %v1718 = vld [vmem:[#allocation8 + $0x1b08] sm:$0xff]
    %v1719 = vld [vmem:[#allocation8 + $0x1b10] sm:$0xff]
    %v1720 = vld [vmem:[#allocation8 + $0x1b18] sm:$0xff]
    %v1721 = vld [vmem:[#allocation8 + $0x1b20] sm:$0xff]
    %v1722 = vld [vmem:[#allocation8 + $0x1b28] sm:$0xff]
    %v1723 = vld [vmem:[#allocation8 + $0x1b30] sm:$0xff]
    %v1724 = vld [vmem:[#allocation8 + $0x1b38] sm:$0xff]
    %v1725 = vld [vmem:[#allocation8 + $0x1b40] sm:$0xff]
    %v1726 = vld [vmem:[#allocation8 + $0x1b48] sm:$0xff]
    %v1727 = vld [vmem:[#allocation8 + $0x1b50] sm:$0xff]
    %v1728 = vld [vmem:[#allocation8 + $0x1b58] sm:$0xff]
    %v1729 = vld [vmem:[#allocation8 + $0x1b60] sm:$0xff]
    %v1730 = vld [vmem:[#allocation8 + $0x1b68] sm:$0xff]
    %v1731 = vld [vmem:[#allocation8 + $0x1b70] sm:$0xff]
    %v1732 = vld [vmem:[#allocation8 + $0x1b78] sm:$0xff]
    %v1733 = vld [vmem:[#allocation8 + $0x1b80] sm:$0xff]
    %v1734 = vld [vmem:[#allocation8 + $0x1b88] sm:$0xff]
    %v1735 = vld [vmem:[#allocation8 + $0x1b90] sm:$0xff]
    %v1736 = vld [vmem:[#allocation8 + $0x1b98] sm:$0xff]
    %v1737 = vld [vmem:[#allocation8 + $0x1ba0] sm:$0xff]
    %v1738 = vld [vmem:[#allocation8 + $0x1ba8] sm:$0xff]
    %v1739 = vld [vmem:[#allocation8 + $0x1bb0] sm:$0xff]
    %v1740 = vld [vmem:[#allocation8 + $0x1bb8] sm:$0xff]
    %v1741 = vld [vmem:[#allocation8 + $0x1bc0] sm:$0xff]
    %v1742 = vld [vmem:[#allocation8 + $0x1bc8] sm:$0xff]
    %v1743 = vld [vmem:[#allocation8 + $0x1bd0] sm:$0xff]
    %v1744 = vld [vmem:[#allocation8 + $0x1bd8] sm:$0xff]
    %v1745 = vld [vmem:[#allocation8 + $0x1be0] sm:$0xff]
    %v1746 = vld [vmem:[#allocation8 + $0x1be8] sm:$0xff]
    %v1747 = vld [vmem:[#allocation8 + $0x1bf0] sm:$0xff]
    %v1748 = vld [vmem:[#allocation8 + $0x1bf8] sm:$0xff]
    %v1749 = vld [vmem:[#allocation8 + $0x1c00] sm:$0xff]
    %v1750 = vld [vmem:[#allocation8 + $0x1c08] sm:$0xff]
    %v1751 = vld [vmem:[#allocation8 + $0x1c10] sm:$0xff]
    %v1752 = vld [vmem:[#allocation8 + $0x1c18] sm:$0xff]
    %v1753 = vld [vmem:[#allocation8 + $0x1c20] sm:$0xff]
    %v1754 = vld [vmem:[#allocation8 + $0x1c28] sm:$0xff]
    %v1755 = vld [vmem:[#allocation8 + $0x1c30] sm:$0xff]
    %v1756 = vld [vmem:[#allocation8 + $0x1c38] sm:$0xff]
    %v1757 = vld [vmem:[#allocation8 + $0x1c40] sm:$0xff]
    %v1758 = vld [vmem:[#allocation8 + $0x1c48] sm:$0xff]
    %v1759 = vld [vmem:[#allocation8 + $0x1c50] sm:$0xff]
    %v1760 = vld [vmem:[#allocation8 + $0x1c58] sm:$0xff]
    %v1761 = vld [vmem:[#allocation8 + $0x1c60] sm:$0xff]
    %v1762 = vld [vmem:[#allocation8 + $0x1c68] sm:$0xff]
    %v1763 = vld [vmem:[#allocation8 + $0x1c70] sm:$0xff]
    %v1764 = vld [vmem:[#allocation8 + $0x1c78] sm:$0xff]
    %v1765 = vld [vmem:[#allocation8 + $0x1c80] sm:$0xff]
    %v1766 = vld [vmem:[#allocation8 + $0x1c88] sm:$0xff]
    %v1767 = vld [vmem:[#allocation8 + $0x1c90] sm:$0xff]
    %v1768 = vld [vmem:[#allocation8 + $0x1c98] sm:$0xff]
    %v1769 = vld [vmem:[#allocation8 + $0x1ca0] sm:$0xff]
    %v1770 = vld [vmem:[#allocation8 + $0x1ca8] sm:$0xff]
    %v1771 = vld [vmem:[#allocation8 + $0x1cb0] sm:$0xff]
    %v1772 = vld [vmem:[#allocation8 + $0x1cb8] sm:$0xff]
    %v1773 = vld [vmem:[#allocation8 + $0x1cc0] sm:$0xff]
    %v1774 = vld [vmem:[#allocation8 + $0x1cc8] sm:$0xff]
    %v1775 = vld [vmem:[#allocation8 + $0x1cd0] sm:$0xff]
    %v1776 = vld [vmem:[#allocation8 + $0x1cd8] sm:$0xff]
    %v1777 = vld [vmem:[#allocation8 + $0x1ce0] sm:$0xff]
    %v1778 = vld [vmem:[#allocation8 + $0x1ce8] sm:$0xff]
    %v1779 = vld [vmem:[#allocation8 + $0x1cf0] sm:$0xff]
    %v1780 = vld [vmem:[#allocation8 + $0x1cf8] sm:$0xff]
    %v1781 = vld [vmem:[#allocation8 + $0x1d00] sm:$0xff]
    %v1782 = vld [vmem:[#allocation8 + $0x1d08] sm:$0xff]
    %v1783 = vld [vmem:[#allocation8 + $0x1d10] sm:$0xff]
    %v1784 = vld [vmem:[#allocation8 + $0x1d18] sm:$0xff]
    %v1785 = vld [vmem:[#allocation8 + $0x1d20] sm:$0xff]
    %v1786 = vld [vmem:[#allocation8 + $0x1d28] sm:$0xff]
    %v1787 = vld [vmem:[#allocation8 + $0x1d30] sm:$0xff]
    %v1788 = vld [vmem:[#allocation8 + $0x1d38] sm:$0xff]
    %v1789 = vld [vmem:[#allocation8 + $0x1d40] sm:$0xff]
    %v1790 = vld [vmem:[#allocation8 + $0x1d48] sm:$0xff]
    %v1791 = vld [vmem:[#allocation8 + $0x1d50] sm:$0xff]
    %v1792 = vld [vmem:[#allocation8 + $0x1d58] sm:$0xff]
    %v1793 = vld [vmem:[#allocation8 + $0x1d60] sm:$0xff]
    %v1794 = vld [vmem:[#allocation8 + $0x1d68] sm:$0xff]
    %v1795 = vld [vmem:[#allocation8 + $0x1d70] sm:$0xff]
    %v1796 = vld [vmem:[#allocation8 + $0x1d78] sm:$0xff]
    %v1797 = vld [vmem:[#allocation8 + $0x1d80] sm:$0xff]
    %v1798 = vld [vmem:[#allocation8 + $0x1d88] sm:$0xff]
    %v1799 = vld [vmem:[#allocation8 + $0x1d90] sm:$0xff]
    %v1800 = vld [vmem:[#allocation8 + $0x1d98] sm:$0xff]
    %v1801 = vld [vmem:[#allocation8 + $0x1da0] sm:$0xff]
    %v1802 = vld [vmem:[#allocation8 + $0x1da8] sm:$0xff]
    %v1803 = vld [vmem:[#allocation8 + $0x1db0] sm:$0xff]
    %v1804 = vld [vmem:[#allocation8 + $0x1db8] sm:$0xff]
    %v1805 = vld [vmem:[#allocation8 + $0x1dc0] sm:$0xff]
    %v1806 = vld [vmem:[#allocation8 + $0x1dc8] sm:$0xff]
    %v1807 = vld [vmem:[#allocation8 + $0x1dd0] sm:$0xff]
    %v1808 = vld [vmem:[#allocation8 + $0x1dd8] sm:$0xff]
    %v1809 = vld [vmem:[#allocation8 + $0x1de0] sm:$0xff]
    %v1810 = vld [vmem:[#allocation8 + $0x1de8] sm:$0xff]
    %v1811 = vld [vmem:[#allocation8 + $0x1df0] sm:$0xff]
    %v1812 = vld [vmem:[#allocation8 + $0x1df8] sm:$0xff]
    %v1813 = vld [vmem:[#allocation8 + $0x1e00] sm:$0xff]
    %v1814 = vld [vmem:[#allocation8 + $0x1e08] sm:$0xff]
    %v1815 = vld [vmem:[#allocation8 + $0x1e10] sm:$0xff]
    %v1816 = vld [vmem:[#allocation8 + $0x1e18] sm:$0xff]
    %v1817 = vld [vmem:[#allocation8 + $0x1e20] sm:$0xff]
    %v1818 = vld [vmem:[#allocation8 + $0x1e28] sm:$0xff]
    %v1819 = vld [vmem:[#allocation8 + $0x1e30] sm:$0xff]
    %v1820 = vld [vmem:[#allocation8 + $0x1e38] sm:$0xff]
    %v1821 = vld [vmem:[#allocation8 + $0x1e40] sm:$0xff]
    %v1822 = vld [vmem:[#allocation8 + $0x1e48] sm:$0xff]
    %v1823 = vld [vmem:[#allocation8 + $0x1e50] sm:$0xff]
    %v1824 = vld [vmem:[#allocation8 + $0x1e58] sm:$0xff]
    %v1825 = vld [vmem:[#allocation8 + $0x1e60] sm:$0xff]
    %v1826 = vld [vmem:[#allocation8 + $0x1e68] sm:$0xff]
    %v1827 = vld [vmem:[#allocation8 + $0x1e70] sm:$0xff]
    %v1828 = vld [vmem:[#allocation8 + $0x1e78] sm:$0xff]
    %v1829 = vld [vmem:[#allocation8 + $0x1e80] sm:$0xff]
    %v1830 = vld [vmem:[#allocation8 + $0x1e88] sm:$0xff]
    %v1831 = vld [vmem:[#allocation8 + $0x1e90] sm:$0xff]
    %v1832 = vld [vmem:[#allocation8 + $0x1e98] sm:$0xff]
    %v1833 = vld [vmem:[#allocation8 + $0x1ea0] sm:$0xff]
    %v1834 = vld [vmem:[#allocation8 + $0x1ea8] sm:$0xff]
    %v1835 = vld [vmem:[#allocation8 + $0x1eb0] sm:$0xff]
    %v1836 = vld [vmem:[#allocation8 + $0x1eb8] sm:$0xff]
    %v1837 = vld [vmem:[#allocation8 + $0x1ec0] sm:$0xff]
    %v1838 = vld [vmem:[#allocation8 + $0x1ec8] sm:$0xff]
    %v1839 = vld [vmem:[#allocation8 + $0x1ed0] sm:$0xff]
    %v1840 = vld [vmem:[#allocation8 + $0x1ed8] sm:$0xff]
    %v1841 = vld [vmem:[#allocation8 + $0x1ee0] sm:$0xff]
    %v1842 = vld [vmem:[#allocation8 + $0x1ee8] sm:$0xff]
    %v1843 = vld [vmem:[#allocation8 + $0x1ef0] sm:$0xff]
    %v1844 = vld [vmem:[#allocation8 + $0x1ef8] sm:$0xff]
    %v1845 = vld [vmem:[#allocation8 + $0x1f00] sm:$0xff]
    %v1846 = vld [vmem:[#allocation8 + $0x1f08] sm:$0xff]
    %v1847 = vld [vmem:[#allocation8 + $0x1f10] sm:$0xff]
    %v1848 = vld [vmem:[#allocation8 + $0x1f18] sm:$0xff]
    %v1849 = vld [vmem:[#allocation8 + $0x1f20] sm:$0xff]
    %v1850 = vld [vmem:[#allocation8 + $0x1f28] sm:$0xff]
    %v1851 = vld [vmem:[#allocation8 + $0x1f30] sm:$0xff]
    %v1852 = vld [vmem:[#allocation8 + $0x1f38] sm:$0xff]
    %v1853 = vld [vmem:[#allocation8 + $0x1f40] sm:$0xff]
    %v1854 = vld [vmem:[#allocation8 + $0x1f48] sm:$0xff]
    %v1855 = vld [vmem:[#allocation8 + $0x1f50] sm:$0xff]
    %v1856 = vld [vmem:[#allocation8 + $0x1f58] sm:$0xff]
    %v1857 = vld [vmem:[#allocation8 + $0x1f60] sm:$0xff]
    %v1858 = vld [vmem:[#allocation8 + $0x1f68] sm:$0xff]
    %v1859 = vld [vmem:[#allocation8 + $0x1f70] sm:$0xff]
    %v1860 = vld [vmem:[#allocation8 + $0x1f78] sm:$0xff]
    %v1861 = vld [vmem:[#allocation8 + $0x1f80] sm:$0xff]
    %v1862 = vld [vmem:[#allocation8 + $0x1f88] sm:$0xff]
    %v1863 = vld [vmem:[#allocation8 + $0x1f90] sm:$0xff]
    %v1864 = vld [vmem:[#allocation8 + $0x1f98] sm:$0xff]
    %v1865 = vld [vmem:[#allocation8 + $0x1fa0] sm:$0xff]
    %v1866 = vld [vmem:[#allocation8 + $0x1fa8] sm:$0xff]
    %v1867 = vld [vmem:[#allocation8 + $0x1fb0] sm:$0xff]
    %v1868 = vld [vmem:[#allocation8 + $0x1fb8] sm:$0xff]
    %v1869 = vld [vmem:[#allocation8 + $0x1fc0] sm:$0xff]
    %v1870 = vld [vmem:[#allocation8 + $0x1fc8] sm:$0xff]
    %v1871 = vld [vmem:[#allocation8 + $0x1fd0] sm:$0xff]
    %v1872 = vld [vmem:[#allocation8 + $0x1fd8] sm:$0xff]
    %v1873 = vld [vmem:[#allocation8 + $0x1fe0] sm:$0xff]
    %v1874 = vld [vmem:[#allocation8 + $0x1fe8] sm:$0xff]
    %v1875 = vld [vmem:[#allocation8 + $0x1ff0] sm:$0xff]
    %v1876 = vld [vmem:[#allocation8 + $0x1ff8] sm:$0xff]
    %v1877 = vld [vmem:[#allocation8 + $0x2000] sm:$0xff]
    %v1878 = vld [vmem:[#allocation8 + $0x2008] sm:$0xff]
    %v1879 = vld [vmem:[#allocation8 + $0x2010] sm:$0xff]
    %v1880 = vld [vmem:[#allocation8 + $0x2018] sm:$0xff]
    %v1881 = vld [vmem:[#allocation8 + $0x2020] sm:$0xff]
    %v1882 = vld [vmem:[#allocation8 + $0x2028] sm:$0xff]
    %v1883 = vld [vmem:[#allocation8 + $0x2030] sm:$0xff]
    %v1884 = vld [vmem:[#allocation8 + $0x2038] sm:$0xff]
    %v1885 = vld [vmem:[#allocation8 + $0x2040] sm:$0xff]
    %v1886 = vld [vmem:[#allocation8 + $0x2048] sm:$0xff]
    %v1887 = vld [vmem:[#allocation8 + $0x2050] sm:$0xff]
    %v1888 = vld [vmem:[#allocation8 + $0x2058] sm:$0xff]
    %v1889 = vld [vmem:[#allocation8 + $0x2060] sm:$0xff]
    %v1890 = vld [vmem:[#allocation8 + $0x2068] sm:$0xff]
    %v1891 = vld [vmem:[#allocation8 + $0x2070] sm:$0xff]
    %v1892 = vld [vmem:[#allocation8 + $0x2078] sm:$0xff]
    %v1893 = vld [vmem:[#allocation8 + $0x2080] sm:$0xff]
    %v1894 = vld [vmem:[#allocation8 + $0x2088] sm:$0xff]
    %v1895 = vld [vmem:[#allocation8 + $0x2090] sm:$0xff]
    %v1896 = vld [vmem:[#allocation8 + $0x2098] sm:$0xff]
    %v1897 = vld [vmem:[#allocation8 + $0x20a0] sm:$0xff]
    %v1898 = vld [vmem:[#allocation8 + $0x20a8] sm:$0xff]
    %v1899 = vld [vmem:[#allocation8 + $0x20b0] sm:$0xff]
    %v1900 = vld [vmem:[#allocation8 + $0x20b8] sm:$0xff]
    %v1901 = vld [vmem:[#allocation8 + $0x20c0] sm:$0xff]
    %v1902 = vld [vmem:[#allocation8 + $0x20c8] sm:$0xff]
    %v1903 = vld [vmem:[#allocation8 + $0x20d0] sm:$0xff]
    %v1904 = vld [vmem:[#allocation8 + $0x20d8] sm:$0xff]
    %v1905 = vld [vmem:[#allocation8 + $0x20e0] sm:$0xff]
    %v1906 = vld [vmem:[#allocation8 + $0x20e8] sm:$0xff]
    %v1907 = vld [vmem:[#allocation8 + $0x20f0] sm:$0xff]
    %v1908 = vld [vmem:[#allocation8 + $0x20f8] sm:$0xff]
    %v1909 = vld [vmem:[#allocation8 + $0x2100] sm:$0xff]
    %v1910 = vld [vmem:[#allocation8 + $0x2108] sm:$0xff]
    %v1911 = vld [vmem:[#allocation8 + $0x2110] sm:$0xff]
    %v1912 = vld [vmem:[#allocation8 + $0x2118] sm:$0xff]
    %v1913 = vld [vmem:[#allocation8 + $0x2120] sm:$0xff]
    %v1914 = vld [vmem:[#allocation8 + $0x2128] sm:$0xff]
    %v1915 = vld [vmem:[#allocation8 + $0x2130] sm:$0xff]
    %v1916 = vld [vmem:[#allocation8 + $0x2138] sm:$0xff]
    %v1917 = vld [vmem:[#allocation8 + $0x2140] sm:$0xff]
    %v1918 = vld [vmem:[#allocation8 + $0x2148] sm:$0xff]
    %v1919 = vld [vmem:[#allocation8 + $0x2150] sm:$0xff]
    %v1920 = vld [vmem:[#allocation8 + $0x2158] sm:$0xff]
    %v1921 = vld [vmem:[#allocation8 + $0x2160] sm:$0xff]
    %v1922 = vld [vmem:[#allocation8 + $0x2168] sm:$0xff]
    %v1923 = vld [vmem:[#allocation8 + $0x2170] sm:$0xff]
    %v1924 = vld [vmem:[#allocation8 + $0x2178] sm:$0xff]
    %v1925 = vld [vmem:[#allocation8 + $0x2180] sm:$0xff]
    %v1926 = vld [vmem:[#allocation8 + $0x2188] sm:$0xff]
    %v1927 = vld [vmem:[#allocation8 + $0x2190] sm:$0xff]
    %v1928 = vld [vmem:[#allocation8 + $0x2198] sm:$0xff]
    %v1929 = vld [vmem:[#allocation8 + $0x21a0] sm:$0xff]
    %v1930 = vld [vmem:[#allocation8 + $0x21a8] sm:$0xff]
    %v1931 = vld [vmem:[#allocation8 + $0x21b0] sm:$0xff]
    %v1932 = vld [vmem:[#allocation8 + $0x21b8] sm:$0xff]
    %v1933 = vld [vmem:[#allocation8 + $0x21c0] sm:$0xff]
    %v1934 = vld [vmem:[#allocation8 + $0x21c8] sm:$0xff]
    %v1935 = vld [vmem:[#allocation8 + $0x21d0] sm:$0xff]
    %v1936 = vld [vmem:[#allocation8 + $0x21d8] sm:$0xff]
    %v1937 = vld [vmem:[#allocation8 + $0x21e0] sm:$0xff]
    %v1938 = vld [vmem:[#allocation8 + $0x21e8] sm:$0xff]
    %v1939 = vld [vmem:[#allocation8 + $0x21f0] sm:$0xff]
    %v1940 = vld [vmem:[#allocation8 + $0x21f8] sm:$0xff]
    %v1941 = vld [vmem:[#allocation8 + $0x2200] sm:$0xff]
    %v1942 = vld [vmem:[#allocation8 + $0x2208] sm:$0xff]
    %v1943 = vld [vmem:[#allocation8 + $0x2210] sm:$0xff]
    %v1944 = vld [vmem:[#allocation8 + $0x2218] sm:$0xff]
    %v1945 = vld [vmem:[#allocation8 + $0x2220] sm:$0xff]
    %v1946 = vld [vmem:[#allocation8 + $0x2228] sm:$0xff]
    %v1947 = vld [vmem:[#allocation8 + $0x2230] sm:$0xff]
    %v1948 = vld [vmem:[#allocation8 + $0x2238] sm:$0xff]
    %v1949 = vld [vmem:[#allocation8 + $0x2240] sm:$0xff]
    %v1950 = vld [vmem:[#allocation8 + $0x2248] sm:$0xff]
    %v1951 = vld [vmem:[#allocation8 + $0x2250] sm:$0xff]
    %v1952 = vld [vmem:[#allocation8 + $0x2258] sm:$0xff]
    %v1953 = vld [vmem:[#allocation8 + $0x2260] sm:$0xff]
    %v1954 = vld [vmem:[#allocation8 + $0x2268] sm:$0xff]
    %v1955 = vld [vmem:[#allocation8 + $0x2270] sm:$0xff]
    %v1956 = vld [vmem:[#allocation8 + $0x2278] sm:$0xff]
    %v1957 = vld [vmem:[#allocation8 + $0x2280] sm:$0xff]
    %v1958 = vld [vmem:[#allocation8 + $0x2288] sm:$0xff]
    %v1959 = vld [vmem:[#allocation8 + $0x2290] sm:$0xff]
    %v1960 = vld [vmem:[#allocation8 + $0x2298] sm:$0xff]
    %v1961 = vld [vmem:[#allocation8 + $0x22a0] sm:$0xff]
    %v1962 = vld [vmem:[#allocation8 + $0x22a8] sm:$0xff]
    %v1963 = vld [vmem:[#allocation8 + $0x22b0] sm:$0xff]
    %v1964 = vld [vmem:[#allocation8 + $0x22b8] sm:$0xff]
    %v1965 = vld [vmem:[#allocation8 + $0x22c0] sm:$0xff]
    %v1966 = vld [vmem:[#allocation8 + $0x22c8] sm:$0xff]
    %v1967 = vld [vmem:[#allocation8 + $0x22d0] sm:$0xff]
    %v1968 = vld [vmem:[#allocation8 + $0x22d8] sm:$0xff]
    %v1969 = vld [vmem:[#allocation8 + $0x22e0] sm:$0xff]
    %v1970 = vld [vmem:[#allocation8 + $0x22e8] sm:$0xff]
    %v1971 = vld [vmem:[#allocation8 + $0x22f0] sm:$0xff]
    %v1972 = vld [vmem:[#allocation8 + $0x22f8] sm:$0xff]
    %v1973 = vld [vmem:[#allocation8 + $0x2300] sm:$0xff]
    %v1974 = vld [vmem:[#allocation8 + $0x2308] sm:$0xff]
    %v1975 = vld [vmem:[#allocation8 + $0x2310] sm:$0xff]
    %v1976 = vld [vmem:[#allocation8 + $0x2318] sm:$0xff]
    %v1977 = vld [vmem:[#allocation8 + $0x2320] sm:$0xff]
    %v1978 = vld [vmem:[#allocation8 + $0x2328] sm:$0xff]
    %v1979 = vld [vmem:[#allocation8 + $0x2330] sm:$0xff]
    %v1980 = vld [vmem:[#allocation8 + $0x2338] sm:$0xff]
    %v1981 = vld [vmem:[#allocation8 + $0x2340] sm:$0xff]
    %v1982 = vld [vmem:[#allocation8 + $0x2348] sm:$0xff]
    %v1983 = vld [vmem:[#allocation8 + $0x2350] sm:$0xff]
    %v1984 = vld [vmem:[#allocation8 + $0x2358] sm:$0xff]
    %v1985 = vld [vmem:[#allocation8 + $0x2360] sm:$0xff]
    %v1986 = vld [vmem:[#allocation8 + $0x2368] sm:$0xff]
    %v1987 = vld [vmem:[#allocation8 + $0x2370] sm:$0xff]
    %v1988 = vld [vmem:[#allocation8 + $0x2378] sm:$0xff]
    %v1989 = vld [vmem:[#allocation8 + $0x2380] sm:$0xff]
    %v1990 = vld [vmem:[#allocation8 + $0x2388] sm:$0xff]
    %v1991 = vld [vmem:[#allocation8 + $0x2390] sm:$0xff]
    %v1992 = vld [vmem:[#allocation8 + $0x2398] sm:$0xff]
    %v1993 = vld [vmem:[#allocation8 + $0x23a0] sm:$0xff]
    %v1994 = vld [vmem:[#allocation8 + $0x23a8] sm:$0xff]
    %v1995 = vld [vmem:[#allocation8 + $0x23b0] sm:$0xff]
    %v1996 = vld [vmem:[#allocation8 + $0x23b8] sm:$0xff]
    %v1997 = vld [vmem:[#allocation8 + $0x23c0] sm:$0xff]
    %v1998 = vld [vmem:[#allocation8 + $0x23c8] sm:$0xff]
    %v1999 = vld [vmem:[#allocation8 + $0x23d0] sm:$0xff]
    %v2000 = vld [vmem:[#allocation8 + $0x23d8] sm:$0xff]
    %v2001 = vld [vmem:[#allocation8 + $0x23e0] sm:$0xff]
    %v2002 = vld [vmem:[#allocation8 + $0x23e8] sm:$0xff]
    %v2003 = vld [vmem:[#allocation8 + $0x23f0] sm:$0xff]
    %v2004 = vld [vmem:[#allocation8 + $0x23f8] sm:$0xff]
    %v2005 = vld [vmem:[#allocation8 + $0x2400] sm:$0xff]
    %v2006 = vld [vmem:[#allocation8 + $0x2408] sm:$0xff]
    %v2007 = vld [vmem:[#allocation8 + $0x2410] sm:$0xff]
    %v2008 = vld [vmem:[#allocation8 + $0x2418] sm:$0xff]
    %v2009 = vld [vmem:[#allocation8 + $0x2420] sm:$0xff]
    %v2010 = vld [vmem:[#allocation8 + $0x2428] sm:$0xff]
    %v2011 = vld [vmem:[#allocation8 + $0x2430] sm:$0xff]
    %v2012 = vld [vmem:[#allocation8 + $0x2438] sm:$0xff]
    %v2013 = vld [vmem:[#allocation8 + $0x2440] sm:$0xff]
    %v2014 = vld [vmem:[#allocation8 + $0x2448] sm:$0xff]
    %v2015 = vld [vmem:[#allocation8 + $0x2450] sm:$0xff]
    %v2016 = vld [vmem:[#allocation8 + $0x2458] sm:$0xff]
    %v2017 = vld [vmem:[#allocation8 + $0x2460] sm:$0xff]
    %v2018 = vld [vmem:[#allocation8 + $0x2468] sm:$0xff]
    %v2019 = vld [vmem:[#allocation8 + $0x2470] sm:$0xff]
    %v2020 = vld [vmem:[#allocation8 + $0x2478] sm:$0xff]
    %v2021 = vld [vmem:[#allocation8 + $0x2480] sm:$0xff]
    %v2022 = vld [vmem:[#allocation8 + $0x2488] sm:$0xff]
    %v2023 = vld [vmem:[#allocation8 + $0x2490] sm:$0xff]
    %v2024 = vld [vmem:[#allocation8 + $0x2498] sm:$0xff]
    %v2025 = vld [vmem:[#allocation8 + $0x24a0] sm:$0xff]
    %v2026 = vld [vmem:[#allocation8 + $0x24a8] sm:$0xff]
    %v2027 = vld [vmem:[#allocation8 + $0x24b0] sm:$0xff]
    %v2028 = vld [vmem:[#allocation8 + $0x24b8] sm:$0xff]
    %v2029 = vld [vmem:[#allocation8 + $0x24c0] sm:$0xff]
    %v2030 = vld [vmem:[#allocation8 + $0x24c8] sm:$0xff]
    %v2031 = vld [vmem:[#allocation8 + $0x24d0] sm:$0xff]
    %v2032 = vld [vmem:[#allocation8 + $0x24d8] sm:$0xff]
    %v2033 = vld [vmem:[#allocation8 + $0x24e0] sm:$0xff]
    %v2034 = vld [vmem:[#allocation8 + $0x24e8] sm:$0xff]
    %v2035 = vld [vmem:[#allocation8 + $0x24f0] sm:$0xff]
    %v2036 = vld [vmem:[#allocation8 + $0x24f8] sm:$0xff]
    %v2037 = vld [vmem:[#allocation8 + $0x2500] sm:$0xff]
    %v2038 = vld [vmem:[#allocation8 + $0x2508] sm:$0xff]
    %v2039 = vld [vmem:[#allocation8 + $0x2510] sm:$0xff]
    %v2040 = vld [vmem:[#allocation8 + $0x2518] sm:$0xff]
    %v2041 = vld [vmem:[#allocation8 + $0x2520] sm:$0xff]
    %v2042 = vld [vmem:[#allocation8 + $0x2528] sm:$0xff]
    %v2043 = vld [vmem:[#allocation8 + $0x2530] sm:$0xff]
    %v2044 = vld [vmem:[#allocation8 + $0x2538] sm:$0xff]
    %v2045 = vld [vmem:[#allocation8 + $0x2540] sm:$0xff]
    %v2046 = vld [vmem:[#allocation8 + $0x2548] sm:$0xff]
    %v2047 = vld [vmem:[#allocation8 + $0x2550] sm:$0xff]
    %v2048 = vld [vmem:[#allocation8 + $0x2558] sm:$0xff]
    %v2049 = vld [vmem:[#allocation8 + $0x2560] sm:$0xff]
    %v2050 = vld [vmem:[#allocation8 + $0x2568] sm:$0xff]
    %v2051 = vld [vmem:[#allocation8 + $0x2570] sm:$0xff]
    %v2052 = vld [vmem:[#allocation8 + $0x2578] sm:$0xff]
    %v2053 = vld [vmem:[#allocation8 + $0x2580] sm:$0xff]
    %v2054 = vld [vmem:[#allocation8 + $0x2588] sm:$0xff]
    %v2055 = vld [vmem:[#allocation8 + $0x2590] sm:$0xff]
    %v2056 = vld [vmem:[#allocation8 + $0x2598] sm:$0xff]
    %v2057 = vld [vmem:[#allocation8 + $0x25a0] sm:$0xff]
    %v2058 = vld [vmem:[#allocation8 + $0x25a8] sm:$0xff]
    %v2059 = vld [vmem:[#allocation8 + $0x25b0] sm:$0xff]
    %v2060 = vld [vmem:[#allocation8 + $0x25b8] sm:$0xff]
    %v2061 = vld [vmem:[#allocation8 + $0x25c0] sm:$0xff]
    %v2062 = vld [vmem:[#allocation8 + $0x25c8] sm:$0xff]
    %v2063 = vld [vmem:[#allocation8 + $0x25d0] sm:$0xff]
    %v2064 = vld [vmem:[#allocation8 + $0x25d8] sm:$0xff]
    %v2065 = vld [vmem:[#allocation8 + $0x25e0] sm:$0xff]
    %v2066 = vld [vmem:[#allocation8 + $0x25e8] sm:$0xff]
    %v2067 = vld [vmem:[#allocation8 + $0x25f0] sm:$0xff]
    %v2068 = vld [vmem:[#allocation8 + $0x25f8] sm:$0xff]
    %v2069 = vld [vmem:[#allocation8 + $0x2600] sm:$0xff]
    %v2070 = vld [vmem:[#allocation8 + $0x2608] sm:$0xff]
    %v2071 = vld [vmem:[#allocation8 + $0x2610] sm:$0xff]
    %v2072 = vld [vmem:[#allocation8 + $0x2618] sm:$0xff]
    %v2073 = vld [vmem:[#allocation8 + $0x2620] sm:$0xff]
    %v2074 = vld [vmem:[#allocation8 + $0x2628] sm:$0xff]
    %v2075 = vld [vmem:[#allocation8 + $0x2630] sm:$0xff]
    %v2076 = vld [vmem:[#allocation8 + $0x2638] sm:$0xff]
    %v2077 = vld [vmem:[#allocation8 + $0x2640] sm:$0xff]
    %v2078 = vld [vmem:[#allocation8 + $0x2648] sm:$0xff]
    %v2079 = vld [vmem:[#allocation8 + $0x2650] sm:$0xff]
    %v2080 = vld [vmem:[#allocation8 + $0x2658] sm:$0xff]
    %v2081 = vld [vmem:[#allocation8 + $0x2660] sm:$0xff]
    %v2082 = vld [vmem:[#allocation8 + $0x2668] sm:$0xff]
    %v2083 = vld [vmem:[#allocation8 + $0x2670] sm:$0xff]
    %v2084 = vld [vmem:[#allocation8 + $0x2678] sm:$0xff]
    %v2085 = vld [vmem:[#allocation8 + $0x2680] sm:$0xff]
    %v2086 = vld [vmem:[#allocation8 + $0x2688] sm:$0xff]
    %v2087 = vld [vmem:[#allocation8 + $0x2690] sm:$0xff]
    %v2088 = vld [vmem:[#allocation8 + $0x2698] sm:$0xff]
    %v2089 = vld [vmem:[#allocation8 + $0x26a0] sm:$0xff]
    %v2090 = vld [vmem:[#allocation8 + $0x26a8] sm:$0xff]
    %v2091 = vld [vmem:[#allocation8 + $0x26b0] sm:$0xff]
    %v2092 = vld [vmem:[#allocation8 + $0x26b8] sm:$0xff]
    %v2093 = vld [vmem:[#allocation8 + $0x26c0] sm:$0xff]
    %v2094 = vld [vmem:[#allocation8 + $0x26c8] sm:$0xff]
    %v2095 = vld [vmem:[#allocation8 + $0x26d0] sm:$0xff]
    %v2096 = vld [vmem:[#allocation8 + $0x26d8] sm:$0xff]
    %v2097 = vld [vmem:[#allocation8 + $0x26e0] sm:$0xff]
    %v2098 = vld [vmem:[#allocation8 + $0x26e8] sm:$0xff]
    %v2099 = vld [vmem:[#allocation8 + $0x26f0] sm:$0xff]
    %v2100 = vld [vmem:[#allocation8 + $0x26f8] sm:$0xff]
    %v2101 = vld [vmem:[#allocation8 + $0x2700] sm:$0xff]
    %v2102 = vld [vmem:[#allocation8 + $0x2708] sm:$0xff]
    %v2103 = vld [vmem:[#allocation8 + $0x2710] sm:$0xff]
    %v2104 = vld [vmem:[#allocation8 + $0x2718] sm:$0xff]
    %v2105 = vld [vmem:[#allocation8 + $0x2720] sm:$0xff]
    %v2106 = vld [vmem:[#allocation8 + $0x2728] sm:$0xff]
    %v2107 = vld [vmem:[#allocation8 + $0x2730] sm:$0xff]
    %v2108 = vld [vmem:[#allocation8 + $0x2738] sm:$0xff]
    %v2109 = vld [vmem:[#allocation8 + $0x2740] sm:$0xff]
    %v2110 = vld [vmem:[#allocation8 + $0x2748] sm:$0xff]
    %v2111 = vld [vmem:[#allocation8 + $0x2750] sm:$0xff]
    %v2112 = vld [vmem:[#allocation8 + $0x2758] sm:$0xff]
    %v2113 = vld [vmem:[#allocation8 + $0x2760] sm:$0xff]
    %v2114 = vld [vmem:[#allocation8 + $0x2768] sm:$0xff]
    %v2115 = vld [vmem:[#allocation8 + $0x2770] sm:$0xff]
    %v2116 = vld [vmem:[#allocation8 + $0x2778] sm:$0xff]
    %v2117 = vld [vmem:[#allocation8 + $0x2780] sm:$0xff]
    %v2118 = vld [vmem:[#allocation8 + $0x2788] sm:$0xff]
    %v2119 = vld [vmem:[#allocation8 + $0x2790] sm:$0xff]
    %v2120 = vld [vmem:[#allocation8 + $0x2798] sm:$0xff]
    %v2121 = vld [vmem:[#allocation8 + $0x27a0] sm:$0xff]
    %v2122 = vld [vmem:[#allocation8 + $0x27a8] sm:$0xff]
    %v2123 = vld [vmem:[#allocation8 + $0x27b0] sm:$0xff]
    %v2124 = vld [vmem:[#allocation8 + $0x27b8] sm:$0xff]
    %v2125 = vld [vmem:[#allocation8 + $0x27c0] sm:$0xff]
    %v2126 = vld [vmem:[#allocation8 + $0x27c8] sm:$0xff]
    %v2127 = vld [vmem:[#allocation8 + $0x27d0] sm:$0xff]
    %v2128 = vld [vmem:[#allocation8 + $0x27d8] sm:$0xff]
    %v2129 = vld [vmem:[#allocation8 + $0x27e0] sm:$0xff]
    %v2130 = vld [vmem:[#allocation8 + $0x27e8] sm:$0xff]
    %v2131 = vld [vmem:[#allocation8 + $0x27f0] sm:$0xff]
    %v2132 = vld [vmem:[#allocation8 + $0x27f8] sm:$0xff]
    %v2133 = vld [vmem:[#allocation8 + $0x2800] sm:$0xff]
    %v2134 = vld [vmem:[#allocation8 + $0x2808] sm:$0xff]
    %v2135 = vld [vmem:[#allocation8 + $0x2810] sm:$0xff]
    %v2136 = vld [vmem:[#allocation8 + $0x2818] sm:$0xff]
    %v2137 = vld [vmem:[#allocation8 + $0x2820] sm:$0xff]
    %v2138 = vld [vmem:[#allocation8 + $0x2828] sm:$0xff]
    %v2139 = vld [vmem:[#allocation8 + $0x2830] sm:$0xff]
    %v2140 = vld [vmem:[#allocation8 + $0x2838] sm:$0xff]
    %v2141 = vld [vmem:[#allocation8 + $0x2840] sm:$0xff]
    %v2142 = vld [vmem:[#allocation8 + $0x2848] sm:$0xff]
    %v2143 = vld [vmem:[#allocation8 + $0x2850] sm:$0xff]
    %v2144 = vld [vmem:[#allocation8 + $0x2858] sm:$0xff]
    %v2145 = vld [vmem:[#allocation8 + $0x2860] sm:$0xff]
    %v2146 = vld [vmem:[#allocation8 + $0x2868] sm:$0xff]
    %v2147 = vld [vmem:[#allocation8 + $0x2870] sm:$0xff]
    %v2148 = vld [vmem:[#allocation8 + $0x2878] sm:$0xff]
    %v2149 = vld [vmem:[#allocation8 + $0x2880] sm:$0xff]
    %v2150 = vld [vmem:[#allocation8 + $0x2888] sm:$0xff]
    %v2151 = vld [vmem:[#allocation8 + $0x2890] sm:$0xff]
    %v2152 = vld [vmem:[#allocation8 + $0x2898] sm:$0xff]
    %v2153 = vld [vmem:[#allocation8 + $0x28a0] sm:$0xff]
    %v2154 = vld [vmem:[#allocation8 + $0x28a8] sm:$0xff]
    %v2155 = vld [vmem:[#allocation8 + $0x28b0] sm:$0xff]
    %v2156 = vld [vmem:[#allocation8 + $0x28b8] sm:$0xff]
    %v2157 = vld [vmem:[#allocation8 + $0x28c0] sm:$0xff]
    %v2158 = vld [vmem:[#allocation8 + $0x28c8] sm:$0xff]
    %v2159 = vld [vmem:[#allocation8 + $0x28d0] sm:$0xff]
    %v2160 = vld [vmem:[#allocation8 + $0x28d8] sm:$0xff]
    %v2161 = vld [vmem:[#allocation8 + $0x28e0] sm:$0xff]
    %v2162 = vld [vmem:[#allocation8 + $0x28e8] sm:$0xff]
    %v2163 = vld [vmem:[#allocation8 + $0x28f0] sm:$0xff]
    %v2164 = vld [vmem:[#allocation8 + $0x28f8] sm:$0xff]
    %v2165 = vld [vmem:[#allocation8 + $0x2900] sm:$0xff]
    %v2166 = vld [vmem:[#allocation8 + $0x2908] sm:$0xff]
    %v2167 = vld [vmem:[#allocation8 + $0x2910] sm:$0xff]
    %v2168 = vld [vmem:[#allocation8 + $0x2918] sm:$0xff]
    %v2169 = vld [vmem:[#allocation8 + $0x2920] sm:$0xff]
    %v2170 = vld [vmem:[#allocation8 + $0x2928] sm:$0xff]
    %v2171 = vld [vmem:[#allocation8 + $0x2930] sm:$0xff]
    %v2172 = vld [vmem:[#allocation8 + $0x2938] sm:$0xff]
    %v2173 = vld [vmem:[#allocation8 + $0x2940] sm:$0xff]
    %v2174 = vld [vmem:[#allocation8 + $0x2948] sm:$0xff]
    %v2175 = vld [vmem:[#allocation8 + $0x2950] sm:$0xff]
    %v2176 = vld [vmem:[#allocation8 + $0x2958] sm:$0xff]
    %v2177 = vld [vmem:[#allocation8 + $0x2960] sm:$0xff]
    %v2178 = vld [vmem:[#allocation8 + $0x2968] sm:$0xff]
    %v2179 = vld [vmem:[#allocation8 + $0x2970] sm:$0xff]
    %v2180 = vld [vmem:[#allocation8 + $0x2978] sm:$0xff]
    %v2181 = vld [vmem:[#allocation8 + $0x2980] sm:$0xff]
    %v2182 = vld [vmem:[#allocation8 + $0x2988] sm:$0xff]
    %v2183 = vld [vmem:[#allocation8 + $0x2990] sm:$0xff]
    %v2184 = vld [vmem:[#allocation8 + $0x2998] sm:$0xff]
    %v2185 = vld [vmem:[#allocation8 + $0x29a0] sm:$0xff]
    %v2186 = vld [vmem:[#allocation8 + $0x29a8] sm:$0xff]
    %v2187 = vld [vmem:[#allocation8 + $0x29b0] sm:$0xff]
    %v2188 = vld [vmem:[#allocation8 + $0x29b8] sm:$0xff]
    %v2189 = vld [vmem:[#allocation8 + $0x29c0] sm:$0xff]
    %v2190 = vld [vmem:[#allocation8 + $0x29c8] sm:$0xff]
    %v2191 = vld [vmem:[#allocation8 + $0x29d0] sm:$0xff]
    %v2192 = vld [vmem:[#allocation8 + $0x29d8] sm:$0xff]
    %v2193 = vld [vmem:[#allocation8 + $0x29e0] sm:$0xff]
    %v2194 = vld [vmem:[#allocation8 + $0x29e8] sm:$0xff]
    %v2195 = vld [vmem:[#allocation8 + $0x29f0] sm:$0xff]
    %v2196 = vld [vmem:[#allocation8 + $0x29f8] sm:$0xff]
    %v2197 = vld [vmem:[#allocation8 + $0x2a00] sm:$0xff]
    %v2198 = vld [vmem:[#allocation8 + $0x2a08] sm:$0xff]
    %v2199 = vld [vmem:[#allocation8 + $0x2a10] sm:$0xff]
    %v2200 = vld [vmem:[#allocation8 + $0x2a18] sm:$0xff]
    %v2201 = vld [vmem:[#allocation8 + $0x2a20] sm:$0xff]
    %v2202 = vld [vmem:[#allocation8 + $0x2a28] sm:$0xff]
    %v2203 = vld [vmem:[#allocation8 + $0x2a30] sm:$0xff]
    %v2204 = vld [vmem:[#allocation8 + $0x2a38] sm:$0xff]
    %v2205 = vld [vmem:[#allocation8 + $0x2a40] sm:$0xff]
    %v2206 = vld [vmem:[#allocation8 + $0x2a48] sm:$0xff]
    %v2207 = vld [vmem:[#allocation8 + $0x2a50] sm:$0xff]
    %v2208 = vld [vmem:[#allocation8 + $0x2a58] sm:$0xff]
    %v2209 = vld [vmem:[#allocation8 + $0x2a60] sm:$0xff]
    %v2210 = vld [vmem:[#allocation8 + $0x2a68] sm:$0xff]
    %v2211 = vld [vmem:[#allocation8 + $0x2a70] sm:$0xff]
    %v2212 = vld [vmem:[#allocation8 + $0x2a78] sm:$0xff]
    %v2213 = vld [vmem:[#allocation8 + $0x2a80] sm:$0xff]
    %v2214 = vld [vmem:[#allocation8 + $0x2a88] sm:$0xff]
    %v2215 = vld [vmem:[#allocation8 + $0x2a90] sm:$0xff]
    %v2216 = vld [vmem:[#allocation8 + $0x2a98] sm:$0xff]
    %v2217 = vld [vmem:[#allocation8 + $0x2aa0] sm:$0xff]
    %v2218 = vld [vmem:[#allocation8 + $0x2aa8] sm:$0xff]
    %v2219 = vld [vmem:[#allocation8 + $0x2ab0] sm:$0xff]
    %v2220 = vld [vmem:[#allocation8 + $0x2ab8] sm:$0xff]
    %v2221 = vld [vmem:[#allocation8 + $0x2ac0] sm:$0xff]
    %v2222 = vld [vmem:[#allocation8 + $0x2ac8] sm:$0xff]
    %v2223 = vld [vmem:[#allocation8 + $0x2ad0] sm:$0xff]
    %v2224 = vld [vmem:[#allocation8 + $0x2ad8] sm:$0xff]
    %v2225 = vld [vmem:[#allocation8 + $0x2ae0] sm:$0xff]
    %v2226 = vld [vmem:[#allocation8 + $0x2ae8] sm:$0xff]
    %v2227 = vld [vmem:[#allocation8 + $0x2af0] sm:$0xff]
    %v2228 = vld [vmem:[#allocation8 + $0x2af8] sm:$0xff]
    %v2229 = vld [vmem:[#allocation8 + $0x2b00] sm:$0xff]
    %v2230 = vld [vmem:[#allocation8 + $0x2b08] sm:$0xff]
    %v2231 = vld [vmem:[#allocation8 + $0x2b10] sm:$0xff]
    %v2232 = vld [vmem:[#allocation8 + $0x2b18] sm:$0xff]
    %v2233 = vld [vmem:[#allocation8 + $0x2b20] sm:$0xff]
    %v2234 = vld [vmem:[#allocation8 + $0x2b28] sm:$0xff]
    %v2235 = vld [vmem:[#allocation8 + $0x2b30] sm:$0xff]
    %v2236 = vld [vmem:[#allocation8 + $0x2b38] sm:$0xff]
    %v2237 = vld [vmem:[#allocation8 + $0x2b40] sm:$0xff]
    %v2238 = vld [vmem:[#allocation8 + $0x2b48] sm:$0xff]
    %v2239 = vld [vmem:[#allocation8 + $0x2b50] sm:$0xff]
    %v2240 = vld [vmem:[#allocation8 + $0x2b58] sm:$0xff]
    %v2241 = vld [vmem:[#allocation8 + $0x2b60] sm:$0xff]
    %v2242 = vld [vmem:[#allocation8 + $0x2b68] sm:$0xff]
    %v2243 = vld [vmem:[#allocation8 + $0x2b70] sm:$0xff]
    %v2244 = vld [vmem:[#allocation8 + $0x2b78] sm:$0xff]
    %v2245 = vld [vmem:[#allocation8 + $0x2b80] sm:$0xff]
    %v2246 = vld [vmem:[#allocation8 + $0x2b88] sm:$0xff]
    %v2247 = vld [vmem:[#allocation8 + $0x2b90] sm:$0xff]
    %v2248 = vld [vmem:[#allocation8 + $0x2b98] sm:$0xff]
    %v2249 = vld [vmem:[#allocation8 + $0x2ba0] sm:$0xff]
    %v2250 = vld [vmem:[#allocation8 + $0x2ba8] sm:$0xff]
    %v2251 = vld [vmem:[#allocation8 + $0x2bb0] sm:$0xff]
    %v2252 = vld [vmem:[#allocation8 + $0x2bb8] sm:$0xff]
    %v2253 = vld [vmem:[#allocation8 + $0x2bc0] sm:$0xff]
    %v2254 = vld [vmem:[#allocation8 + $0x2bc8] sm:$0xff]
    %v2255 = vld [vmem:[#allocation8 + $0x2bd0] sm:$0xff]
    %v2256 = vld [vmem:[#allocation8 + $0x2bd8] sm:$0xff]
    %v2257 = vld [vmem:[#allocation8 + $0x2be0] sm:$0xff]
    %v2258 = vld [vmem:[#allocation8 + $0x2be8] sm:$0xff]
    %v2259 = vld [vmem:[#allocation8 + $0x2bf0] sm:$0xff]
    %v2260 = vld [vmem:[#allocation8 + $0x2bf8] sm:$0xff]
    %v2261 = vld [vmem:[#allocation8 + $0x2c00] sm:$0xff]
    %v2262 = vld [vmem:[#allocation8 + $0x2c08] sm:$0xff]
    %v2263 = vld [vmem:[#allocation8 + $0x2c10] sm:$0xff]
    %v2264 = vld [vmem:[#allocation8 + $0x2c18] sm:$0xff]
    %v2265 = vld [vmem:[#allocation8 + $0x2c20] sm:$0xff]
    %v2266 = vld [vmem:[#allocation8 + $0x2c28] sm:$0xff]
    %v2267 = vld [vmem:[#allocation8 + $0x2c30] sm:$0xff]
    %v2268 = vld [vmem:[#allocation8 + $0x2c38] sm:$0xff]
    %v2269 = vld [vmem:[#allocation8 + $0x2c40] sm:$0xff]
    %v2270 = vld [vmem:[#allocation8 + $0x2c48] sm:$0xff]
    %v2271 = vld [vmem:[#allocation8 + $0x2c50] sm:$0xff]
    %v2272 = vld [vmem:[#allocation8 + $0x2c58] sm:$0xff]
    %v2273 = vld [vmem:[#allocation8 + $0x2c60] sm:$0xff]
    %v2274 = vld [vmem:[#allocation8 + $0x2c68] sm:$0xff]
    %v2275 = vld [vmem:[#allocation8 + $0x2c70] sm:$0xff]
    %v2276 = vld [vmem:[#allocation8 + $0x2c78] sm:$0xff]
    %v2277 = vld [vmem:[#allocation8 + $0x2c80] sm:$0xff]
    %v2278 = vld [vmem:[#allocation8 + $0x2c88] sm:$0xff]
    %v2279 = vld [vmem:[#allocation8 + $0x2c90] sm:$0xff]
    %v2280 = vld [vmem:[#allocation8 + $0x2c98] sm:$0xff]
    %v2281 = vld [vmem:[#allocation8 + $0x2ca0] sm:$0xff]
    %v2282 = vld [vmem:[#allocation8 + $0x2ca8] sm:$0xff]
    %v2283 = vld [vmem:[#allocation8 + $0x2cb0] sm:$0xff]
    %v2284 = vld [vmem:[#allocation8 + $0x2cb8] sm:$0xff]
    %v2285 = vld [vmem:[#allocation8 + $0x2cc0] sm:$0xff]
    %v2286 = vld [vmem:[#allocation8 + $0x2cc8] sm:$0xff]
    %v2287 = vld [vmem:[#allocation8 + $0x2cd0] sm:$0xff]
    %v2288 = vld [vmem:[#allocation8 + $0x2cd8] sm:$0xff]
    %v2289 = vld [vmem:[#allocation8 + $0x2ce0] sm:$0xff]
    %v2290 = vld [vmem:[#allocation8 + $0x2ce8] sm:$0xff]
    %v2291 = vld [vmem:[#allocation8 + $0x2cf0] sm:$0xff]
    %v2292 = vld [vmem:[#allocation8 + $0x2cf8] sm:$0xff]
    %v2293 = vld [vmem:[#allocation8 + $0x2d00] sm:$0xff]
    %v2294 = vld [vmem:[#allocation8 + $0x2d08] sm:$0xff]
    %v2295 = vld [vmem:[#allocation8 + $0x2d10] sm:$0xff]
    %v2296 = vld [vmem:[#allocation8 + $0x2d18] sm:$0xff]
    %v2297 = vld [vmem:[#allocation8 + $0x2d20] sm:$0xff]
    %v2298 = vld [vmem:[#allocation8 + $0x2d28] sm:$0xff]
    %v2299 = vld [vmem:[#allocation8 + $0x2d30] sm:$0xff]
    %v2300 = vld [vmem:[#allocation8 + $0x2d38] sm:$0xff]
    %v2301 = vld [vmem:[#allocation8 + $0x2d40] sm:$0xff]
    %v2302 = vld [vmem:[#allocation8 + $0x2d48] sm:$0xff]
    %v2303 = vld [vmem:[#allocation8 + $0x2d50] sm:$0xff]
    %v2304 = vld [vmem:[#allocation8 + $0x2d58] sm:$0xff]
    %v2305 = vld [vmem:[#allocation8 + $0x2d60] sm:$0xff]
    %v2306 = vld [vmem:[#allocation8 + $0x2d68] sm:$0xff]
    %v2307 = vld [vmem:[#allocation8 + $0x2d70] sm:$0xff]
    %v2308 = vld [vmem:[#allocation8 + $0x2d78] sm:$0xff]
    %v2309 = vld [vmem:[#allocation8 + $0x2d80] sm:$0xff]
    %v2310 = vld [vmem:[#allocation8 + $0x2d88] sm:$0xff]
    %v2311 = vld [vmem:[#allocation8 + $0x2d90] sm:$0xff]
    %v2312 = vld [vmem:[#allocation8 + $0x2d98] sm:$0xff]
    %v2313 = vld [vmem:[#allocation8 + $0x2da0] sm:$0xff]
    %v2314 = vld [vmem:[#allocation8 + $0x2da8] sm:$0xff]
    %v2315 = vld [vmem:[#allocation8 + $0x2db0] sm:$0xff]
    %v2316 = vld [vmem:[#allocation8 + $0x2db8] sm:$0xff]
    %v2317 = vld [vmem:[#allocation8 + $0x2dc0] sm:$0xff]
    %v2318 = vld [vmem:[#allocation8 + $0x2dc8] sm:$0xff]
    %v2319 = vld [vmem:[#allocation8 + $0x2dd0] sm:$0xff]
    %v2320 = vld [vmem:[#allocation8 + $0x2dd8] sm:$0xff]
    %v2321 = vld [vmem:[#allocation8 + $0x2de0] sm:$0xff]
    %v2322 = vld [vmem:[#allocation8 + $0x2de8] sm:$0xff]
    %v2323 = vld [vmem:[#allocation8 + $0x2df0] sm:$0xff]
    %v2324 = vld [vmem:[#allocation8 + $0x2df8] sm:$0xff]
    %v2325 = vld [vmem:[#allocation8 + $0x2e00] sm:$0xff]
    %v2326 = vld [vmem:[#allocation8 + $0x2e08] sm:$0xff]
    %v2327 = vld [vmem:[#allocation8 + $0x2e10] sm:$0xff]
    %v2328 = vld [vmem:[#allocation8 + $0x2e18] sm:$0xff]
    %v2329 = vld [vmem:[#allocation8 + $0x2e20] sm:$0xff]
    %v2330 = vld [vmem:[#allocation8 + $0x2e28] sm:$0xff]
    %v2331 = vld [vmem:[#allocation8 + $0x2e30] sm:$0xff]
    %v2332 = vld [vmem:[#allocation8 + $0x2e38] sm:$0xff]
    %v2333 = vld [vmem:[#allocation8 + $0x2e40] sm:$0xff]
    %v2334 = vld [vmem:[#allocation8 + $0x2e48] sm:$0xff]
    %v2335 = vld [vmem:[#allocation8 + $0x2e50] sm:$0xff]
    %v2336 = vld [vmem:[#allocation8 + $0x2e58] sm:$0xff]
    %v2337 = vld [vmem:[#allocation8 + $0x2e60] sm:$0xff]
    %v2338 = vld [vmem:[#allocation8 + $0x2e68] sm:$0xff]
    %v2339 = vld [vmem:[#allocation8 + $0x2e70] sm:$0xff]
    %v2340 = vld [vmem:[#allocation8 + $0x2e78] sm:$0xff]
    %v2341 = vld [vmem:[#allocation8 + $0x2e80] sm:$0xff]
    %v2342 = vld [vmem:[#allocation8 + $0x2e88] sm:$0xff]
    %v2343 = vld [vmem:[#allocation8 + $0x2e90] sm:$0xff]
    %v2344 = vld [vmem:[#allocation8 + $0x2e98] sm:$0xff]
    %v2345 = vld [vmem:[#allocation8 + $0x2ea0] sm:$0xff]
    %v2346 = vld [vmem:[#allocation8 + $0x2ea8] sm:$0xff]
    %v2347 = vld [vmem:[#allocation8 + $0x2eb0] sm:$0xff]
    %v2348 = vld [vmem:[#allocation8 + $0x2eb8] sm:$0xff]
    %v2349 = vld [vmem:[#allocation8 + $0x2ec0] sm:$0xff]
    %v2350 = vld [vmem:[#allocation8 + $0x2ec8] sm:$0xff]
    %v2351 = vld [vmem:[#allocation8 + $0x2ed0] sm:$0xff]
    %v2352 = vld [vmem:[#allocation8 + $0x2ed8] sm:$0xff]
    %v2353 = vld [vmem:[#allocation8 + $0x2ee0] sm:$0xff]
    %v2354 = vld [vmem:[#allocation8 + $0x2ee8] sm:$0xff]
    %v2355 = vld [vmem:[#allocation8 + $0x2ef0] sm:$0xff]
    %v2356 = vld [vmem:[#allocation8 + $0x2ef8] sm:$0xff]
    %v2357 = vld [vmem:[#allocation8 + $0x2f00] sm:$0xff]
    %v2358 = vld [vmem:[#allocation8 + $0x2f08] sm:$0xff]
    %v2359 = vld [vmem:[#allocation8 + $0x2f10] sm:$0xff]
    %v2360 = vld [vmem:[#allocation8 + $0x2f18] sm:$0xff]
    %v2361 = vld [vmem:[#allocation8 + $0x2f20] sm:$0xff]
    %v2362 = vld [vmem:[#allocation8 + $0x2f28] sm:$0xff]
    %v2363 = vld [vmem:[#allocation8 + $0x2f30] sm:$0xff]
    %v2364 = vld [vmem:[#allocation8 + $0x2f38] sm:$0xff]
    %v2365 = vld [vmem:[#allocation8 + $0x2f40] sm:$0xff]
    %v2366 = vld [vmem:[#allocation8 + $0x2f48] sm:$0xff]
    %v2367 = vld [vmem:[#allocation8 + $0x2f50] sm:$0xff]
    %v2368 = vld [vmem:[#allocation8 + $0x2f58] sm:$0xff]
    %v2369 = vld [vmem:[#allocation8 + $0x2f60] sm:$0xff]
    %v2370 = vld [vmem:[#allocation8 + $0x2f68] sm:$0xff]
    %v2371 = vld [vmem:[#allocation8 + $0x2f70] sm:$0xff]
    %v2372 = vld [vmem:[#allocation8 + $0x2f78] sm:$0xff]
    %v2373 = vld [vmem:[#allocation8 + $0x2f80] sm:$0xff]
    %v2374 = vld [vmem:[#allocation8 + $0x2f88] sm:$0xff]
    %v2375 = vld [vmem:[#allocation8 + $0x2f90] sm:$0xff]
    %v2376 = vld [vmem:[#allocation8 + $0x2f98] sm:$0xff]
    %v2377 = vld [vmem:[#allocation8 + $0x2fa0] sm:$0xff]
    %v2378 = vld [vmem:[#allocation8 + $0x2fa8] sm:$0xff]
    %v2379 = vld [vmem:[#allocation8 + $0x2fb0] sm:$0xff]
    %v2380 = vld [vmem:[#allocation8 + $0x2fb8] sm:$0xff]
    %v2381 = vld [vmem:[#allocation8 + $0x2fc0] sm:$0xff]
    %v2382 = vld [vmem:[#allocation8 + $0x2fc8] sm:$0xff]
    %v2383 = vld [vmem:[#allocation8 + $0x2fd0] sm:$0xff]
    %v2384 = vld [vmem:[#allocation8 + $0x2fd8] sm:$0xff]
    %v2385 = vld [vmem:[#allocation8 + $0x2fe0] sm:$0xff]
    %v2386 = vld [vmem:[#allocation8 + $0x2fe8] sm:$0xff]
    %v2387 = vld [vmem:[#allocation8 + $0x2ff0] sm:$0xff]
    %v2388 = vld [vmem:[#allocation8 + $0x2ff8] sm:$0xff]
    %v2389 = vld [vmem:[#allocation8 + $0x3000] sm:$0xff]
    %v2390 = vld [vmem:[#allocation8 + $0x3008] sm:$0xff]
    %v2391 = vld [vmem:[#allocation8 + $0x3010] sm:$0xff]
    %v2392 = vld [vmem:[#allocation8 + $0x3018] sm:$0xff]
    %v2393 = vld [vmem:[#allocation8 + $0x3020] sm:$0xff]
    %v2394 = vld [vmem:[#allocation8 + $0x3028] sm:$0xff]
    %v2395 = vld [vmem:[#allocation8 + $0x3030] sm:$0xff]
    %v2396 = vld [vmem:[#allocation8 + $0x3038] sm:$0xff]
    %v2397 = vld [vmem:[#allocation8 + $0x3040] sm:$0xff]
    %v2398 = vld [vmem:[#allocation8 + $0x3048] sm:$0xff]
    %v2399 = vld [vmem:[#allocation8 + $0x3050] sm:$0xff]
    %v2400 = vld [vmem:[#allocation8 + $0x3058] sm:$0xff]
    %v2401 = vld [vmem:[#allocation8 + $0x3060] sm:$0xff]
    %v2402 = vld [vmem:[#allocation8 + $0x3068] sm:$0xff]
    %v2403 = vld [vmem:[#allocation8 + $0x3070] sm:$0xff]
    %v2404 = vld [vmem:[#allocation8 + $0x3078] sm:$0xff]
    %v2405 = vld [vmem:[#allocation8 + $0x3080] sm:$0xff]
    %v2406 = vld [vmem:[#allocation8 + $0x3088] sm:$0xff]
    %v2407 = vld [vmem:[#allocation8 + $0x3090] sm:$0xff]
    %v2408 = vld [vmem:[#allocation8 + $0x3098] sm:$0xff]
    %v2409 = vld [vmem:[#allocation8 + $0x30a0] sm:$0xff]
    %v2410 = vld [vmem:[#allocation8 + $0x30a8] sm:$0xff]
    %v2411 = vld [vmem:[#allocation8 + $0x30b0] sm:$0xff]
    %v2412 = vld [vmem:[#allocation8 + $0x30b8] sm:$0xff]
    %v2413 = vld [vmem:[#allocation8 + $0x30c0] sm:$0xff]
    %v2414 = vld [vmem:[#allocation8 + $0x30c8] sm:$0xff]
    %v2415 = vld [vmem:[#allocation8 + $0x30d0] sm:$0xff]
    %v2416 = vld [vmem:[#allocation8 + $0x30d8] sm:$0xff]
    %v2417 = vld [vmem:[#allocation8 + $0x30e0] sm:$0xff]
    %v2418 = vld [vmem:[#allocation8 + $0x30e8] sm:$0xff]
    %v2419 = vld [vmem:[#allocation8 + $0x30f0] sm:$0xff]
    %v2420 = vld [vmem:[#allocation8 + $0x30f8] sm:$0xff]
    %v2421 = vld [vmem:[#allocation8 + $0x3100] sm:$0xff]
    %v2422 = vld [vmem:[#allocation8 + $0x3108] sm:$0xff]
    %v2423 = vld [vmem:[#allocation8 + $0x3110] sm:$0xff]
    %v2424 = vld [vmem:[#allocation8 + $0x3118] sm:$0xff]
    %v2425 = vld [vmem:[#allocation8 + $0x3120] sm:$0xff]
    %v2426 = vld [vmem:[#allocation8 + $0x3128] sm:$0xff]
    %v2427 = vld [vmem:[#allocation8 + $0x3130] sm:$0xff]
    %v2428 = vld [vmem:[#allocation8 + $0x3138] sm:$0xff]
    %v2429 = vld [vmem:[#allocation8 + $0x3140] sm:$0xff]
    %v2430 = vld [vmem:[#allocation8 + $0x3148] sm:$0xff]
    %v2431 = vld [vmem:[#allocation8 + $0x3150] sm:$0xff]
    %v2432 = vld [vmem:[#allocation8 + $0x3158] sm:$0xff]
    %v2433 = vld [vmem:[#allocation8 + $0x3160] sm:$0xff]
    %v2434 = vld [vmem:[#allocation8 + $0x3168] sm:$0xff]
    %v2435 = vld [vmem:[#allocation8 + $0x3170] sm:$0xff]
    %v2436 = vld [vmem:[#allocation8 + $0x3178] sm:$0xff]
    %v2437 = vld [vmem:[#allocation8 + $0x3180] sm:$0xff]
    %v2438 = vld [vmem:[#allocation8 + $0x3188] sm:$0xff]
    %v2439 = vld [vmem:[#allocation8 + $0x3190] sm:$0xff]
    %v2440 = vld [vmem:[#allocation8 + $0x3198] sm:$0xff]
    %v2441 = vld [vmem:[#allocation8 + $0x31a0] sm:$0xff]
    %v2442 = vld [vmem:[#allocation8 + $0x31a8] sm:$0xff]
    %v2443 = vld [vmem:[#allocation8 + $0x31b0] sm:$0xff]
    %v2444 = vld [vmem:[#allocation8 + $0x31b8] sm:$0xff]
    %v2445 = vld [vmem:[#allocation8 + $0x31c0] sm:$0xff]
    %v2446 = vld [vmem:[#allocation8 + $0x31c8] sm:$0xff]
    %v2447 = vld [vmem:[#allocation8 + $0x31d0] sm:$0xff]
    %v2448 = vld [vmem:[#allocation8 + $0x31d8] sm:$0xff]
    %v2449 = vld [vmem:[#allocation8 + $0x31e0] sm:$0xff]
    %v2450 = vld [vmem:[#allocation8 + $0x31e8] sm:$0xff]
    %v2451 = vld [vmem:[#allocation8 + $0x31f0] sm:$0xff]
    %v2452 = vld [vmem:[#allocation8 + $0x31f8] sm:$0xff]
    %v2453 = vld [vmem:[#allocation8 + $0x3200] sm:$0xff]
    %v2454 = vld [vmem:[#allocation8 + $0x3208] sm:$0xff]
    %v2455 = vld [vmem:[#allocation8 + $0x3210] sm:$0xff]
    %v2456 = vld [vmem:[#allocation8 + $0x3218] sm:$0xff]
    %v2457 = vld [vmem:[#allocation8 + $0x3220] sm:$0xff]
    %v2458 = vld [vmem:[#allocation8 + $0x3228] sm:$0xff]
    %v2459 = vld [vmem:[#allocation8 + $0x3230] sm:$0xff]
    %v2460 = vld [vmem:[#allocation8 + $0x3238] sm:$0xff]
    %v2461 = vld [vmem:[#allocation8 + $0x3240] sm:$0xff]
    %v2462 = vld [vmem:[#allocation8 + $0x3248] sm:$0xff]
    %v2463 = vld [vmem:[#allocation8 + $0x3250] sm:$0xff]
    %v2464 = vld [vmem:[#allocation8 + $0x3258] sm:$0xff]
    %v2465 = vld [vmem:[#allocation8 + $0x3260] sm:$0xff]
    %v2466 = vld [vmem:[#allocation8 + $0x3268] sm:$0xff]
    %v2467 = vld [vmem:[#allocation8 + $0x3270] sm:$0xff]
    %v2468 = vld [vmem:[#allocation8 + $0x3278] sm:$0xff]
    %v2469 = vld [vmem:[#allocation8 + $0x3280] sm:$0xff]
    %v2470 = vld [vmem:[#allocation8 + $0x3288] sm:$0xff]
    %v2471 = vld [vmem:[#allocation8 + $0x3290] sm:$0xff]
    %v2472 = vld [vmem:[#allocation8 + $0x3298] sm:$0xff]
    %v2473 = vld [vmem:[#allocation8 + $0x32a0] sm:$0xff]
    %v2474 = vld [vmem:[#allocation8 + $0x32a8] sm:$0xff]
    %v2475 = vld [vmem:[#allocation8 + $0x32b0] sm:$0xff]
    %v2476 = vld [vmem:[#allocation8 + $0x32b8] sm:$0xff]
    %v2477 = vld [vmem:[#allocation8 + $0x32c0] sm:$0xff]
    %v2478 = vld [vmem:[#allocation8 + $0x32c8] sm:$0xff]
    %v2479 = vld [vmem:[#allocation8 + $0x32d0] sm:$0xff]
    %v2480 = vld [vmem:[#allocation8 + $0x32d8] sm:$0xff]
    %v2481 = vld [vmem:[#allocation8 + $0x32e0] sm:$0xff]
    %v2482 = vld [vmem:[#allocation8 + $0x32e8] sm:$0xff]
    %v2483 = vld [vmem:[#allocation8 + $0x32f0] sm:$0xff]
    %v2484 = vld [vmem:[#allocation8 + $0x32f8] sm:$0xff]
    %v2485 = vld [vmem:[#allocation8 + $0x3300] sm:$0xff]
    %v2486 = vld [vmem:[#allocation8 + $0x3308] sm:$0xff]
    %v2487 = vld [vmem:[#allocation8 + $0x3310] sm:$0xff]
    %v2488 = vld [vmem:[#allocation8 + $0x3318] sm:$0xff]
    %v2489 = vld [vmem:[#allocation8 + $0x3320] sm:$0xff]
    %v2490 = vld [vmem:[#allocation8 + $0x3328] sm:$0xff]
    %v2491 = vld [vmem:[#allocation8 + $0x3330] sm:$0xff]
    %v2492 = vld [vmem:[#allocation8 + $0x3338] sm:$0xff]
    %v2493 = vld [vmem:[#allocation8 + $0x3340] sm:$0xff]
    %v2494 = vld [vmem:[#allocation8 + $0x3348] sm:$0xff]
    %v2495 = vld [vmem:[#allocation8 + $0x3350] sm:$0xff]
    %v2496 = vld [vmem:[#allocation8 + $0x3358] sm:$0xff]
    %v2497 = vld [vmem:[#allocation8 + $0x3360] sm:$0xff]
    %v2498 = vld [vmem:[#allocation8 + $0x3368] sm:$0xff]
    %v2499 = vld [vmem:[#allocation8 + $0x3370] sm:$0xff]
    %v2500 = vld [vmem:[#allocation8 + $0x3378] sm:$0xff]
    %v2501 = vld [vmem:[#allocation8 + $0x3380] sm:$0xff]
    %v2502 = vld [vmem:[#allocation8 + $0x3388] sm:$0xff]
    %v2503 = vld [vmem:[#allocation8 + $0x3390] sm:$0xff]
    %v2504 = vld [vmem:[#allocation8 + $0x3398] sm:$0xff]
    %v2505 = vld [vmem:[#allocation8 + $0x33a0] sm:$0xff]
    %v2506 = vld [vmem:[#allocation8 + $0x33a8] sm:$0xff]
    %v2507 = vld [vmem:[#allocation8 + $0x33b0] sm:$0xff]
    %v2508 = vld [vmem:[#allocation8 + $0x33b8] sm:$0xff]
    %v2509 = vld [vmem:[#allocation8 + $0x33c0] sm:$0xff]
    %v2510 = vld [vmem:[#allocation8 + $0x33c8] sm:$0xff]
    %v2511 = vld [vmem:[#allocation8 + $0x33d0] sm:$0xff]
    %v2512 = vld [vmem:[#allocation8 + $0x33d8] sm:$0xff]
    %v2513 = vld [vmem:[#allocation8 + $0x33e0] sm:$0xff]
    %v2514 = vld [vmem:[#allocation8 + $0x33e8] sm:$0xff]
    %v2515 = vld [vmem:[#allocation8 + $0x33f0] sm:$0xff]
    %v2516 = vld [vmem:[#allocation8 + $0x33f8] sm:$0xff]
    %v2517 = vld [vmem:[#allocation8 + $0x3400] sm:$0xff]
    %v2518 = vld [vmem:[#allocation8 + $0x3408] sm:$0xff]
    %v2519 = vld [vmem:[#allocation8 + $0x3410] sm:$0xff]
    %v2520 = vld [vmem:[#allocation8 + $0x3418] sm:$0xff]
    %v2521 = vld [vmem:[#allocation8 + $0x3420] sm:$0xff]
    %v2522 = vld [vmem:[#allocation8 + $0x3428] sm:$0xff]
    %v2523 = vld [vmem:[#allocation8 + $0x3430] sm:$0xff]
    %v2524 = vld [vmem:[#allocation8 + $0x3438] sm:$0xff]
    %v2525 = vld [vmem:[#allocation8 + $0x3440] sm:$0xff]
    %v2526 = vld [vmem:[#allocation8 + $0x3448] sm:$0xff]
    %v2527 = vld [vmem:[#allocation8 + $0x3450] sm:$0xff]
    %v2528 = vld [vmem:[#allocation8 + $0x3458] sm:$0xff]
    %v2529 = vld [vmem:[#allocation8 + $0x3460] sm:$0xff]
    %v2530 = vld [vmem:[#allocation8 + $0x3468] sm:$0xff]
    %v2531 = vld [vmem:[#allocation8 + $0x3470] sm:$0xff]
    %v2532 = vld [vmem:[#allocation8 + $0x3478] sm:$0xff]
    %v2533 = vld [vmem:[#allocation8 + $0x3480] sm:$0xff]
    %v2534 = vld [vmem:[#allocation8 + $0x3488] sm:$0xff]
    %v2535 = vld [vmem:[#allocation8 + $0x3490] sm:$0xff]
    %v2536 = vld [vmem:[#allocation8 + $0x3498] sm:$0xff]
    %v2537 = vld [vmem:[#allocation8 + $0x34a0] sm:$0xff]
    %v2538 = vld [vmem:[#allocation8 + $0x34a8] sm:$0xff]
    %v2539 = vld [vmem:[#allocation8 + $0x34b0] sm:$0xff]
    %v2540 = vld [vmem:[#allocation8 + $0x34b8] sm:$0xff]
    %v2541 = vld [vmem:[#allocation8 + $0x34c0] sm:$0xff]
    %v2542 = vld [vmem:[#allocation8 + $0x34c8] sm:$0xff]
    %v2543 = vld [vmem:[#allocation8 + $0x34d0] sm:$0xff]
    %v2544 = vld [vmem:[#allocation8 + $0x34d8] sm:$0xff]
    %v2545 = vld [vmem:[#allocation8 + $0x34e0] sm:$0xff]
    %v2546 = vld [vmem:[#allocation8 + $0x34e8] sm:$0xff]
    %v2547 = vld [vmem:[#allocation8 + $0x34f0] sm:$0xff]
    %v2548 = vld [vmem:[#allocation8 + $0x34f8] sm:$0xff]
    %v2549 = vld [vmem:[#allocation8 + $0x3500] sm:$0xff]
    %v2550 = vld [vmem:[#allocation8 + $0x3508] sm:$0xff]
    %v2551 = vld [vmem:[#allocation8 + $0x3510] sm:$0xff]
    %v2552 = vld [vmem:[#allocation8 + $0x3518] sm:$0xff]
    %v2553 = vld [vmem:[#allocation8 + $0x3520] sm:$0xff]
    %v2554 = vld [vmem:[#allocation8 + $0x3528] sm:$0xff]
    %v2555 = vld [vmem:[#allocation8 + $0x3530] sm:$0xff]
    %v2556 = vld [vmem:[#allocation8 + $0x3538] sm:$0xff]
    %v2557 = vld [vmem:[#allocation8 + $0x3540] sm:$0xff]
    %v2558 = vld [vmem:[#allocation8 + $0x3548] sm:$0xff]
    %v2559 = vld [vmem:[#allocation8 + $0x3550] sm:$0xff]
    %v2560 = vld [vmem:[#allocation8 + $0x3558] sm:$0xff]
    %v2561 = vld [vmem:[#allocation8 + $0x3560] sm:$0xff]
    %v2562 = vld [vmem:[#allocation8 + $0x3568] sm:$0xff]
    %v2563 = vld [vmem:[#allocation8 + $0x3570] sm:$0xff]
    %v2564 = vld [vmem:[#allocation8 + $0x3578] sm:$0xff]
    %v2565 = vld [vmem:[#allocation8 + $0x3580] sm:$0xff]
    %v2566 = vld [vmem:[#allocation8 + $0x3588] sm:$0xff]
    %v2567 = vld [vmem:[#allocation8 + $0x3590] sm:$0xff]
    %v2568 = vld [vmem:[#allocation8 + $0x3598] sm:$0xff]
    %v2569 = vld [vmem:[#allocation8 + $0x35a0] sm:$0xff]
    %v2570 = vld [vmem:[#allocation8 + $0x35a8] sm:$0xff]
    %v2571 = vld [vmem:[#allocation8 + $0x35b0] sm:$0xff]
    %v2572 = vld [vmem:[#allocation8 + $0x35b8] sm:$0xff]
    %v2573 = vld [vmem:[#allocation8 + $0x35c0] sm:$0xff]
    %v2574 = vld [vmem:[#allocation8 + $0x35c8] sm:$0xff]
    %v2575 = vld [vmem:[#allocation8 + $0x35d0] sm:$0xff]
    %v2576 = vld [vmem:[#allocation8 + $0x35d8] sm:$0xff]
    %v2577 = vld [vmem:[#allocation8 + $0x35e0] sm:$0xff]
    %v2578 = vld [vmem:[#allocation8 + $0x35e8] sm:$0xff]
    %v2579 = vld [vmem:[#allocation8 + $0x35f0] sm:$0xff]
    %v2580 = vld [vmem:[#allocation8 + $0x35f8] sm:$0xff]
    %v2581 = vld [vmem:[#allocation8 + $0x3600] sm:$0xff]
    %v2582 = vld [vmem:[#allocation8 + $0x3608] sm:$0xff]
    %v2583 = vld [vmem:[#allocation8 + $0x3610] sm:$0xff]
    %v2584 = vld [vmem:[#allocation8 + $0x3618] sm:$0xff]
    %v2585 = vld [vmem:[#allocation8 + $0x3620] sm:$0xff]
    %v2586 = vld [vmem:[#allocation8 + $0x3628] sm:$0xff]
    %v2587 = vld [vmem:[#allocation8 + $0x3630] sm:$0xff]
    %v2588 = vld [vmem:[#allocation8 + $0x3638] sm:$0xff]
    %v2589 = vld [vmem:[#allocation8 + $0x3640] sm:$0xff]
    %v2590 = vld [vmem:[#allocation8 + $0x3648] sm:$0xff]
    %v2591 = vld [vmem:[#allocation8 + $0x3650] sm:$0xff]
    %v2592 = vld [vmem:[#allocation8 + $0x3658] sm:$0xff]
    %v2593 = vld [vmem:[#allocation8 + $0x3660] sm:$0xff]
    %v2594 = vld [vmem:[#allocation8 + $0x3668] sm:$0xff]
    %v2595 = vld [vmem:[#allocation8 + $0x3670] sm:$0xff]
    %v2596 = vld [vmem:[#allocation8 + $0x3678] sm:$0xff]
    %v2597 = vld [vmem:[#allocation8 + $0x3680] sm:$0xff]
    %v2598 = vld [vmem:[#allocation8 + $0x3688] sm:$0xff]
    %v2599 = vld [vmem:[#allocation8 + $0x3690] sm:$0xff]
    %v2600 = vld [vmem:[#allocation8 + $0x3698] sm:$0xff]
    %v2601 = vld [vmem:[#allocation8 + $0x36a0] sm:$0xff]
    %v2602 = vld [vmem:[#allocation8 + $0x36a8] sm:$0xff]
    %v2603 = vld [vmem:[#allocation8 + $0x36b0] sm:$0xff]
    %v2604 = vld [vmem:[#allocation8 + $0x36b8] sm:$0xff]
    %v2605 = vld [vmem:[#allocation8 + $0x36c0] sm:$0xff]
    %v2606 = vld [vmem:[#allocation8 + $0x36c8] sm:$0xff]
    %v2607 = vld [vmem:[#allocation8 + $0x36d0] sm:$0xff]
    %v2608 = vld [vmem:[#allocation8 + $0x36d8] sm:$0xff]
    %v2609 = vld [vmem:[#allocation8 + $0x36e0] sm:$0xff]
    %v2610 = vld [vmem:[#allocation8 + $0x36e8] sm:$0xff]
    %v2611 = vld [vmem:[#allocation8 + $0x36f0] sm:$0xff]
    %v2612 = vld [vmem:[#allocation8 + $0x36f8] sm:$0xff]
    %v2613 = vld [vmem:[#allocation8 + $0x3700] sm:$0xff]
    %v2614 = vld [vmem:[#allocation8 + $0x3708] sm:$0xff]
    %v2615 = vld [vmem:[#allocation8 + $0x3710] sm:$0xff]
    %v2616 = vld [vmem:[#allocation8 + $0x3718] sm:$0xff]
    %v2617 = vld [vmem:[#allocation8 + $0x3720] sm:$0xff]
    %v2618 = vld [vmem:[#allocation8 + $0x3728] sm:$0xff]
    %v2619 = vld [vmem:[#allocation8 + $0x3730] sm:$0xff]
    %v2620 = vld [vmem:[#allocation8 + $0x3738] sm:$0xff]
    %v2621 = vld [vmem:[#allocation8 + $0x3740] sm:$0xff]
    %v2622 = vld [vmem:[#allocation8 + $0x3748] sm:$0xff]
    %v2623 = vld [vmem:[#allocation8 + $0x3750] sm:$0xff]
    %v2624 = vld [vmem:[#allocation8 + $0x3758] sm:$0xff]
    %v2625 = vld [vmem:[#allocation8 + $0x3760] sm:$0xff]
    %v2626 = vld [vmem:[#allocation8 + $0x3768] sm:$0xff]
    %v2627 = vld [vmem:[#allocation8 + $0x3770] sm:$0xff]
    %v2628 = vld [vmem:[#allocation8 + $0x3778] sm:$0xff]
    %v2629 = vld [vmem:[#allocation8 + $0x3780] sm:$0xff]
    %v2630 = vld [vmem:[#allocation8 + $0x3788] sm:$0xff]
    %v2631 = vld [vmem:[#allocation8 + $0x3790] sm:$0xff]
    %v2632 = vld [vmem:[#allocation8 + $0x3798] sm:$0xff]
    %v2633 = vld [vmem:[#allocation8 + $0x37a0] sm:$0xff]
    %v2634 = vld [vmem:[#allocation8 + $0x37a8] sm:$0xff]
    %v2635 = vld [vmem:[#allocation8 + $0x37b0] sm:$0xff]
    %v2636 = vld [vmem:[#allocation8 + $0x37b8] sm:$0xff]
    %v2637 = vld [vmem:[#allocation8 + $0x37c0] sm:$0xff]
    %v2638 = vld [vmem:[#allocation8 + $0x37c8] sm:$0xff]
    %v2639 = vld [vmem:[#allocation8 + $0x37d0] sm:$0xff]
    %v2640 = vld [vmem:[#allocation8 + $0x37d8] sm:$0xff]
    %v2641 = vld [vmem:[#allocation8 + $0x37e0] sm:$0xff]
    %v2642 = vld [vmem:[#allocation8 + $0x37e8] sm:$0xff]
    %v2643 = vld [vmem:[#allocation8 + $0x37f0] sm:$0xff]
    %v2644 = vld [vmem:[#allocation8 + $0x37f8] sm:$0xff]
    %v2645 = vld [vmem:[#allocation8 + $0x3800] sm:$0xff]
    %v2646 = vld [vmem:[#allocation8 + $0x3808] sm:$0xff]
    %v2647 = vld [vmem:[#allocation8 + $0x3810] sm:$0xff]
    %v2648 = vld [vmem:[#allocation8 + $0x3818] sm:$0xff]
    %v2649 = vld [vmem:[#allocation8 + $0x3820] sm:$0xff]
    %v2650 = vld [vmem:[#allocation8 + $0x3828] sm:$0xff]
    %v2651 = vld [vmem:[#allocation8 + $0x3830] sm:$0xff]
    %v2652 = vld [vmem:[#allocation8 + $0x3838] sm:$0xff]
    %v2653 = vld [vmem:[#allocation8 + $0x3840] sm:$0xff]
    %v2654 = vld [vmem:[#allocation8 + $0x3848] sm:$0xff]
    %v2655 = vld [vmem:[#allocation8 + $0x3850] sm:$0xff]
    %v2656 = vld [vmem:[#allocation8 + $0x3858] sm:$0xff]
    %v2657 = vld [vmem:[#allocation8 + $0x3860] sm:$0xff]
    %v2658 = vld [vmem:[#allocation8 + $0x3868] sm:$0xff]
    %v2659 = vld [vmem:[#allocation8 + $0x3870] sm:$0xff]
    %v2660 = vld [vmem:[#allocation8 + $0x3878] sm:$0xff]
    %v2661 = vld [vmem:[#allocation8 + $0x3880] sm:$0xff]
    %v2662 = vld [vmem:[#allocation8 + $0x3888] sm:$0xff]
    %v2663 = vld [vmem:[#allocation8 + $0x3890] sm:$0xff]
    %v2664 = vld [vmem:[#allocation8 + $0x3898] sm:$0xff]
    %v2665 = vld [vmem:[#allocation8 + $0x38a0] sm:$0xff]
    %v2666 = vld [vmem:[#allocation8 + $0x38a8] sm:$0xff]
    %v2667 = vld [vmem:[#allocation8 + $0x38b0] sm:$0xff]
    %v2668 = vld [vmem:[#allocation8 + $0x38b8] sm:$0xff]
    %v2669 = vld [vmem:[#allocation8 + $0x38c0] sm:$0xff]
    %v2670 = vld [vmem:[#allocation8 + $0x38c8] sm:$0xff]
    %v2671 = vld [vmem:[#allocation8 + $0x38d0] sm:$0xff]
    %v2672 = vld [vmem:[#allocation8 + $0x38d8] sm:$0xff]
    %v2673 = vld [vmem:[#allocation8 + $0x38e0] sm:$0xff]
    %v2674 = vld [vmem:[#allocation8 + $0x38e8] sm:$0xff]
    %v2675 = vld [vmem:[#allocation8 + $0x38f0] sm:$0xff]
    %v2676 = vld [vmem:[#allocation8 + $0x38f8] sm:$0xff]
    %v2677 = vld [vmem:[#allocation8 + $0x3900] sm:$0xff]
    %v2678 = vld [vmem:[#allocation8 + $0x3908] sm:$0xff]
    %v2679 = vld [vmem:[#allocation8 + $0x3910] sm:$0xff]
    %v2680 = vld [vmem:[#allocation8 + $0x3918] sm:$0xff]
    %v2681 = vld [vmem:[#allocation8 + $0x3920] sm:$0xff]
    %v2682 = vld [vmem:[#allocation8 + $0x3928] sm:$0xff]
    %v2683 = vld [vmem:[#allocation8 + $0x3930] sm:$0xff]
    %v2684 = vld [vmem:[#allocation8 + $0x3938] sm:$0xff]
    %v2685 = vld [vmem:[#allocation8 + $0x3940] sm:$0xff]
    %v2686 = vld [vmem:[#allocation8 + $0x3948] sm:$0xff]
    %v2687 = vld [vmem:[#allocation8 + $0x3950] sm:$0xff]
    %v2688 = vld [vmem:[#allocation8 + $0x3958] sm:$0xff]
    %v2689 = vld [vmem:[#allocation8 + $0x3960] sm:$0xff]
    %v2690 = vld [vmem:[#allocation8 + $0x3968] sm:$0xff]
    %v2691 = vld [vmem:[#allocation8 + $0x3970] sm:$0xff]
    %v2692 = vld [vmem:[#allocation8 + $0x3978] sm:$0xff]
    %v2693 = vld [vmem:[#allocation8 + $0x3980] sm:$0xff]
    %v2694 = vld [vmem:[#allocation8 + $0x3988] sm:$0xff]
    %v2695 = vld [vmem:[#allocation8 + $0x3990] sm:$0xff]
    %v2696 = vld [vmem:[#allocation8 + $0x3998] sm:$0xff]
    %v2697 = vld [vmem:[#allocation8 + $0x39a0] sm:$0xff]
    %v2698 = vld [vmem:[#allocation8 + $0x39a8] sm:$0xff]
    %v2699 = vld [vmem:[#allocation8 + $0x39b0] sm:$0xff]
    %v2700 = vld [vmem:[#allocation8 + $0x39b8] sm:$0xff]
    %v2701 = vld [vmem:[#allocation8 + $0x39c0] sm:$0xff]
    %v2702 = vld [vmem:[#allocation8 + $0x39c8] sm:$0xff]
    %v2703 = vld [vmem:[#allocation8 + $0x39d0] sm:$0xff]
    %v2704 = vld [vmem:[#allocation8 + $0x39d8] sm:$0xff]
    %v2705 = vld [vmem:[#allocation8 + $0x39e0] sm:$0xff]
    %v2706 = vld [vmem:[#allocation8 + $0x39e8] sm:$0xff]
    %v2707 = vld [vmem:[#allocation8 + $0x39f0] sm:$0xff]
    %v2708 = vld [vmem:[#allocation8 + $0x39f8] sm:$0xff]
    %v2709 = vld [vmem:[#allocation8 + $0x3a00] sm:$0xff]
    %v2710 = vld [vmem:[#allocation8 + $0x3a08] sm:$0xff]
    %v2711 = vld [vmem:[#allocation8 + $0x3a10] sm:$0xff]
    %v2712 = vld [vmem:[#allocation8 + $0x3a18] sm:$0xff]
    %v2713 = vld [vmem:[#allocation8 + $0x3a20] sm:$0xff]
    %v2714 = vld [vmem:[#allocation8 + $0x3a28] sm:$0xff]
    %v2715 = vld [vmem:[#allocation8 + $0x3a30] sm:$0xff]
    %v2716 = vld [vmem:[#allocation8 + $0x3a38] sm:$0xff]
    %v2717 = vld [vmem:[#allocation8 + $0x3a40] sm:$0xff]
    %v2718 = vld [vmem:[#allocation8 + $0x3a48] sm:$0xff]
    %v2719 = vld [vmem:[#allocation8 + $0x3a50] sm:$0xff]
    %v2720 = vld [vmem:[#allocation8 + $0x3a58] sm:$0xff]
    %v2721 = vld [vmem:[#allocation8 + $0x3a60] sm:$0xff]
    %v2722 = vld [vmem:[#allocation8 + $0x3a68] sm:$0xff]
    %v2723 = vld [vmem:[#allocation8 + $0x3a70] sm:$0xff]
    %v2724 = vld [vmem:[#allocation8 + $0x3a78] sm:$0xff]
    %v2725 = vld [vmem:[#allocation8 + $0x3a80] sm:$0xff]
    %v2726 = vld [vmem:[#allocation8 + $0x3a88] sm:$0xff]
    %v2727 = vld [vmem:[#allocation8 + $0x3a90] sm:$0xff]
    %v2728 = vld [vmem:[#allocation8 + $0x3a98] sm:$0xff]
    %v2729 = vld [vmem:[#allocation8 + $0x3aa0] sm:$0xff]
    %v2730 = vld [vmem:[#allocation8 + $0x3aa8] sm:$0xff]
    %v2731 = vld [vmem:[#allocation8 + $0x3ab0] sm:$0xff]
    %v2732 = vld [vmem:[#allocation8 + $0x3ab8] sm:$0xff]
    %v2733 = vld [vmem:[#allocation8 + $0x3ac0] sm:$0xff]
    %v2734 = vld [vmem:[#allocation8 + $0x3ac8] sm:$0xff]
    %v2735 = vld [vmem:[#allocation8 + $0x3ad0] sm:$0xff]
    %v2736 = vld [vmem:[#allocation8 + $0x3ad8] sm:$0xff]
    %v2737 = vld [vmem:[#allocation8 + $0x3ae0] sm:$0xff]
    %v2738 = vld [vmem:[#allocation8 + $0x3ae8] sm:$0xff]
    %v2739 = vld [vmem:[#allocation8 + $0x3af0] sm:$0xff]
    %v2740 = vld [vmem:[#allocation8 + $0x3af8] sm:$0xff]
    %v2741 = vld [vmem:[#allocation8 + $0x3b00] sm:$0xff]
    %v2742 = vld [vmem:[#allocation8 + $0x3b08] sm:$0xff]
    %v2743 = vld [vmem:[#allocation8 + $0x3b10] sm:$0xff]
    %v2744 = vld [vmem:[#allocation8 + $0x3b18] sm:$0xff]
    %v2745 = vld [vmem:[#allocation8 + $0x3b20] sm:$0xff]
    %v2746 = vld [vmem:[#allocation8 + $0x3b28] sm:$0xff]
    %v2747 = vld [vmem:[#allocation8 + $0x3b30] sm:$0xff]
    %v2748 = vld [vmem:[#allocation8 + $0x3b38] sm:$0xff]
    %v2749 = vld [vmem:[#allocation8 + $0x3b40] sm:$0xff]
    %v2750 = vld [vmem:[#allocation8 + $0x3b48] sm:$0xff]
    %v2751 = vld [vmem:[#allocation8 + $0x3b50] sm:$0xff]
    %v2752 = vld [vmem:[#allocation8 + $0x3b58] sm:$0xff]
    %v2753 = vld [vmem:[#allocation8 + $0x3b60] sm:$0xff]
    %v2754 = vld [vmem:[#allocation8 + $0x3b68] sm:$0xff]
    %v2755 = vld [vmem:[#allocation8 + $0x3b70] sm:$0xff]
    %v2756 = vld [vmem:[#allocation8 + $0x3b78] sm:$0xff]
    %v2757 = vld [vmem:[#allocation8 + $0x3b80] sm:$0xff]
    %v2758 = vld [vmem:[#allocation8 + $0x3b88] sm:$0xff]
    %v2759 = vld [vmem:[#allocation8 + $0x3b90] sm:$0xff]
    %v2760 = vld [vmem:[#allocation8 + $0x3b98] sm:$0xff]
    %v2761 = vld [vmem:[#allocation8 + $0x3ba0] sm:$0xff]
    %v2762 = vld [vmem:[#allocation8 + $0x3ba8] sm:$0xff]
    %v2763 = vld [vmem:[#allocation8 + $0x3bb0] sm:$0xff]
    %v2764 = vld [vmem:[#allocation8 + $0x3bb8] sm:$0xff]
    %v2765 = vld [vmem:[#allocation8 + $0x3bc0] sm:$0xff]
    %v2766 = vld [vmem:[#allocation8 + $0x3bc8] sm:$0xff]
    %v2767 = vld [vmem:[#allocation8 + $0x3bd0] sm:$0xff]
    %v2768 = vld [vmem:[#allocation8 + $0x3bd8] sm:$0xff]
    %v2769 = vld [vmem:[#allocation8 + $0x3be0] sm:$0xff]
    %v2770 = vld [vmem:[#allocation8 + $0x3be8] sm:$0xff]
    %v2771 = vld [vmem:[#allocation8 + $0x3bf0] sm:$0xff]
    %v2772 = vld [vmem:[#allocation8 + $0x3bf8] sm:$0xff]
    %v2773 = vld [vmem:[#allocation8 + $0x3c00] sm:$0xff]
    %v2774 = vld [vmem:[#allocation8 + $0x3c08] sm:$0xff]
    %v2775 = vld [vmem:[#allocation8 + $0x3c10] sm:$0xff]
    %v2776 = vld [vmem:[#allocation8 + $0x3c18] sm:$0xff]
    %v2777 = vld [vmem:[#allocation8 + $0x3c20] sm:$0xff]
    %v2778 = vld [vmem:[#allocation8 + $0x3c28] sm:$0xff]
    %v2779 = vld [vmem:[#allocation8 + $0x3c30] sm:$0xff]
    %v2780 = vld [vmem:[#allocation8 + $0x3c38] sm:$0xff]
    %v2781 = vld [vmem:[#allocation8 + $0x3c40] sm:$0xff]
    %v2782 = vld [vmem:[#allocation8 + $0x3c48] sm:$0xff]
    %v2783 = vld [vmem:[#allocation8 + $0x3c50] sm:$0xff]
    %v2784 = vld [vmem:[#allocation8 + $0x3c58] sm:$0xff]
    %v2785 = vld [vmem:[#allocation8 + $0x3c60] sm:$0xff]
    %v2786 = vld [vmem:[#allocation8 + $0x3c68] sm:$0xff]
    %v2787 = vld [vmem:[#allocation8 + $0x3c70] sm:$0xff]
    %v2788 = vld [vmem:[#allocation8 + $0x3c78] sm:$0xff]
    %v2789 = vld [vmem:[#allocation8 + $0x3c80] sm:$0xff]
    %v2790 = vld [vmem:[#allocation8 + $0x3c88] sm:$0xff]
    %v2791 = vld [vmem:[#allocation8 + $0x3c90] sm:$0xff]
    %v2792 = vld [vmem:[#allocation8 + $0x3c98] sm:$0xff]
    %v2793 = vld [vmem:[#allocation8 + $0x3ca0] sm:$0xff]
    %v2794 = vld [vmem:[#allocation8 + $0x3ca8] sm:$0xff]
    %v2795 = vld [vmem:[#allocation8 + $0x3cb0] sm:$0xff]
    %v2796 = vld [vmem:[#allocation8 + $0x3cb8] sm:$0xff]
    %v2797 = vld [vmem:[#allocation8 + $0x3cc0] sm:$0xff]
    %v2798 = vld [vmem:[#allocation8 + $0x3cc8] sm:$0xff]
    %v2799 = vld [vmem:[#allocation8 + $0x3cd0] sm:$0xff]
    %v2800 = vld [vmem:[#allocation8 + $0x3cd8] sm:$0xff]
    %v2801 = vld [vmem:[#allocation8 + $0x3ce0] sm:$0xff]
    %v2802 = vld [vmem:[#allocation8 + $0x3ce8] sm:$0xff]
    %v2803 = vld [vmem:[#allocation8 + $0x3cf0] sm:$0xff]
    %v2804 = vld [vmem:[#allocation8 + $0x3cf8] sm:$0xff]
    %v2805 = vld [vmem:[#allocation8 + $0x3d00] sm:$0xff]
    %v2806 = vld [vmem:[#allocation8 + $0x3d08] sm:$0xff]
    %v2807 = vld [vmem:[#allocation8 + $0x3d10] sm:$0xff]
    %v2808 = vld [vmem:[#allocation8 + $0x3d18] sm:$0xff]
    %v2809 = vld [vmem:[#allocation8 + $0x3d20] sm:$0xff]
    %v2810 = vld [vmem:[#allocation8 + $0x3d28] sm:$0xff]
    %v2811 = vld [vmem:[#allocation8 + $0x3d30] sm:$0xff]
    %v2812 = vld [vmem:[#allocation8 + $0x3d38] sm:$0xff]
    %v2813 = vld [vmem:[#allocation8 + $0x3d40] sm:$0xff]
    %v2814 = vld [vmem:[#allocation8 + $0x3d48] sm:$0xff]
    %v2815 = vld [vmem:[#allocation8 + $0x3d50] sm:$0xff]
    %v2816 = vld [vmem:[#allocation8 + $0x3d58] sm:$0xff]
    %v2817 = vld [vmem:[#allocation8 + $0x3d60] sm:$0xff]
    %v2818 = vld [vmem:[#allocation8 + $0x3d68] sm:$0xff]
    %v2819 = vld [vmem:[#allocation8 + $0x3d70] sm:$0xff]
    %v2820 = vld [vmem:[#allocation8 + $0x3d78] sm:$0xff]
    %v2821 = vld [vmem:[#allocation8 + $0x3d80] sm:$0xff]
    %v2822 = vld [vmem:[#allocation8 + $0x3d88] sm:$0xff]
    %v2823 = vld [vmem:[#allocation8 + $0x3d90] sm:$0xff]
    %v2824 = vld [vmem:[#allocation8 + $0x3d98] sm:$0xff]
    %v2825 = vld [vmem:[#allocation8 + $0x3da0] sm:$0xff]
    %v2826 = vld [vmem:[#allocation8 + $0x3da8] sm:$0xff]
    %v2827 = vld [vmem:[#allocation8 + $0x3db0] sm:$0xff]
    %v2828 = vld [vmem:[#allocation8 + $0x3db8] sm:$0xff]
    %v2829 = vld [vmem:[#allocation8 + $0x3dc0] sm:$0xff]
    %v2830 = vld [vmem:[#allocation8 + $0x3dc8] sm:$0xff]
    %v2831 = vld [vmem:[#allocation8 + $0x3dd0] sm:$0xff]
    %v2832 = vld [vmem:[#allocation8 + $0x3dd8] sm:$0xff]
    %v2833 = vld [vmem:[#allocation8 + $0x3de0] sm:$0xff]
    %v2834 = vld [vmem:[#allocation8 + $0x3de8] sm:$0xff]
    %v2835 = vld [vmem:[#allocation8 + $0x3df0] sm:$0xff]
    %v2836 = vld [vmem:[#allocation8 + $0x3df8] sm:$0xff]
    %v2837 = vld [vmem:[#allocation8 + $0x3e00] sm:$0xff]
    %v2838 = vld [vmem:[#allocation8 + $0x3e08] sm:$0xff]
    %v2839 = vld [vmem:[#allocation8 + $0x3e10] sm:$0xff]
    %v2840 = vld [vmem:[#allocation8 + $0x3e18] sm:$0xff]
    %v2841 = vld [vmem:[#allocation8 + $0x3e20] sm:$0xff]
    %v2842 = vld [vmem:[#allocation8 + $0x3e28] sm:$0xff]
    %v2843 = vld [vmem:[#allocation8 + $0x3e30] sm:$0xff]
    %v2844 = vld [vmem:[#allocation8 + $0x3e38] sm:$0xff]
    %v2845 = vld [vmem:[#allocation8 + $0x3e40] sm:$0xff]
    %v2846 = vld [vmem:[#allocation8 + $0x3e48] sm:$0xff]
    %v2847 = vld [vmem:[#allocation8 + $0x3e50] sm:$0xff]
    %v2848 = vld [vmem:[#allocation8 + $0x3e58] sm:$0xff]
    %v2849 = vld [vmem:[#allocation8 + $0x3e60] sm:$0xff]
    %v2850 = vld [vmem:[#allocation8 + $0x3e68] sm:$0xff]
    %v2851 = vld [vmem:[#allocation8 + $0x3e70] sm:$0xff]
    %v2852 = vld [vmem:[#allocation8 + $0x3e78] sm:$0xff]
    %v2853 = vld [vmem:[#allocation8 + $0x3e80] sm:$0xff]
    %v2854 = vld [vmem:[#allocation8 + $0x3e88] sm:$0xff]
    %v2855 = vld [vmem:[#allocation8 + $0x3e90] sm:$0xff]
    %v2856 = vld [vmem:[#allocation8 + $0x3e98] sm:$0xff]
    %v2857 = vld [vmem:[#allocation8 + $0x3ea0] sm:$0xff]
    %v2858 = vld [vmem:[#allocation8 + $0x3ea8] sm:$0xff]
    %v2859 = vld [vmem:[#allocation8 + $0x3eb0] sm:$0xff]
    %v2860 = vld [vmem:[#allocation8 + $0x3eb8] sm:$0xff]
    %v2861 = vld [vmem:[#allocation8 + $0x3ec0] sm:$0xff]
    %v2862 = vld [vmem:[#allocation8 + $0x3ec8] sm:$0xff]
    %v2863 = vld [vmem:[#allocation8 + $0x3ed0] sm:$0xff]
    %v2864 = vld [vmem:[#allocation8 + $0x3ed8] sm:$0xff]
    %v2865 = vld [vmem:[#allocation8 + $0x3ee0] sm:$0xff]
    %v2866 = vld [vmem:[#allocation8 + $0x3ee8] sm:$0xff]
    %v2867 = vld [vmem:[#allocation8 + $0x3ef0] sm:$0xff]
    %v2868 = vld [vmem:[#allocation8 + $0x3ef8] sm:$0xff]
    %v2869 = vld [vmem:[#allocation8 + $0x3f00] sm:$0xff]
    %v2870 = vld [vmem:[#allocation8 + $0x3f08] sm:$0xff]
    %v2871 = vld [vmem:[#allocation8 + $0x3f10] sm:$0xff]
    %v2872 = vld [vmem:[#allocation8 + $0x3f18] sm:$0xff]
    %v2873 = vld [vmem:[#allocation8 + $0x3f20] sm:$0xff]
    %v2874 = vld [vmem:[#allocation8 + $0x3f28] sm:$0xff]
    %v2875 = vld [vmem:[#allocation8 + $0x3f30] sm:$0xff]
    %v2876 = vld [vmem:[#allocation8 + $0x3f38] sm:$0xff]
    %v2877 = vld [vmem:[#allocation8 + $0x3f40] sm:$0xff]
    %v2878 = vld [vmem:[#allocation8 + $0x3f48] sm:$0xff]
    %v2879 = vld [vmem:[#allocation8 + $0x3f50] sm:$0xff]
    %v2880 = vld [vmem:[#allocation8 + $0x3f58] sm:$0xff]
    %v2881 = vld [vmem:[#allocation8 + $0x3f60] sm:$0xff]
    %v2882 = vld [vmem:[#allocation8 + $0x3f68] sm:$0xff]
    %v2883 = vld [vmem:[#allocation8 + $0x3f70] sm:$0xff]
    %v2884 = vld [vmem:[#allocation8 + $0x3f78] sm:$0xff]
    %v2885 = vld [vmem:[#allocation8 + $0x3f80] sm:$0xff]
    %v2886 = vld [vmem:[#allocation8 + $0x3f88] sm:$0xff]
    %v2887 = vld [vmem:[#allocation8 + $0x3f90] sm:$0xff]
    %v2888 = vld [vmem:[#allocation8 + $0x3f98] sm:$0xff]
    %v2889 = vld [vmem:[#allocation8 + $0x3fa0] sm:$0xff]
    %v2890 = vld [vmem:[#allocation8 + $0x3fa8] sm:$0xff]
    %v2891 = vld [vmem:[#allocation8 + $0x3fb0] sm:$0xff]
    %v2892 = vld [vmem:[#allocation8 + $0x3fb8] sm:$0xff]
    %v2893 = vld [vmem:[#allocation8 + $0x3fc0] sm:$0xff]
    %v2894 = vld [vmem:[#allocation8 + $0x3fc8] sm:$0xff]
    %v2895 = vld [vmem:[#allocation8 + $0x3fd0] sm:$0xff]
    %v2896 = vld [vmem:[#allocation8 + $0x3fd8] sm:$0xff]
    %v2897 = vld [vmem:[#allocation8 + $0x3fe0] sm:$0xff]
    %v2898 = vld [vmem:[#allocation8 + $0x3fe8] sm:$0xff]
    %v2899 = vld [vmem:[#allocation8 + $0x3ff0] sm:$0xff]
    %v2900 = vld [vmem:[#allocation8 + $0x3ff8] sm:$0xff]
    %v2901 = vld [vmem:[#allocation10] sm:$0xff]
    %v2903 = vlaneseq
    %v2904 = vshrl.u32 %v2903, 7
    %v2905 = vsub.s32 0, %v2904
    %v2906 = vrot.slane %v2901, %v2905
    %v2907 = vlaneseq
    %v2908 = vshrl.u32 %v2907, 7
    %v2909 = vsub.s32 1, %v2908
    %v2910 = vrot.slane %v2901, %v2909
    %v2911 = vlaneseq
    %v2912 = vshrl.u32 %v2911, 7
    %v2913 = vsub.s32 2, %v2912
    %v2914 = vrot.slane %v2901, %v2913
    %v2915 = vlaneseq
    %v2916 = vshrl.u32 %v2915, 7
    %v2917 = vsub.s32 3, %v2916
    %v2918 = vrot.slane %v2901, %v2917
    %v2919 = vlaneseq
    %v2920 = vshrl.u32 %v2919, 7
    %v2921 = vsub.s32 4, %v2920
    %v2922 = vrot.slane %v2901, %v2921
    %v2923 = vlaneseq
    %v2924 = vshrl.u32 %v2923, 7
    %v2925 = vsub.s32 5, %v2924
    %v2926 = vrot.slane %v2901, %v2925
    %v2927 = vlaneseq
    %v2928 = vshrl.u32 %v2927, 7
    %v2929 = vsub.s32 6, %v2928
    %v2930 = vrot.slane %v2901, %v2929
    %v2931 = vlaneseq
    %v2932 = vshrl.u32 %v2931, 7
    %v2933 = vsub.s32 7, %v2932
    %v2934 = vrot.slane %v2901, %v2933
    %2943 = vmatprep.subr.mxu0 %v854
    %2944 = vmatpush1.msra.mxu0 %v853
    %2945 = vmatprep.subr.mxu0 %v862
    %2946 = vmatpush1.msra.mxu0 %v861
    %2947 = vmatprep.subr.mxu0 %v870
    %2948 = vmatpush1.msra.mxu0 %v869
    %2949 = vmatprep.subr.mxu0 %v878
    %2950 = vmatpush1.msra.mxu0 %v877
    %2951 = vmatprep.subr.mxu0 %v886
    %2952 = vmatpush1.msra.mxu0 %v885
    %2953 = vmatprep.subr.mxu0 %v894
    %2954 = vmatpush1.msra.mxu0 %v893
    %2955 = vmatprep.subr.mxu0 %v902
    %2956 = vmatpush1.msra.mxu0 %v901
    %2957 = vmatprep.subr.mxu0 %v910
    %2958 = vmatpush1.msra.mxu0 %v909
    %2959 = vmatprep.subr.mxu0 %v918
    %2960 = vmatpush1.msra.mxu0 %v917
    %2961 = vmatprep.subr.mxu0 %v926
    %2962 = vmatpush1.msra.mxu0 %v925
    %2963 = vmatprep.subr.mxu0 %v934
    %2964 = vmatpush1.msra.mxu0 %v933
    %2965 = vmatprep.subr.mxu0 %v942
    %2966 = vmatpush1.msra.mxu0 %v941
    %2967 = vmatprep.subr.mxu0 %v950
    %2968 = vmatpush1.msra.mxu0 %v949
    %2969 = vmatprep.subr.mxu0 %v958
    %2970 = vmatpush1.msra.mxu0 %v957
    %2971 = vmatprep.subr.mxu0 %v966
    %2972 = vmatpush1.msra.mxu0 %v965
    %2973 = vmatprep.subr.mxu0 %v974
    %2974 = vmatpush1.msra.mxu0 %v973
    %2975 = vmatprep.subr.mxu0 %v982
    %2976 = vmatpush1.msra.mxu0 %v981
    %2977 = vmatprep.subr.mxu0 %v990
    %2978 = vmatpush1.msra.mxu0 %v989
    %2979 = vmatprep.subr.mxu0 %v998
    %2980 = vmatpush1.msra.mxu0 %v997
    %2981 = vmatprep.subr.mxu0 %v1006
    %2982 = vmatpush1.msra.mxu0 %v1005
    %2983 = vmatprep.subr.mxu0 %v1014
    %2984 = vmatpush1.msra.mxu0 %v1013
    %2985 = vmatprep.subr.mxu0 %v1022
    %2986 = vmatpush1.msra.mxu0 %v1021
    %2987 = vmatprep.subr.mxu0 %v1030
    %2988 = vmatpush1.msra.mxu0 %v1029
    %2989 = vmatprep.subr.mxu0 %v1038
    %2990 = vmatpush1.msra.mxu0 %v1037
    %2991 = vmatprep.subr.mxu0 %v1046
    %2992 = vmatpush1.msra.mxu0 %v1045
    %2993 = vmatprep.subr.mxu0 %v1054
    %2994 = vmatpush1.msra.mxu0 %v1053
    %2995 = vmatprep.subr.mxu0 %v1062
    %2996 = vmatpush1.msra.mxu0 %v1061
    %2997 = vmatprep.subr.mxu0 %v1070
    %2998 = vmatpush1.msra.mxu0 %v1069
    %2999 = vmatprep.subr.mxu0 %v1078
    %3000 = vmatpush1.msra.mxu0 %v1077
    %3001 = vmatprep.subr.mxu0 %v1086
    %3002 = vmatpush1.msra.mxu0 %v1085
    %3003 = vmatprep.subr.mxu0 %v1094
    %3004 = vmatpush1.msra.mxu0 %v1093
    %3005 = vmatprep.subr.mxu0 %v1102
    %3006 = vmatpush1.msra.mxu0 %v1101
    %3007 = vmatprep.mubr.f32.mxu0 %v354
    %3008 = vmatmul.mubr.f32.gmra.mrb[0].mxu0 %v352
    %v3009 = vpop.f32.mrb[0].mxu0
    %v3010 = vadd.f32 %v2906, %v3009
    %v3011 = vpop.f32.mrb[0].mxu0
    %v3012 = vadd.f32 %v2910, %v3011
    %3013 = vdwg.mxu0
    %3014 = vmatprep.subr.mxu0 %v1110
    %3015 = vmatpush1.msra.mxu0 %v1109
    %3016 = vmatprep.subr.mxu0 %v1118
    %3017 = vmatpush1.msra.mxu0 %v1117
    %3018 = vmatprep.subr.mxu0 %v1126
    %3019 = vmatpush1.msra.mxu0 %v1125
    %3020 = vmatprep.subr.mxu0 %v1134
    %3021 = vmatpush1.msra.mxu0 %v1133
    %3022 = vmatprep.subr.mxu0 %v1142
    %3023 = vmatpush1.msra.mxu0 %v1141
    %3024 = vmatprep.subr.mxu0 %v1150
    %3025 = vmatpush1.msra.mxu0 %v1149
    %3026 = vmatprep.subr.mxu0 %v1158
    %3027 = vmatpush1.msra.mxu0 %v1157
    %3028 = vmatprep.subr.mxu0 %v1166
    %3029 = vmatpush1.msra.mxu0 %v1165
    %3030 = vmatprep.subr.mxu0 %v1174
    %3031 = vmatpush1.msra.mxu0 %v1173
    %3032 = vmatprep.subr.mxu0 %v1182
    %3033 = vmatpush1.msra.mxu0 %v1181
    %3034 = vmatprep.subr.mxu0 %v1190
    %3035 = vmatpush1.msra.mxu0 %v1189
    %3036 = vmatprep.subr.mxu0 %v1198
    %3037 = vmatpush1.msra.mxu0 %v1197
    %3038 = vmatprep.subr.mxu0 %v1206
    %3039 = vmatpush1.msra.mxu0 %v1205
    %3040 = vmatprep.subr.mxu0 %v1214
    %3041 = vmatpush1.msra.mxu0 %v1213
    %3042 = vmatprep.subr.mxu0 %v1222
    %3043 = vmatpush1.msra.mxu0 %v1221
    %3044 = vmatprep.subr.mxu0 %v1230
    %3045 = vmatpush1.msra.mxu0 %v1229
    %3046 = vmatprep.subr.mxu0 %v1238
    %3047 = vmatpush1.msra.mxu0 %v1237
    %3048 = vmatprep.subr.mxu0 %v1246
    %3049 = vmatpush1.msra.mxu0 %v1245
    %3050 = vmatprep.subr.mxu0 %v1254
    %3051 = vmatpush1.msra.mxu0 %v1253
    %3052 = vmatprep.subr.mxu0 %v1262
    %3053 = vmatpush1.msra.mxu0 %v1261
    %3054 = vmatprep.subr.mxu0 %v1270
    %3055 = vmatpush1.msra.mxu0 %v1269
    %3056 = vmatprep.subr.mxu0 %v1278
    %3057 = vmatpush1.msra.mxu0 %v1277
    %3058 = vmatprep.subr.mxu0 %v1286
    %3059 = vmatpush1.msra.mxu0 %v1285
    %3060 = vmatprep.subr.mxu0 %v1294
    %3061 = vmatpush1.msra.mxu0 %v1293
    %3062 = vmatprep.subr.mxu0 %v1302
    %3063 = vmatpush1.msra.mxu0 %v1301
    %3064 = vmatprep.subr.mxu0 %v1310
    %3065 = vmatpush1.msra.mxu0 %v1309
    %3066 = vmatprep.subr.mxu0 %v1318
    %3067 = vmatpush1.msra.mxu0 %v1317
    %3068 = vmatprep.subr.mxu0 %v1326
    %3069 = vmatpush1.msra.mxu0 %v1325
    %3070 = vmatprep.subr.mxu0 %v1334
    %3071 = vmatpush1.msra.mxu0 %v1333
    %3072 = vmatprep.subr.mxu0 %v1342
    %3073 = vmatpush1.msra.mxu0 %v1341
    %3074 = vmatprep.subr.mxu0 %v1350
    %3075 = vmatpush1.msra.mxu0 %v1349
    %3076 = vmatprep.subr.mxu0 %v1358
    %3077 = vmatpush1.msra.mxu0 %v1357
    %3078 = vmatprep.mubr.f32.mxu0 %v425
    %3079 = vmatmul.mubr.f32.gmra.mrb[0].mxu0 %v423
    %v3080 = vpop.f32.mrb[0].mxu0
    %v3081 = vadd.f32 %v3010, %v3080
    %v3082 = vpop.f32.mrb[0].mxu0
    %v3083 = vadd.f32 %v3012, %v3082
    %3084 = vdwg.mxu0
    %3085 = vmatprep.subr.mxu0 %v1366
    %3086 = vmatpush1.msra.mxu0 %v1365
    %3087 = vmatprep.subr.mxu0 %v1374
    %3088 = vmatpush1.msra.mxu0 %v1373
    %3089 = vmatprep.subr.mxu0 %v1382
    %3090 = vmatpush1.msra.mxu0 %v1381
    %3091 = vmatprep.subr.mxu0 %v1390
    %3092 = vmatpush1.msra.mxu0 %v1389
    %3093 = vmatprep.subr.mxu0 %v1398
    %3094 = vmatpush1.msra.mxu0 %v1397
    %3095 = vmatprep.subr.mxu0 %v1406
    %3096 = vmatpush1.msra.mxu0 %v1405
    %3097 = vmatprep.subr.mxu0 %v1414
    %3098 = vmatpush1.msra.mxu0 %v1413
    %3099 = vmatprep.subr.mxu0 %v1422
    %3100 = vmatpush1.msra.mxu0 %v1421
    %3101 = vmatprep.subr.mxu0 %v1430
    %3102 = vmatpush1.msra.mxu0 %v1429
    %3103 = vmatprep.subr.mxu0 %v1438
    %3104 = vmatpush1.msra.mxu0 %v1437
    %3105 = vmatprep.subr.mxu0 %v1446
    %3106 = vmatpush1.msra.mxu0 %v1445
    %3107 = vmatprep.subr.mxu0 %v1454
    %3108 = vmatpush1.msra.mxu0 %v1453
    %3109 = vmatprep.subr.mxu0 %v1462
    %3110 = vmatpush1.msra.mxu0 %v1461
    %3111 = vmatprep.subr.mxu0 %v1470
    %3112 = vmatpush1.msra.mxu0 %v1469
    %3113 = vmatprep.subr.mxu0 %v1478
    %3114 = vmatpush1.msra.mxu0 %v1477
    %3115 = vmatprep.subr.mxu0 %v1486
    %3116 = vmatpush1.msra.mxu0 %v1485
    %3117 = vmatprep.subr.mxu0 %v1494
    %3118 = vmatpush1.msra.mxu0 %v1493
    %3119 = vmatprep.subr.mxu0 %v1502
    %3120 = vmatpush1.msra.mxu0 %v1501
    %3121 = vmatprep.subr.mxu0 %v1510
    %3122 = vmatpush1.msra.mxu0 %v1509
    %3123 = vmatprep.subr.mxu0 %v1518
    %3124 = vmatpush1.msra.mxu0 %v1517
    %3125 = vmatprep.subr.mxu0 %v1526
    %3126 = vmatpush1.msra.mxu0 %v1525
    %3127 = vmatprep.subr.mxu0 %v1534
    %3128 = vmatpush1.msra.mxu0 %v1533
    %3129 = vmatprep.subr.mxu0 %v1542
    %3130 = vmatpush1.msra.mxu0 %v1541
    %3131 = vmatprep.subr.mxu0 %v1550
    %3132 = vmatpush1.msra.mxu0 %v1549
    %3133 = vmatprep.subr.mxu0 %v1558
    %3134 = vmatpush1.msra.mxu0 %v1557
    %3135 = vmatprep.subr.mxu0 %v1566
    %3136 = vmatpush1.msra.mxu0 %v1565
    %3137 = vmatprep.subr.mxu0 %v1574
    %3138 = vmatpush1.msra.mxu0 %v1573
    %3139 = vmatprep.subr.mxu0 %v1582
    %3140 = vmatpush1.msra.mxu0 %v1581
    %3141 = vmatprep.subr.mxu0 %v1590
    %3142 = vmatpush1.msra.mxu0 %v1589
    %3143 = vmatprep.subr.mxu0 %v1598
    %3144 = vmatpush1.msra.mxu0 %v1597
    %3145 = vmatprep.subr.mxu0 %v1606
    %3146 = vmatpush1.msra.mxu0 %v1605
    %3147 = vmatprep.subr.mxu0 %v1614
    %3148 = vmatpush1.msra.mxu0 %v1613
    %3149 = vmatprep.mubr.f32.mxu0 %v496
    %3150 = vmatmul.mubr.f32.gmra.mrb[0].mxu0 %v494
    %v3151 = vpop.f32.mrb[0].mxu0
    %v3152 = vadd.f32 %v3081, %v3151
    %v3153 = vpop.f32.mrb[0].mxu0
    %v3154 = vadd.f32 %v3083, %v3153
    %3155 = vdwg.mxu0
    %3156 = vmatprep.subr.mxu0 %v1622
    %3157 = vmatpush1.msra.mxu0 %v1621
    %3158 = vmatprep.subr.mxu0 %v1630
    %3159 = vmatpush1.msra.mxu0 %v1629
    %3160 = vmatprep.subr.mxu0 %v1638
    %3161 = vmatpush1.msra.mxu0 %v1637
    %3162 = vmatprep.subr.mxu0 %v1646
    %3163 = vmatpush1.msra.mxu0 %v1645
    %3164 = vmatprep.subr.mxu0 %v1654
    %3165 = vmatpush1.msra.mxu0 %v1653
    %3166 = vmatprep.subr.mxu0 %v1662
    %3167 = vmatpush1.msra.mxu0 %v1661
    %3168 = vmatprep.subr.mxu0 %v1670
    %3169 = vmatpush1.msra.mxu0 %v1669
    %3170 = vmatprep.subr.mxu0 %v1678
    %3171 = vmatpush1.msra.mxu0 %v1677
    %3172 = vmatprep.subr.mxu0 %v1686
    %3173 = vmatpush1.msra.mxu0 %v1685
    %3174 = vmatprep.subr.mxu0 %v1694
    %3175 = vmatpush1.msra.mxu0 %v1693
    %3176 = vmatprep.subr.mxu0 %v1702
    %3177 = vmatpush1.msra.mxu0 %v1701
    %3178 = vmatprep.subr.mxu0 %v1710
    %3179 = vmatpush1.msra.mxu0 %v1709
    %3180 = vmatprep.subr.mxu0 %v1718
    %3181 = vmatpush1.msra.mxu0 %v1717
    %3182 = vmatprep.subr.mxu0 %v1726
    %3183 = vmatpush1.msra.mxu0 %v1725
    %3184 = vmatprep.subr.mxu0 %v1734
    %3185 = vmatpush1.msra.mxu0 %v1733
    %3186 = vmatprep.subr.mxu0 %v1742
    %3187 = vmatpush1.msra.mxu0 %v1741
    %3188 = vmatprep.subr.mxu0 %v1750
    %3189 = vmatpush1.msra.mxu0 %v1749
    %3190 = vmatprep.subr.mxu0 %v1758
    %3191 = vmatpush1.msra.mxu0 %v1757
    %3192 = vmatprep.subr.mxu0 %v1766
    %3193 = vmatpush1.msra.mxu0 %v1765
    %3194 = vmatprep.subr.mxu0 %v1774
    %3195 = vmatpush1.msra.mxu0 %v1773
    %3196 = vmatprep.subr.mxu0 %v1782
    %3197 = vmatpush1.msra.mxu0 %v1781
    %3198 = vmatprep.subr.mxu0 %v1790
    %3199 = vmatpush1.msra.mxu0 %v1789
    %3200 = vmatprep.subr.mxu0 %v1798
    %3201 = vmatpush1.msra.mxu0 %v1797
    %3202 = vmatprep.subr.mxu0 %v1806
    %3203 = vmatpush1.msra.mxu0 %v1805
    %3204 = vmatprep.subr.mxu0 %v1814
    %3205 = vmatpush1.msra.mxu0 %v1813
    %3206 = vmatprep.subr.mxu0 %v1822
    %3207 = vmatpush1.msra.mxu0 %v1821
    %3208 = vmatprep.subr.mxu0 %v1830
    %3209 = vmatpush1.msra.mxu0 %v1829
    %3210 = vmatprep.subr.mxu0 %v1838
    %3211 = vmatpush1.msra.mxu0 %v1837
    %3212 = vmatprep.subr.mxu0 %v1846
    %3213 = vmatpush1.msra.mxu0 %v1845
    %3214 = vmatprep.subr.mxu0 %v1854
    %3215 = vmatpush1.msra.mxu0 %v1853
    %3216 = vmatprep.subr.mxu0 %v1862
    %3217 = vmatpush1.msra.mxu0 %v1861
    %3218 = vmatprep.subr.mxu0 %v1870
    %3219 = vmatpush1.msra.mxu0 %v1869
    %3220 = vmatprep.mubr.f32.mxu0 %v567
    %3221 = vmatmul.mubr.f32.gmra.mrb[0].mxu0 %v565
    %v3222 = vpop.f32.mrb[0].mxu0
    %v3223 = vadd.f32 %v3152, %v3222
    %v3224 = vpop.f32.mrb[0].mxu0
    %v3225 = vadd.f32 %v3154, %v3224
    %3226 = vdwg.mxu0
    %3227 = vmatprep.subr.mxu0 %v1878
    %3228 = vmatpush1.msra.mxu0 %v1877
    %3229 = vmatprep.subr.mxu0 %v1886
    %3230 = vmatpush1.msra.mxu0 %v1885
    %3231 = vmatprep.subr.mxu0 %v1894
    %3232 = vmatpush1.msra.mxu0 %v1893
    %3233 = vmatprep.subr.mxu0 %v1902
    %3234 = vmatpush1.msra.mxu0 %v1901
    %3235 = vmatprep.subr.mxu0 %v1910
    %3236 = vmatpush1.msra.mxu0 %v1909
    %3237 = vmatprep.subr.mxu0 %v1918
    %3238 = vmatpush1.msra.mxu0 %v1917
    %3239 = vmatprep.subr.mxu0 %v1926
    %3240 = vmatpush1.msra.mxu0 %v1925
    %3241 = vmatprep.subr.mxu0 %v1934
    %3242 = vmatpush1.msra.mxu0 %v1933
    %3243 = vmatprep.subr.mxu0 %v1942
    %3244 = vmatpush1.msra.mxu0 %v1941
    %3245 = vmatprep.subr.mxu0 %v1950
    %3246 = vmatpush1.msra.mxu0 %v1949
    %3247 = vmatprep.subr.mxu0 %v1958
    %3248 = vmatpush1.msra.mxu0 %v1957
    %3249 = vmatprep.subr.mxu0 %v1966
    %3250 = vmatpush1.msra.mxu0 %v1965
    %3251 = vmatprep.subr.mxu0 %v1974
    %3252 = vmatpush1.msra.mxu0 %v1973
    %3253 = vmatprep.subr.mxu0 %v1982
    %3254 = vmatpush1.msra.mxu0 %v1981
    %3255 = vmatprep.subr.mxu0 %v1990
    %3256 = vmatpush1.msra.mxu0 %v1989
    %3257 = vmatprep.subr.mxu0 %v1998
    %3258 = vmatpush1.msra.mxu0 %v1997
    %3259 = vmatprep.subr.mxu0 %v2006
    %3260 = vmatpush1.msra.mxu0 %v2005
    %3261 = vmatprep.subr.mxu0 %v2014
    %3262 = vmatpush1.msra.mxu0 %v2013
    %3263 = vmatprep.subr.mxu0 %v2022
    %3264 = vmatpush1.msra.mxu0 %v2021
    %3265 = vmatprep.subr.mxu0 %v2030
    %3266 = vmatpush1.msra.mxu0 %v2029
    %3267 = vmatprep.subr.mxu0 %v2038
    %3268 = vmatpush1.msra.mxu0 %v2037
    %3269 = vmatprep.subr.mxu0 %v2046
    %3270 = vmatpush1.msra.mxu0 %v2045
    %3271 = vmatprep.subr.mxu0 %v2054
    %3272 = vmatpush1.msra.mxu0 %v2053
    %3273 = vmatprep.subr.mxu0 %v2062
    %3274 = vmatpush1.msra.mxu0 %v2061
    %3275 = vmatprep.subr.mxu0 %v2070
    %3276 = vmatpush1.msra.mxu0 %v2069
    %3277 = vmatprep.subr.mxu0 %v2078
    %3278 = vmatpush1.msra.mxu0 %v2077
    %3279 = vmatprep.subr.mxu0 %v2086
    %3280 = vmatpush1.msra.mxu0 %v2085
    %3281 = vmatprep.subr.mxu0 %v2094
    %3282 = vmatpush1.msra.mxu0 %v2093
    %3283 = vmatprep.subr.mxu0 %v2102
    %3284 = vmatpush1.msra.mxu0 %v2101
    %3285 = vmatprep.subr.mxu0 %v2110
    %3286 = vmatpush1.msra.mxu0 %v2109
    %3287 = vmatprep.subr.mxu0 %v2118
    %3288 = vmatpush1.msra.mxu0 %v2117
    %3289 = vmatprep.subr.mxu0 %v2126
    %3290 = vmatpush1.msra.mxu0 %v2125
    %3291 = vmatprep.mubr.f32.mxu0 %v638
    %3292 = vmatmul.mubr.f32.gmra.mrb[0].mxu0 %v636
    %v3293 = vpop.f32.mrb[0].mxu0
    %v3294 = vadd.f32 %v3223, %v3293
    %v3295 = vpop.f32.mrb[0].mxu0
    %v3296 = vadd.f32 %v3225, %v3295
    %3297 = vdwg.mxu0
    %3298 = vmatprep.subr.mxu0 %v2134
    %3299 = vmatpush1.msra.mxu0 %v2133
    %3300 = vmatprep.subr.mxu0 %v2142
    %3301 = vmatpush1.msra.mxu0 %v2141
    %3302 = vmatprep.subr.mxu0 %v2150
    %3303 = vmatpush1.msra.mxu0 %v2149
    %3304 = vmatprep.subr.mxu0 %v2158
    %3305 = vmatpush1.msra.mxu0 %v2157
    %3306 = vmatprep.subr.mxu0 %v2166
    %3307 = vmatpush1.msra.mxu0 %v2165
    %3308 = vmatprep.subr.mxu0 %v2174
    %3309 = vmatpush1.msra.mxu0 %v2173
    %3310 = vmatprep.subr.mxu0 %v2182
    %3311 = vmatpush1.msra.mxu0 %v2181
    %3312 = vmatprep.subr.mxu0 %v2190
    %3313 = vmatpush1.msra.mxu0 %v2189
    %3314 = vmatprep.subr.mxu0 %v2198
    %3315 = vmatpush1.msra.mxu0 %v2197
    %3316 = vmatprep.subr.mxu0 %v2206
    %3317 = vmatpush1.msra.mxu0 %v2205
    %3318 = vmatprep.subr.mxu0 %v2214
    %3319 = vmatpush1.msra.mxu0 %v2213
    %3320 = vmatprep.subr.mxu0 %v2222
    %3321 = vmatpush1.msra.mxu0 %v2221
    %3322 = vmatprep.subr.mxu0 %v2230
    %3323 = vmatpush1.msra.mxu0 %v2229
    %3324 = vmatprep.subr.mxu0 %v2238
    %3325 = vmatpush1.msra.mxu0 %v2237
    %3326 = vmatprep.subr.mxu0 %v2246
    %3327 = vmatpush1.msra.mxu0 %v2245
    %3328 = vmatprep.subr.mxu0 %v2254
    %3329 = vmatpush1.msra.mxu0 %v2253
    %3330 = vmatprep.subr.mxu0 %v2262
    %3331 = vmatpush1.msra.mxu0 %v2261
    %3332 = vmatprep.subr.mxu0 %v2270
    %3333 = vmatpush1.msra.mxu0 %v2269
    %3334 = vmatprep.subr.mxu0 %v2278
    %3335 = vmatpush1.msra.mxu0 %v2277
    %3336 = vmatprep.subr.mxu0 %v2286
    %3337 = vmatpush1.msra.mxu0 %v2285
    %3338 = vmatprep.subr.mxu0 %v2294
    %3339 = vmatpush1.msra.mxu0 %v2293
    %3340 = vmatprep.subr.mxu0 %v2302
    %3341 = vmatpush1.msra.mxu0 %v2301
    %3342 = vmatprep.subr.mxu0 %v2310
    %3343 = vmatpush1.msra.mxu0 %v2309
    %3344 = vmatprep.subr.mxu0 %v2318
    %3345 = vmatpush1.msra.mxu0 %v2317
    %3346 = vmatprep.subr.mxu0 %v2326
    %3347 = vmatpush1.msra.mxu0 %v2325
    %3348 = vmatprep.subr.mxu0 %v2334
    %3349 = vmatpush1.msra.mxu0 %v2333
    %3350 = vmatprep.subr.mxu0 %v2342
    %3351 = vmatpush1.msra.mxu0 %v2341
    %3352 = vmatprep.subr.mxu0 %v2350
    %3353 = vmatpush1.msra.mxu0 %v2349
    %3354 = vmatprep.subr.mxu0 %v2358
    %3355 = vmatpush1.msra.mxu0 %v2357
    %3356 = vmatprep.subr.mxu0 %v2366
    %3357 = vmatpush1.msra.mxu0 %v2365
    %3358 = vmatprep.subr.mxu0 %v2374
    %3359 = vmatpush1.msra.mxu0 %v2373
    %3360 = vmatprep.subr.mxu0 %v2382
    %3361 = vmatpush1.msra.mxu0 %v2381
    %3362 = vmatprep.mubr.f32.mxu0 %v709
    %3363 = vmatmul.mubr.f32.gmra.mrb[0].mxu0 %v707
    %v3364 = vpop.f32.mrb[0].mxu0
    %v3365 = vadd.f32 %v3294, %v3364
    %v3366 = vpop.f32.mrb[0].mxu0
    %v3367 = vadd.f32 %v3296, %v3366
    %3368 = vdwg.mxu0
    %3369 = vmatprep.subr.mxu0 %v2390
    %3370 = vmatpush1.msra.mxu0 %v2389
    %3371 = vmatprep.subr.mxu0 %v2398
    %3372 = vmatpush1.msra.mxu0 %v2397
    %3373 = vmatprep.subr.mxu0 %v2406
    %3374 = vmatpush1.msra.mxu0 %v2405
    %3375 = vmatprep.subr.mxu0 %v2414
    %3376 = vmatpush1.msra.mxu0 %v2413
    %3377 = vmatprep.subr.mxu0 %v2422
    %3378 = vmatpush1.msra.mxu0 %v2421
    %3379 = vmatprep.subr.mxu0 %v2430
    %3380 = vmatpush1.msra.mxu0 %v2429
    %3381 = vmatprep.subr.mxu0 %v2438
    %3382 = vmatpush1.msra.mxu0 %v2437
    %3383 = vmatprep.subr.mxu0 %v2446
    %3384 = vmatpush1.msra.mxu0 %v2445
    %3385 = vmatprep.subr.mxu0 %v2454
    %3386 = vmatpush1.msra.mxu0 %v2453
    %3387 = vmatprep.subr.mxu0 %v2462
    %3388 = vmatpush1.msra.mxu0 %v2461
    %3389 = vmatprep.subr.mxu0 %v2470
    %3390 = vmatpush1.msra.mxu0 %v2469
    %3391 = vmatprep.subr.mxu0 %v2478
    %3392 = vmatpush1.msra.mxu0 %v2477
    %3393 = vmatprep.subr.mxu0 %v2486
    %3394 = vmatpush1.msra.mxu0 %v2485
    %3395 = vmatprep.subr.mxu0 %v2494
    %3396 = vmatpush1.msra.mxu0 %v2493
    %3397 = vmatprep.subr.mxu0 %v2502
    %3398 = vmatpush1.msra.mxu0 %v2501
    %3399 = vmatprep.subr.mxu0 %v2510
    %3400 = vmatpush1.msra.mxu0 %v2509
    %3401 = vmatprep.subr.mxu0 %v2518
    %3402 = vmatpush1.msra.mxu0 %v2517
    %3403 = vmatprep.subr.mxu0 %v2526
    %3404 = vmatpush1.msra.mxu0 %v2525
    %3405 = vmatprep.subr.mxu0 %v2534
    %3406 = vmatpush1.msra.mxu0 %v2533
    %3407 = vmatprep.subr.mxu0 %v2542
    %3408 = vmatpush1.msra.mxu0 %v2541
    %3409 = vmatprep.subr.mxu0 %v2550
    %3410 = vmatpush1.msra.mxu0 %v2549
    %3411 = vmatprep.subr.mxu0 %v2558
    %3412 = vmatpush1.msra.mxu0 %v2557
    %3413 = vmatprep.subr.mxu0 %v2566
    %3414 = vmatpush1.msra.mxu0 %v2565
    %3415 = vmatprep.subr.mxu0 %v2574
    %3416 = vmatpush1.msra.mxu0 %v2573
    %3417 = vmatprep.subr.mxu0 %v2582
    %3418 = vmatpush1.msra.mxu0 %v2581
    %3419 = vmatprep.subr.mxu0 %v2590
    %3420 = vmatpush1.msra.mxu0 %v2589
    %3421 = vmatprep.subr.mxu0 %v2598
    %3422 = vmatpush1.msra.mxu0 %v2597
    %3423 = vmatprep.subr.mxu0 %v2606
    %3424 = vmatpush1.msra.mxu0 %v2605
    %3425 = vmatprep.subr.mxu0 %v2614
    %3426 = vmatpush1.msra.mxu0 %v2613
    %3427 = vmatprep.subr.mxu0 %v2622
    %3428 = vmatpush1.msra.mxu0 %v2621
    %3429 = vmatprep.subr.mxu0 %v2630
    %3430 = vmatpush1.msra.mxu0 %v2629
    %3431 = vmatprep.subr.mxu0 %v2638
    %3432 = vmatpush1.msra.mxu0 %v2637
    %3433 = vmatprep.mubr.f32.mxu0 %v780
    %3434 = vmatmul.mubr.f32.gmra.mrb[0].mxu0 %v778
    %v3435 = vpop.f32.mrb[0].mxu0
    %v3436 = vadd.f32 %v3365, %v3435
    %v3437 = vpop.f32.mrb[0].mxu0
    %v3438 = vadd.f32 %v3367, %v3437
    %3439 = vdwg.mxu0
    %3440 = vmatprep.subr.mxu0 %v2646
    %3441 = vmatpush1.msra.mxu0 %v2645
    %3442 = vmatprep.subr.mxu0 %v2654
    %3443 = vmatpush1.msra.mxu0 %v2653
    %3444 = vmatprep.subr.mxu0 %v2662
    %3445 = vmatpush1.msra.mxu0 %v2661
    %3446 = vmatprep.subr.mxu0 %v2670
    %3447 = vmatpush1.msra.mxu0 %v2669
    %3448 = vmatprep.subr.mxu0 %v2678
    %3449 = vmatpush1.msra.mxu0 %v2677
    %3450 = vmatprep.subr.mxu0 %v2686
    %3451 = vmatpush1.msra.mxu0 %v2685
    %3452 = vmatprep.subr.mxu0 %v2694
    %3453 = vmatpush1.msra.mxu0 %v2693
    %3454 = vmatprep.subr.mxu0 %v2702
    %3455 = vmatpush1.msra.mxu0 %v2701
    %3456 = vmatprep.subr.mxu0 %v2710
    %3457 = vmatpush1.msra.mxu0 %v2709
    %3458 = vmatprep.subr.mxu0 %v2718
    %3459 = vmatpush1.msra.mxu0 %v2717
    %3460 = vmatprep.subr.mxu0 %v2726
    %3461 = vmatpush1.msra.mxu0 %v2725
    %3462 = vmatprep.subr.mxu0 %v2734
    %3463 = vmatpush1.msra.mxu0 %v2733
    %3464 = vmatprep.subr.mxu0 %v2742
    %3465 = vmatpush1.msra.mxu0 %v2741
    %3466 = vmatprep.subr.mxu0 %v2750
    %3467 = vmatpush1.msra.mxu0 %v2749
    %3468 = vmatprep.subr.mxu0 %v2758
    %3469 = vmatpush1.msra.mxu0 %v2757
    %3470 = vmatprep.subr.mxu0 %v2766
    %3471 = vmatpush1.msra.mxu0 %v2765
    %3472 = vmatprep.subr.mxu0 %v2774
    %3473 = vmatpush1.msra.mxu0 %v2773
    %3474 = vmatprep.subr.mxu0 %v2782
    %3475 = vmatpush1.msra.mxu0 %v2781
    %3476 = vmatprep.subr.mxu0 %v2790
    %3477 = vmatpush1.msra.mxu0 %v2789
    %3478 = vmatprep.subr.mxu0 %v2798
    %3479 = vmatpush1.msra.mxu0 %v2797
    %3480 = vmatprep.subr.mxu0 %v2806
    %3481 = vmatpush1.msra.mxu0 %v2805
    %3482 = vmatprep.subr.mxu0 %v2814
    %3483 = vmatpush1.msra.mxu0 %v2813
    %3484 = vmatprep.subr.mxu0 %v2822
    %3485 = vmatpush1.msra.mxu0 %v2821
    %3486 = vmatprep.subr.mxu0 %v2830
    %3487 = vmatpush1.msra.mxu0 %v2829
    %3488 = vmatprep.subr.mxu0 %v2838
    %3489 = vmatpush1.msra.mxu0 %v2837
    %3490 = vmatprep.subr.mxu0 %v2846
    %3491 = vmatpush1.msra.mxu0 %v2845
    %3492 = vmatprep.subr.mxu0 %v2854
    %3493 = vmatpush1.msra.mxu0 %v2853
    %3494 = vmatprep.subr.mxu0 %v2862
    %3495 = vmatpush1.msra.mxu0 %v2861
    %3496 = vmatprep.subr.mxu0 %v2870
    %3497 = vmatpush1.msra.mxu0 %v2869
    %3498 = vmatprep.subr.mxu0 %v2878
    %3499 = vmatpush1.msra.mxu0 %v2877
    %3500 = vmatprep.subr.mxu0 %v2886
    %3501 = vmatpush1.msra.mxu0 %v2885
    %3502 = vmatprep.subr.mxu0 %v2894
    %3503 = vmatpush1.msra.mxu0 %v2893
    %3504 = vmatprep.mubr.f32.mxu0 %v851
    %3505 = vmatmul.mubr.f32.gmra.mrb[0].mxu0 %v849
    %v3506 = vpop.f32.mrb[0].mxu0
    %v3507 = vadd.f32 %v3436, %v3506
    %v3508 = vpop.f32.mrb[0].mxu0
    %v3509 = vadd.f32 %v3438, %v3508
    %3510 = vdwg.mxu0
    %3511 = vmatprep.subr.mxu0 %v856
    %3512 = vmatpush1.msra.mxu0 %v855
    %3513 = vmatprep.subr.mxu0 %v864
    %3514 = vmatpush1.msra.mxu0 %v863
    %3515 = vmatprep.subr.mxu0 %v872
    %3516 = vmatpush1.msra.mxu0 %v871
    %3517 = vmatprep.subr.mxu0 %v880
    %3518 = vmatpush1.msra.mxu0 %v879
    %3519 = vmatprep.subr.mxu0 %v888
    %3520 = vmatpush1.msra.mxu0 %v887
    %3521 = vmatprep.subr.mxu0 %v896
    %3522 = vmatpush1.msra.mxu0 %v895
    %3523 = vmatprep.subr.mxu0 %v904
    %3524 = vmatpush1.msra.mxu0 %v903
    %3525 = vmatprep.subr.mxu0 %v912
    %3526 = vmatpush1.msra.mxu0 %v911
    %3527 = vmatprep.subr.mxu0 %v920
    %3528 = vmatpush1.msra.mxu0 %v919
    %3529 = vmatprep.subr.mxu0 %v928
    %3530 = vmatpush1.msra.mxu0 %v927
    %3531 = vmatprep.subr.mxu0 %v936
    %3532 = vmatpush1.msra.mxu0 %v935
    %3533 = vmatprep.subr.mxu0 %v944
    %3534 = vmatpush1.msra.mxu0 %v943
    %3535 = vmatprep.subr.mxu0 %v952
    %3536 = vmatpush1.msra.mxu0 %v951
    %3537 = vmatprep.subr.mxu0 %v960
    %3538 = vmatpush1.msra.mxu0 %v959
    %3539 = vmatprep.subr.mxu0 %v968
    %3540 = vmatpush1.msra.mxu0 %v967
    %3541 = vmatprep.subr.mxu0 %v976
    %3542 = vmatpush1.msra.mxu0 %v975
    %3543 = vmatprep.subr.mxu0 %v984
    %3544 = vmatpush1.msra.mxu0 %v983
    %3545 = vmatprep.subr.mxu0 %v992
    %3546 = vmatpush1.msra.mxu0 %v991
    %3547 = vmatprep.subr.mxu0 %v1000
    %3548 = vmatpush1.msra.mxu0 %v999
    %3549 = vmatprep.subr.mxu0 %v1008
    %3550 = vmatpush1.msra.mxu0 %v1007
    %3551 = vmatprep.subr.mxu0 %v1016
    %3552 = vmatpush1.msra.mxu0 %v1015
    %3553 = vmatprep.subr.mxu0 %v1024
    %3554 = vmatpush1.msra.mxu0 %v1023
    %3555 = vmatprep.subr.mxu0 %v1032
    %3556 = vmatpush1.msra.mxu0 %v1031
    %3557 = vmatprep.subr.mxu0 %v1040
    %3558 = vmatpush1.msra.mxu0 %v1039
    %3559 = vmatprep.subr.mxu0 %v1048
    %3560 = vmatpush1.msra.mxu0 %v1047
    %3561 = vmatprep.subr.mxu0 %v1056
    %3562 = vmatpush1.msra.mxu0 %v1055
    %3563 = vmatprep.subr.mxu0 %v1064
    %3564 = vmatpush1.msra.mxu0 %v1063
    %3565 = vmatprep.subr.mxu0 %v1072
    %3566 = vmatpush1.msra.mxu0 %v1071
    %3567 = vmatprep.subr.mxu0 %v1080
    %3568 = vmatpush1.msra.mxu0 %v1079
    %3569 = vmatprep.subr.mxu0 %v1088
    %3570 = vmatpush1.msra.mxu0 %v1087
    %3571 = vmatprep.subr.mxu0 %v1096
    %3572 = vmatpush1.msra.mxu0 %v1095
    %3573 = vmatprep.subr.mxu0 %v1104
    %3574 = vmatpush1.msra.mxu0 %v1103
    %3575 = vmatprep.mubr.f32.mxu0 %v354
    %3576 = vmatmul.mubr.f32.gmra.mrb[0].mxu0 %v352
    %v3577 = vpop.f32.mrb[0].mxu0
    %v3578 = vadd.f32 %v2914, %v3577
    %v3579 = vpop.f32.mrb[0].mxu0
    %v3580 = vadd.f32 %v2918, %v3579
    %3581 = vdwg.mxu0
    %3582 = vmatprep.subr.mxu0 %v1112
    %3583 = vmatpush1.msra.mxu0 %v1111
    %3584 = vmatprep.subr.mxu0 %v1120
    %3585 = vmatpush1.msra.mxu0 %v1119
    %3586 = vmatprep.subr.mxu0 %v1128
    %3587 = vmatpush1.msra.mxu0 %v1127
    %3588 = vmatprep.subr.mxu0 %v1136
    %3589 = vmatpush1.msra.mxu0 %v1135
    %3590 = vmatprep.subr.mxu0 %v1144
    %3591 = vmatpush1.msra.mxu0 %v1143
    %3592 = vmatprep.subr.mxu0 %v1152
    %3593 = vmatpush1.msra.mxu0 %v1151
    %3594 = vmatprep.subr.mxu0 %v1160
    %3595 = vmatpush1.msra.mxu0 %v1159
    %3596 = vmatprep.subr.mxu0 %v1168
    %3597 = vmatpush1.msra.mxu0 %v1167
    %3598 = vmatprep.subr.mxu0 %v1176
    %3599 = vmatpush1.msra.mxu0 %v1175
    %3600 = vmatprep.subr.mxu0 %v1184
    %3601 = vmatpush1.msra.mxu0 %v1183
    %3602 = vmatprep.subr.mxu0 %v1192
    %3603 = vmatpush1.msra.mxu0 %v1191
    %3604 = vmatprep.subr.mxu0 %v1200
    %3605 = vmatpush1.msra.mxu0 %v1199
    %3606 = vmatprep.subr.mxu0 %v1208
    %3607 = vmatpush1.msra.mxu0 %v1207
    %3608 = vmatprep.subr.mxu0 %v1216
    %3609 = vmatpush1.msra.mxu0 %v1215
    %3610 = vmatprep.subr.mxu0 %v1224
    %3611 = vmatpush1.msra.mxu0 %v1223
    %3612 = vmatprep.subr.mxu0 %v1232
    %3613 = vmatpush1.msra.mxu0 %v1231
    %3614 = vmatprep.subr.mxu0 %v1240
    %3615 = vmatpush1.msra.mxu0 %v1239
    %3616 = vmatprep.subr.mxu0 %v1248
    %3617 = vmatpush1.msra.mxu0 %v1247
    %3618 = vmatprep.subr.mxu0 %v1256
    %3619 = vmatpush1.msra.mxu0 %v1255
    %3620 = vmatprep.subr.mxu0 %v1264
    %3621 = vmatpush1.msra.mxu0 %v1263
    %3622 = vmatprep.subr.mxu0 %v1272
    %3623 = vmatpush1.msra.mxu0 %v1271
    %3624 = vmatprep.subr.mxu0 %v1280
    %3625 = vmatpush1.msra.mxu0 %v1279
    %3626 = vmatprep.subr.mxu0 %v1288
    %3627 = vmatpush1.msra.mxu0 %v1287
    %3628 = vmatprep.subr.mxu0 %v1296
    %3629 = vmatpush1.msra.mxu0 %v1295
    %3630 = vmatprep.subr.mxu0 %v1304
    %3631 = vmatpush1.msra.mxu0 %v1303
    %3632 = vmatprep.subr.mxu0 %v1312
    %3633 = vmatpush1.msra.mxu0 %v1311
    %3634 = vmatprep.subr.mxu0 %v1320
    %3635 = vmatpush1.msra.mxu0 %v1319
    %3636 = vmatprep.subr.mxu0 %v1328
    %3637 = vmatpush1.msra.mxu0 %v1327
    %3638 = vmatprep.subr.mxu0 %v1336
    %3639 = vmatpush1.msra.mxu0 %v1335
    %3640 = vmatprep.subr.mxu0 %v1344
    %3641 = vmatpush1.msra.mxu0 %v1343
    %3642 = vmatprep.subr.mxu0 %v1352
    %3643 = vmatpush1.msra.mxu0 %v1351
    %3644 = vmatprep.subr.mxu0 %v1360
    %3645 = vmatpush1.msra.mxu0 %v1359
    %3646 = vmatprep.mubr.f32.mxu0 %v425
    %3647 = vmatmul.mubr.f32.gmra.mrb[0].mxu0 %v423
    %v3648 = vpop.f32.mrb[0].mxu0
    %v3649 = vadd.f32 %v3578, %v3648
    %v3650 = vpop.f32.mrb[0].mxu0
    %v3651 = vadd.f32 %v3580, %v3650
    %3652 = vdwg.mxu0
    %3653 = vmatprep.subr.mxu0 %v1368
    %3654 = vmatpush1.msra.mxu0 %v1367
    %3655 = vmatprep.subr.mxu0 %v1376
    %3656 = vmatpush1.msra.mxu0 %v1375
    %3657 = vmatprep.subr.mxu0 %v1384
    %3658 = vmatpush1.msra.mxu0 %v1383
    %3659 = vmatprep.subr.mxu0 %v1392
    %3660 = vmatpush1.msra.mxu0 %v1391
    %3661 = vmatprep.subr.mxu0 %v1400
    %3662 = vmatpush1.msra.mxu0 %v1399
    %3663 = vmatprep.subr.mxu0 %v1408
    %3664 = vmatpush1.msra.mxu0 %v1407
    %3665 = vmatprep.subr.mxu0 %v1416
    %3666 = vmatpush1.msra.mxu0 %v1415
    %3667 = vmatprep.subr.mxu0 %v1424
    %3668 = vmatpush1.msra.mxu0 %v1423
    %3669 = vmatprep.subr.mxu0 %v1432
    %3670 = vmatpush1.msra.mxu0 %v1431
    %3671 = vmatprep.subr.mxu0 %v1440
    %3672 = vmatpush1.msra.mxu0 %v1439
    %3673 = vmatprep.subr.mxu0 %v1448
    %3674 = vmatpush1.msra.mxu0 %v1447
    %3675 = vmatprep.subr.mxu0 %v1456
    %3676 = vmatpush1.msra.mxu0 %v1455
    %3677 = vmatprep.subr.mxu0 %v1464
    %3678 = vmatpush1.msra.mxu0 %v1463
    %3679 = vmatprep.subr.mxu0 %v1472
    %3680 = vmatpush1.msra.mxu0 %v1471
    %3681 = vmatprep.subr.mxu0 %v1480
    %3682 = vmatpush1.msra.mxu0 %v1479
    %3683 = vmatprep.subr.mxu0 %v1488
    %3684 = vmatpush1.msra.mxu0 %v1487
    %3685 = vmatprep.subr.mxu0 %v1496
    %3686 = vmatpush1.msra.mxu0 %v1495
    %3687 = vmatprep.subr.mxu0 %v1504
    %3688 = vmatpush1.msra.mxu0 %v1503
    %3689 = vmatprep.subr.mxu0 %v1512
    %3690 = vmatpush1.msra.mxu0 %v1511
    %3691 = vmatprep.subr.mxu0 %v1520
    %3692 = vmatpush1.msra.mxu0 %v1519
    %3693 = vmatprep.subr.mxu0 %v1528
    %3694 = vmatpush1.msra.mxu0 %v1527
    %3695 = vmatprep.subr.mxu0 %v1536
    %3696 = vmatpush1.msra.mxu0 %v1535
    %3697 = vmatprep.subr.mxu0 %v1544
    %3698 = vmatpush1.msra.mxu0 %v1543
    %3699 = vmatprep.subr.mxu0 %v1552
    %3700 = vmatpush1.msra.mxu0 %v1551
    %3701 = vmatprep.subr.mxu0 %v1560
    %3702 = vmatpush1.msra.mxu0 %v1559
    %3703 = vmatprep.subr.mxu0 %v1568
    %3704 = vmatpush1.msra.mxu0 %v1567
    %3705 = vmatprep.subr.mxu0 %v1576
    %3706 = vmatpush1.msra.mxu0 %v1575
    %3707 = vmatprep.subr.mxu0 %v1584
    %3708 = vmatpush1.msra.mxu0 %v1583
    %3709 = vmatprep.subr.mxu0 %v1592
    %3710 = vmatpush1.msra.mxu0 %v1591
    %3711 = vmatprep.subr.mxu0 %v1600
    %3712 = vmatpush1.msra.mxu0 %v1599
    %3713 = vmatprep.subr.mxu0 %v1608
    %3714 = vmatpush1.msra.mxu0 %v1607
    %3715 = vmatprep.subr.mxu0 %v1616
    %3716 = vmatpush1.msra.mxu0 %v1615
    %3717 = vmatprep.mubr.f32.mxu0 %v496
    %3718 = vmatmul.mubr.f32.gmra.mrb[0].mxu0 %v494
    %v3719 = vpop.f32.mrb[0].mxu0
    %v3720 = vadd.f32 %v3649, %v3719
    %v3721 = vpop.f32.mrb[0].mxu0
    %v3722 = vadd.f32 %v3651, %v3721
    %3723 = vdwg.mxu0
    %3724 = vmatprep.subr.mxu0 %v1624
    %3725 = vmatpush1.msra.mxu0 %v1623
    %3726 = vmatprep.subr.mxu0 %v1632
    %3727 = vmatpush1.msra.mxu0 %v1631
    %3728 = vmatprep.subr.mxu0 %v1640
    %3729 = vmatpush1.msra.mxu0 %v1639
    %3730 = vmatprep.subr.mxu0 %v1648
    %3731 = vmatpush1.msra.mxu0 %v1647
    %3732 = vmatprep.subr.mxu0 %v1656
    %3733 = vmatpush1.msra.mxu0 %v1655
    %3734 = vmatprep.subr.mxu0 %v1664
    %3735 = vmatpush1.msra.mxu0 %v1663
    %3736 = vmatprep.subr.mxu0 %v1672
    %3737 = vmatpush1.msra.mxu0 %v1671
    %3738 = vmatprep.subr.mxu0 %v1680
    %3739 = vmatpush1.msra.mxu0 %v1679
    %3740 = vmatprep.subr.mxu0 %v1688
    %3741 = vmatpush1.msra.mxu0 %v1687
    %3742 = vmatprep.subr.mxu0 %v1696
    %3743 = vmatpush1.msra.mxu0 %v1695
    %3744 = vmatprep.subr.mxu0 %v1704
    %3745 = vmatpush1.msra.mxu0 %v1703
    %3746 = vmatprep.subr.mxu0 %v1712
    %3747 = vmatpush1.msra.mxu0 %v1711
    %3748 = vmatprep.subr.mxu0 %v1720
    %3749 = vmatpush1.msra.mxu0 %v1719
    %3750 = vmatprep.subr.mxu0 %v1728
    %3751 = vmatpush1.msra.mxu0 %v1727
    %3752 = vmatprep.subr.mxu0 %v1736
    %3753 = vmatpush1.msra.mxu0 %v1735
    %3754 = vmatprep.subr.mxu0 %v1744
    %3755 = vmatpush1.msra.mxu0 %v1743
    %3756 = vmatprep.subr.mxu0 %v1752
    %3757 = vmatpush1.msra.mxu0 %v1751
    %3758 = vmatprep.subr.mxu0 %v1760
    %3759 = vmatpush1.msra.mxu0 %v1759
    %3760 = vmatprep.subr.mxu0 %v1768
    %3761 = vmatpush1.msra.mxu0 %v1767
    %3762 = vmatprep.subr.mxu0 %v1776
    %3763 = vmatpush1.msra.mxu0 %v1775
    %3764 = vmatprep.subr.mxu0 %v1784
    %3765 = vmatpush1.msra.mxu0 %v1783
    %3766 = vmatprep.subr.mxu0 %v1792
    %3767 = vmatpush1.msra.mxu0 %v1791
    %3768 = vmatprep.subr.mxu0 %v1800
    %3769 = vmatpush1.msra.mxu0 %v1799
    %3770 = vmatprep.subr.mxu0 %v1808
    %3771 = vmatpush1.msra.mxu0 %v1807
    %3772 = vmatprep.subr.mxu0 %v1816
    %3773 = vmatpush1.msra.mxu0 %v1815
    %3774 = vmatprep.subr.mxu0 %v1824
    %3775 = vmatpush1.msra.mxu0 %v1823
    %3776 = vmatprep.subr.mxu0 %v1832
    %3777 = vmatpush1.msra.mxu0 %v1831
    %3778 = vmatprep.subr.mxu0 %v1840
    %3779 = vmatpush1.msra.mxu0 %v1839
    %3780 = vmatprep.subr.mxu0 %v1848
    %3781 = vmatpush1.msra.mxu0 %v1847
    %3782 = vmatprep.subr.mxu0 %v1856
    %3783 = vmatpush1.msra.mxu0 %v1855
    %3784 = vmatprep.subr.mxu0 %v1864
    %3785 = vmatpush1.msra.mxu0 %v1863
    %3786 = vmatprep.subr.mxu0 %v1872
    %3787 = vmatpush1.msra.mxu0 %v1871
    %3788 = vmatprep.mubr.f32.mxu0 %v567
    %3789 = vmatmul.mubr.f32.gmra.mrb[0].mxu0 %v565
    %v3790 = vpop.f32.mrb[0].mxu0
    %v3791 = vadd.f32 %v3720, %v3790
    %v3792 = vpop.f32.mrb[0].mxu0
    %v3793 = vadd.f32 %v3722, %v3792
    %3794 = vdwg.mxu0
    %3795 = vmatprep.subr.mxu0 %v1880
    %3796 = vmatpush1.msra.mxu0 %v1879
    %3797 = vmatprep.subr.mxu0 %v1888
    %3798 = vmatpush1.msra.mxu0 %v1887
    %3799 = vmatprep.subr.mxu0 %v1896
    %3800 = vmatpush1.msra.mxu0 %v1895
    %3801 = vmatprep.subr.mxu0 %v1904
    %3802 = vmatpush1.msra.mxu0 %v1903
    %3803 = vmatprep.subr.mxu0 %v1912
    %3804 = vmatpush1.msra.mxu0 %v1911
    %3805 = vmatprep.subr.mxu0 %v1920
    %3806 = vmatpush1.msra.mxu0 %v1919
    %3807 = vmatprep.subr.mxu0 %v1928
    %3808 = vmatpush1.msra.mxu0 %v1927
    %3809 = vmatprep.subr.mxu0 %v1936
    %3810 = vmatpush1.msra.mxu0 %v1935
    %3811 = vmatprep.subr.mxu0 %v1944
    %3812 = vmatpush1.msra.mxu0 %v1943
    %3813 = vmatprep.subr.mxu0 %v1952
    %3814 = vmatpush1.msra.mxu0 %v1951
    %3815 = vmatprep.subr.mxu0 %v1960
    %3816 = vmatpush1.msra.mxu0 %v1959
    %3817 = vmatprep.subr.mxu0 %v1968
    %3818 = vmatpush1.msra.mxu0 %v1967
    %3819 = vmatprep.subr.mxu0 %v1976
    %3820 = vmatpush1.msra.mxu0 %v1975
    %3821 = vmatprep.subr.mxu0 %v1984
    %3822 = vmatpush1.msra.mxu0 %v1983
    %3823 = vmatprep.subr.mxu0 %v1992
    %3824 = vmatpush1.msra.mxu0 %v1991
    %3825 = vmatprep.subr.mxu0 %v2000
    %3826 = vmatpush1.msra.mxu0 %v1999
    %3827 = vmatprep.subr.mxu0 %v2008
    %3828 = vmatpush1.msra.mxu0 %v2007
    %3829 = vmatprep.subr.mxu0 %v2016
    %3830 = vmatpush1.msra.mxu0 %v2015
    %3831 = vmatprep.subr.mxu0 %v2024
    %3832 = vmatpush1.msra.mxu0 %v2023
    %3833 = vmatprep.subr.mxu0 %v2032
    %3834 = vmatpush1.msra.mxu0 %v2031
    %3835 = vmatprep.subr.mxu0 %v2040
    %3836 = vmatpush1.msra.mxu0 %v2039
    %3837 = vmatprep.subr.mxu0 %v2048
    %3838 = vmatpush1.msra.mxu0 %v2047
    %3839 = vmatprep.subr.mxu0 %v2056
    %3840 = vmatpush1.msra.mxu0 %v2055
    %3841 = vmatprep.subr.mxu0 %v2064
    %3842 = vmatpush1.msra.mxu0 %v2063
    %3843 = vmatprep.subr.mxu0 %v2072
    %3844 = vmatpush1.msra.mxu0 %v2071
    %3845 = vmatprep.subr.mxu0 %v2080
    %3846 = vmatpush1.msra.mxu0 %v2079
    %3847 = vmatprep.subr.mxu0 %v2088
    %3848 = vmatpush1.msra.mxu0 %v2087
    %3849 = vmatprep.subr.mxu0 %v2096
    %3850 = vmatpush1.msra.mxu0 %v2095
    %3851 = vmatprep.subr.mxu0 %v2104
    %3852 = vmatpush1.msra.mxu0 %v2103
    %3853 = vmatprep.subr.mxu0 %v2112
    %3854 = vmatpush1.msra.mxu0 %v2111
    %3855 = vmatprep.subr.mxu0 %v2120
    %3856 = vmatpush1.msra.mxu0 %v2119
    %3857 = vmatprep.subr.mxu0 %v2128
    %3858 = vmatpush1.msra.mxu0 %v2127
    %3859 = vmatprep.mubr.f32.mxu0 %v638
    %3860 = vmatmul.mubr.f32.gmra.mrb[0].mxu0 %v636
    %v3861 = vpop.f32.mrb[0].mxu0
    %v3862 = vadd.f32 %v3791, %v3861
    %v3863 = vpop.f32.mrb[0].mxu0
    %v3864 = vadd.f32 %v3793, %v3863
    %3865 = vdwg.mxu0
    %3866 = vmatprep.subr.mxu0 %v2136
    %3867 = vmatpush1.msra.mxu0 %v2135
    %3868 = vmatprep.subr.mxu0 %v2144
    %3869 = vmatpush1.msra.mxu0 %v2143
    %3870 = vmatprep.subr.mxu0 %v2152
    %3871 = vmatpush1.msra.mxu0 %v2151
    %3872 = vmatprep.subr.mxu0 %v2160
    %3873 = vmatpush1.msra.mxu0 %v2159
    %3874 = vmatprep.subr.mxu0 %v2168
    %3875 = vmatpush1.msra.mxu0 %v2167
    %3876 = vmatprep.subr.mxu0 %v2176
    %3877 = vmatpush1.msra.mxu0 %v2175
    %3878 = vmatprep.subr.mxu0 %v2184
    %3879 = vmatpush1.msra.mxu0 %v2183
    %3880 = vmatprep.subr.mxu0 %v2192
    %3881 = vmatpush1.msra.mxu0 %v2191
    %3882 = vmatprep.subr.mxu0 %v2200
    %3883 = vmatpush1.msra.mxu0 %v2199
    %3884 = vmatprep.subr.mxu0 %v2208
    %3885 = vmatpush1.msra.mxu0 %v2207
    %3886 = vmatprep.subr.mxu0 %v2216
    %3887 = vmatpush1.msra.mxu0 %v2215
    %3888 = vmatprep.subr.mxu0 %v2224
    %3889 = vmatpush1.msra.mxu0 %v2223
    %3890 = vmatprep.subr.mxu0 %v2232
    %3891 = vmatpush1.msra.mxu0 %v2231
    %3892 = vmatprep.subr.mxu0 %v2240
    %3893 = vmatpush1.msra.mxu0 %v2239
    %3894 = vmatprep.subr.mxu0 %v2248
    %3895 = vmatpush1.msra.mxu0 %v2247
    %3896 = vmatprep.subr.mxu0 %v2256
    %3897 = vmatpush1.msra.mxu0 %v2255
    %3898 = vmatprep.subr.mxu0 %v2264
    %3899 = vmatpush1.msra.mxu0 %v2263
    %3900 = vmatprep.subr.mxu0 %v2272
    %3901 = vmatpush1.msra.mxu0 %v2271
    %3902 = vmatprep.subr.mxu0 %v2280
    %3903 = vmatpush1.msra.mxu0 %v2279
    %3904 = vmatprep.subr.mxu0 %v2288
    %3905 = vmatpush1.msra.mxu0 %v2287
    %3906 = vmatprep.subr.mxu0 %v2296
    %3907 = vmatpush1.msra.mxu0 %v2295
    %3908 = vmatprep.subr.mxu0 %v2304
    %3909 = vmatpush1.msra.mxu0 %v2303
    %3910 = vmatprep.subr.mxu0 %v2312
    %3911 = vmatpush1.msra.mxu0 %v2311
    %3912 = vmatprep.subr.mxu0 %v2320
    %3913 = vmatpush1.msra.mxu0 %v2319
    %3914 = vmatprep.subr.mxu0 %v2328
    %3915 = vmatpush1.msra.mxu0 %v2327
    %3916 = vmatprep.subr.mxu0 %v2336
    %3917 = vmatpush1.msra.mxu0 %v2335
    %3918 = vmatprep.subr.mxu0 %v2344
    %3919 = vmatpush1.msra.mxu0 %v2343
    %3920 = vmatprep.subr.mxu0 %v2352
    %3921 = vmatpush1.msra.mxu0 %v2351
    %3922 = vmatprep.subr.mxu0 %v2360
    %3923 = vmatpush1.msra.mxu0 %v2359
    %3924 = vmatprep.subr.mxu0 %v2368
    %3925 = vmatpush1.msra.mxu0 %v2367
    %3926 = vmatprep.subr.mxu0 %v2376
    %3927 = vmatpush1.msra.mxu0 %v2375
    %3928 = vmatprep.subr.mxu0 %v2384
    %3929 = vmatpush1.msra.mxu0 %v2383
    %3930 = vmatprep.mubr.f32.mxu0 %v709
    %3931 = vmatmul.mubr.f32.gmra.mrb[0].mxu0 %v707
    %v3932 = vpop.f32.mrb[0].mxu0
    %v3933 = vadd.f32 %v3862, %v3932
    %v3934 = vpop.f32.mrb[0].mxu0
    %v3935 = vadd.f32 %v3864, %v3934
    %3936 = vdwg.mxu0
    %3937 = vmatprep.subr.mxu0 %v2392
    %3938 = vmatpush1.msra.mxu0 %v2391
    %3939 = vmatprep.subr.mxu0 %v2400
    %3940 = vmatpush1.msra.mxu0 %v2399
    %3941 = vmatprep.subr.mxu0 %v2408
    %3942 = vmatpush1.msra.mxu0 %v2407
    %3943 = vmatprep.subr.mxu0 %v2416
    %3944 = vmatpush1.msra.mxu0 %v2415
    %3945 = vmatprep.subr.mxu0 %v2424
    %3946 = vmatpush1.msra.mxu0 %v2423
    %3947 = vmatprep.subr.mxu0 %v2432
    %3948 = vmatpush1.msra.mxu0 %v2431
    %3949 = vmatprep.subr.mxu0 %v2440
    %3950 = vmatpush1.msra.mxu0 %v2439
    %3951 = vmatprep.subr.mxu0 %v2448
    %3952 = vmatpush1.msra.mxu0 %v2447
    %3953 = vmatprep.subr.mxu0 %v2456
    %3954 = vmatpush1.msra.mxu0 %v2455
    %3955 = vmatprep.subr.mxu0 %v2464
    %3956 = vmatpush1.msra.mxu0 %v2463
    %3957 = vmatprep.subr.mxu0 %v2472
    %3958 = vmatpush1.msra.mxu0 %v2471
    %3959 = vmatprep.subr.mxu0 %v2480
    %3960 = vmatpush1.msra.mxu0 %v2479
    %3961 = vmatprep.subr.mxu0 %v2488
    %3962 = vmatpush1.msra.mxu0 %v2487
    %3963 = vmatprep.subr.mxu0 %v2496
    %3964 = vmatpush1.msra.mxu0 %v2495
    %3965 = vmatprep.subr.mxu0 %v2504
    %3966 = vmatpush1.msra.mxu0 %v2503
    %3967 = vmatprep.subr.mxu0 %v2512
    %3968 = vmatpush1.msra.mxu0 %v2511
    %3969 = vmatprep.subr.mxu0 %v2520
    %3970 = vmatpush1.msra.mxu0 %v2519
    %3971 = vmatprep.subr.mxu0 %v2528
    %3972 = vmatpush1.msra.mxu0 %v2527
    %3973 = vmatprep.subr.mxu0 %v2536
    %3974 = vmatpush1.msra.mxu0 %v2535
    %3975 = vmatprep.subr.mxu0 %v2544
    %3976 = vmatpush1.msra.mxu0 %v2543
    %3977 = vmatprep.subr.mxu0 %v2552
    %3978 = vmatpush1.msra.mxu0 %v2551
    %3979 = vmatprep.subr.mxu0 %v2560
    %3980 = vmatpush1.msra.mxu0 %v2559
    %3981 = vmatprep.subr.mxu0 %v2568
    %3982 = vmatpush1.msra.mxu0 %v2567
    %3983 = vmatprep.subr.mxu0 %v2576
    %3984 = vmatpush1.msra.mxu0 %v2575
    %3985 = vmatprep.subr.mxu0 %v2584
    %3986 = vmatpush1.msra.mxu0 %v2583
    %3987 = vmatprep.subr.mxu0 %v2592
    %3988 = vmatpush1.msra.mxu0 %v2591
    %3989 = vmatprep.subr.mxu0 %v2600
    %3990 = vmatpush1.msra.mxu0 %v2599
    %3991 = vmatprep.subr.mxu0 %v2608
    %3992 = vmatpush1.msra.mxu0 %v2607
    %3993 = vmatprep.subr.mxu0 %v2616
    %3994 = vmatpush1.msra.mxu0 %v2615
    %3995 = vmatprep.subr.mxu0 %v2624
    %3996 = vmatpush1.msra.mxu0 %v2623
    %3997 = vmatprep.subr.mxu0 %v2632
    %3998 = vmatpush1.msra.mxu0 %v2631
    %3999 = vmatprep.subr.mxu0 %v2640
    %4000 = vmatpush1.msra.mxu0 %v2639
    %4001 = vmatprep.mubr.f32.mxu0 %v780
    %4002 = vmatmul.mubr.f32.gmra.mrb[0].mxu0 %v778
    %v4003 = vpop.f32.mrb[0].mxu0
    %v4004 = vadd.f32 %v3933, %v4003
    %v4005 = vpop.f32.mrb[0].mxu0
    %v4006 = vadd.f32 %v3935, %v4005
    %4007 = vdwg.mxu0
    %4008 = vmatprep.subr.mxu0 %v2648
    %4009 = vmatpush1.msra.mxu0 %v2647
    %4010 = vmatprep.subr.mxu0 %v2656
    %4011 = vmatpush1.msra.mxu0 %v2655
    %4012 = vmatprep.subr.mxu0 %v2664
    %4013 = vmatpush1.msra.mxu0 %v2663
    %4014 = vmatprep.subr.mxu0 %v2672
    %4015 = vmatpush1.msra.mxu0 %v2671
    %4016 = vmatprep.subr.mxu0 %v2680
    %4017 = vmatpush1.msra.mxu0 %v2679
    %4018 = vmatprep.subr.mxu0 %v2688
    %4019 = vmatpush1.msra.mxu0 %v2687
    %4020 = vmatprep.subr.mxu0 %v2696
    %4021 = vmatpush1.msra.mxu0 %v2695
    %4022 = vmatprep.subr.mxu0 %v2704
    %4023 = vmatpush1.msra.mxu0 %v2703
    %4024 = vmatprep.subr.mxu0 %v2712
    %4025 = vmatpush1.msra.mxu0 %v2711
    %4026 = vmatprep.subr.mxu0 %v2720
    %4027 = vmatpush1.msra.mxu0 %v2719
    %4028 = vmatprep.subr.mxu0 %v2728
    %4029 = vmatpush1.msra.mxu0 %v2727
    %4030 = vmatprep.subr.mxu0 %v2736
    %4031 = vmatpush1.msra.mxu0 %v2735
    %4032 = vmatprep.subr.mxu0 %v2744
    %4033 = vmatpush1.msra.mxu0 %v2743
    %4034 = vmatprep.subr.mxu0 %v2752
    %4035 = vmatpush1.msra.mxu0 %v2751
    %4036 = vmatprep.subr.mxu0 %v2760
    %4037 = vmatpush1.msra.mxu0 %v2759
    %4038 = vmatprep.subr.mxu0 %v2768
    %4039 = vmatpush1.msra.mxu0 %v2767
    %4040 = vmatprep.subr.mxu0 %v2776
    %4041 = vmatpush1.msra.mxu0 %v2775
    %4042 = vmatprep.subr.mxu0 %v2784
    %4043 = vmatpush1.msra.mxu0 %v2783
    %4044 = vmatprep.subr.mxu0 %v2792
    %4045 = vmatpush1.msra.mxu0 %v2791
    %4046 = vmatprep.subr.mxu0 %v2800
    %4047 = vmatpush1.msra.mxu0 %v2799
    %4048 = vmatprep.subr.mxu0 %v2808
    %4049 = vmatpush1.msra.mxu0 %v2807
    %4050 = vmatprep.subr.mxu0 %v2816
    %4051 = vmatpush1.msra.mxu0 %v2815
    %4052 = vmatprep.subr.mxu0 %v2824
    %4053 = vmatpush1.msra.mxu0 %v2823
    %4054 = vmatprep.subr.mxu0 %v2832
    %4055 = vmatpush1.msra.mxu0 %v2831
    %4056 = vmatprep.subr.mxu0 %v2840
    %4057 = vmatpush1.msra.mxu0 %v2839
    %4058 = vmatprep.subr.mxu0 %v2848
    %4059 = vmatpush1.msra.mxu0 %v2847
    %4060 = vmatprep.subr.mxu0 %v2856
    %4061 = vmatpush1.msra.mxu0 %v2855
    %4062 = vmatprep.subr.mxu0 %v2864
    %4063 = vmatpush1.msra.mxu0 %v2863
    %4064 = vmatprep.subr.mxu0 %v2872
    %4065 = vmatpush1.msra.mxu0 %v2871
    %4066 = vmatprep.subr.mxu0 %v2880
    %4067 = vmatpush1.msra.mxu0 %v2879
    %4068 = vmatprep.subr.mxu0 %v2888
    %4069 = vmatpush1.msra.mxu0 %v2887
    %4070 = vmatprep.subr.mxu0 %v2896
    %4071 = vmatpush1.msra.mxu0 %v2895
    %4072 = vmatprep.mubr.f32.mxu0 %v851
    %4073 = vmatmul.mubr.f32.gmra.mrb[0].mxu0 %v849
    %v4074 = vpop.f32.mrb[0].mxu0
    %v4075 = vadd.f32 %v4004, %v4074
    %v4076 = vpop.f32.mrb[0].mxu0
    %v4077 = vadd.f32 %v4006, %v4076
    %4078 = vdwg.mxu0
    %4079 = vmatprep.subr.mxu0 %v858
    %4080 = vmatpush1.msra.mxu0 %v857
    %4081 = vmatprep.subr.mxu0 %v866
    %4082 = vmatpush1.msra.mxu0 %v865
    %4083 = vmatprep.subr.mxu0 %v874
    %4084 = vmatpush1.msra.mxu0 %v873
    %4085 = vmatprep.subr.mxu0 %v882
    %4086 = vmatpush1.msra.mxu0 %v881
    %4087 = vmatprep.subr.mxu0 %v890
    %4088 = vmatpush1.msra.mxu0 %v889
    %4089 = vmatprep.subr.mxu0 %v898
    %4090 = vmatpush1.msra.mxu0 %v897
    %4091 = vmatprep.subr.mxu0 %v906
    %4092 = vmatpush1.msra.mxu0 %v905
    %4093 = vmatprep.subr.mxu0 %v914
    %4094 = vmatpush1.msra.mxu0 %v913
    %4095 = vmatprep.subr.mxu0 %v922
    %4096 = vmatpush1.msra.mxu0 %v921
    %4097 = vmatprep.subr.mxu0 %v930
    %4098 = vmatpush1.msra.mxu0 %v929
    %4099 = vmatprep.subr.mxu0 %v938
    %4100 = vmatpush1.msra.mxu0 %v937
    %4101 = vmatprep.subr.mxu0 %v946
    %4102 = vmatpush1.msra.mxu0 %v945
    %4103 = vmatprep.subr.mxu0 %v954
    %4104 = vmatpush1.msra.mxu0 %v953
    %4105 = vmatprep.subr.mxu0 %v962
    %4106 = vmatpush1.msra.mxu0 %v961
    %4107 = vmatprep.subr.mxu0 %v970
    %4108 = vmatpush1.msra.mxu0 %v969
    %4109 = vmatprep.subr.mxu0 %v978
    %4110 = vmatpush1.msra.mxu0 %v977
    %4111 = vmatprep.subr.mxu0 %v986
    %4112 = vmatpush1.msra.mxu0 %v985
    %4113 = vmatprep.subr.mxu0 %v994
    %4114 = vmatpush1.msra.mxu0 %v993
    %4115 = vmatprep.subr.mxu0 %v1002
    %4116 = vmatpush1.msra.mxu0 %v1001
    %4117 = vmatprep.subr.mxu0 %v1010
    %4118 = vmatpush1.msra.mxu0 %v1009
    %4119 = vmatprep.subr.mxu0 %v1018
    %4120 = vmatpush1.msra.mxu0 %v1017
    %4121 = vmatprep.subr.mxu0 %v1026
    %4122 = vmatpush1.msra.mxu0 %v1025
    %4123 = vmatprep.subr.mxu0 %v1034
    %4124 = vmatpush1.msra.mxu0 %v1033
    %4125 = vmatprep.subr.mxu0 %v1042
    %4126 = vmatpush1.msra.mxu0 %v1041
    %4127 = vmatprep.subr.mxu0 %v1050
    %4128 = vmatpush1.msra.mxu0 %v1049
    %4129 = vmatprep.subr.mxu0 %v1058
    %4130 = vmatpush1.msra.mxu0 %v1057
    %4131 = vmatprep.subr.mxu0 %v1066
    %4132 = vmatpush1.msra.mxu0 %v1065
    %4133 = vmatprep.subr.mxu0 %v1074
    %4134 = vmatpush1.msra.mxu0 %v1073
    %4135 = vmatprep.subr.mxu0 %v1082
    %4136 = vmatpush1.msra.mxu0 %v1081
    %4137 = vmatprep.subr.mxu0 %v1090
    %4138 = vmatpush1.msra.mxu0 %v1089
    %4139 = vmatprep.subr.mxu0 %v1098
    %4140 = vmatpush1.msra.mxu0 %v1097
    %4141 = vmatprep.subr.mxu0 %v1106
    %4142 = vmatpush1.msra.mxu0 %v1105
    %4143 = vmatprep.mubr.f32.mxu0 %v354
    %4144 = vmatmul.mubr.f32.gmra.mrb[0].mxu0 %v352
    %v4145 = vpop.f32.mrb[0].mxu0
    %v4146 = vadd.f32 %v2922, %v4145
    %v4147 = vpop.f32.mrb[0].mxu0
    %v4148 = vadd.f32 %v2926, %v4147
    %4149 = vdwg.mxu0
    %4150 = vmatprep.subr.mxu0 %v1114
    %4151 = vmatpush1.msra.mxu0 %v1113
    %4152 = vmatprep.subr.mxu0 %v1122
    %4153 = vmatpush1.msra.mxu0 %v1121
    %4154 = vmatprep.subr.mxu0 %v1130
    %4155 = vmatpush1.msra.mxu0 %v1129
    %4156 = vmatprep.subr.mxu0 %v1138
    %4157 = vmatpush1.msra.mxu0 %v1137
    %4158 = vmatprep.subr.mxu0 %v1146
    %4159 = vmatpush1.msra.mxu0 %v1145
    %4160 = vmatprep.subr.mxu0 %v1154
    %4161 = vmatpush1.msra.mxu0 %v1153
    %4162 = vmatprep.subr.mxu0 %v1162
    %4163 = vmatpush1.msra.mxu0 %v1161
    %4164 = vmatprep.subr.mxu0 %v1170
    %4165 = vmatpush1.msra.mxu0 %v1169
    %4166 = vmatprep.subr.mxu0 %v1178
    %4167 = vmatpush1.msra.mxu0 %v1177
    %4168 = vmatprep.subr.mxu0 %v1186
    %4169 = vmatpush1.msra.mxu0 %v1185
    %4170 = vmatprep.subr.mxu0 %v1194
    %4171 = vmatpush1.msra.mxu0 %v1193
    %4172 = vmatprep.subr.mxu0 %v1202
    %4173 = vmatpush1.msra.mxu0 %v1201
    %4174 = vmatprep.subr.mxu0 %v1210
    %4175 = vmatpush1.msra.mxu0 %v1209
    %4176 = vmatprep.subr.mxu0 %v1218
    %4177 = vmatpush1.msra.mxu0 %v1217
    %4178 = vmatprep.subr.mxu0 %v1226
    %4179 = vmatpush1.msra.mxu0 %v1225
    %4180 = vmatprep.subr.mxu0 %v1234
    %4181 = vmatpush1.msra.mxu0 %v1233
    %4182 = vmatprep.subr.mxu0 %v1242
    %4183 = vmatpush1.msra.mxu0 %v1241
    %4184 = vmatprep.subr.mxu0 %v1250
    %4185 = vmatpush1.msra.mxu0 %v1249
    %4186 = vmatprep.subr.mxu0 %v1258
    %4187 = vmatpush1.msra.mxu0 %v1257
    %4188 = vmatprep.subr.mxu0 %v1266
    %4189 = vmatpush1.msra.mxu0 %v1265
    %4190 = vmatprep.subr.mxu0 %v1274
    %4191 = vmatpush1.msra.mxu0 %v1273
    %4192 = vmatprep.subr.mxu0 %v1282
    %4193 = vmatpush1.msra.mxu0 %v1281
    %4194 = vmatprep.subr.mxu0 %v1290
    %4195 = vmatpush1.msra.mxu0 %v1289
    %4196 = vmatprep.subr.mxu0 %v1298
    %4197 = vmatpush1.msra.mxu0 %v1297
    %4198 = vmatprep.subr.mxu0 %v1306
    %4199 = vmatpush1.msra.mxu0 %v1305
    %4200 = vmatprep.subr.mxu0 %v1314
    %4201 = vmatpush1.msra.mxu0 %v1313
    %4202 = vmatprep.subr.mxu0 %v1322
    %4203 = vmatpush1.msra.mxu0 %v1321
    %4204 = vmatprep.subr.mxu0 %v1330
    %4205 = vmatpush1.msra.mxu0 %v1329
    %4206 = vmatprep.subr.mxu0 %v1338
    %4207 = vmatpush1.msra.mxu0 %v1337
    %4208 = vmatprep.subr.mxu0 %v1346
    %4209 = vmatpush1.msra.mxu0 %v1345
    %4210 = vmatprep.subr.mxu0 %v1354
    %4211 = vmatpush1.msra.mxu0 %v1353
    %4212 = vmatprep.subr.mxu0 %v1362
    %4213 = vmatpush1.msra.mxu0 %v1361
    %4214 = vmatprep.mubr.f32.mxu0 %v425
    %4215 = vmatmul.mubr.f32.gmra.mrb[0].mxu0 %v423
    %v4216 = vpop.f32.mrb[0].mxu0
    %v4217 = vadd.f32 %v4146, %v4216
    %v4218 = vpop.f32.mrb[0].mxu0
    %v4219 = vadd.f32 %v4148, %v4218
    %4220 = vdwg.mxu0
    %4221 = vmatprep.subr.mxu0 %v1370
    %4222 = vmatpush1.msra.mxu0 %v1369
    %4223 = vmatprep.subr.mxu0 %v1378
    %4224 = vmatpush1.msra.mxu0 %v1377
    %4225 = vmatprep.subr.mxu0 %v1386
    %4226 = vmatpush1.msra.mxu0 %v1385
    %4227 = vmatprep.subr.mxu0 %v1394
    %4228 = vmatpush1.msra.mxu0 %v1393
    %4229 = vmatprep.subr.mxu0 %v1402
    %4230 = vmatpush1.msra.mxu0 %v1401
    %4231 = vmatprep.subr.mxu0 %v1410
    %4232 = vmatpush1.msra.mxu0 %v1409
    %4233 = vmatprep.subr.mxu0 %v1418
    %4234 = vmatpush1.msra.mxu0 %v1417
    %4235 = vmatprep.subr.mxu0 %v1426
    %4236 = vmatpush1.msra.mxu0 %v1425
    %4237 = vmatprep.subr.mxu0 %v1434
    %4238 = vmatpush1.msra.mxu0 %v1433
    %4239 = vmatprep.subr.mxu0 %v1442
    %4240 = vmatpush1.msra.mxu0 %v1441
    %4241 = vmatprep.subr.mxu0 %v1450
    %4242 = vmatpush1.msra.mxu0 %v1449
    %4243 = vmatprep.subr.mxu0 %v1458
    %4244 = vmatpush1.msra.mxu0 %v1457
    %4245 = vmatprep.subr.mxu0 %v1466
    %4246 = vmatpush1.msra.mxu0 %v1465
    %4247 = vmatprep.subr.mxu0 %v1474
    %4248 = vmatpush1.msra.mxu0 %v1473
    %4249 = vmatprep.subr.mxu0 %v1482
    %4250 = vmatpush1.msra.mxu0 %v1481
    %4251 = vmatprep.subr.mxu0 %v1490
    %4252 = vmatpush1.msra.mxu0 %v1489
    %4253 = vmatprep.subr.mxu0 %v1498
    %4254 = vmatpush1.msra.mxu0 %v1497
    %4255 = vmatprep.subr.mxu0 %v1506
    %4256 = vmatpush1.msra.mxu0 %v1505
    %4257 = vmatprep.subr.mxu0 %v1514
    %4258 = vmatpush1.msra.mxu0 %v1513
    %4259 = vmatprep.subr.mxu0 %v1522
    %4260 = vmatpush1.msra.mxu0 %v1521
    %4261 = vmatprep.subr.mxu0 %v1530
    %4262 = vmatpush1.msra.mxu0 %v1529
    %4263 = vmatprep.subr.mxu0 %v1538
    %4264 = vmatpush1.msra.mxu0 %v1537
    %4265 = vmatprep.subr.mxu0 %v1546
    %4266 = vmatpush1.msra.mxu0 %v1545
    %4267 = vmatprep.subr.mxu0 %v1554
    %4268 = vmatpush1.msra.mxu0 %v1553
    %4269 = vmatprep.subr.mxu0 %v1562
    %4270 = vmatpush1.msra.mxu0 %v1561
    %4271 = vmatprep.subr.mxu0 %v1570
    %4272 = vmatpush1.msra.mxu0 %v1569
    %4273 = vmatprep.subr.mxu0 %v1578
    %4274 = vmatpush1.msra.mxu0 %v1577
    %4275 = vmatprep.subr.mxu0 %v1586
    %4276 = vmatpush1.msra.mxu0 %v1585
    %4277 = vmatprep.subr.mxu0 %v1594
    %4278 = vmatpush1.msra.mxu0 %v1593
    %4279 = vmatprep.subr.mxu0 %v1602
    %4280 = vmatpush1.msra.mxu0 %v1601
    %4281 = vmatprep.subr.mxu0 %v1610
    %4282 = vmatpush1.msra.mxu0 %v1609
    %4283 = vmatprep.subr.mxu0 %v1618
    %4284 = vmatpush1.msra.mxu0 %v1617
    %4285 = vmatprep.mubr.f32.mxu0 %v496
    %4286 = vmatmul.mubr.f32.gmra.mrb[0].mxu0 %v494
    %v4287 = vpop.f32.mrb[0].mxu0
    %v4288 = vadd.f32 %v4217, %v4287
    %v4289 = vpop.f32.mrb[0].mxu0
    %v4290 = vadd.f32 %v4219, %v4289
    %4291 = vdwg.mxu0
    %4292 = vmatprep.subr.mxu0 %v1626
    %4293 = vmatpush1.msra.mxu0 %v1625
    %4294 = vmatprep.subr.mxu0 %v1634
    %4295 = vmatpush1.msra.mxu0 %v1633
    %4296 = vmatprep.subr.mxu0 %v1642
    %4297 = vmatpush1.msra.mxu0 %v1641
    %4298 = vmatprep.subr.mxu0 %v1650
    %4299 = vmatpush1.msra.mxu0 %v1649
    %4300 = vmatprep.subr.mxu0 %v1658
    %4301 = vmatpush1.msra.mxu0 %v1657
    %4302 = vmatprep.subr.mxu0 %v1666
    %4303 = vmatpush1.msra.mxu0 %v1665
    %4304 = vmatprep.subr.mxu0 %v1674
    %4305 = vmatpush1.msra.mxu0 %v1673
    %4306 = vmatprep.subr.mxu0 %v1682
    %4307 = vmatpush1.msra.mxu0 %v1681
    %4308 = vmatprep.subr.mxu0 %v1690
    %4309 = vmatpush1.msra.mxu0 %v1689
    %4310 = vmatprep.subr.mxu0 %v1698
    %4311 = vmatpush1.msra.mxu0 %v1697
    %4312 = vmatprep.subr.mxu0 %v1706
    %4313 = vmatpush1.msra.mxu0 %v1705
    %4314 = vmatprep.subr.mxu0 %v1714
    %4315 = vmatpush1.msra.mxu0 %v1713
    %4316 = vmatprep.subr.mxu0 %v1722
    %4317 = vmatpush1.msra.mxu0 %v1721
    %4318 = vmatprep.subr.mxu0 %v1730
    %4319 = vmatpush1.msra.mxu0 %v1729
    %4320 = vmatprep.subr.mxu0 %v1738
    %4321 = vmatpush1.msra.mxu0 %v1737
    %4322 = vmatprep.subr.mxu0 %v1746
    %4323 = vmatpush1.msra.mxu0 %v1745
    %4324 = vmatprep.subr.mxu0 %v1754
    %4325 = vmatpush1.msra.mxu0 %v1753
    %4326 = vmatprep.subr.mxu0 %v1762
    %4327 = vmatpush1.msra.mxu0 %v1761
    %4328 = vmatprep.subr.mxu0 %v1770
    %4329 = vmatpush1.msra.mxu0 %v1769
    %4330 = vmatprep.subr.mxu0 %v1778
    %4331 = vmatpush1.msra.mxu0 %v1777
    %4332 = vmatprep.subr.mxu0 %v1786
    %4333 = vmatpush1.msra.mxu0 %v1785
    %4334 = vmatprep.subr.mxu0 %v1794
    %4335 = vmatpush1.msra.mxu0 %v1793
    %4336 = vmatprep.subr.mxu0 %v1802
    %4337 = vmatpush1.msra.mxu0 %v1801
    %4338 = vmatprep.subr.mxu0 %v1810
    %4339 = vmatpush1.msra.mxu0 %v1809
    %4340 = vmatprep.subr.mxu0 %v1818
    %4341 = vmatpush1.msra.mxu0 %v1817
    %4342 = vmatprep.subr.mxu0 %v1826
    %4343 = vmatpush1.msra.mxu0 %v1825
    %4344 = vmatprep.subr.mxu0 %v1834
    %4345 = vmatpush1.msra.mxu0 %v1833
    %4346 = vmatprep.subr.mxu0 %v1842
    %4347 = vmatpush1.msra.mxu0 %v1841
    %4348 = vmatprep.subr.mxu0 %v1850
    %4349 = vmatpush1.msra.mxu0 %v1849
    %4350 = vmatprep.subr.mxu0 %v1858
    %4351 = vmatpush1.msra.mxu0 %v1857
    %4352 = vmatprep.subr.mxu0 %v1866
    %4353 = vmatpush1.msra.mxu0 %v1865
    %4354 = vmatprep.subr.mxu0 %v1874
    %4355 = vmatpush1.msra.mxu0 %v1873
    %4356 = vmatprep.mubr.f32.mxu0 %v567
    %4357 = vmatmul.mubr.f32.gmra.mrb[0].mxu0 %v565
    %v4358 = vpop.f32.mrb[0].mxu0
    %v4359 = vadd.f32 %v4288, %v4358
    %v4360 = vpop.f32.mrb[0].mxu0
    %v4361 = vadd.f32 %v4290, %v4360
    %4362 = vdwg.mxu0
    %4363 = vmatprep.subr.mxu0 %v1882
    %4364 = vmatpush1.msra.mxu0 %v1881
    %4365 = vmatprep.subr.mxu0 %v1890
    %4366 = vmatpush1.msra.mxu0 %v1889
    %4367 = vmatprep.subr.mxu0 %v1898
    %4368 = vmatpush1.msra.mxu0 %v1897
    %4369 = vmatprep.subr.mxu0 %v1906
    %4370 = vmatpush1.msra.mxu0 %v1905
    %4371 = vmatprep.subr.mxu0 %v1914
    %4372 = vmatpush1.msra.mxu0 %v1913
    %4373 = vmatprep.subr.mxu0 %v1922
    %4374 = vmatpush1.msra.mxu0 %v1921
    %4375 = vmatprep.subr.mxu0 %v1930
    %4376 = vmatpush1.msra.mxu0 %v1929
    %4377 = vmatprep.subr.mxu0 %v1938
    %4378 = vmatpush1.msra.mxu0 %v1937
    %4379 = vmatprep.subr.mxu0 %v1946
    %4380 = vmatpush1.msra.mxu0 %v1945
    %4381 = vmatprep.subr.mxu0 %v1954
    %4382 = vmatpush1.msra.mxu0 %v1953
    %4383 = vmatprep.subr.mxu0 %v1962
    %4384 = vmatpush1.msra.mxu0 %v1961
    %4385 = vmatprep.subr.mxu0 %v1970
    %4386 = vmatpush1.msra.mxu0 %v1969
    %4387 = vmatprep.subr.mxu0 %v1978
    %4388 = vmatpush1.msra.mxu0 %v1977
    %4389 = vmatprep.subr.mxu0 %v1986
    %4390 = vmatpush1.msra.mxu0 %v1985
    %4391 = vmatprep.subr.mxu0 %v1994
    %4392 = vmatpush1.msra.mxu0 %v1993
    %4393 = vmatprep.subr.mxu0 %v2002
    %4394 = vmatpush1.msra.mxu0 %v2001
    %4395 = vmatprep.subr.mxu0 %v2010
    %4396 = vmatpush1.msra.mxu0 %v2009
    %4397 = vmatprep.subr.mxu0 %v2018
    %4398 = vmatpush1.msra.mxu0 %v2017
    %4399 = vmatprep.subr.mxu0 %v2026
    %4400 = vmatpush1.msra.mxu0 %v2025
    %4401 = vmatprep.subr.mxu0 %v2034
    %4402 = vmatpush1.msra.mxu0 %v2033
    %4403 = vmatprep.subr.mxu0 %v2042
    %4404 = vmatpush1.msra.mxu0 %v2041
    %4405 = vmatprep.subr.mxu0 %v2050
    %4406 = vmatpush1.msra.mxu0 %v2049
    %4407 = vmatprep.subr.mxu0 %v2058
    %4408 = vmatpush1.msra.mxu0 %v2057
    %4409 = vmatprep.subr.mxu0 %v2066
    %4410 = vmatpush1.msra.mxu0 %v2065
    %4411 = vmatprep.subr.mxu0 %v2074
    %4412 = vmatpush1.msra.mxu0 %v2073
    %4413 = vmatprep.subr.mxu0 %v2082
    %4414 = vmatpush1.msra.mxu0 %v2081
    %4415 = vmatprep.subr.mxu0 %v2090
    %4416 = vmatpush1.msra.mxu0 %v2089
    %4417 = vmatprep.subr.mxu0 %v2098
    %4418 = vmatpush1.msra.mxu0 %v2097
    %4419 = vmatprep.subr.mxu0 %v2106
    %4420 = vmatpush1.msra.mxu0 %v2105
    %4421 = vmatprep.subr.mxu0 %v2114
    %4422 = vmatpush1.msra.mxu0 %v2113
    %4423 = vmatprep.subr.mxu0 %v2122
    %4424 = vmatpush1.msra.mxu0 %v2121
    %4425 = vmatprep.subr.mxu0 %v2130
    %4426 = vmatpush1.msra.mxu0 %v2129
    %4427 = vmatprep.mubr.f32.mxu0 %v638
    %4428 = vmatmul.mubr.f32.gmra.mrb[0].mxu0 %v636
    %v4429 = vpop.f32.mrb[0].mxu0
    %v4430 = vadd.f32 %v4359, %v4429
    %v4431 = vpop.f32.mrb[0].mxu0
    %v4432 = vadd.f32 %v4361, %v4431
    %4433 = vdwg.mxu0
    %4434 = vmatprep.subr.mxu0 %v2138
    %4435 = vmatpush1.msra.mxu0 %v2137
    %4436 = vmatprep.subr.mxu0 %v2146
    %4437 = vmatpush1.msra.mxu0 %v2145
    %4438 = vmatprep.subr.mxu0 %v2154
    %4439 = vmatpush1.msra.mxu0 %v2153
    %4440 = vmatprep.subr.mxu0 %v2162
    %4441 = vmatpush1.msra.mxu0 %v2161
    %4442 = vmatprep.subr.mxu0 %v2170
    %4443 = vmatpush1.msra.mxu0 %v2169
    %4444 = vmatprep.subr.mxu0 %v2178
    %4445 = vmatpush1.msra.mxu0 %v2177
    %4446 = vmatprep.subr.mxu0 %v2186
    %4447 = vmatpush1.msra.mxu0 %v2185
    %4448 = vmatprep.subr.mxu0 %v2194
    %4449 = vmatpush1.msra.mxu0 %v2193
    %4450 = vmatprep.subr.mxu0 %v2202
    %4451 = vmatpush1.msra.mxu0 %v2201
    %4452 = vmatprep.subr.mxu0 %v2210
    %4453 = vmatpush1.msra.mxu0 %v2209
    %4454 = vmatprep.subr.mxu0 %v2218
    %4455 = vmatpush1.msra.mxu0 %v2217
    %4456 = vmatprep.subr.mxu0 %v2226
    %4457 = vmatpush1.msra.mxu0 %v2225
    %4458 = vmatprep.subr.mxu0 %v2234
    %4459 = vmatpush1.msra.mxu0 %v2233
    %4460 = vmatprep.subr.mxu0 %v2242
    %4461 = vmatpush1.msra.mxu0 %v2241
    %4462 = vmatprep.subr.mxu0 %v2250
    %4463 = vmatpush1.msra.mxu0 %v2249
    %4464 = vmatprep.subr.mxu0 %v2258
    %4465 = vmatpush1.msra.mxu0 %v2257
    %4466 = vmatprep.subr.mxu0 %v2266
    %4467 = vmatpush1.msra.mxu0 %v2265
    %4468 = vmatprep.subr.mxu0 %v2274
    %4469 = vmatpush1.msra.mxu0 %v2273
    %4470 = vmatprep.subr.mxu0 %v2282
    %4471 = vmatpush1.msra.mxu0 %v2281
    %4472 = vmatprep.subr.mxu0 %v2290
    %4473 = vmatpush1.msra.mxu0 %v2289
    %4474 = vmatprep.subr.mxu0 %v2298
    %4475 = vmatpush1.msra.mxu0 %v2297
    %4476 = vmatprep.subr.mxu0 %v2306
    %4477 = vmatpush1.msra.mxu0 %v2305
    %4478 = vmatprep.subr.mxu0 %v2314
    %4479 = vmatpush1.msra.mxu0 %v2313
    %4480 = vmatprep.subr.mxu0 %v2322
    %4481 = vmatpush1.msra.mxu0 %v2321
    %4482 = vmatprep.subr.mxu0 %v2330
    %4483 = vmatpush1.msra.mxu0 %v2329
    %4484 = vmatprep.subr.mxu0 %v2338
    %4485 = vmatpush1.msra.mxu0 %v2337
    %4486 = vmatprep.subr.mxu0 %v2346
    %4487 = vmatpush1.msra.mxu0 %v2345
    %4488 = vmatprep.subr.mxu0 %v2354
    %4489 = vmatpush1.msra.mxu0 %v2353
    %4490 = vmatprep.subr.mxu0 %v2362
    %4491 = vmatpush1.msra.mxu0 %v2361
    %4492 = vmatprep.subr.mxu0 %v2370
    %4493 = vmatpush1.msra.mxu0 %v2369
    %4494 = vmatprep.subr.mxu0 %v2378
    %4495 = vmatpush1.msra.mxu0 %v2377
    %4496 = vmatprep.subr.mxu0 %v2386
    %4497 = vmatpush1.msra.mxu0 %v2385
    %4498 = vmatprep.mubr.f32.mxu0 %v709
    %4499 = vmatmul.mubr.f32.gmra.mrb[0].mxu0 %v707
    %v4500 = vpop.f32.mrb[0].mxu0
    %v4501 = vadd.f32 %v4430, %v4500
    %v4502 = vpop.f32.mrb[0].mxu0
    %v4503 = vadd.f32 %v4432, %v4502
    %4504 = vdwg.mxu0
    %4505 = vmatprep.subr.mxu0 %v2394
    %4506 = vmatpush1.msra.mxu0 %v2393
    %4507 = vmatprep.subr.mxu0 %v2402
    %4508 = vmatpush1.msra.mxu0 %v2401
    %4509 = vmatprep.subr.mxu0 %v2410
    %4510 = vmatpush1.msra.mxu0 %v2409
    %4511 = vmatprep.subr.mxu0 %v2418
    %4512 = vmatpush1.msra.mxu0 %v2417
    %4513 = vmatprep.subr.mxu0 %v2426
    %4514 = vmatpush1.msra.mxu0 %v2425
    %4515 = vmatprep.subr.mxu0 %v2434
    %4516 = vmatpush1.msra.mxu0 %v2433
    %4517 = vmatprep.subr.mxu0 %v2442
    %4518 = vmatpush1.msra.mxu0 %v2441
    %4519 = vmatprep.subr.mxu0 %v2450
    %4520 = vmatpush1.msra.mxu0 %v2449
    %4521 = vmatprep.subr.mxu0 %v2458
    %4522 = vmatpush1.msra.mxu0 %v2457
    %4523 = vmatprep.subr.mxu0 %v2466
    %4524 = vmatpush1.msra.mxu0 %v2465
    %4525 = vmatprep.subr.mxu0 %v2474
    %4526 = vmatpush1.msra.mxu0 %v2473
    %4527 = vmatprep.subr.mxu0 %v2482
    %4528 = vmatpush1.msra.mxu0 %v2481
    %4529 = vmatprep.subr.mxu0 %v2490
    %4530 = vmatpush1.msra.mxu0 %v2489
    %4531 = vmatprep.subr.mxu0 %v2498
    %4532 = vmatpush1.msra.mxu0 %v2497
    %4533 = vmatprep.subr.mxu0 %v2506
    %4534 = vmatpush1.msra.mxu0 %v2505
    %4535 = vmatprep.subr.mxu0 %v2514
    %4536 = vmatpush1.msra.mxu0 %v2513
    %4537 = vmatprep.subr.mxu0 %v2522
    %4538 = vmatpush1.msra.mxu0 %v2521
    %4539 = vmatprep.subr.mxu0 %v2530
    %4540 = vmatpush1.msra.mxu0 %v2529
    %4541 = vmatprep.subr.mxu0 %v2538
    %4542 = vmatpush1.msra.mxu0 %v2537
    %4543 = vmatprep.subr.mxu0 %v2546
    %4544 = vmatpush1.msra.mxu0 %v2545
    %4545 = vmatprep.subr.mxu0 %v2554
    %4546 = vmatpush1.msra.mxu0 %v2553
    %4547 = vmatprep.subr.mxu0 %v2562
    %4548 = vmatpush1.msra.mxu0 %v2561
    %4549 = vmatprep.subr.mxu0 %v2570
    %4550 = vmatpush1.msra.mxu0 %v2569
    %4551 = vmatprep.subr.mxu0 %v2578
    %4552 = vmatpush1.msra.mxu0 %v2577
    %4553 = vmatprep.subr.mxu0 %v2586
    %4554 = vmatpush1.msra.mxu0 %v2585
    %4555 = vmatprep.subr.mxu0 %v2594
    %4556 = vmatpush1.msra.mxu0 %v2593
    %4557 = vmatprep.subr.mxu0 %v2602
    %4558 = vmatpush1.msra.mxu0 %v2601
    %4559 = vmatprep.subr.mxu0 %v2610
    %4560 = vmatpush1.msra.mxu0 %v2609
    %4561 = vmatprep.subr.mxu0 %v2618
    %4562 = vmatpush1.msra.mxu0 %v2617
    %4563 = vmatprep.subr.mxu0 %v2626
    %4564 = vmatpush1.msra.mxu0 %v2625
    %4565 = vmatprep.subr.mxu0 %v2634
    %4566 = vmatpush1.msra.mxu0 %v2633
    %4567 = vmatprep.subr.mxu0 %v2642
    %4568 = vmatpush1.msra.mxu0 %v2641
    %4569 = vmatprep.mubr.f32.mxu0 %v780
    %4570 = vmatmul.mubr.f32.gmra.mrb[0].mxu0 %v778
    %v4571 = vpop.f32.mrb[0].mxu0
    %v4572 = vadd.f32 %v4501, %v4571
    %v4573 = vpop.f32.mrb[0].mxu0
    %v4574 = vadd.f32 %v4503, %v4573
    %4575 = vdwg.mxu0
    %4576 = vmatprep.subr.mxu0 %v2650
    %4577 = vmatpush1.msra.mxu0 %v2649
    %4578 = vmatprep.subr.mxu0 %v2658
    %4579 = vmatpush1.msra.mxu0 %v2657
    %4580 = vmatprep.subr.mxu0 %v2666
    %4581 = vmatpush1.msra.mxu0 %v2665
    %4582 = vmatprep.subr.mxu0 %v2674
    %4583 = vmatpush1.msra.mxu0 %v2673
    %4584 = vmatprep.subr.mxu0 %v2682
    %4585 = vmatpush1.msra.mxu0 %v2681
    %4586 = vmatprep.subr.mxu0 %v2690
    %4587 = vmatpush1.msra.mxu0 %v2689
    %4588 = vmatprep.subr.mxu0 %v2698
    %4589 = vmatpush1.msra.mxu0 %v2697
    %4590 = vmatprep.subr.mxu0 %v2706
    %4591 = vmatpush1.msra.mxu0 %v2705
    %4592 = vmatprep.subr.mxu0 %v2714
    %4593 = vmatpush1.msra.mxu0 %v2713
    %4594 = vmatprep.subr.mxu0 %v2722
    %4595 = vmatpush1.msra.mxu0 %v2721
    %4596 = vmatprep.subr.mxu0 %v2730
    %4597 = vmatpush1.msra.mxu0 %v2729
    %4598 = vmatprep.subr.mxu0 %v2738
    %4599 = vmatpush1.msra.mxu0 %v2737
    %4600 = vmatprep.subr.mxu0 %v2746
    %4601 = vmatpush1.msra.mxu0 %v2745
    %4602 = vmatprep.subr.mxu0 %v2754
    %4603 = vmatpush1.msra.mxu0 %v2753
    %4604 = vmatprep.subr.mxu0 %v2762
    %4605 = vmatpush1.msra.mxu0 %v2761
    %4606 = vmatprep.subr.mxu0 %v2770
    %4607 = vmatpush1.msra.mxu0 %v2769
    %4608 = vmatprep.subr.mxu0 %v2778
    %4609 = vmatpush1.msra.mxu0 %v2777
    %4610 = vmatprep.subr.mxu0 %v2786
    %4611 = vmatpush1.msra.mxu0 %v2785
    %4612 = vmatprep.subr.mxu0 %v2794
    %4613 = vmatpush1.msra.mxu0 %v2793
    %4614 = vmatprep.subr.mxu0 %v2802
    %4615 = vmatpush1.msra.mxu0 %v2801
    %4616 = vmatprep.subr.mxu0 %v2810
    %4617 = vmatpush1.msra.mxu0 %v2809
    %4618 = vmatprep.subr.mxu0 %v2818
    %4619 = vmatpush1.msra.mxu0 %v2817
    %4620 = vmatprep.subr.mxu0 %v2826
    %4621 = vmatpush1.msra.mxu0 %v2825
    %4622 = vmatprep.subr.mxu0 %v2834
    %4623 = vmatpush1.msra.mxu0 %v2833
    %4624 = vmatprep.subr.mxu0 %v2842
    %4625 = vmatpush1.msra.mxu0 %v2841
    %4626 = vmatprep.subr.mxu0 %v2850
    %4627 = vmatpush1.msra.mxu0 %v2849
    %4628 = vmatprep.subr.mxu0 %v2858
    %4629 = vmatpush1.msra.mxu0 %v2857
    %4630 = vmatprep.subr.mxu0 %v2866
    %4631 = vmatpush1.msra.mxu0 %v2865
    %4632 = vmatprep.subr.mxu0 %v2874
    %4633 = vmatpush1.msra.mxu0 %v2873
    %4634 = vmatprep.subr.mxu0 %v2882
    %4635 = vmatpush1.msra.mxu0 %v2881
    %4636 = vmatprep.subr.mxu0 %v2890
    %4637 = vmatpush1.msra.mxu0 %v2889
    %4638 = vmatprep.subr.mxu0 %v2898
    %4639 = vmatpush1.msra.mxu0 %v2897
    %4640 = vmatprep.mubr.f32.mxu0 %v851
    %4641 = vmatmul.mubr.f32.gmra.mrb[0].mxu0 %v849
    %v4642 = vpop.f32.mrb[0].mxu0
    %v4643 = vadd.f32 %v4572, %v4642
    %v4644 = vpop.f32.mrb[0].mxu0
    %v4645 = vadd.f32 %v4574, %v4644
    %4646 = vdwg.mxu0
    %4647 = vmatprep.subr.mxu0 %v860
    %4648 = vmatpush1.msra.mxu0 %v859
    %4649 = vmatprep.subr.mxu0 %v868
    %4650 = vmatpush1.msra.mxu0 %v867
    %4651 = vmatprep.subr.mxu0 %v876
    %4652 = vmatpush1.msra.mxu0 %v875
    %4653 = vmatprep.subr.mxu0 %v884
    %4654 = vmatpush1.msra.mxu0 %v883
    %4655 = vmatprep.subr.mxu0 %v892
    %4656 = vmatpush1.msra.mxu0 %v891
    %4657 = vmatprep.subr.mxu0 %v900
    %4658 = vmatpush1.msra.mxu0 %v899
    %4659 = vmatprep.subr.mxu0 %v908
    %4660 = vmatpush1.msra.mxu0 %v907
    %4661 = vmatprep.subr.mxu0 %v916
    %4662 = vmatpush1.msra.mxu0 %v915
    %4663 = vmatprep.subr.mxu0 %v924
    %4664 = vmatpush1.msra.mxu0 %v923
    %4665 = vmatprep.subr.mxu0 %v932
    %4666 = vmatpush1.msra.mxu0 %v931
    %4667 = vmatprep.subr.mxu0 %v940
    %4668 = vmatpush1.msra.mxu0 %v939
    %4669 = vmatprep.subr.mxu0 %v948
    %4670 = vmatpush1.msra.mxu0 %v947
    %4671 = vmatprep.subr.mxu0 %v956
    %4672 = vmatpush1.msra.mxu0 %v955
    %4673 = vmatprep.subr.mxu0 %v964
    %4674 = vmatpush1.msra.mxu0 %v963
    %4675 = vmatprep.subr.mxu0 %v972
    %4676 = vmatpush1.msra.mxu0 %v971
    %4677 = vmatprep.subr.mxu0 %v980
    %4678 = vmatpush1.msra.mxu0 %v979
    %4679 = vmatprep.subr.mxu0 %v988
    %4680 = vmatpush1.msra.mxu0 %v987
    %4681 = vmatprep.subr.mxu0 %v996
    %4682 = vmatpush1.msra.mxu0 %v995
    %4683 = vmatprep.subr.mxu0 %v1004
    %4684 = vmatpush1.msra.mxu0 %v1003
    %4685 = vmatprep.subr.mxu0 %v1012
    %4686 = vmatpush1.msra.mxu0 %v1011
    %4687 = vmatprep.subr.mxu0 %v1020
    %4688 = vmatpush1.msra.mxu0 %v1019
    %4689 = vmatprep.subr.mxu0 %v1028
    %4690 = vmatpush1.msra.mxu0 %v1027
    %4691 = vmatprep.subr.mxu0 %v1036
    %4692 = vmatpush1.msra.mxu0 %v1035
    %4693 = vmatprep.subr.mxu0 %v1044
    %4694 = vmatpush1.msra.mxu0 %v1043
    %4695 = vmatprep.subr.mxu0 %v1052
    %4696 = vmatpush1.msra.mxu0 %v1051
    %4697 = vmatprep.subr.mxu0 %v1060
    %4698 = vmatpush1.msra.mxu0 %v1059
    %4699 = vmatprep.subr.mxu0 %v1068
    %4700 = vmatpush1.msra.mxu0 %v1067
    %4701 = vmatprep.subr.mxu0 %v1076
    %4702 = vmatpush1.msra.mxu0 %v1075
    %4703 = vmatprep.subr.mxu0 %v1084
    %4704 = vmatpush1.msra.mxu0 %v1083
    %4705 = vmatprep.subr.mxu0 %v1092
    %4706 = vmatpush1.msra.mxu0 %v1091
    %4707 = vmatprep.subr.mxu0 %v1100
    %4708 = vmatpush1.msra.mxu0 %v1099
    %4709 = vmatprep.subr.mxu0 %v1108
    %4710 = vmatpush1.msra.mxu0 %v1107
    %4711 = vmatprep.mubr.f32.mxu0 %v354
    %4712 = vmatmul.mubr.f32.gmra.mrb[0].mxu0 %v352
    %v4713 = vpop.f32.mrb[0].mxu0
    %v4714 = vadd.f32 %v2930, %v4713
    %v4715 = vpop.f32.mrb[0].mxu0
    %v4716 = vadd.f32 %v2934, %v4715
    %4717 = vdwg.mxu0
    %4718 = vmatprep.subr.mxu0 %v1116
    %4719 = vmatpush1.msra.mxu0 %v1115
    %4720 = vmatprep.subr.mxu0 %v1124
    %4721 = vmatpush1.msra.mxu0 %v1123
    %4722 = vmatprep.subr.mxu0 %v1132
    %4723 = vmatpush1.msra.mxu0 %v1131
    %4724 = vmatprep.subr.mxu0 %v1140
    %4725 = vmatpush1.msra.mxu0 %v1139
    %4726 = vmatprep.subr.mxu0 %v1148
    %4727 = vmatpush1.msra.mxu0 %v1147
    %4728 = vmatprep.subr.mxu0 %v1156
    %4729 = vmatpush1.msra.mxu0 %v1155
    %4730 = vmatprep.subr.mxu0 %v1164
    %4731 = vmatpush1.msra.mxu0 %v1163
    %4732 = vmatprep.subr.mxu0 %v1172
    %4733 = vmatpush1.msra.mxu0 %v1171
    %4734 = vmatprep.subr.mxu0 %v1180
    %4735 = vmatpush1.msra.mxu0 %v1179
    %4736 = vmatprep.subr.mxu0 %v1188
    %4737 = vmatpush1.msra.mxu0 %v1187
    %4738 = vmatprep.subr.mxu0 %v1196
    %4739 = vmatpush1.msra.mxu0 %v1195
    %4740 = vmatprep.subr.mxu0 %v1204
    %4741 = vmatpush1.msra.mxu0 %v1203
    %4742 = vmatprep.subr.mxu0 %v1212
    %4743 = vmatpush1.msra.mxu0 %v1211
    %4744 = vmatprep.subr.mxu0 %v1220
    %4745 = vmatpush1.msra.mxu0 %v1219
    %4746 = vmatprep.subr.mxu0 %v1228
    %4747 = vmatpush1.msra.mxu0 %v1227
    %4748 = vmatprep.subr.mxu0 %v1236
    %4749 = vmatpush1.msra.mxu0 %v1235
    %4750 = vmatprep.subr.mxu0 %v1244
    %4751 = vmatpush1.msra.mxu0 %v1243
    %4752 = vmatprep.subr.mxu0 %v1252
    %4753 = vmatpush1.msra.mxu0 %v1251
    %4754 = vmatprep.subr.mxu0 %v1260
    %4755 = vmatpush1.msra.mxu0 %v1259
    %4756 = vmatprep.subr.mxu0 %v1268
    %4757 = vmatpush1.msra.mxu0 %v1267
    %4758 = vmatprep.subr.mxu0 %v1276
    %4759 = vmatpush1.msra.mxu0 %v1275
    %4760 = vmatprep.subr.mxu0 %v1284
    %4761 = vmatpush1.msra.mxu0 %v1283
    %4762 = vmatprep.subr.mxu0 %v1292
    %4763 = vmatpush1.msra.mxu0 %v1291
    %4764 = vmatprep.subr.mxu0 %v1300
    %4765 = vmatpush1.msra.mxu0 %v1299
    %4766 = vmatprep.subr.mxu0 %v1308
    %4767 = vmatpush1.msra.mxu0 %v1307
    %4768 = vmatprep.subr.mxu0 %v1316
    %4769 = vmatpush1.msra.mxu0 %v1315
    %4770 = vmatprep.subr.mxu0 %v1324
    %4771 = vmatpush1.msra.mxu0 %v1323
    %4772 = vmatprep.subr.mxu0 %v1332
    %4773 = vmatpush1.msra.mxu0 %v1331
    %4774 = vmatprep.subr.mxu0 %v1340
    %4775 = vmatpush1.msra.mxu0 %v1339
    %4776 = vmatprep.subr.mxu0 %v1348
    %4777 = vmatpush1.msra.mxu0 %v1347
    %4778 = vmatprep.subr.mxu0 %v1356
    %4779 = vmatpush1.msra.mxu0 %v1355
    %4780 = vmatprep.subr.mxu0 %v1364
    %4781 = vmatpush1.msra.mxu0 %v1363
    %4782 = vmatprep.mubr.f32.mxu0 %v425
    %4783 = vmatmul.mubr.f32.gmra.mrb[0].mxu0 %v423
    %v4784 = vpop.f32.mrb[0].mxu0
    %v4785 = vadd.f32 %v4714, %v4784
    %v4786 = vpop.f32.mrb[0].mxu0
    %v4787 = vadd.f32 %v4716, %v4786
    %4788 = vdwg.mxu0
    %4789 = vmatprep.subr.mxu0 %v1372
    %4790 = vmatpush1.msra.mxu0 %v1371
    %4791 = vmatprep.subr.mxu0 %v1380
    %4792 = vmatpush1.msra.mxu0 %v1379
    %4793 = vmatprep.subr.mxu0 %v1388
    %4794 = vmatpush1.msra.mxu0 %v1387
    %4795 = vmatprep.subr.mxu0 %v1396
    %4796 = vmatpush1.msra.mxu0 %v1395
    %4797 = vmatprep.subr.mxu0 %v1404
    %4798 = vmatpush1.msra.mxu0 %v1403
    %4799 = vmatprep.subr.mxu0 %v1412
    %4800 = vmatpush1.msra.mxu0 %v1411
    %4801 = vmatprep.subr.mxu0 %v1420
    %4802 = vmatpush1.msra.mxu0 %v1419
    %4803 = vmatprep.subr.mxu0 %v1428
    %4804 = vmatpush1.msra.mxu0 %v1427
    %4805 = vmatprep.subr.mxu0 %v1436
    %4806 = vmatpush1.msra.mxu0 %v1435
    %4807 = vmatprep.subr.mxu0 %v1444
    %4808 = vmatpush1.msra.mxu0 %v1443
    %4809 = vmatprep.subr.mxu0 %v1452
    %4810 = vmatpush1.msra.mxu0 %v1451
    %4811 = vmatprep.subr.mxu0 %v1460
    %4812 = vmatpush1.msra.mxu0 %v1459
    %4813 = vmatprep.subr.mxu0 %v1468
    %4814 = vmatpush1.msra.mxu0 %v1467
    %4815 = vmatprep.subr.mxu0 %v1476
    %4816 = vmatpush1.msra.mxu0 %v1475
    %4817 = vmatprep.subr.mxu0 %v1484
    %4818 = vmatpush1.msra.mxu0 %v1483
    %4819 = vmatprep.subr.mxu0 %v1492
    %4820 = vmatpush1.msra.mxu0 %v1491
    %4821 = vmatprep.subr.mxu0 %v1500
    %4822 = vmatpush1.msra.mxu0 %v1499
    %4823 = vmatprep.subr.mxu0 %v1508
    %4824 = vmatpush1.msra.mxu0 %v1507
    %4825 = vmatprep.subr.mxu0 %v1516
    %4826 = vmatpush1.msra.mxu0 %v1515
    %4827 = vmatprep.subr.mxu0 %v1524
    %4828 = vmatpush1.msra.mxu0 %v1523
    %4829 = vmatprep.subr.mxu0 %v1532
    %4830 = vmatpush1.msra.mxu0 %v1531
    %4831 = vmatprep.subr.mxu0 %v1540
    %4832 = vmatpush1.msra.mxu0 %v1539
    %4833 = vmatprep.subr.mxu0 %v1548
    %4834 = vmatpush1.msra.mxu0 %v1547
    %4835 = vmatprep.subr.mxu0 %v1556
    %4836 = vmatpush1.msra.mxu0 %v1555
    %4837 = vmatprep.subr.mxu0 %v1564
    %4838 = vmatpush1.msra.mxu0 %v1563
    %4839 = vmatprep.subr.mxu0 %v1572
    %4840 = vmatpush1.msra.mxu0 %v1571
    %4841 = vmatprep.subr.mxu0 %v1580
    %4842 = vmatpush1.msra.mxu0 %v1579
    %4843 = vmatprep.subr.mxu0 %v1588
    %4844 = vmatpush1.msra.mxu0 %v1587
    %4845 = vmatprep.subr.mxu0 %v1596
    %4846 = vmatpush1.msra.mxu0 %v1595
    %4847 = vmatprep.subr.mxu0 %v1604
    %4848 = vmatpush1.msra.mxu0 %v1603
    %4849 = vmatprep.subr.mxu0 %v1612
    %4850 = vmatpush1.msra.mxu0 %v1611
    %4851 = vmatprep.subr.mxu0 %v1620
    %4852 = vmatpush1.msra.mxu0 %v1619
    %4853 = vmatprep.mubr.f32.mxu0 %v496
    %4854 = vmatmul.mubr.f32.gmra.mrb[0].mxu0 %v494
    %v4855 = vpop.f32.mrb[0].mxu0
    %v4856 = vadd.f32 %v4785, %v4855
    %v4857 = vpop.f32.mrb[0].mxu0
    %v4858 = vadd.f32 %v4787, %v4857
    %4859 = vdwg.mxu0
    %4860 = vmatprep.subr.mxu0 %v1628
    %4861 = vmatpush1.msra.mxu0 %v1627
    %4862 = vmatprep.subr.mxu0 %v1636
    %4863 = vmatpush1.msra.mxu0 %v1635
    %4864 = vmatprep.subr.mxu0 %v1644
    %4865 = vmatpush1.msra.mxu0 %v1643
    %4866 = vmatprep.subr.mxu0 %v1652
    %4867 = vmatpush1.msra.mxu0 %v1651
    %4868 = vmatprep.subr.mxu0 %v1660
    %4869 = vmatpush1.msra.mxu0 %v1659
    %4870 = vmatprep.subr.mxu0 %v1668
    %4871 = vmatpush1.msra.mxu0 %v1667
    %4872 = vmatprep.subr.mxu0 %v1676
    %4873 = vmatpush1.msra.mxu0 %v1675
    %4874 = vmatprep.subr.mxu0 %v1684
    %4875 = vmatpush1.msra.mxu0 %v1683
    %4876 = vmatprep.subr.mxu0 %v1692
    %4877 = vmatpush1.msra.mxu0 %v1691
    %4878 = vmatprep.subr.mxu0 %v1700
    %4879 = vmatpush1.msra.mxu0 %v1699
    %4880 = vmatprep.subr.mxu0 %v1708
    %4881 = vmatpush1.msra.mxu0 %v1707
    %4882 = vmatprep.subr.mxu0 %v1716
    %4883 = vmatpush1.msra.mxu0 %v1715
    %4884 = vmatprep.subr.mxu0 %v1724
    %4885 = vmatpush1.msra.mxu0 %v1723
    %4886 = vmatprep.subr.mxu0 %v1732
    %4887 = vmatpush1.msra.mxu0 %v1731
    %4888 = vmatprep.subr.mxu0 %v1740
    %4889 = vmatpush1.msra.mxu0 %v1739
    %4890 = vmatprep.subr.mxu0 %v1748
    %4891 = vmatpush1.msra.mxu0 %v1747
    %4892 = vmatprep.subr.mxu0 %v1756
    %4893 = vmatpush1.msra.mxu0 %v1755
    %4894 = vmatprep.subr.mxu0 %v1764
    %4895 = vmatpush1.msra.mxu0 %v1763
    %4896 = vmatprep.subr.mxu0 %v1772
    %4897 = vmatpush1.msra.mxu0 %v1771
    %4898 = vmatprep.subr.mxu0 %v1780
    %4899 = vmatpush1.msra.mxu0 %v1779
    %4900 = vmatprep.subr.mxu0 %v1788
    %4901 = vmatpush1.msra.mxu0 %v1787
    %4902 = vmatprep.subr.mxu0 %v1796
    %4903 = vmatpush1.msra.mxu0 %v1795
    %4904 = vmatprep.subr.mxu0 %v1804
    %4905 = vmatpush1.msra.mxu0 %v1803
    %4906 = vmatprep.subr.mxu0 %v1812
    %4907 = vmatpush1.msra.mxu0 %v1811
    %4908 = vmatprep.subr.mxu0 %v1820
    %4909 = vmatpush1.msra.mxu0 %v1819
    %4910 = vmatprep.subr.mxu0 %v1828
    %4911 = vmatpush1.msra.mxu0 %v1827
    %4912 = vmatprep.subr.mxu0 %v1836
    %4913 = vmatpush1.msra.mxu0 %v1835
    %4914 = vmatprep.subr.mxu0 %v1844
    %4915 = vmatpush1.msra.mxu0 %v1843
    %4916 = vmatprep.subr.mxu0 %v1852
    %4917 = vmatpush1.msra.mxu0 %v1851
    %4918 = vmatprep.subr.mxu0 %v1860
    %4919 = vmatpush1.msra.mxu0 %v1859
    %4920 = vmatprep.subr.mxu0 %v1868
    %4921 = vmatpush1.msra.mxu0 %v1867
    %4922 = vmatprep.subr.mxu0 %v1876
    %4923 = vmatpush1.msra.mxu0 %v1875
    %4924 = vmatprep.mubr.f32.mxu0 %v567
    %4925 = vmatmul.mubr.f32.gmra.mrb[0].mxu0 %v565
    %v4926 = vpop.f32.mrb[0].mxu0
    %v4927 = vadd.f32 %v4856, %v4926
    %v4928 = vpop.f32.mrb[0].mxu0
    %v4929 = vadd.f32 %v4858, %v4928
    %4930 = vdwg.mxu0
    %4931 = vmatprep.subr.mxu0 %v1884
    %4932 = vmatpush1.msra.mxu0 %v1883
    %4933 = vmatprep.subr.mxu0 %v1892
    %4934 = vmatpush1.msra.mxu0 %v1891
    %4935 = vmatprep.subr.mxu0 %v1900
    %4936 = vmatpush1.msra.mxu0 %v1899
    %4937 = vmatprep.subr.mxu0 %v1908
    %4938 = vmatpush1.msra.mxu0 %v1907
    %4939 = vmatprep.subr.mxu0 %v1916
    %4940 = vmatpush1.msra.mxu0 %v1915
    %4941 = vmatprep.subr.mxu0 %v1924
    %4942 = vmatpush1.msra.mxu0 %v1923
    %4943 = vmatprep.subr.mxu0 %v1932
    %4944 = vmatpush1.msra.mxu0 %v1931
    %4945 = vmatprep.subr.mxu0 %v1940
    %4946 = vmatpush1.msra.mxu0 %v1939
    %4947 = vmatprep.subr.mxu0 %v1948
    %4948 = vmatpush1.msra.mxu0 %v1947
    %4949 = vmatprep.subr.mxu0 %v1956
    %4950 = vmatpush1.msra.mxu0 %v1955
    %4951 = vmatprep.subr.mxu0 %v1964
    %4952 = vmatpush1.msra.mxu0 %v1963
    %4953 = vmatprep.subr.mxu0 %v1972
    %4954 = vmatpush1.msra.mxu0 %v1971
    %4955 = vmatprep.subr.mxu0 %v1980
    %4956 = vmatpush1.msra.mxu0 %v1979
    %4957 = vmatprep.subr.mxu0 %v1988
    %4958 = vmatpush1.msra.mxu0 %v1987
    %4959 = vmatprep.subr.mxu0 %v1996
    %4960 = vmatpush1.msra.mxu0 %v1995
    %4961 = vmatprep.subr.mxu0 %v2004
    %4962 = vmatpush1.msra.mxu0 %v2003
    %4963 = vmatprep.subr.mxu0 %v2012
    %4964 = vmatpush1.msra.mxu0 %v2011
    %4965 = vmatprep.subr.mxu0 %v2020
    %4966 = vmatpush1.msra.mxu0 %v2019
    %4967 = vmatprep.subr.mxu0 %v2028
    %4968 = vmatpush1.msra.mxu0 %v2027
    %4969 = vmatprep.subr.mxu0 %v2036
    %4970 = vmatpush1.msra.mxu0 %v2035
    %4971 = vmatprep.subr.mxu0 %v2044
    %4972 = vmatpush1.msra.mxu0 %v2043
    %4973 = vmatprep.subr.mxu0 %v2052
    %4974 = vmatpush1.msra.mxu0 %v2051
    %4975 = vmatprep.subr.mxu0 %v2060
    %4976 = vmatpush1.msra.mxu0 %v2059
    %4977 = vmatprep.subr.mxu0 %v2068
    %4978 = vmatpush1.msra.mxu0 %v2067
    %4979 = vmatprep.subr.mxu0 %v2076
    %4980 = vmatpush1.msra.mxu0 %v2075
    %4981 = vmatprep.subr.mxu0 %v2084
    %4982 = vmatpush1.msra.mxu0 %v2083
    %4983 = vmatprep.subr.mxu0 %v2092
    %4984 = vmatpush1.msra.mxu0 %v2091
    %4985 = vmatprep.subr.mxu0 %v2100
    %4986 = vmatpush1.msra.mxu0 %v2099
    %4987 = vmatprep.subr.mxu0 %v2108
    %4988 = vmatpush1.msra.mxu0 %v2107
    %4989 = vmatprep.subr.mxu0 %v2116
    %4990 = vmatpush1.msra.mxu0 %v2115
    %4991 = vmatprep.subr.mxu0 %v2124
    %4992 = vmatpush1.msra.mxu0 %v2123
    %4993 = vmatprep.subr.mxu0 %v2132
    %4994 = vmatpush1.msra.mxu0 %v2131
    %4995 = vmatprep.mubr.f32.mxu0 %v638
    %4996 = vmatmul.mubr.f32.gmra.mrb[0].mxu0 %v636
    %v4997 = vpop.f32.mrb[0].mxu0
    %v4998 = vadd.f32 %v4927, %v4997
    %v4999 = vpop.f32.mrb[0].mxu0
    %v5000 = vadd.f32 %v4929, %v4999
    %5001 = vdwg.mxu0
    %5002 = vmatprep.subr.mxu0 %v2140
    %5003 = vmatpush1.msra.mxu0 %v2139
    %5004 = vmatprep.subr.mxu0 %v2148
    %5005 = vmatpush1.msra.mxu0 %v2147
    %5006 = vmatprep.subr.mxu0 %v2156
    %5007 = vmatpush1.msra.mxu0 %v2155
    %5008 = vmatprep.subr.mxu0 %v2164
    %5009 = vmatpush1.msra.mxu0 %v2163
    %5010 = vmatprep.subr.mxu0 %v2172
    %5011 = vmatpush1.msra.mxu0 %v2171
    %5012 = vmatprep.subr.mxu0 %v2180
    %5013 = vmatpush1.msra.mxu0 %v2179
    %5014 = vmatprep.subr.mxu0 %v2188
    %5015 = vmatpush1.msra.mxu0 %v2187
    %5016 = vmatprep.subr.mxu0 %v2196
    %5017 = vmatpush1.msra.mxu0 %v2195
    %5018 = vmatprep.subr.mxu0 %v2204
    %5019 = vmatpush1.msra.mxu0 %v2203
    %5020 = vmatprep.subr.mxu0 %v2212
    %5021 = vmatpush1.msra.mxu0 %v2211
    %5022 = vmatprep.subr.mxu0 %v2220
    %5023 = vmatpush1.msra.mxu0 %v2219
    %5024 = vmatprep.subr.mxu0 %v2228
    %5025 = vmatpush1.msra.mxu0 %v2227
    %5026 = vmatprep.subr.mxu0 %v2236
    %5027 = vmatpush1.msra.mxu0 %v2235
    %5028 = vmatprep.subr.mxu0 %v2244
    %5029 = vmatpush1.msra.mxu0 %v2243
    %5030 = vmatprep.subr.mxu0 %v2252
    %5031 = vmatpush1.msra.mxu0 %v2251
    %5032 = vmatprep.subr.mxu0 %v2260
    %5033 = vmatpush1.msra.mxu0 %v2259
    %5034 = vmatprep.subr.mxu0 %v2268
    %5035 = vmatpush1.msra.mxu0 %v2267
    %5036 = vmatprep.subr.mxu0 %v2276
    %5037 = vmatpush1.msra.mxu0 %v2275
    %5038 = vmatprep.subr.mxu0 %v2284
    %5039 = vmatpush1.msra.mxu0 %v2283
    %5040 = vmatprep.subr.mxu0 %v2292
    %5041 = vmatpush1.msra.mxu0 %v2291
    %5042 = vmatprep.subr.mxu0 %v2300
    %5043 = vmatpush1.msra.mxu0 %v2299
    %5044 = vmatprep.subr.mxu0 %v2308
    %5045 = vmatpush1.msra.mxu0 %v2307
    %5046 = vmatprep.subr.mxu0 %v2316
    %5047 = vmatpush1.msra.mxu0 %v2315
    %5048 = vmatprep.subr.mxu0 %v2324
    %5049 = vmatpush1.msra.mxu0 %v2323
    %5050 = vmatprep.subr.mxu0 %v2332
    %5051 = vmatpush1.msra.mxu0 %v2331
    %5052 = vmatprep.subr.mxu0 %v2340
    %5053 = vmatpush1.msra.mxu0 %v2339
    %5054 = vmatprep.subr.mxu0 %v2348
    %5055 = vmatpush1.msra.mxu0 %v2347
    %5056 = vmatprep.subr.mxu0 %v2356
    %5057 = vmatpush1.msra.mxu0 %v2355
    %5058 = vmatprep.subr.mxu0 %v2364
    %5059 = vmatpush1.msra.mxu0 %v2363
    %5060 = vmatprep.subr.mxu0 %v2372
    %5061 = vmatpush1.msra.mxu0 %v2371
    %5062 = vmatprep.subr.mxu0 %v2380
    %5063 = vmatpush1.msra.mxu0 %v2379
    %5064 = vmatprep.subr.mxu0 %v2388
    %5065 = vmatpush1.msra.mxu0 %v2387
    %5066 = vmatprep.mubr.f32.mxu0 %v709
    %5067 = vmatmul.mubr.f32.gmra.mrb[0].mxu0 %v707
    %v5068 = vpop.f32.mrb[0].mxu0
    %v5069 = vadd.f32 %v4998, %v5068
    %v5070 = vpop.f32.mrb[0].mxu0
    %v5071 = vadd.f32 %v5000, %v5070
    %5072 = vdwg.mxu0
    %5073 = vmatprep.subr.mxu0 %v2396
    %5074 = vmatpush1.msra.mxu0 %v2395
    %5075 = vmatprep.subr.mxu0 %v2404
    %5076 = vmatpush1.msra.mxu0 %v2403
    %5077 = vmatprep.subr.mxu0 %v2412
    %5078 = vmatpush1.msra.mxu0 %v2411
    %5079 = vmatprep.subr.mxu0 %v2420
    %5080 = vmatpush1.msra.mxu0 %v2419
    %5081 = vmatprep.subr.mxu0 %v2428
    %5082 = vmatpush1.msra.mxu0 %v2427
    %5083 = vmatprep.subr.mxu0 %v2436
    %5084 = vmatpush1.msra.mxu0 %v2435
    %5085 = vmatprep.subr.mxu0 %v2444
    %5086 = vmatpush1.msra.mxu0 %v2443
    %5087 = vmatprep.subr.mxu0 %v2452
    %5088 = vmatpush1.msra.mxu0 %v2451
    %5089 = vmatprep.subr.mxu0 %v2460
    %5090 = vmatpush1.msra.mxu0 %v2459
    %5091 = vmatprep.subr.mxu0 %v2468
    %5092 = vmatpush1.msra.mxu0 %v2467
    %5093 = vmatprep.subr.mxu0 %v2476
    %5094 = vmatpush1.msra.mxu0 %v2475
    %5095 = vmatprep.subr.mxu0 %v2484
    %5096 = vmatpush1.msra.mxu0 %v2483
    %5097 = vmatprep.subr.mxu0 %v2492
    %5098 = vmatpush1.msra.mxu0 %v2491
    %5099 = vmatprep.subr.mxu0 %v2500
    %5100 = vmatpush1.msra.mxu0 %v2499
    %5101 = vmatprep.subr.mxu0 %v2508
    %5102 = vmatpush1.msra.mxu0 %v2507
    %5103 = vmatprep.subr.mxu0 %v2516
    %5104 = vmatpush1.msra.mxu0 %v2515
    %5105 = vmatprep.subr.mxu0 %v2524
    %5106 = vmatpush1.msra.mxu0 %v2523
    %5107 = vmatprep.subr.mxu0 %v2532
    %5108 = vmatpush1.msra.mxu0 %v2531
    %5109 = vmatprep.subr.mxu0 %v2540
    %5110 = vmatpush1.msra.mxu0 %v2539
    %5111 = vmatprep.subr.mxu0 %v2548
    %5112 = vmatpush1.msra.mxu0 %v2547
    %5113 = vmatprep.subr.mxu0 %v2556
    %5114 = vmatpush1.msra.mxu0 %v2555
    %5115 = vmatprep.subr.mxu0 %v2564
    %5116 = vmatpush1.msra.mxu0 %v2563
    %5117 = vmatprep.subr.mxu0 %v2572
    %5118 = vmatpush1.msra.mxu0 %v2571
    %5119 = vmatprep.subr.mxu0 %v2580
    %5120 = vmatpush1.msra.mxu0 %v2579
    %5121 = vmatprep.subr.mxu0 %v2588
    %5122 = vmatpush1.msra.mxu0 %v2587
    %5123 = vmatprep.subr.mxu0 %v2596
    %5124 = vmatpush1.msra.mxu0 %v2595
    %5125 = vmatprep.subr.mxu0 %v2604
    %5126 = vmatpush1.msra.mxu0 %v2603
    %5127 = vmatprep.subr.mxu0 %v2612
    %5128 = vmatpush1.msra.mxu0 %v2611
    %5129 = vmatprep.subr.mxu0 %v2620
    %5130 = vmatpush1.msra.mxu0 %v2619
    %5131 = vmatprep.subr.mxu0 %v2628
    %5132 = vmatpush1.msra.mxu0 %v2627
    %5133 = vmatprep.subr.mxu0 %v2636
    %5134 = vmatpush1.msra.mxu0 %v2635
    %5135 = vmatprep.subr.mxu0 %v2644
    %5136 = vmatpush1.msra.mxu0 %v2643
    %5137 = vmatprep.mubr.f32.mxu0 %v780
    %5138 = vmatmul.mubr.f32.gmra.mrb[0].mxu0 %v778
    %v5139 = vpop.f32.mrb[0].mxu0
    %v5140 = vadd.f32 %v5069, %v5139
    %v5141 = vpop.f32.mrb[0].mxu0
    %v5142 = vadd.f32 %v5071, %v5141
    %5143 = vdwg.mxu0
    %5144 = vmatprep.subr.mxu0 %v2652
    %5145 = vmatpush1.msra.mxu0 %v2651
    %5146 = vmatprep.subr.mxu0 %v2660
    %5147 = vmatpush1.msra.mxu0 %v2659
    %5148 = vmatprep.subr.mxu0 %v2668
    %5149 = vmatpush1.msra.mxu0 %v2667
    %5150 = vmatprep.subr.mxu0 %v2676
    %5151 = vmatpush1.msra.mxu0 %v2675
    %5152 = vmatprep.subr.mxu0 %v2684
    %5153 = vmatpush1.msra.mxu0 %v2683
    %5154 = vmatprep.subr.mxu0 %v2692
    %5155 = vmatpush1.msra.mxu0 %v2691
    %5156 = vmatprep.subr.mxu0 %v2700
    %5157 = vmatpush1.msra.mxu0 %v2699
    %5158 = vmatprep.subr.mxu0 %v2708
    %5159 = vmatpush1.msra.mxu0 %v2707
    %5160 = vmatprep.subr.mxu0 %v2716
    %5161 = vmatpush1.msra.mxu0 %v2715
    %5162 = vmatprep.subr.mxu0 %v2724
    %5163 = vmatpush1.msra.mxu0 %v2723
    %5164 = vmatprep.subr.mxu0 %v2732
    %5165 = vmatpush1.msra.mxu0 %v2731
    %5166 = vmatprep.subr.mxu0 %v2740
    %5167 = vmatpush1.msra.mxu0 %v2739
    %5168 = vmatprep.subr.mxu0 %v2748
    %5169 = vmatpush1.msra.mxu0 %v2747
    %5170 = vmatprep.subr.mxu0 %v2756
    %5171 = vmatpush1.msra.mxu0 %v2755
    %5172 = vmatprep.subr.mxu0 %v2764
    %5173 = vmatpush1.msra.mxu0 %v2763
    %5174 = vmatprep.subr.mxu0 %v2772
    %5175 = vmatpush1.msra.mxu0 %v2771
    %5176 = vmatprep.subr.mxu0 %v2780
    %5177 = vmatpush1.msra.mxu0 %v2779
    %5178 = vmatprep.subr.mxu0 %v2788
    %5179 = vmatpush1.msra.mxu0 %v2787
    %5180 = vmatprep.subr.mxu0 %v2796
    %5181 = vmatpush1.msra.mxu0 %v2795
    %5182 = vmatprep.subr.mxu0 %v2804
    %5183 = vmatpush1.msra.mxu0 %v2803
    %5184 = vmatprep.subr.mxu0 %v2812
    %5185 = vmatpush1.msra.mxu0 %v2811
    %5186 = vmatprep.subr.mxu0 %v2820
    %5187 = vmatpush1.msra.mxu0 %v2819
    %5188 = vmatprep.subr.mxu0 %v2828
    %5189 = vmatpush1.msra.mxu0 %v2827
    %5190 = vmatprep.subr.mxu0 %v2836
    %5191 = vmatpush1.msra.mxu0 %v2835
    %5192 = vmatprep.subr.mxu0 %v2844
    %5193 = vmatpush1.msra.mxu0 %v2843
    %5194 = vmatprep.subr.mxu0 %v2852
    %5195 = vmatpush1.msra.mxu0 %v2851
    %5196 = vmatprep.subr.mxu0 %v2860
    %5197 = vmatpush1.msra.mxu0 %v2859
    %5198 = vmatprep.subr.mxu0 %v2868
    %5199 = vmatpush1.msra.mxu0 %v2867
    %5200 = vmatprep.subr.mxu0 %v2876
    %5201 = vmatpush1.msra.mxu0 %v2875
    %5202 = vmatprep.subr.mxu0 %v2884
    %5203 = vmatpush1.msra.mxu0 %v2883
    %5204 = vmatprep.subr.mxu0 %v2892
    %5205 = vmatpush1.msra.mxu0 %v2891
    %5206 = vmatprep.subr.mxu0 %v2900
    %5207 = vmatpush1.msra.mxu0 %v2899
    %5208 = vmatprep.mubr.f32.mxu0 %v851
    %5209 = vmatmul.mubr.f32.gmra.mrb[0].mxu0 %v849
    %v5210 = vpop.f32.mrb[0].mxu0
    %v5211 = vadd.f32 %v5140, %v5210
    %v5212 = vpop.f32.mrb[0].mxu0
    %v5213 = vadd.f32 %v5142, %v5212
    %5214 = vdwg.mxu0
    %v5215 = vld [vmem:[#allocation11] sm:$0xff]
    %v5216 = vld [vmem:[#allocation11 + $0x8] sm:$0xff]
    %v5217 = vld [vmem:[#allocation11 + $0x10] sm:$0xff]
    %v5218 = vld [vmem:[#allocation11 + $0x18] sm:$0xff]
    %v5219 = vld [vmem:[#allocation11 + $0x20] sm:$0xff]
    %v5220 = vld [vmem:[#allocation11 + $0x28] sm:$0xff]
    %v5221 = vld [vmem:[#allocation11 + $0x30] sm:$0xff]
    %v5222 = vld [vmem:[#allocation11 + $0x38] sm:$0xff]
    %v5223 = vld [vmem:[#allocation11 + $0x40] sm:$0xff]
    %v5224 = vld [vmem:[#allocation11 + $0x48] sm:$0xff]
    %v5225 = vld [vmem:[#allocation11 + $0x50] sm:$0xff]
    %v5226 = vld [vmem:[#allocation11 + $0x58] sm:$0xff]
    %v5227 = vld [vmem:[#allocation11 + $0x60] sm:$0xff]
    %v5228 = vld [vmem:[#allocation11 + $0x68] sm:$0xff]
    %v5229 = vld [vmem:[#allocation11 + $0x70] sm:$0xff]
    %v5230 = vld [vmem:[#allocation11 + $0x78] sm:$0xff]
    %v5231 = vld [vmem:[#allocation11 + $0x80] sm:$0xff]
    %v5232 = vld [vmem:[#allocation11 + $0x88] sm:$0xff]
    %v5233 = vld [vmem:[#allocation11 + $0x90] sm:$0xff]
    %v5234 = vld [vmem:[#allocation11 + $0x98] sm:$0xff]
    %v5235 = vld [vmem:[#allocation11 + $0xa0] sm:$0xff]
    %v5236 = vld [vmem:[#allocation11 + $0xa8] sm:$0xff]
    %v5237 = vld [vmem:[#allocation11 + $0xb0] sm:$0xff]
    %v5238 = vld [vmem:[#allocation11 + $0xb8] sm:$0xff]
    %v5239 = vld [vmem:[#allocation11 + $0xc0] sm:$0xff]
    %v5240 = vld [vmem:[#allocation11 + $0xc8] sm:$0xff]
    %v5241 = vld [vmem:[#allocation11 + $0xd0] sm:$0xff]
    %v5242 = vld [vmem:[#allocation11 + $0xd8] sm:$0xff]
    %v5243 = vld [vmem:[#allocation11 + $0xe0] sm:$0xff]
    %v5244 = vld [vmem:[#allocation11 + $0xe8] sm:$0xff]
    %v5245 = vld [vmem:[#allocation11 + $0xf0] sm:$0xff]
    %v5246 = vld [vmem:[#allocation11 + $0xf8] sm:$0xff]
    %v5247 = vld [vmem:[#allocation11 + $0x100] sm:$0xff]
    %v5248 = vld [vmem:[#allocation11 + $0x108] sm:$0xff]
    %v5249 = vld [vmem:[#allocation11 + $0x110] sm:$0xff]
    %v5250 = vld [vmem:[#allocation11 + $0x118] sm:$0xff]
    %v5251 = vld [vmem:[#allocation11 + $0x120] sm:$0xff]
    %v5252 = vld [vmem:[#allocation11 + $0x128] sm:$0xff]
    %v5253 = vld [vmem:[#allocation11 + $0x130] sm:$0xff]
    %v5254 = vld [vmem:[#allocation11 + $0x138] sm:$0xff]
    %v5255 = vld [vmem:[#allocation11 + $0x140] sm:$0xff]
    %v5256 = vld [vmem:[#allocation11 + $0x148] sm:$0xff]
    %v5257 = vld [vmem:[#allocation11 + $0x150] sm:$0xff]
    %v5258 = vld [vmem:[#allocation11 + $0x158] sm:$0xff]
    %v5259 = vld [vmem:[#allocation11 + $0x160] sm:$0xff]
    %v5260 = vld [vmem:[#allocation11 + $0x168] sm:$0xff]
    %v5261 = vld [vmem:[#allocation11 + $0x170] sm:$0xff]
    %v5262 = vld [vmem:[#allocation11 + $0x178] sm:$0xff]
    %v5263 = vld [vmem:[#allocation11 + $0x180] sm:$0xff]
    %v5264 = vld [vmem:[#allocation11 + $0x188] sm:$0xff]
    %v5265 = vld [vmem:[#allocation11 + $0x190] sm:$0xff]
    %v5266 = vld [vmem:[#allocation11 + $0x198] sm:$0xff]
    %v5267 = vld [vmem:[#allocation11 + $0x1a0] sm:$0xff]
    %v5268 = vld [vmem:[#allocation11 + $0x1a8] sm:$0xff]
    %v5269 = vld [vmem:[#allocation11 + $0x1b0] sm:$0xff]
    %v5270 = vld [vmem:[#allocation11 + $0x1b8] sm:$0xff]
    %v5271 = vld [vmem:[#allocation11 + $0x1c0] sm:$0xff]
    %v5272 = vld [vmem:[#allocation11 + $0x1c8] sm:$0xff]
    %v5273 = vld [vmem:[#allocation11 + $0x1d0] sm:$0xff]
    %v5274 = vld [vmem:[#allocation11 + $0x1d8] sm:$0xff]
    %v5275 = vld [vmem:[#allocation11 + $0x1e0] sm:$0xff]
    %v5276 = vld [vmem:[#allocation11 + $0x1e8] sm:$0xff]
    %v5277 = vld [vmem:[#allocation11 + $0x1f0] sm:$0xff]
    %v5278 = vld [vmem:[#allocation11 + $0x1f8] sm:$0xff]
    %v5279 = vld [vmem:[#allocation11 + $0x200] sm:$0xff]
    %v5280 = vld [vmem:[#allocation11 + $0x208] sm:$0xff]
    %v5281 = vld [vmem:[#allocation11 + $0x210] sm:$0xff]
    %v5282 = vld [vmem:[#allocation11 + $0x218] sm:$0xff]
    %v5283 = vld [vmem:[#allocation11 + $0x220] sm:$0xff]
    %v5284 = vld [vmem:[#allocation11 + $0x228] sm:$0xff]
    %v5285 = vld [vmem:[#allocation11 + $0x230] sm:$0xff]
    %v5286 = vld [vmem:[#allocation11 + $0x238] sm:$0xff]
    %v5287 = vld [vmem:[#allocation11 + $0x240] sm:$0xff]
    %v5288 = vld [vmem:[#allocation11 + $0x248] sm:$0xff]
    %v5289 = vld [vmem:[#allocation11 + $0x250] sm:$0xff]
    %v5290 = vld [vmem:[#allocation11 + $0x258] sm:$0xff]
    %v5291 = vld [vmem:[#allocation11 + $0x260] sm:$0xff]
    %v5292 = vld [vmem:[#allocation11 + $0x268] sm:$0xff]
    %v5293 = vld [vmem:[#allocation11 + $0x270] sm:$0xff]
    %v5294 = vld [vmem:[#allocation11 + $0x278] sm:$0xff]
    %v5295 = vld [vmem:[#allocation11 + $0x280] sm:$0xff]
    %v5296 = vld [vmem:[#allocation11 + $0x288] sm:$0xff]
    %v5297 = vld [vmem:[#allocation11 + $0x290] sm:$0xff]
    %v5298 = vld [vmem:[#allocation11 + $0x298] sm:$0xff]
    %v5299 = vld [vmem:[#allocation11 + $0x2a0] sm:$0xff]
    %v5300 = vld [vmem:[#allocation11 + $0x2a8] sm:$0xff]
    %v5301 = vld [vmem:[#allocation11 + $0x2b0] sm:$0xff]
    %v5302 = vld [vmem:[#allocation11 + $0x2b8] sm:$0xff]
    %v5303 = vld [vmem:[#allocation11 + $0x2c0] sm:$0xff]
    %v5304 = vld [vmem:[#allocation11 + $0x2c8] sm:$0xff]
    %v5305 = vld [vmem:[#allocation11 + $0x2d0] sm:$0xff]
    %v5306 = vld [vmem:[#allocation11 + $0x2d8] sm:$0xff]
    %v5307 = vld [vmem:[#allocation11 + $0x2e0] sm:$0xff]
    %v5308 = vld [vmem:[#allocation11 + $0x2e8] sm:$0xff]
    %v5309 = vld [vmem:[#allocation11 + $0x2f0] sm:$0xff]
    %v5310 = vld [vmem:[#allocation11 + $0x2f8] sm:$0xff]
    %v5311 = vld [vmem:[#allocation11 + $0x300] sm:$0xff]
    %v5312 = vld [vmem:[#allocation11 + $0x308] sm:$0xff]
    %v5313 = vld [vmem:[#allocation11 + $0x310] sm:$0xff]
    %v5314 = vld [vmem:[#allocation11 + $0x318] sm:$0xff]
    %v5315 = vld [vmem:[#allocation11 + $0x320] sm:$0xff]
    %v5316 = vld [vmem:[#allocation11 + $0x328] sm:$0xff]
    %v5317 = vld [vmem:[#allocation11 + $0x330] sm:$0xff]
    %v5318 = vld [vmem:[#allocation11 + $0x338] sm:$0xff]
    %v5319 = vld [vmem:[#allocation11 + $0x340] sm:$0xff]
    %v5320 = vld [vmem:[#allocation11 + $0x348] sm:$0xff]
    %v5321 = vld [vmem:[#allocation11 + $0x350] sm:$0xff]
    %v5322 = vld [vmem:[#allocation11 + $0x358] sm:$0xff]
    %v5323 = vld [vmem:[#allocation11 + $0x360] sm:$0xff]
    %v5324 = vld [vmem:[#allocation11 + $0x368] sm:$0xff]
    %v5325 = vld [vmem:[#allocation11 + $0x370] sm:$0xff]
    %v5326 = vld [vmem:[#allocation11 + $0x378] sm:$0xff]
    %v5327 = vld [vmem:[#allocation11 + $0x380] sm:$0xff]
    %v5328 = vld [vmem:[#allocation11 + $0x388] sm:$0xff]
    %v5329 = vld [vmem:[#allocation11 + $0x390] sm:$0xff]
    %v5330 = vld [vmem:[#allocation11 + $0x398] sm:$0xff]
    %v5331 = vld [vmem:[#allocation11 + $0x3a0] sm:$0xff]
    %v5332 = vld [vmem:[#allocation11 + $0x3a8] sm:$0xff]
    %v5333 = vld [vmem:[#allocation11 + $0x3b0] sm:$0xff]
    %v5334 = vld [vmem:[#allocation11 + $0x3b8] sm:$0xff]
    %v5335 = vld [vmem:[#allocation11 + $0x3c0] sm:$0xff]
    %v5336 = vld [vmem:[#allocation11 + $0x3c8] sm:$0xff]
    %v5337 = vld [vmem:[#allocation11 + $0x3d0] sm:$0xff]
    %v5338 = vld [vmem:[#allocation11 + $0x3d8] sm:$0xff]
    %v5339 = vld [vmem:[#allocation11 + $0x3e0] sm:$0xff]
    %v5340 = vld [vmem:[#allocation11 + $0x3e8] sm:$0xff]
    %v5341 = vld [vmem:[#allocation11 + $0x3f0] sm:$0xff]
    %v5342 = vld [vmem:[#allocation11 + $0x3f8] sm:$0xff]
    %v5343 = vld [vmem:[#allocation11 + $0x400] sm:$0xff]
    %v5344 = vld [vmem:[#allocation11 + $0x408] sm:$0xff]
    %v5345 = vld [vmem:[#allocation11 + $0x410] sm:$0xff]
    %v5346 = vld [vmem:[#allocation11 + $0x418] sm:$0xff]
    %v5347 = vld [vmem:[#allocation11 + $0x420] sm:$0xff]
    %v5348 = vld [vmem:[#allocation11 + $0x428] sm:$0xff]
    %v5349 = vld [vmem:[#allocation11 + $0x430] sm:$0xff]
    %v5350 = vld [vmem:[#allocation11 + $0x438] sm:$0xff]
    %v5351 = vld [vmem:[#allocation11 + $0x440] sm:$0xff]
    %v5352 = vld [vmem:[#allocation11 + $0x448] sm:$0xff]
    %v5353 = vld [vmem:[#allocation11 + $0x450] sm:$0xff]
    %v5354 = vld [vmem:[#allocation11 + $0x458] sm:$0xff]
    %v5355 = vld [vmem:[#allocation11 + $0x460] sm:$0xff]
    %v5356 = vld [vmem:[#allocation11 + $0x468] sm:$0xff]
    %v5357 = vld [vmem:[#allocation11 + $0x470] sm:$0xff]
    %v5358 = vld [vmem:[#allocation11 + $0x478] sm:$0xff]
    %v5359 = vld [vmem:[#allocation11 + $0x480] sm:$0xff]
    %v5360 = vld [vmem:[#allocation11 + $0x488] sm:$0xff]
    %v5361 = vld [vmem:[#allocation11 + $0x490] sm:$0xff]
    %v5362 = vld [vmem:[#allocation11 + $0x498] sm:$0xff]
    %v5363 = vld [vmem:[#allocation11 + $0x4a0] sm:$0xff]
    %v5364 = vld [vmem:[#allocation11 + $0x4a8] sm:$0xff]
    %v5365 = vld [vmem:[#allocation11 + $0x4b0] sm:$0xff]
    %v5366 = vld [vmem:[#allocation11 + $0x4b8] sm:$0xff]
    %v5367 = vld [vmem:[#allocation11 + $0x4c0] sm:$0xff]
    %v5368 = vld [vmem:[#allocation11 + $0x4c8] sm:$0xff]
    %v5369 = vld [vmem:[#allocation11 + $0x4d0] sm:$0xff]
    %v5370 = vld [vmem:[#allocation11 + $0x4d8] sm:$0xff]
    %v5371 = vld [vmem:[#allocation11 + $0x4e0] sm:$0xff]
    %v5372 = vld [vmem:[#allocation11 + $0x4e8] sm:$0xff]
    %v5373 = vld [vmem:[#allocation11 + $0x4f0] sm:$0xff]
    %v5374 = vld [vmem:[#allocation11 + $0x4f8] sm:$0xff]
    %v5375 = vld [vmem:[#allocation11 + $0x500] sm:$0xff]
    %v5376 = vld [vmem:[#allocation11 + $0x508] sm:$0xff]
    %v5377 = vld [vmem:[#allocation11 + $0x510] sm:$0xff]
    %v5378 = vld [vmem:[#allocation11 + $0x518] sm:$0xff]
    %v5379 = vld [vmem:[#allocation11 + $0x520] sm:$0xff]
    %v5380 = vld [vmem:[#allocation11 + $0x528] sm:$0xff]
    %v5381 = vld [vmem:[#allocation11 + $0x530] sm:$0xff]
    %v5382 = vld [vmem:[#allocation11 + $0x538] sm:$0xff]
    %v5383 = vld [vmem:[#allocation11 + $0x540] sm:$0xff]
    %v5384 = vld [vmem:[#allocation11 + $0x548] sm:$0xff]
    %v5385 = vld [vmem:[#allocation11 + $0x550] sm:$0xff]
    %v5386 = vld [vmem:[#allocation11 + $0x558] sm:$0xff]
    %v5387 = vld [vmem:[#allocation11 + $0x560] sm:$0xff]
    %v5388 = vld [vmem:[#allocation11 + $0x568] sm:$0xff]
    %v5389 = vld [vmem:[#allocation11 + $0x570] sm:$0xff]
    %v5390 = vld [vmem:[#allocation11 + $0x578] sm:$0xff]
    %v5391 = vld [vmem:[#allocation11 + $0x580] sm:$0xff]
    %v5392 = vld [vmem:[#allocation11 + $0x588] sm:$0xff]
    %v5393 = vld [vmem:[#allocation11 + $0x590] sm:$0xff]
    %v5394 = vld [vmem:[#allocation11 + $0x598] sm:$0xff]
    %v5395 = vld [vmem:[#allocation11 + $0x5a0] sm:$0xff]
    %v5396 = vld [vmem:[#allocation11 + $0x5a8] sm:$0xff]
    %v5397 = vld [vmem:[#allocation11 + $0x5b0] sm:$0xff]
    %v5398 = vld [vmem:[#allocation11 + $0x5b8] sm:$0xff]
    %v5399 = vld [vmem:[#allocation11 + $0x5c0] sm:$0xff]
    %v5400 = vld [vmem:[#allocation11 + $0x5c8] sm:$0xff]
    %v5401 = vld [vmem:[#allocation11 + $0x5d0] sm:$0xff]
    %v5402 = vld [vmem:[#allocation11 + $0x5d8] sm:$0xff]
    %v5403 = vld [vmem:[#allocation11 + $0x5e0] sm:$0xff]
    %v5404 = vld [vmem:[#allocation11 + $0x5e8] sm:$0xff]
    %v5405 = vld [vmem:[#allocation11 + $0x5f0] sm:$0xff]
    %v5406 = vld [vmem:[#allocation11 + $0x5f8] sm:$0xff]
    %v5407 = vld [vmem:[#allocation11 + $0x600] sm:$0xff]
    %v5408 = vld [vmem:[#allocation11 + $0x608] sm:$0xff]
    %v5409 = vld [vmem:[#allocation11 + $0x610] sm:$0xff]
    %v5410 = vld [vmem:[#allocation11 + $0x618] sm:$0xff]
    %v5411 = vld [vmem:[#allocation11 + $0x620] sm:$0xff]
    %v5412 = vld [vmem:[#allocation11 + $0x628] sm:$0xff]
    %v5413 = vld [vmem:[#allocation11 + $0x630] sm:$0xff]
    %v5414 = vld [vmem:[#allocation11 + $0x638] sm:$0xff]
    %v5415 = vld [vmem:[#allocation11 + $0x640] sm:$0xff]
    %v5416 = vld [vmem:[#allocation11 + $0x648] sm:$0xff]
    %v5417 = vld [vmem:[#allocation11 + $0x650] sm:$0xff]
    %v5418 = vld [vmem:[#allocation11 + $0x658] sm:$0xff]
    %v5419 = vld [vmem:[#allocation11 + $0x660] sm:$0xff]
    %v5420 = vld [vmem:[#allocation11 + $0x668] sm:$0xff]
    %v5421 = vld [vmem:[#allocation11 + $0x670] sm:$0xff]
    %v5422 = vld [vmem:[#allocation11 + $0x678] sm:$0xff]
    %v5423 = vld [vmem:[#allocation11 + $0x680] sm:$0xff]
    %v5424 = vld [vmem:[#allocation11 + $0x688] sm:$0xff]
    %v5425 = vld [vmem:[#allocation11 + $0x690] sm:$0xff]
    %v5426 = vld [vmem:[#allocation11 + $0x698] sm:$0xff]
    %v5427 = vld [vmem:[#allocation11 + $0x6a0] sm:$0xff]
    %v5428 = vld [vmem:[#allocation11 + $0x6a8] sm:$0xff]
    %v5429 = vld [vmem:[#allocation11 + $0x6b0] sm:$0xff]
    %v5430 = vld [vmem:[#allocation11 + $0x6b8] sm:$0xff]
    %v5431 = vld [vmem:[#allocation11 + $0x6c0] sm:$0xff]
    %v5432 = vld [vmem:[#allocation11 + $0x6c8] sm:$0xff]
    %v5433 = vld [vmem:[#allocation11 + $0x6d0] sm:$0xff]
    %v5434 = vld [vmem:[#allocation11 + $0x6d8] sm:$0xff]
    %v5435 = vld [vmem:[#allocation11 + $0x6e0] sm:$0xff]
    %v5436 = vld [vmem:[#allocation11 + $0x6e8] sm:$0xff]
    %v5437 = vld [vmem:[#allocation11 + $0x6f0] sm:$0xff]
    %v5438 = vld [vmem:[#allocation11 + $0x6f8] sm:$0xff]
    %v5439 = vld [vmem:[#allocation11 + $0x700] sm:$0xff]
    %v5440 = vld [vmem:[#allocation11 + $0x708] sm:$0xff]
    %v5441 = vld [vmem:[#allocation11 + $0x710] sm:$0xff]
    %v5442 = vld [vmem:[#allocation11 + $0x718] sm:$0xff]
    %v5443 = vld [vmem:[#allocation11 + $0x720] sm:$0xff]
    %v5444 = vld [vmem:[#allocation11 + $0x728] sm:$0xff]
    %v5445 = vld [vmem:[#allocation11 + $0x730] sm:$0xff]
    %v5446 = vld [vmem:[#allocation11 + $0x738] sm:$0xff]
    %v5447 = vld [vmem:[#allocation11 + $0x740] sm:$0xff]
    %v5448 = vld [vmem:[#allocation11 + $0x748] sm:$0xff]
    %v5449 = vld [vmem:[#allocation11 + $0x750] sm:$0xff]
    %v5450 = vld [vmem:[#allocation11 + $0x758] sm:$0xff]
    %v5451 = vld [vmem:[#allocation11 + $0x760] sm:$0xff]
    %v5452 = vld [vmem:[#allocation11 + $0x768] sm:$0xff]
    %v5453 = vld [vmem:[#allocation11 + $0x770] sm:$0xff]
    %v5454 = vld [vmem:[#allocation11 + $0x778] sm:$0xff]
    %v5455 = vld [vmem:[#allocation11 + $0x780] sm:$0xff]
    %v5456 = vld [vmem:[#allocation11 + $0x788] sm:$0xff]
    %v5457 = vld [vmem:[#allocation11 + $0x790] sm:$0xff]
    %v5458 = vld [vmem:[#allocation11 + $0x798] sm:$0xff]
    %v5459 = vld [vmem:[#allocation11 + $0x7a0] sm:$0xff]
    %v5460 = vld [vmem:[#allocation11 + $0x7a8] sm:$0xff]
    %v5461 = vld [vmem:[#allocation11 + $0x7b0] sm:$0xff]
    %v5462 = vld [vmem:[#allocation11 + $0x7b8] sm:$0xff]
    %v5463 = vld [vmem:[#allocation11 + $0x7c0] sm:$0xff]
    %v5464 = vld [vmem:[#allocation11 + $0x7c8] sm:$0xff]
    %v5465 = vld [vmem:[#allocation11 + $0x7d0] sm:$0xff]
    %v5466 = vld [vmem:[#allocation11 + $0x7d8] sm:$0xff]
    %v5467 = vld [vmem:[#allocation11 + $0x7e0] sm:$0xff]
    %v5468 = vld [vmem:[#allocation11 + $0x7e8] sm:$0xff]
    %v5469 = vld [vmem:[#allocation11 + $0x7f0] sm:$0xff]
    %v5470 = vld [vmem:[#allocation11 + $0x7f8] sm:$0xff]
    %v5471 = vld [vmem:[#allocation11 + $0x800] sm:$0xff]
    %v5472 = vld [vmem:[#allocation11 + $0x808] sm:$0xff]
    %v5473 = vld [vmem:[#allocation11 + $0x810] sm:$0xff]
    %v5474 = vld [vmem:[#allocation11 + $0x818] sm:$0xff]
    %v5475 = vld [vmem:[#allocation11 + $0x820] sm:$0xff]
    %v5476 = vld [vmem:[#allocation11 + $0x828] sm:$0xff]
    %v5477 = vld [vmem:[#allocation11 + $0x830] sm:$0xff]
    %v5478 = vld [vmem:[#allocation11 + $0x838] sm:$0xff]
    %v5479 = vld [vmem:[#allocation11 + $0x840] sm:$0xff]
    %v5480 = vld [vmem:[#allocation11 + $0x848] sm:$0xff]
    %v5481 = vld [vmem:[#allocation11 + $0x850] sm:$0xff]
    %v5482 = vld [vmem:[#allocation11 + $0x858] sm:$0xff]
    %v5483 = vld [vmem:[#allocation11 + $0x860] sm:$0xff]
    %v5484 = vld [vmem:[#allocation11 + $0x868] sm:$0xff]
    %v5485 = vld [vmem:[#allocation11 + $0x870] sm:$0xff]
    %v5486 = vld [vmem:[#allocation11 + $0x878] sm:$0xff]
    %v5487 = vld [vmem:[#allocation11 + $0x880] sm:$0xff]
    %v5488 = vld [vmem:[#allocation11 + $0x888] sm:$0xff]
    %v5489 = vld [vmem:[#allocation11 + $0x890] sm:$0xff]
    %v5490 = vld [vmem:[#allocation11 + $0x898] sm:$0xff]
    %v5491 = vld [vmem:[#allocation11 + $0x8a0] sm:$0xff]
    %v5492 = vld [vmem:[#allocation11 + $0x8a8] sm:$0xff]
    %v5493 = vld [vmem:[#allocation11 + $0x8b0] sm:$0xff]
    %v5494 = vld [vmem:[#allocation11 + $0x8b8] sm:$0xff]
    %v5495 = vld [vmem:[#allocation11 + $0x8c0] sm:$0xff]
    %v5496 = vld [vmem:[#allocation11 + $0x8c8] sm:$0xff]
    %v5497 = vld [vmem:[#allocation11 + $0x8d0] sm:$0xff]
    %v5498 = vld [vmem:[#allocation11 + $0x8d8] sm:$0xff]
    %v5499 = vld [vmem:[#allocation11 + $0x8e0] sm:$0xff]
    %v5500 = vld [vmem:[#allocation11 + $0x8e8] sm:$0xff]
    %v5501 = vld [vmem:[#allocation11 + $0x8f0] sm:$0xff]
    %v5502 = vld [vmem:[#allocation11 + $0x8f8] sm:$0xff]
    %v5503 = vld [vmem:[#allocation11 + $0x900] sm:$0xff]
    %v5504 = vld [vmem:[#allocation11 + $0x908] sm:$0xff]
    %v5505 = vld [vmem:[#allocation11 + $0x910] sm:$0xff]
    %v5506 = vld [vmem:[#allocation11 + $0x918] sm:$0xff]
    %v5507 = vld [vmem:[#allocation11 + $0x920] sm:$0xff]
    %v5508 = vld [vmem:[#allocation11 + $0x928] sm:$0xff]
    %v5509 = vld [vmem:[#allocation11 + $0x930] sm:$0xff]
    %v5510 = vld [vmem:[#allocation11 + $0x938] sm:$0xff]
    %v5511 = vld [vmem:[#allocation11 + $0x940] sm:$0xff]
    %v5512 = vld [vmem:[#allocation11 + $0x948] sm:$0xff]
    %v5513 = vld [vmem:[#allocation11 + $0x950] sm:$0xff]
    %v5514 = vld [vmem:[#allocation11 + $0x958] sm:$0xff]
    %v5515 = vld [vmem:[#allocation11 + $0x960] sm:$0xff]
    %v5516 = vld [vmem:[#allocation11 + $0x968] sm:$0xff]
    %v5517 = vld [vmem:[#allocation11 + $0x970] sm:$0xff]
    %v5518 = vld [vmem:[#allocation11 + $0x978] sm:$0xff]
    %v5519 = vld [vmem:[#allocation11 + $0x980] sm:$0xff]
    %v5520 = vld [vmem:[#allocation11 + $0x988] sm:$0xff]
    %v5521 = vld [vmem:[#allocation11 + $0x990] sm:$0xff]
    %v5522 = vld [vmem:[#allocation11 + $0x998] sm:$0xff]
    %v5523 = vld [vmem:[#allocation11 + $0x9a0] sm:$0xff]
    %v5524 = vld [vmem:[#allocation11 + $0x9a8] sm:$0xff]
    %v5525 = vld [vmem:[#allocation11 + $0x9b0] sm:$0xff]
    %v5526 = vld [vmem:[#allocation11 + $0x9b8] sm:$0xff]
    %v5527 = vld [vmem:[#allocation11 + $0x9c0] sm:$0xff]
    %v5528 = vld [vmem:[#allocation11 + $0x9c8] sm:$0xff]
    %v5529 = vld [vmem:[#allocation11 + $0x9d0] sm:$0xff]
    %v5530 = vld [vmem:[#allocation11 + $0x9d8] sm:$0xff]
    %v5531 = vld [vmem:[#allocation11 + $0x9e0] sm:$0xff]
    %v5532 = vld [vmem:[#allocation11 + $0x9e8] sm:$0xff]
    %v5533 = vld [vmem:[#allocation11 + $0x9f0] sm:$0xff]
    %v5534 = vld [vmem:[#allocation11 + $0x9f8] sm:$0xff]
    %v5535 = vld [vmem:[#allocation11 + $0xa00] sm:$0xff]
    %v5536 = vld [vmem:[#allocation11 + $0xa08] sm:$0xff]
    %v5537 = vld [vmem:[#allocation11 + $0xa10] sm:$0xff]
    %v5538 = vld [vmem:[#allocation11 + $0xa18] sm:$0xff]
    %v5539 = vld [vmem:[#allocation11 + $0xa20] sm:$0xff]
    %v5540 = vld [vmem:[#allocation11 + $0xa28] sm:$0xff]
    %v5541 = vld [vmem:[#allocation11 + $0xa30] sm:$0xff]
    %v5542 = vld [vmem:[#allocation11 + $0xa38] sm:$0xff]
    %v5543 = vld [vmem:[#allocation11 + $0xa40] sm:$0xff]
    %v5544 = vld [vmem:[#allocation11 + $0xa48] sm:$0xff]
    %v5545 = vld [vmem:[#allocation11 + $0xa50] sm:$0xff]
    %v5546 = vld [vmem:[#allocation11 + $0xa58] sm:$0xff]
    %v5547 = vld [vmem:[#allocation11 + $0xa60] sm:$0xff]
    %v5548 = vld [vmem:[#allocation11 + $0xa68] sm:$0xff]
    %v5549 = vld [vmem:[#allocation11 + $0xa70] sm:$0xff]
    %v5550 = vld [vmem:[#allocation11 + $0xa78] sm:$0xff]
    %v5551 = vld [vmem:[#allocation11 + $0xa80] sm:$0xff]
    %v5552 = vld [vmem:[#allocation11 + $0xa88] sm:$0xff]
    %v5553 = vld [vmem:[#allocation11 + $0xa90] sm:$0xff]
    %v5554 = vld [vmem:[#allocation11 + $0xa98] sm:$0xff]
    %v5555 = vld [vmem:[#allocation11 + $0xaa0] sm:$0xff]
    %v5556 = vld [vmem:[#allocation11 + $0xaa8] sm:$0xff]
    %v5557 = vld [vmem:[#allocation11 + $0xab0] sm:$0xff]
    %v5558 = vld [vmem:[#allocation11 + $0xab8] sm:$0xff]
    %v5559 = vld [vmem:[#allocation11 + $0xac0] sm:$0xff]
    %v5560 = vld [vmem:[#allocation11 + $0xac8] sm:$0xff]
    %v5561 = vld [vmem:[#allocation11 + $0xad0] sm:$0xff]
    %v5562 = vld [vmem:[#allocation11 + $0xad8] sm:$0xff]
    %v5563 = vld [vmem:[#allocation11 + $0xae0] sm:$0xff]
    %v5564 = vld [vmem:[#allocation11 + $0xae8] sm:$0xff]
    %v5565 = vld [vmem:[#allocation11 + $0xaf0] sm:$0xff]
    %v5566 = vld [vmem:[#allocation11 + $0xaf8] sm:$0xff]
    %v5567 = vld [vmem:[#allocation11 + $0xb00] sm:$0xff]
    %v5568 = vld [vmem:[#allocation11 + $0xb08] sm:$0xff]
    %v5569 = vld [vmem:[#allocation11 + $0xb10] sm:$0xff]
    %v5570 = vld [vmem:[#allocation11 + $0xb18] sm:$0xff]
    %v5571 = vld [vmem:[#allocation11 + $0xb20] sm:$0xff]
    %v5572 = vld [vmem:[#allocation11 + $0xb28] sm:$0xff]
    %v5573 = vld [vmem:[#allocation11 + $0xb30] sm:$0xff]
    %v5574 = vld [vmem:[#allocation11 + $0xb38] sm:$0xff]
    %v5575 = vld [vmem:[#allocation11 + $0xb40] sm:$0xff]
    %v5576 = vld [vmem:[#allocation11 + $0xb48] sm:$0xff]
    %v5577 = vld [vmem:[#allocation11 + $0xb50] sm:$0xff]
    %v5578 = vld [vmem:[#allocation11 + $0xb58] sm:$0xff]
    %v5579 = vld [vmem:[#allocation11 + $0xb60] sm:$0xff]
    %v5580 = vld [vmem:[#allocation11 + $0xb68] sm:$0xff]
    %v5581 = vld [vmem:[#allocation11 + $0xb70] sm:$0xff]
    %v5582 = vld [vmem:[#allocation11 + $0xb78] sm:$0xff]
    %v5583 = vld [vmem:[#allocation11 + $0xb80] sm:$0xff]
    %v5584 = vld [vmem:[#allocation11 + $0xb88] sm:$0xff]
    %v5585 = vld [vmem:[#allocation11 + $0xb90] sm:$0xff]
    %v5586 = vld [vmem:[#allocation11 + $0xb98] sm:$0xff]
    %v5587 = vld [vmem:[#allocation11 + $0xba0] sm:$0xff]
    %v5588 = vld [vmem:[#allocation11 + $0xba8] sm:$0xff]
    %v5589 = vld [vmem:[#allocation11 + $0xbb0] sm:$0xff]
    %v5590 = vld [vmem:[#allocation11 + $0xbb8] sm:$0xff]
    %v5591 = vld [vmem:[#allocation11 + $0xbc0] sm:$0xff]
    %v5592 = vld [vmem:[#allocation11 + $0xbc8] sm:$0xff]
    %v5593 = vld [vmem:[#allocation11 + $0xbd0] sm:$0xff]
    %v5594 = vld [vmem:[#allocation11 + $0xbd8] sm:$0xff]
    %v5595 = vld [vmem:[#allocation11 + $0xbe0] sm:$0xff]
    %v5596 = vld [vmem:[#allocation11 + $0xbe8] sm:$0xff]
    %v5597 = vld [vmem:[#allocation11 + $0xbf0] sm:$0xff]
    %v5598 = vld [vmem:[#allocation11 + $0xbf8] sm:$0xff]
    %v5599 = vld [vmem:[#allocation11 + $0xc00] sm:$0xff]
    %v5600 = vld [vmem:[#allocation11 + $0xc08] sm:$0xff]
    %v5601 = vld [vmem:[#allocation11 + $0xc10] sm:$0xff]
    %v5602 = vld [vmem:[#allocation11 + $0xc18] sm:$0xff]
    %v5603 = vld [vmem:[#allocation11 + $0xc20] sm:$0xff]
    %v5604 = vld [vmem:[#allocation11 + $0xc28] sm:$0xff]
    %v5605 = vld [vmem:[#allocation11 + $0xc30] sm:$0xff]
    %v5606 = vld [vmem:[#allocation11 + $0xc38] sm:$0xff]
    %v5607 = vld [vmem:[#allocation11 + $0xc40] sm:$0xff]
    %v5608 = vld [vmem:[#allocation11 + $0xc48] sm:$0xff]
    %v5609 = vld [vmem:[#allocation11 + $0xc50] sm:$0xff]
    %v5610 = vld [vmem:[#allocation11 + $0xc58] sm:$0xff]
    %v5611 = vld [vmem:[#allocation11 + $0xc60] sm:$0xff]
    %v5612 = vld [vmem:[#allocation11 + $0xc68] sm:$0xff]
    %v5613 = vld [vmem:[#allocation11 + $0xc70] sm:$0xff]
    %v5614 = vld [vmem:[#allocation11 + $0xc78] sm:$0xff]
    %v5615 = vld [vmem:[#allocation11 + $0xc80] sm:$0xff]
    %v5616 = vld [vmem:[#allocation11 + $0xc88] sm:$0xff]
    %v5617 = vld [vmem:[#allocation11 + $0xc90] sm:$0xff]
    %v5618 = vld [vmem:[#allocation11 + $0xc98] sm:$0xff]
    %v5619 = vld [vmem:[#allocation11 + $0xca0] sm:$0xff]
    %v5620 = vld [vmem:[#allocation11 + $0xca8] sm:$0xff]
    %v5621 = vld [vmem:[#allocation11 + $0xcb0] sm:$0xff]
    %v5622 = vld [vmem:[#allocation11 + $0xcb8] sm:$0xff]
    %v5623 = vld [vmem:[#allocation11 + $0xcc0] sm:$0xff]
    %v5624 = vld [vmem:[#allocation11 + $0xcc8] sm:$0xff]
    %v5625 = vld [vmem:[#allocation11 + $0xcd0] sm:$0xff]
    %v5626 = vld [vmem:[#allocation11 + $0xcd8] sm:$0xff]
    %v5627 = vld [vmem:[#allocation11 + $0xce0] sm:$0xff]
    %v5628 = vld [vmem:[#allocation11 + $0xce8] sm:$0xff]
    %v5629 = vld [vmem:[#allocation11 + $0xcf0] sm:$0xff]
    %v5630 = vld [vmem:[#allocation11 + $0xcf8] sm:$0xff]
    %v5631 = vld [vmem:[#allocation11 + $0xd00] sm:$0xff]
    %v5632 = vld [vmem:[#allocation11 + $0xd08] sm:$0xff]
    %v5633 = vld [vmem:[#allocation11 + $0xd10] sm:$0xff]
    %v5634 = vld [vmem:[#allocation11 + $0xd18] sm:$0xff]
    %v5635 = vld [vmem:[#allocation11 + $0xd20] sm:$0xff]
    %v5636 = vld [vmem:[#allocation11 + $0xd28] sm:$0xff]
    %v5637 = vld [vmem:[#allocation11 + $0xd30] sm:$0xff]
    %v5638 = vld [vmem:[#allocation11 + $0xd38] sm:$0xff]
    %v5639 = vld [vmem:[#allocation11 + $0xd40] sm:$0xff]
    %v5640 = vld [vmem:[#allocation11 + $0xd48] sm:$0xff]
    %v5641 = vld [vmem:[#allocation11 + $0xd50] sm:$0xff]
    %v5642 = vld [vmem:[#allocation11 + $0xd58] sm:$0xff]
    %v5643 = vld [vmem:[#allocation11 + $0xd60] sm:$0xff]
    %v5644 = vld [vmem:[#allocation11 + $0xd68] sm:$0xff]
    %v5645 = vld [vmem:[#allocation11 + $0xd70] sm:$0xff]
    %v5646 = vld [vmem:[#allocation11 + $0xd78] sm:$0xff]
    %v5647 = vld [vmem:[#allocation11 + $0xd80] sm:$0xff]
    %v5648 = vld [vmem:[#allocation11 + $0xd88] sm:$0xff]
    %v5649 = vld [vmem:[#allocation11 + $0xd90] sm:$0xff]
    %v5650 = vld [vmem:[#allocation11 + $0xd98] sm:$0xff]
    %v5651 = vld [vmem:[#allocation11 + $0xda0] sm:$0xff]
    %v5652 = vld [vmem:[#allocation11 + $0xda8] sm:$0xff]
    %v5653 = vld [vmem:[#allocation11 + $0xdb0] sm:$0xff]
    %v5654 = vld [vmem:[#allocation11 + $0xdb8] sm:$0xff]
    %v5655 = vld [vmem:[#allocation11 + $0xdc0] sm:$0xff]
    %v5656 = vld [vmem:[#allocation11 + $0xdc8] sm:$0xff]
    %v5657 = vld [vmem:[#allocation11 + $0xdd0] sm:$0xff]
    %v5658 = vld [vmem:[#allocation11 + $0xdd8] sm:$0xff]
    %v5659 = vld [vmem:[#allocation11 + $0xde0] sm:$0xff]
    %v5660 = vld [vmem:[#allocation11 + $0xde8] sm:$0xff]
    %v5661 = vld [vmem:[#allocation11 + $0xdf0] sm:$0xff]
    %v5662 = vld [vmem:[#allocation11 + $0xdf8] sm:$0xff]
    %v5663 = vld [vmem:[#allocation11 + $0xe00] sm:$0xff]
    %v5664 = vld [vmem:[#allocation11 + $0xe08] sm:$0xff]
    %v5665 = vld [vmem:[#allocation11 + $0xe10] sm:$0xff]
    %v5666 = vld [vmem:[#allocation11 + $0xe18] sm:$0xff]
    %v5667 = vld [vmem:[#allocation11 + $0xe20] sm:$0xff]
    %v5668 = vld [vmem:[#allocation11 + $0xe28] sm:$0xff]
    %v5669 = vld [vmem:[#allocation11 + $0xe30] sm:$0xff]
    %v5670 = vld [vmem:[#allocation11 + $0xe38] sm:$0xff]
    %v5671 = vld [vmem:[#allocation11 + $0xe40] sm:$0xff]
    %v5672 = vld [vmem:[#allocation11 + $0xe48] sm:$0xff]
    %v5673 = vld [vmem:[#allocation11 + $0xe50] sm:$0xff]
    %v5674 = vld [vmem:[#allocation11 + $0xe58] sm:$0xff]
    %v5675 = vld [vmem:[#allocation11 + $0xe60] sm:$0xff]
    %v5676 = vld [vmem:[#allocation11 + $0xe68] sm:$0xff]
    %v5677 = vld [vmem:[#allocation11 + $0xe70] sm:$0xff]
    %v5678 = vld [vmem:[#allocation11 + $0xe78] sm:$0xff]
    %v5679 = vld [vmem:[#allocation11 + $0xe80] sm:$0xff]
    %v5680 = vld [vmem:[#allocation11 + $0xe88] sm:$0xff]
    %v5681 = vld [vmem:[#allocation11 + $0xe90] sm:$0xff]
    %v5682 = vld [vmem:[#allocation11 + $0xe98] sm:$0xff]
    %v5683 = vld [vmem:[#allocation11 + $0xea0] sm:$0xff]
    %v5684 = vld [vmem:[#allocation11 + $0xea8] sm:$0xff]
    %v5685 = vld [vmem:[#allocation11 + $0xeb0] sm:$0xff]
    %v5686 = vld [vmem:[#allocation11 + $0xeb8] sm:$0xff]
    %v5687 = vld [vmem:[#allocation11 + $0xec0] sm:$0xff]
    %v5688 = vld [vmem:[#allocation11 + $0xec8] sm:$0xff]
    %v5689 = vld [vmem:[#allocation11 + $0xed0] sm:$0xff]
    %v5690 = vld [vmem:[#allocation11 + $0xed8] sm:$0xff]
    %v5691 = vld [vmem:[#allocation11 + $0xee0] sm:$0xff]
    %v5692 = vld [vmem:[#allocation11 + $0xee8] sm:$0xff]
    %v5693 = vld [vmem:[#allocation11 + $0xef0] sm:$0xff]
    %v5694 = vld [vmem:[#allocation11 + $0xef8] sm:$0xff]
    %v5695 = vld [vmem:[#allocation11 + $0xf00] sm:$0xff]
    %v5696 = vld [vmem:[#allocation11 + $0xf08] sm:$0xff]
    %v5697 = vld [vmem:[#allocation11 + $0xf10] sm:$0xff]
    %v5698 = vld [vmem:[#allocation11 + $0xf18] sm:$0xff]
    %v5699 = vld [vmem:[#allocation11 + $0xf20] sm:$0xff]
    %v5700 = vld [vmem:[#allocation11 + $0xf28] sm:$0xff]
    %v5701 = vld [vmem:[#allocation11 + $0xf30] sm:$0xff]
    %v5702 = vld [vmem:[#allocation11 + $0xf38] sm:$0xff]
    %v5703 = vld [vmem:[#allocation11 + $0xf40] sm:$0xff]
    %v5704 = vld [vmem:[#allocation11 + $0xf48] sm:$0xff]
    %v5705 = vld [vmem:[#allocation11 + $0xf50] sm:$0xff]
    %v5706 = vld [vmem:[#allocation11 + $0xf58] sm:$0xff]
    %v5707 = vld [vmem:[#allocation11 + $0xf60] sm:$0xff]
    %v5708 = vld [vmem:[#allocation11 + $0xf68] sm:$0xff]
    %v5709 = vld [vmem:[#allocation11 + $0xf70] sm:$0xff]
    %v5710 = vld [vmem:[#allocation11 + $0xf78] sm:$0xff]
    %v5711 = vld [vmem:[#allocation11 + $0xf80] sm:$0xff]
    %v5712 = vld [vmem:[#allocation11 + $0xf88] sm:$0xff]
    %v5713 = vld [vmem:[#allocation11 + $0xf90] sm:$0xff]
    %v5714 = vld [vmem:[#allocation11 + $0xf98] sm:$0xff]
    %v5715 = vld [vmem:[#allocation11 + $0xfa0] sm:$0xff]
    %v5716 = vld [vmem:[#allocation11 + $0xfa8] sm:$0xff]
    %v5717 = vld [vmem:[#allocation11 + $0xfb0] sm:$0xff]
    %v5718 = vld [vmem:[#allocation11 + $0xfb8] sm:$0xff]
    %v5719 = vld [vmem:[#allocation11 + $0xfc0] sm:$0xff]
    %v5720 = vld [vmem:[#allocation11 + $0xfc8] sm:$0xff]
    %v5721 = vld [vmem:[#allocation11 + $0xfd0] sm:$0xff]
    %v5722 = vld [vmem:[#allocation11 + $0xfd8] sm:$0xff]
    %v5723 = vld [vmem:[#allocation11 + $0xfe0] sm:$0xff]
    %v5724 = vld [vmem:[#allocation11 + $0xfe8] sm:$0xff]
    %v5725 = vld [vmem:[#allocation11 + $0xff0] sm:$0xff]
    %v5726 = vld [vmem:[#allocation11 + $0xff8] sm:$0xff]
    %v5727 = vld [vmem:[#allocation13] sm:$0xf]
    %v5729 = vlaneseq
    %v5730 = vshrl.u32 %v5729, 7
    %v5731 = vsub.s32 0, %v5730
    %v5732 = vrot.slane %v5727, %v5731
    %v5733 = vlaneseq
    %v5734 = vshrl.u32 %v5733, 7
    %v5735 = vsub.s32 1, %v5734
    %v5736 = vrot.slane %v5727, %v5735
    %v5737 = vlaneseq
    %v5738 = vshrl.u32 %v5737, 7
    %v5739 = vsub.s32 2, %v5738
    %v5740 = vrot.slane %v5727, %v5739
    %v5741 = vlaneseq
    %v5742 = vshrl.u32 %v5741, 7
    %v5743 = vsub.s32 3, %v5742
    %v5744 = vrot.slane %v5727, %v5743
    %5749 = vmatprep.subr.mxu0 %v5216
    %5750 = vmatpush1.msra.mxu0 %v5215
    %5751 = vmatprep.subr.mxu0 %v5220
    %5752 = vmatpush1.msra.mxu0 %v5219
    %5753 = vmatprep.subr.mxu0 %v5224
    %5754 = vmatpush1.msra.mxu0 %v5223
    %5755 = vmatprep.subr.mxu0 %v5228
    %5756 = vmatpush1.msra.mxu0 %v5227
    %5757 = vmatprep.subr.mxu0 %v5232
    %5758 = vmatpush1.msra.mxu0 %v5231
    %5759 = vmatprep.subr.mxu0 %v5236
    %5760 = vmatpush1.msra.mxu0 %v5235
    %5761 = vmatprep.subr.mxu0 %v5240
    %5762 = vmatpush1.msra.mxu0 %v5239
    %5763 = vmatprep.subr.mxu0 %v5244
    %5764 = vmatpush1.msra.mxu0 %v5243
    %5765 = vmatprep.subr.mxu0 %v5248
    %5766 = vmatpush1.msra.mxu0 %v5247
    %5767 = vmatprep.subr.mxu0 %v5252
    %5768 = vmatpush1.msra.mxu0 %v5251
    %5769 = vmatprep.subr.mxu0 %v5256
    %5770 = vmatpush1.msra.mxu0 %v5255
    %5771 = vmatprep.subr.mxu0 %v5260
    %5772 = vmatpush1.msra.mxu0 %v5259
    %5773 = vmatprep.subr.mxu0 %v5264
    %5774 = vmatpush1.msra.mxu0 %v5263
    %5775 = vmatprep.subr.mxu0 %v5268
    %5776 = vmatpush1.msra.mxu0 %v5267
    %5777 = vmatprep.subr.mxu0 %v5272
    %5778 = vmatpush1.msra.mxu0 %v5271
    %5779 = vmatprep.subr.mxu0 %v5276
    %5780 = vmatpush1.msra.mxu0 %v5275
    %5781 = vmatprep.subr.mxu0 %v5280
    %5782 = vmatpush1.msra.mxu0 %v5279
    %5783 = vmatprep.subr.mxu0 %v5284
    %5784 = vmatpush1.msra.mxu0 %v5283
    %5785 = vmatprep.subr.mxu0 %v5288
    %5786 = vmatpush1.msra.mxu0 %v5287
    %5787 = vmatprep.subr.mxu0 %v5292
    %5788 = vmatpush1.msra.mxu0 %v5291
    %5789 = vmatprep.subr.mxu0 %v5296
    %5790 = vmatpush1.msra.mxu0 %v5295
    %5791 = vmatprep.subr.mxu0 %v5300
    %5792 = vmatpush1.msra.mxu0 %v5299
    %5793 = vmatprep.subr.mxu0 %v5304
    %5794 = vmatpush1.msra.mxu0 %v5303
    %5795 = vmatprep.subr.mxu0 %v5308
    %5796 = vmatpush1.msra.mxu0 %v5307
    %5797 = vmatprep.subr.mxu0 %v5312
    %5798 = vmatpush1.msra.mxu0 %v5311
    %5799 = vmatprep.subr.mxu0 %v5316
    %5800 = vmatpush1.msra.mxu0 %v5315
    %5801 = vmatprep.subr.mxu0 %v5320
    %5802 = vmatpush1.msra.mxu0 %v5319
    %5803 = vmatprep.subr.mxu0 %v5324
    %5804 = vmatpush1.msra.mxu0 %v5323
    %5805 = vmatprep.subr.mxu0 %v5328
    %5806 = vmatpush1.msra.mxu0 %v5327
    %5807 = vmatprep.subr.mxu0 %v5332
    %5808 = vmatpush1.msra.mxu0 %v5331
    %5809 = vmatprep.subr.mxu0 %v5336
    %5810 = vmatpush1.msra.mxu0 %v5335
    %5811 = vmatprep.subr.mxu0 %v5340
    %5812 = vmatpush1.msra.mxu0 %v5339
    %5813 = vmatprep.mubr.f32.mxu0 %v3509
    %5814 = vmatmul.mubr.f32.gmra.mrb[0].mxu0 %v3507
    %v5815 = vpop.f32.mrb[0].mxu0
    %v5816 = vadd.f32 %v5732, %v5815
    %v5817 = vpop.f32.mrb[0].mxu0
    %v5818 = vadd.f32 %v5736, %v5817
    %5819 = vdwg.mxu0
    %5820 = vmatprep.subr.mxu0 %v5344
    %5821 = vmatpush1.msra.mxu0 %v5343
    %5822 = vmatprep.subr.mxu0 %v5348
    %5823 = vmatpush1.msra.mxu0 %v5347
    %5824 = vmatprep.subr.mxu0 %v5352
    %5825 = vmatpush1.msra.mxu0 %v5351
    %5826 = vmatprep.subr.mxu0 %v5356
    %5827 = vmatpush1.msra.mxu0 %v5355
    %5828 = vmatprep.subr.mxu0 %v5360
    %5829 = vmatpush1.msra.mxu0 %v5359
    %5830 = vmatprep.subr.mxu0 %v5364
    %5831 = vmatpush1.msra.mxu0 %v5363
    %5832 = vmatprep.subr.mxu0 %v5368
    %5833 = vmatpush1.msra.mxu0 %v5367
    %5834 = vmatprep.subr.mxu0 %v5372
    %5835 = vmatpush1.msra.mxu0 %v5371
    %5836 = vmatprep.subr.mxu0 %v5376
    %5837 = vmatpush1.msra.mxu0 %v5375
    %5838 = vmatprep.subr.mxu0 %v5380
    %5839 = vmatpush1.msra.mxu0 %v5379
    %5840 = vmatprep.subr.mxu0 %v5384
    %5841 = vmatpush1.msra.mxu0 %v5383
    %5842 = vmatprep.subr.mxu0 %v5388
    %5843 = vmatpush1.msra.mxu0 %v5387
    %5844 = vmatprep.subr.mxu0 %v5392
    %5845 = vmatpush1.msra.mxu0 %v5391
    %5846 = vmatprep.subr.mxu0 %v5396
    %5847 = vmatpush1.msra.mxu0 %v5395
    %5848 = vmatprep.subr.mxu0 %v5400
    %5849 = vmatpush1.msra.mxu0 %v5399
    %5850 = vmatprep.subr.mxu0 %v5404
    %5851 = vmatpush1.msra.mxu0 %v5403
    %5852 = vmatprep.subr.mxu0 %v5408
    %5853 = vmatpush1.msra.mxu0 %v5407
    %5854 = vmatprep.subr.mxu0 %v5412
    %5855 = vmatpush1.msra.mxu0 %v5411
    %5856 = vmatprep.subr.mxu0 %v5416
    %5857 = vmatpush1.msra.mxu0 %v5415
    %5858 = vmatprep.subr.mxu0 %v5420
    %5859 = vmatpush1.msra.mxu0 %v5419
    %5860 = vmatprep.subr.mxu0 %v5424
    %5861 = vmatpush1.msra.mxu0 %v5423
    %5862 = vmatprep.subr.mxu0 %v5428
    %5863 = vmatpush1.msra.mxu0 %v5427
    %5864 = vmatprep.subr.mxu0 %v5432
    %5865 = vmatpush1.msra.mxu0 %v5431
    %5866 = vmatprep.subr.mxu0 %v5436
    %5867 = vmatpush1.msra.mxu0 %v5435
    %5868 = vmatprep.subr.mxu0 %v5440
    %5869 = vmatpush1.msra.mxu0 %v5439
    %5870 = vmatprep.subr.mxu0 %v5444
    %5871 = vmatpush1.msra.mxu0 %v5443
    %5872 = vmatprep.subr.mxu0 %v5448
    %5873 = vmatpush1.msra.mxu0 %v5447
    %5874 = vmatprep.subr.mxu0 %v5452
    %5875 = vmatpush1.msra.mxu0 %v5451
    %5876 = vmatprep.subr.mxu0 %v5456
    %5877 = vmatpush1.msra.mxu0 %v5455
    %5878 = vmatprep.subr.mxu0 %v5460
    %5879 = vmatpush1.msra.mxu0 %v5459
    %5880 = vmatprep.subr.mxu0 %v5464
    %5881 = vmatpush1.msra.mxu0 %v5463
    %5882 = vmatprep.subr.mxu0 %v5468
    %5883 = vmatpush1.msra.mxu0 %v5467
    %5884 = vmatprep.mubr.f32.mxu0 %v4077
    %5885 = vmatmul.mubr.f32.gmra.mrb[0].mxu0 %v4075
    %v5886 = vpop.f32.mrb[0].mxu0
    %v5887 = vadd.f32 %v5816, %v5886
    %v5888 = vpop.f32.mrb[0].mxu0
    %v5889 = vadd.f32 %v5818, %v5888
    %5890 = vdwg.mxu0
    %5891 = vmatprep.subr.mxu0 %v5472
    %5892 = vmatpush1.msra.mxu0 %v5471
    %5893 = vmatprep.subr.mxu0 %v5476
    %5894 = vmatpush1.msra.mxu0 %v5475
    %5895 = vmatprep.subr.mxu0 %v5480
    %5896 = vmatpush1.msra.mxu0 %v5479
    %5897 = vmatprep.subr.mxu0 %v5484
    %5898 = vmatpush1.msra.mxu0 %v5483
    %5899 = vmatprep.subr.mxu0 %v5488
    %5900 = vmatpush1.msra.mxu0 %v5487
    %5901 = vmatprep.subr.mxu0 %v5492
    %5902 = vmatpush1.msra.mxu0 %v5491
    %5903 = vmatprep.subr.mxu0 %v5496
    %5904 = vmatpush1.msra.mxu0 %v5495
    %5905 = vmatprep.subr.mxu0 %v5500
    %5906 = vmatpush1.msra.mxu0 %v5499
    %5907 = vmatprep.subr.mxu0 %v5504
    %5908 = vmatpush1.msra.mxu0 %v5503
    %5909 = vmatprep.subr.mxu0 %v5508
    %5910 = vmatpush1.msra.mxu0 %v5507
    %5911 = vmatprep.subr.mxu0 %v5512
    %5912 = vmatpush1.msra.mxu0 %v5511
    %5913 = vmatprep.subr.mxu0 %v5516
    %5914 = vmatpush1.msra.mxu0 %v5515
    %5915 = vmatprep.subr.mxu0 %v5520
    %5916 = vmatpush1.msra.mxu0 %v5519
    %5917 = vmatprep.subr.mxu0 %v5524
    %5918 = vmatpush1.msra.mxu0 %v5523
    %5919 = vmatprep.subr.mxu0 %v5528
    %5920 = vmatpush1.msra.mxu0 %v5527
    %5921 = vmatprep.subr.mxu0 %v5532
    %5922 = vmatpush1.msra.mxu0 %v5531
    %5923 = vmatprep.subr.mxu0 %v5536
    %5924 = vmatpush1.msra.mxu0 %v5535
    %5925 = vmatprep.subr.mxu0 %v5540
    %5926 = vmatpush1.msra.mxu0 %v5539
    %5927 = vmatprep.subr.mxu0 %v5544
    %5928 = vmatpush1.msra.mxu0 %v5543
    %5929 = vmatprep.subr.mxu0 %v5548
    %5930 = vmatpush1.msra.mxu0 %v5547
    %5931 = vmatprep.subr.mxu0 %v5552
    %5932 = vmatpush1.msra.mxu0 %v5551
    %5933 = vmatprep.subr.mxu0 %v5556
    %5934 = vmatpush1.msra.mxu0 %v5555
    %5935 = vmatprep.subr.mxu0 %v5560
    %5936 = vmatpush1.msra.mxu0 %v5559
    %5937 = vmatprep.subr.mxu0 %v5564
    %5938 = vmatpush1.msra.mxu0 %v5563
    %5939 = vmatprep.subr.mxu0 %v5568
    %5940 = vmatpush1.msra.mxu0 %v5567
    %5941 = vmatprep.subr.mxu0 %v5572
    %5942 = vmatpush1.msra.mxu0 %v5571
    %5943 = vmatprep.subr.mxu0 %v5576
    %5944 = vmatpush1.msra.mxu0 %v5575
    %5945 = vmatprep.subr.mxu0 %v5580
    %5946 = vmatpush1.msra.mxu0 %v5579
    %5947 = vmatprep.subr.mxu0 %v5584
    %5948 = vmatpush1.msra.mxu0 %v5583
    %5949 = vmatprep.subr.mxu0 %v5588
    %5950 = vmatpush1.msra.mxu0 %v5587
    %5951 = vmatprep.subr.mxu0 %v5592
    %5952 = vmatpush1.msra.mxu0 %v5591
    %5953 = vmatprep.subr.mxu0 %v5596
    %5954 = vmatpush1.msra.mxu0 %v5595
    %5955 = vmatprep.mubr.f32.mxu0 %v4645
    %5956 = vmatmul.mubr.f32.gmra.mrb[0].mxu0 %v4643
    %v5957 = vpop.f32.mrb[0].mxu0
    %v5958 = vadd.f32 %v5887, %v5957
    %v5959 = vpop.f32.mrb[0].mxu0
    %v5960 = vadd.f32 %v5889, %v5959
    %5961 = vdwg.mxu0
    %5962 = vmatprep.subr.mxu0 %v5600
    %5963 = vmatpush1.msra.mxu0 %v5599
    %5964 = vmatprep.subr.mxu0 %v5604
    %5965 = vmatpush1.msra.mxu0 %v5603
    %5966 = vmatprep.subr.mxu0 %v5608
    %5967 = vmatpush1.msra.mxu0 %v5607
    %5968 = vmatprep.subr.mxu0 %v5612
    %5969 = vmatpush1.msra.mxu0 %v5611
    %5970 = vmatprep.subr.mxu0 %v5616
    %5971 = vmatpush1.msra.mxu0 %v5615
    %5972 = vmatprep.subr.mxu0 %v5620
    %5973 = vmatpush1.msra.mxu0 %v5619
    %5974 = vmatprep.subr.mxu0 %v5624
    %5975 = vmatpush1.msra.mxu0 %v5623
    %5976 = vmatprep.subr.mxu0 %v5628
    %5977 = vmatpush1.msra.mxu0 %v5627
    %5978 = vmatprep.subr.mxu0 %v5632
    %5979 = vmatpush1.msra.mxu0 %v5631
    %5980 = vmatprep.subr.mxu0 %v5636
    %5981 = vmatpush1.msra.mxu0 %v5635
    %5982 = vmatprep.subr.mxu0 %v5640
    %5983 = vmatpush1.msra.mxu0 %v5639
    %5984 = vmatprep.subr.mxu0 %v5644
    %5985 = vmatpush1.msra.mxu0 %v5643
    %5986 = vmatprep.subr.mxu0 %v5648
    %5987 = vmatpush1.msra.mxu0 %v5647
    %5988 = vmatprep.subr.mxu0 %v5652
    %5989 = vmatpush1.msra.mxu0 %v5651
    %5990 = vmatprep.subr.mxu0 %v5656
    %5991 = vmatpush1.msra.mxu0 %v5655
    %5992 = vmatprep.subr.mxu0 %v5660
    %5993 = vmatpush1.msra.mxu0 %v5659
    %5994 = vmatprep.subr.mxu0 %v5664
    %5995 = vmatpush1.msra.mxu0 %v5663
    %5996 = vmatprep.subr.mxu0 %v5668
    %5997 = vmatpush1.msra.mxu0 %v5667
    %5998 = vmatprep.subr.mxu0 %v5672
    %5999 = vmatpush1.msra.mxu0 %v5671
    %6000 = vmatprep.subr.mxu0 %v5676
    %6001 = vmatpush1.msra.mxu0 %v5675
    %6002 = vmatprep.subr.mxu0 %v5680
    %6003 = vmatpush1.msra.mxu0 %v5679
    %6004 = vmatprep.subr.mxu0 %v5684
    %6005 = vmatpush1.msra.mxu0 %v5683
    %6006 = vmatprep.subr.mxu0 %v5688
    %6007 = vmatpush1.msra.mxu0 %v5687
    %6008 = vmatprep.subr.mxu0 %v5692
    %6009 = vmatpush1.msra.mxu0 %v5691
    %6010 = vmatprep.subr.mxu0 %v5696
    %6011 = vmatpush1.msra.mxu0 %v5695
    %6012 = vmatprep.subr.mxu0 %v5700
    %6013 = vmatpush1.msra.mxu0 %v5699
    %6014 = vmatprep.subr.mxu0 %v5704
    %6015 = vmatpush1.msra.mxu0 %v5703
    %6016 = vmatprep.subr.mxu0 %v5708
    %6017 = vmatpush1.msra.mxu0 %v5707
    %6018 = vmatprep.subr.mxu0 %v5712
    %6019 = vmatpush1.msra.mxu0 %v5711
    %6020 = vmatprep.subr.mxu0 %v5716
    %6021 = vmatpush1.msra.mxu0 %v5715
    %6022 = vmatprep.subr.mxu0 %v5720
    %6023 = vmatpush1.msra.mxu0 %v5719
    %6024 = vmatprep.subr.mxu0 %v5724
    %6025 = vmatpush1.msra.mxu0 %v5723
    %6026 = vmatprep.mubr.f32.mxu0 %v5213
    %6027 = vmatmul.mubr.f32.gmra.mrb[0].mxu0 %v5211
    %v6028 = vpop.f32.mrb[0].mxu0
    %v6029 = vadd.f32 %v5958, %v6028
    %v6030 = vpop.f32.mrb[0].mxu0
    %v6031 = vadd.f32 %v5960, %v6030
    %6032 = vdwg.mxu0
    %6033 = vmatprep.subr.mxu0 %v5218
    %6034 = vmatpush1.msra.mxu0 %v5217
    %6035 = vmatprep.subr.mxu0 %v5222
    %6036 = vmatpush1.msra.mxu0 %v5221
    %6037 = vmatprep.subr.mxu0 %v5226
    %6038 = vmatpush1.msra.mxu0 %v5225
    %6039 = vmatprep.subr.mxu0 %v5230
    %6040 = vmatpush1.msra.mxu0 %v5229
    %6041 = vmatprep.subr.mxu0 %v5234
    %6042 = vmatpush1.msra.mxu0 %v5233
    %6043 = vmatprep.subr.mxu0 %v5238
    %6044 = vmatpush1.msra.mxu0 %v5237
    %6045 = vmatprep.subr.mxu0 %v5242
    %6046 = vmatpush1.msra.mxu0 %v5241
    %6047 = vmatprep.subr.mxu0 %v5246
    %6048 = vmatpush1.msra.mxu0 %v5245
    %6049 = vmatprep.subr.mxu0 %v5250
    %6050 = vmatpush1.msra.mxu0 %v5249
    %6051 = vmatprep.subr.mxu0 %v5254
    %6052 = vmatpush1.msra.mxu0 %v5253
    %6053 = vmatprep.subr.mxu0 %v5258
    %6054 = vmatpush1.msra.mxu0 %v5257
    %6055 = vmatprep.subr.mxu0 %v5262
    %6056 = vmatpush1.msra.mxu0 %v5261
    %6057 = vmatprep.subr.mxu0 %v5266
    %6058 = vmatpush1.msra.mxu0 %v5265
    %6059 = vmatprep.subr.mxu0 %v5270
    %6060 = vmatpush1.msra.mxu0 %v5269
    %6061 = vmatprep.subr.mxu0 %v5274
    %6062 = vmatpush1.msra.mxu0 %v5273
    %6063 = vmatprep.subr.mxu0 %v5278
    %6064 = vmatpush1.msra.mxu0 %v5277
    %6065 = vmatprep.subr.mxu0 %v5282
    %6066 = vmatpush1.msra.mxu0 %v5281
    %6067 = vmatprep.subr.mxu0 %v5286
    %6068 = vmatpush1.msra.mxu0 %v5285
    %6069 = vmatprep.subr.mxu0 %v5290
    %6070 = vmatpush1.msra.mxu0 %v5289
    %6071 = vmatprep.subr.mxu0 %v5294
    %6072 = vmatpush1.msra.mxu0 %v5293
    %6073 = vmatprep.subr.mxu0 %v5298
    %6074 = vmatpush1.msra.mxu0 %v5297
    %6075 = vmatprep.subr.mxu0 %v5302
    %6076 = vmatpush1.msra.mxu0 %v5301
    %6077 = vmatprep.subr.mxu0 %v5306
    %6078 = vmatpush1.msra.mxu0 %v5305
    %6079 = vmatprep.subr.mxu0 %v5310
    %6080 = vmatpush1.msra.mxu0 %v5309
    %6081 = vmatprep.subr.mxu0 %v5314
    %6082 = vmatpush1.msra.mxu0 %v5313
    %6083 = vmatprep.subr.mxu0 %v5318
    %6084 = vmatpush1.msra.mxu0 %v5317
    %6085 = vmatprep.subr.mxu0 %v5322
    %6086 = vmatpush1.msra.mxu0 %v5321
    %6087 = vmatprep.subr.mxu0 %v5326
    %6088 = vmatpush1.msra.mxu0 %v5325
    %6089 = vmatprep.subr.mxu0 %v5330
    %6090 = vmatpush1.msra.mxu0 %v5329
    %6091 = vmatprep.subr.mxu0 %v5334
    %6092 = vmatpush1.msra.mxu0 %v5333
    %6093 = vmatprep.subr.mxu0 %v5338
    %6094 = vmatpush1.msra.mxu0 %v5337
    %6095 = vmatprep.subr.mxu0 %v5342
    %6096 = vmatpush1.msra.mxu0 %v5341
    %6097 = vmatprep.mubr.f32.mxu0 %v3509
    %6098 = vmatmul.mubr.f32.gmra.mrb[0].mxu0 %v3507
    %v6099 = vpop.f32.mrb[0].mxu0
    %v6100 = vadd.f32 %v5740, %v6099
    %v6101 = vpop.f32.mrb[0].mxu0
    %v6102 = vadd.f32 %v5744, %v6101
    %6103 = vdwg.mxu0
    %6104 = vmatprep.subr.mxu0 %v5346
    %6105 = vmatpush1.msra.mxu0 %v5345
    %6106 = vmatprep.subr.mxu0 %v5350
    %6107 = vmatpush1.msra.mxu0 %v5349
    %6108 = vmatprep.subr.mxu0 %v5354
    %6109 = vmatpush1.msra.mxu0 %v5353
    %6110 = vmatprep.subr.mxu0 %v5358
    %6111 = vmatpush1.msra.mxu0 %v5357
    %6112 = vmatprep.subr.mxu0 %v5362
    %6113 = vmatpush1.msra.mxu0 %v5361
    %6114 = vmatprep.subr.mxu0 %v5366
    %6115 = vmatpush1.msra.mxu0 %v5365
    %6116 = vmatprep.subr.mxu0 %v5370
    %6117 = vmatpush1.msra.mxu0 %v5369
    %6118 = vmatprep.subr.mxu0 %v5374
    %6119 = vmatpush1.msra.mxu0 %v5373
    %6120 = vmatprep.subr.mxu0 %v5378
    %6121 = vmatpush1.msra.mxu0 %v5377
    %6122 = vmatprep.subr.mxu0 %v5382
    %6123 = vmatpush1.msra.mxu0 %v5381
    %6124 = vmatprep.subr.mxu0 %v5386
    %6125 = vmatpush1.msra.mxu0 %v5385
    %6126 = vmatprep.subr.mxu0 %v5390
    %6127 = vmatpush1.msra.mxu0 %v5389
    %6128 = vmatprep.subr.mxu0 %v5394
    %6129 = vmatpush1.msra.mxu0 %v5393
    %6130 = vmatprep.subr.mxu0 %v5398
    %6131 = vmatpush1.msra.mxu0 %v5397
    %6132 = vmatprep.subr.mxu0 %v5402
    %6133 = vmatpush1.msra.mxu0 %v5401
    %6134 = vmatprep.subr.mxu0 %v5406
    %6135 = vmatpush1.msra.mxu0 %v5405
    %6136 = vmatprep.subr.mxu0 %v5410
    %6137 = vmatpush1.msra.mxu0 %v5409
    %6138 = vmatprep.subr.mxu0 %v5414
    %6139 = vmatpush1.msra.mxu0 %v5413
    %6140 = vmatprep.subr.mxu0 %v5418
    %6141 = vmatpush1.msra.mxu0 %v5417
    %6142 = vmatprep.subr.mxu0 %v5422
    %6143 = vmatpush1.msra.mxu0 %v5421
    %6144 = vmatprep.subr.mxu0 %v5426
    %6145 = vmatpush1.msra.mxu0 %v5425
    %6146 = vmatprep.subr.mxu0 %v5430
    %6147 = vmatpush1.msra.mxu0 %v5429
    %6148 = vmatprep.subr.mxu0 %v5434
    %6149 = vmatpush1.msra.mxu0 %v5433
    %6150 = vmatprep.subr.mxu0 %v5438
    %6151 = vmatpush1.msra.mxu0 %v5437
    %6152 = vmatprep.subr.mxu0 %v5442
    %6153 = vmatpush1.msra.mxu0 %v5441
    %6154 = vmatprep.subr.mxu0 %v5446
    %6155 = vmatpush1.msra.mxu0 %v5445
    %6156 = vmatprep.subr.mxu0 %v5450
    %6157 = vmatpush1.msra.mxu0 %v5449
    %6158 = vmatprep.subr.mxu0 %v5454
    %6159 = vmatpush1.msra.mxu0 %v5453
    %6160 = vmatprep.subr.mxu0 %v5458
    %6161 = vmatpush1.msra.mxu0 %v5457
    %6162 = vmatprep.subr.mxu0 %v5462
    %6163 = vmatpush1.msra.mxu0 %v5461
    %6164 = vmatprep.subr.mxu0 %v5466
    %6165 = vmatpush1.msra.mxu0 %v5465
    %6166 = vmatprep.subr.mxu0 %v5470
    %6167 = vmatpush1.msra.mxu0 %v5469
    %6168 = vmatprep.mubr.f32.mxu0 %v4077
    %6169 = vmatmul.mubr.f32.gmra.mrb[0].mxu0 %v4075
    %v6170 = vpop.f32.mrb[0].mxu0
    %v6171 = vadd.f32 %v6100, %v6170
    %v6172 = vpop.f32.mrb[0].mxu0
    %v6173 = vadd.f32 %v6102, %v6172
    %6174 = vdwg.mxu0
    %6175 = vmatprep.subr.mxu0 %v5474
    %6176 = vmatpush1.msra.mxu0 %v5473
    %6177 = vmatprep.subr.mxu0 %v5478
    %6178 = vmatpush1.msra.mxu0 %v5477
    %6179 = vmatprep.subr.mxu0 %v5482
    %6180 = vmatpush1.msra.mxu0 %v5481
    %6181 = vmatprep.subr.mxu0 %v5486
    %6182 = vmatpush1.msra.mxu0 %v5485
    %6183 = vmatprep.subr.mxu0 %v5490
    %6184 = vmatpush1.msra.mxu0 %v5489
    %6185 = vmatprep.subr.mxu0 %v5494
    %6186 = vmatpush1.msra.mxu0 %v5493
    %6187 = vmatprep.subr.mxu0 %v5498
    %6188 = vmatpush1.msra.mxu0 %v5497
    %6189 = vmatprep.subr.mxu0 %v5502
    %6190 = vmatpush1.msra.mxu0 %v5501
    %6191 = vmatprep.subr.mxu0 %v5506
    %6192 = vmatpush1.msra.mxu0 %v5505
    %6193 = vmatprep.subr.mxu0 %v5510
    %6194 = vmatpush1.msra.mxu0 %v5509
    %6195 = vmatprep.subr.mxu0 %v5514
    %6196 = vmatpush1.msra.mxu0 %v5513
    %6197 = vmatprep.subr.mxu0 %v5518
    %6198 = vmatpush1.msra.mxu0 %v5517
    %6199 = vmatprep.subr.mxu0 %v5522
    %6200 = vmatpush1.msra.mxu0 %v5521
    %6201 = vmatprep.subr.mxu0 %v5526
    %6202 = vmatpush1.msra.mxu0 %v5525
    %6203 = vmatprep.subr.mxu0 %v5530
    %6204 = vmatpush1.msra.mxu0 %v5529
    %6205 = vmatprep.subr.mxu0 %v5534
    %6206 = vmatpush1.msra.mxu0 %v5533
    %6207 = vmatprep.subr.mxu0 %v5538
    %6208 = vmatpush1.msra.mxu0 %v5537
    %6209 = vmatprep.subr.mxu0 %v5542
    %6210 = vmatpush1.msra.mxu0 %v5541
    %6211 = vmatprep.subr.mxu0 %v5546
    %6212 = vmatpush1.msra.mxu0 %v5545
    %6213 = vmatprep.subr.mxu0 %v5550
    %6214 = vmatpush1.msra.mxu0 %v5549
    %6215 = vmatprep.subr.mxu0 %v5554
    %6216 = vmatpush1.msra.mxu0 %v5553
    %6217 = vmatprep.subr.mxu0 %v5558
    %6218 = vmatpush1.msra.mxu0 %v5557
    %6219 = vmatprep.subr.mxu0 %v5562
    %6220 = vmatpush1.msra.mxu0 %v5561
    %6221 = vmatprep.subr.mxu0 %v5566
    %6222 = vmatpush1.msra.mxu0 %v5565
    %6223 = vmatprep.subr.mxu0 %v5570
    %6224 = vmatpush1.msra.mxu0 %v5569
    %6225 = vmatprep.subr.mxu0 %v5574
    %6226 = vmatpush1.msra.mxu0 %v5573
    %6227 = vmatprep.subr.mxu0 %v5578
    %6228 = vmatpush1.msra.mxu0 %v5577
    %6229 = vmatprep.subr.mxu0 %v5582
    %6230 = vmatpush1.msra.mxu0 %v5581
    %6231 = vmatprep.subr.mxu0 %v5586
    %6232 = vmatpush1.msra.mxu0 %v5585
    %6233 = vmatprep.subr.mxu0 %v5590
    %6234 = vmatpush1.msra.mxu0 %v5589
    %6235 = vmatprep.subr.mxu0 %v5594
    %6236 = vmatpush1.msra.mxu0 %v5593
    %6237 = vmatprep.subr.mxu0 %v5598
    %6238 = vmatpush1.msra.mxu0 %v5597
    %6239 = vmatprep.mubr.f32.mxu0 %v4645
    %6240 = vmatmul.mubr.f32.gmra.mrb[0].mxu0 %v4643
    %v6241 = vpop.f32.mrb[0].mxu0
    %v6242 = vadd.f32 %v6171, %v6241
    %v6243 = vpop.f32.mrb[0].mxu0
    %v6244 = vadd.f32 %v6173, %v6243
    %6245 = vdwg.mxu0
    %6246 = vmatprep.subr.mxu0 %v5602
    %6247 = vmatpush1.msra.mxu0 %v5601
    %6248 = vmatprep.subr.mxu0 %v5606
    %6249 = vmatpush1.msra.mxu0 %v5605
    %6250 = vmatprep.subr.mxu0 %v5610
    %6251 = vmatpush1.msra.mxu0 %v5609
    %6252 = vmatprep.subr.mxu0 %v5614
    %6253 = vmatpush1.msra.mxu0 %v5613
    %6254 = vmatprep.subr.mxu0 %v5618
    %6255 = vmatpush1.msra.mxu0 %v5617
    %6256 = vmatprep.subr.mxu0 %v5622
    %6257 = vmatpush1.msra.mxu0 %v5621
    %6258 = vmatprep.subr.mxu0 %v5626
    %6259 = vmatpush1.msra.mxu0 %v5625
    %6260 = vmatprep.subr.mxu0 %v5630
    %6261 = vmatpush1.msra.mxu0 %v5629
    %6262 = vmatprep.subr.mxu0 %v5634
    %6263 = vmatpush1.msra.mxu0 %v5633
    %6264 = vmatprep.subr.mxu0 %v5638
    %6265 = vmatpush1.msra.mxu0 %v5637
    %6266 = vmatprep.subr.mxu0 %v5642
    %6267 = vmatpush1.msra.mxu0 %v5641
    %6268 = vmatprep.subr.mxu0 %v5646
    %6269 = vmatpush1.msra.mxu0 %v5645
    %6270 = vmatprep.subr.mxu0 %v5650
    %6271 = vmatpush1.msra.mxu0 %v5649
    %6272 = vmatprep.subr.mxu0 %v5654
    %6273 = vmatpush1.msra.mxu0 %v5653
    %6274 = vmatprep.subr.mxu0 %v5658
    %6275 = vmatpush1.msra.mxu0 %v5657
    %6276 = vmatprep.subr.mxu0 %v5662
    %6277 = vmatpush1.msra.mxu0 %v5661
    %6278 = vmatprep.subr.mxu0 %v5666
    %6279 = vmatpush1.msra.mxu0 %v5665
    %6280 = vmatprep.subr.mxu0 %v5670
    %6281 = vmatpush1.msra.mxu0 %v5669
    %6282 = vmatprep.subr.mxu0 %v5674
    %6283 = vmatpush1.msra.mxu0 %v5673
    %6284 = vmatprep.subr.mxu0 %v5678
    %6285 = vmatpush1.msra.mxu0 %v5677
    %6286 = vmatprep.subr.mxu0 %v5682
    %6287 = vmatpush1.msra.mxu0 %v5681
    %6288 = vmatprep.subr.mxu0 %v5686
    %6289 = vmatpush1.msra.mxu0 %v5685
    %6290 = vmatprep.subr.mxu0 %v5690
    %6291 = vmatpush1.msra.mxu0 %v5689
    %6292 = vmatprep.subr.mxu0 %v5694
    %6293 = vmatpush1.msra.mxu0 %v5693
    %6294 = vmatprep.subr.mxu0 %v5698
    %6295 = vmatpush1.msra.mxu0 %v5697
    %6296 = vmatprep.subr.mxu0 %v5702
    %6297 = vmatpush1.msra.mxu0 %v5701
    %6298 = vmatprep.subr.mxu0 %v5706
    %6299 = vmatpush1.msra.mxu0 %v5705
    %6300 = vmatprep.subr.mxu0 %v5710
    %6301 = vmatpush1.msra.mxu0 %v5709
    %6302 = vmatprep.subr.mxu0 %v5714
    %6303 = vmatpush1.msra.mxu0 %v5713
    %6304 = vmatprep.subr.mxu0 %v5718
    %6305 = vmatpush1.msra.mxu0 %v5717
    %6306 = vmatprep.subr.mxu0 %v5722
    %6307 = vmatpush1.msra.mxu0 %v5721
    %6308 = vmatprep.subr.mxu0 %v5726
    %6309 = vmatpush1.msra.mxu0 %v5725
    %6310 = vmatprep.mubr.f32.mxu0 %v5213
    %6311 = vmatmul.mubr.f32.gmra.mrb[0].mxu0 %v5211
    %v6312 = vpop.f32.mrb[0].mxu0
    %v6313 = vadd.f32 %v6242, %v6312
    %v6314 = vpop.f32.mrb[0].mxu0
    %v6315 = vadd.f32 %v6244, %v6314
    %6316 = vdwg.mxu0
    %v6317 = vld [vmem:[%s7] sm:$0xff]
    %v6318 = vld [vmem:[%s7 + $0x8] sm:$0xff]
    %v6319 = vld [vmem:[%s7 + $0x10] sm:$0xff]
    %v6320 = vld [vmem:[%s7 + $0x18] sm:$0xff]
    %v6321 = vld [vmem:[%s7 + $0x20] sm:$0xff]
    %v6322 = vld [vmem:[%s7 + $0x28] sm:$0xff]
    %v6323 = vld [vmem:[%s7 + $0x30] sm:$0xff]
    %v6324 = vld [vmem:[%s7 + $0x38] sm:$0xff]
    %v6325 = vld [vmem:[%s7 + $0x40] sm:$0xff]
    %v6326 = vld [vmem:[%s7 + $0x48] sm:$0xff]
    %v6327 = vld [vmem:[%s7 + $0x50] sm:$0xff]
    %v6328 = vld [vmem:[%s7 + $0x58] sm:$0xff]
    %v6329 = vld [vmem:[%s7 + $0x60] sm:$0xff]
    %v6330 = vld [vmem:[%s7 + $0x68] sm:$0xff]
    %v6331 = vld [vmem:[%s7 + $0x70] sm:$0xff]
    %v6332 = vld [vmem:[%s7 + $0x78] sm:$0xff]
    %v6333 = vld [vmem:[%s7 + $0x80] sm:$0xff]
    %v6334 = vld [vmem:[%s7 + $0x88] sm:$0xff]
    %v6335 = vld [vmem:[%s7 + $0x90] sm:$0xff]
    %v6336 = vld [vmem:[%s7 + $0x98] sm:$0xff]
    %v6337 = vld [vmem:[%s7 + $0xa0] sm:$0xff]
    %v6338 = vld [vmem:[%s7 + $0xa8] sm:$0xff]
    %v6339 = vld [vmem:[%s7 + $0xb0] sm:$0xff]
    %v6340 = vld [vmem:[%s7 + $0xb8] sm:$0xff]
    %v6341 = vld [vmem:[%s7 + $0xc0] sm:$0xff]
    %v6342 = vld [vmem:[%s7 + $0xc8] sm:$0xff]
    %v6343 = vld [vmem:[%s7 + $0xd0] sm:$0xff]
    %v6344 = vld [vmem:[%s7 + $0xd8] sm:$0xff]
    %v6345 = vld [vmem:[%s7 + $0xe0] sm:$0xff]
    %v6346 = vld [vmem:[%s7 + $0xe8] sm:$0xff]
    %v6347 = vld [vmem:[%s7 + $0xf0] sm:$0xff]
    %v6348 = vld [vmem:[%s7 + $0xf8] sm:$0xff]
    %v6349 = vld [vmem:[%s7 + $0x100] sm:$0xff]
    %v6350 = vld [vmem:[%s7 + $0x108] sm:$0xff]
    %v6351 = vld [vmem:[%s7 + $0x110] sm:$0xff]
    %v6352 = vld [vmem:[%s7 + $0x118] sm:$0xff]
    %v6353 = vld [vmem:[%s7 + $0x120] sm:$0xff]
    %v6354 = vld [vmem:[%s7 + $0x128] sm:$0xff]
    %v6355 = vld [vmem:[%s7 + $0x130] sm:$0xff]
    %v6356 = vld [vmem:[%s7 + $0x138] sm:$0xff]
    %v6357 = vld [vmem:[%s7 + $0x140] sm:$0xff]
    %v6358 = vld [vmem:[%s7 + $0x148] sm:$0xff]
    %v6359 = vld [vmem:[%s7 + $0x150] sm:$0xff]
    %v6360 = vld [vmem:[%s7 + $0x158] sm:$0xff]
    %v6361 = vld [vmem:[%s7 + $0x160] sm:$0xff]
    %v6362 = vld [vmem:[%s7 + $0x168] sm:$0xff]
    %v6363 = vld [vmem:[%s7 + $0x170] sm:$0xff]
    %v6364 = vld [vmem:[%s7 + $0x178] sm:$0xff]
    %v6365 = vld [vmem:[%s7 + $0x180] sm:$0xff]
    %v6366 = vld [vmem:[%s7 + $0x188] sm:$0xff]
    %v6367 = vld [vmem:[%s7 + $0x190] sm:$0xff]
    %v6368 = vld [vmem:[%s7 + $0x198] sm:$0xff]
    %v6369 = vld [vmem:[%s7 + $0x1a0] sm:$0xff]
    %v6370 = vld [vmem:[%s7 + $0x1a8] sm:$0xff]
    %v6371 = vld [vmem:[%s7 + $0x1b0] sm:$0xff]
    %v6372 = vld [vmem:[%s7 + $0x1b8] sm:$0xff]
    %v6373 = vld [vmem:[%s7 + $0x1c0] sm:$0xff]
    %v6374 = vld [vmem:[%s7 + $0x1c8] sm:$0xff]
    %v6375 = vld [vmem:[%s7 + $0x1d0] sm:$0xff]
    %v6376 = vld [vmem:[%s7 + $0x1d8] sm:$0xff]
    %v6377 = vld [vmem:[%s7 + $0x1e0] sm:$0xff]
    %v6378 = vld [vmem:[%s7 + $0x1e8] sm:$0xff]
    %v6379 = vld [vmem:[%s7 + $0x1f0] sm:$0xff]
    %v6380 = vld [vmem:[%s7 + $0x1f8] sm:$0xff]
    %v6381 = vld [vmem:[#allocation14] sm:$0x1]
    %v6383 = vlaneseq
    %v6384 = vshrl.u32 %v6383, 7
    %v6385 = vsub.s32 0, %v6384
    %v6386 = vrot.slane %v6381, %v6385
    %6388 = vmatprep.subr.mxu0 0.0
    %6389 = vmatpush1.msra.mxu0 %v6317
    %6390 = vmatprep.subr.mxu0 0.0
    %6391 = vmatpush1.msra.mxu0 %v6318
    %6392 = vmatprep.subr.mxu0 0.0
    %6393 = vmatpush1.msra.mxu0 %v6319
    %6394 = vmatprep.subr.mxu0 0.0
    %6395 = vmatpush1.msra.mxu0 %v6320
    %6396 = vmatprep.subr.mxu0 0.0
    %6397 = vmatpush1.msra.mxu0 %v6321
    %6398 = vmatprep.subr.mxu0 0.0
    %6399 = vmatpush1.msra.mxu0 %v6322
    %6400 = vmatprep.subr.mxu0 0.0
    %6401 = vmatpush1.msra.mxu0 %v6323
    %6402 = vmatprep.subr.mxu0 0.0
    %6403 = vmatpush1.msra.mxu0 %v6324
    %6404 = vmatprep.subr.mxu0 0.0
    %6405 = vmatpush1.msra.mxu0 %v6325
    %6406 = vmatprep.subr.mxu0 0.0
    %6407 = vmatpush1.msra.mxu0 %v6326
    %6408 = vmatprep.subr.mxu0 0.0
    %6409 = vmatpush1.msra.mxu0 %v6327
    %6410 = vmatprep.subr.mxu0 0.0
    %6411 = vmatpush1.msra.mxu0 %v6328
    %6412 = vmatprep.subr.mxu0 0.0
    %6413 = vmatpush1.msra.mxu0 %v6329
    %6414 = vmatprep.subr.mxu0 0.0
    %6415 = vmatpush1.msra.mxu0 %v6330
    %6416 = vmatprep.subr.mxu0 0.0
    %6417 = vmatpush1.msra.mxu0 %v6331
    %6418 = vmatprep.subr.mxu0 0.0
    %6419 = vmatpush1.msra.mxu0 %v6332
    %6420 = vmatprep.subr.mxu0 0.0
    %6421 = vmatpush1.msra.mxu0 %v6333
    %6422 = vmatprep.subr.mxu0 0.0
    %6423 = vmatpush1.msra.mxu0 %v6334
    %6424 = vmatprep.subr.mxu0 0.0
    %6425 = vmatpush1.msra.mxu0 %v6335
    %6426 = vmatprep.subr.mxu0 0.0
    %6427 = vmatpush1.msra.mxu0 %v6336
    %6428 = vmatprep.subr.mxu0 0.0
    %6429 = vmatpush1.msra.mxu0 %v6337
    %6430 = vmatprep.subr.mxu0 0.0
    %6431 = vmatpush1.msra.mxu0 %v6338
    %6432 = vmatprep.subr.mxu0 0.0
    %6433 = vmatpush1.msra.mxu0 %v6339
    %6434 = vmatprep.subr.mxu0 0.0
    %6435 = vmatpush1.msra.mxu0 %v6340
    %6436 = vmatprep.subr.mxu0 0.0
    %6437 = vmatpush1.msra.mxu0 %v6341
    %6438 = vmatprep.subr.mxu0 0.0
    %6439 = vmatpush1.msra.mxu0 %v6342
    %6440 = vmatprep.subr.mxu0 0.0
    %6441 = vmatpush1.msra.mxu0 %v6343
    %6442 = vmatprep.subr.mxu0 0.0
    %6443 = vmatpush1.msra.mxu0 %v6344
    %6444 = vmatprep.subr.mxu0 0.0
    %6445 = vmatpush1.msra.mxu0 %v6345
    %6446 = vmatprep.subr.mxu0 0.0
    %6447 = vmatpush1.msra.mxu0 %v6346
    %6448 = vmatprep.subr.mxu0 0.0
    %6449 = vmatpush1.msra.mxu0 %v6347
    %6450 = vmatprep.subr.mxu0 0.0
    %6451 = vmatpush1.msra.mxu0 %v6348
    %6452 = vmatprep.mubr.f32.mxu0 %v6031
    %6453 = vmatmul.mubr.f32.gmra.mrb[0].mxu0 %v6029
    %v6454 = vpop.f32.mrb[0].mxu0
    %v6455 = vadd.f32 %v6386, %v6454
    %v6456 = vpop.f32.mrb[0].mxu0
    %6457 = vdwg.mxu0
    %6458 = vmatprep.subr.mxu0 0.0
    %6459 = vmatpush1.msra.mxu0 %v6349
    %6460 = vmatprep.subr.mxu0 0.0
    %6461 = vmatpush1.msra.mxu0 %v6350
    %6462 = vmatprep.subr.mxu0 0.0
    %6463 = vmatpush1.msra.mxu0 %v6351
    %6464 = vmatprep.subr.mxu0 0.0
    %6465 = vmatpush1.msra.mxu0 %v6352
    %6466 = vmatprep.subr.mxu0 0.0
    %6467 = vmatpush1.msra.mxu0 %v6353
    %6468 = vmatprep.subr.mxu0 0.0
    %6469 = vmatpush1.msra.mxu0 %v6354
    %6470 = vmatprep.subr.mxu0 0.0
    %6471 = vmatpush1.msra.mxu0 %v6355
    %6472 = vmatprep.subr.mxu0 0.0
    %6473 = vmatpush1.msra.mxu0 %v6356
    %6474 = vmatprep.subr.mxu0 0.0
    %6475 = vmatpush1.msra.mxu0 %v6357
    %6476 = vmatprep.subr.mxu0 0.0
    %6477 = vmatpush1.msra.mxu0 %v6358
    %6478 = vmatprep.subr.mxu0 0.0
    %6479 = vmatpush1.msra.mxu0 %v6359
    %6480 = vmatprep.subr.mxu0 0.0
    %6481 = vmatpush1.msra.mxu0 %v6360
    %6482 = vmatprep.subr.mxu0 0.0
    %6483 = vmatpush1.msra.mxu0 %v6361
    %6484 = vmatprep.subr.mxu0 0.0
    %6485 = vmatpush1.msra.mxu0 %v6362
    %6486 = vmatprep.subr.mxu0 0.0
    %6487 = vmatpush1.msra.mxu0 %v6363
    %6488 = vmatprep.subr.mxu0 0.0
    %6489 = vmatpush1.msra.mxu0 %v6364
    %6490 = vmatprep.subr.mxu0 0.0
    %6491 = vmatpush1.msra.mxu0 %v6365
    %6492 = vmatprep.subr.mxu0 0.0
    %6493 = vmatpush1.msra.mxu0 %v6366
    %6494 = vmatprep.subr.mxu0 0.0
    %6495 = vmatpush1.msra.mxu0 %v6367
    %6496 = vmatprep.subr.mxu0 0.0
    %6497 = vmatpush1.msra.mxu0 %v6368
    %6498 = vmatprep.subr.mxu0 0.0
    %6499 = vmatpush1.msra.mxu0 %v6369
    %6500 = vmatprep.subr.mxu0 0.0
    %6501 = vmatpush1.msra.mxu0 %v6370
    %6502 = vmatprep.subr.mxu0 0.0
    %6503 = vmatpush1.msra.mxu0 %v6371
    %6504 = vmatprep.subr.mxu0 0.0
    %6505 = vmatpush1.msra.mxu0 %v6372
    %6506 = vmatprep.subr.mxu0 0.0
    %6507 = vmatpush1.msra.mxu0 %v6373
    %6508 = vmatprep.subr.mxu0 0.0
    %6509 = vmatpush1.msra.mxu0 %v6374
    %6510 = vmatprep.subr.mxu0 0.0
    %6511 = vmatpush1.msra.mxu0 %v6375
    %6512 = vmatprep.subr.mxu0 0.0
    %6513 = vmatpush1.msra.mxu0 %v6376
    %6514 = vmatprep.subr.mxu0 0.0
    %6515 = vmatpush1.msra.mxu0 %v6377
    %6516 = vmatprep.subr.mxu0 0.0
    %6517 = vmatpush1.msra.mxu0 %v6378
    %6518 = vmatprep.subr.mxu0 0.0
    %6519 = vmatpush1.msra.mxu0 %v6379
    %6520 = vmatprep.subr.mxu0 0.0
    %6521 = vmatpush1.msra.mxu0 %v6380
    %6522 = vmatprep.mubr.f32.mxu0 %v6315
    %6523 = vmatmul.mubr.f32.gmra.mrb[0].mxu0 %v6313
    %v6524 = vpop.f32.mrb[0].mxu0
    %v6525 = vadd.f32 %v6455, %v6524
    %v6526 = vpop.f32.mrb[0].mxu0
    %6527 = vdwg.mxu0
    %v6528 = vxor.u32 %v6525, 2147483648
    %v6529 = vmul.f32 %v6528, 1.442695
    %v6530 = vpow.pop %v6529
    %v6531 = vadd.f32 %v6530, 1.0
    %v6532 = vrcp.pop %v6531
    %v6533 = vmul.f32 1.0, %v6532
    %vm6534 = vcmask 130048
    %6535 = vst.msk [vmem:[#allocation16] sm:$0xff] %vm6534, %v6533
    // Predicated region
    $region70: #{tpu_custom_call.1} parent=1 // pred_check
      _
    $region71: #{tpu_custom_call.1} parent=1 // pred_check_branch
      %6537 = sbr.rel (0) target = $region73
    $region72: #{tpu_custom_call.1} parent=1 // pred_region
      %s6539 = ssub.s32 128, 128
      %6540 = vsyncadd [#allocation4], %s6539
      %s6542 = sshll.u32 [#allocation16], 4
      %s6543 = int_to_ptr.vmem [resolvable:$true] %s6542
      %6545 = dma.vmem_to_hbm [thread:$0]  %s6543, 128, %s9, [#allocation4]
    $region73: #{tpu_custom_call.1} parent=1 // pred_fallthru
      _
    // Predicated region
    $region74: #{tpu_custom_call.1} parent=1 // pred_check
      _
    $region75: #{tpu_custom_call.1} parent=1 // pred_check_branch
      %6547 = sbr.rel (0) target = $region77
    $region76: #{tpu_custom_call.1} parent=1 // pred_region
      %6548 = dma.done [#allocation4], 128
    $region77: #{tpu_custom_call.1} parent=1 // pred_fallthru
      _
    %6549 = vsyncpa [#allocation3], 1
    %6550 = vsyncpa [#allocation6], 1
    %6551 = vsyncpa [#allocation9], 1
    %6552 = vsyncpa [#allocation12], 1
    %6553 = vsyncpa [#allocation15], 1
    %6554 = vsyncpa [#allocation4], 1

</llo_original>
